<compile_context>
chip_gen: v6e
topology: v6e:2x2x1
jax: 0.10.0
libtpu: 0.0.40
codegen_flags: <defaults>
</compile_context>

<pallas_src>
import jax
import jax.numpy as jnp
from jax.experimental import pallas as pl
from jax.experimental.pallas import tpu as pltpu


def _round_up(v, m):
    return ((v + m - 1) // m) * m


_MG = 2            # margin, in grid rows, baked into every framed activation
_CHUNK_ROWS = 256  # max output rows per accumulation chunk (keeps acc in vregs)


# ------------------------------ fused kernel -------------------------------

def _make_netdepth_kernel(batch, chans, hs, wpads):
    C0, C1, C2, C3 = chans
    H1, H2, H3, H4 = hs
    WP1, WP2, WP3, WP4 = wpads

    def conv_stage(framed, w_ref, b_ref, H, WP, residual):
        # framed: ((H + 2 + 2*_MG) * WP, lanes_in) f32, zero margins + zero frame.
        #   flat row = (grid_row) * WP + grid_col; conv output grid starts at
        #   flat row m0 = _MG * WP and spans ntot = (H+2)*WP rows.
        ntot = (H + 2) * WP
        m0 = _MG * WP
        bias = b_ref[...]
        wmats = [w_ref[o] for o in range(9)]           # bf16 (B*Cin, B*Cout) each
        n_chunks = max(1, -(-ntot // _CHUNK_ROWS))
        chunk = _round_up(-(-ntot // n_chunks), 8)
        parts = []
        cs = 0
        while cs < ntot:
            clen = min(chunk, ntot - cs)
            acc = None
            for dy in range(3):
                for dx in range(3):
                    sh = (dy - 1) * WP + (dx - 1)
                    piece = framed[m0 + sh + cs:m0 + sh + cs + clen, :]
                    part = jnp.dot(piece.astype(jnp.bfloat16), wmats[dy * 3 + dx],
                                   preferred_element_type=jnp.float32)
                    acc = part if acc is None else acc + part
            yc = jnp.maximum(acc + bias, 0.0)           # bias + relu per chunk
            if residual:
                # relu(conv4) + identity (zero frame of the input is harmless)
                yc = yc + framed[m0 + cs:m0 + cs + clen, :]
            parts.append(yc)
            cs += clen
        return parts[0] if len(parts) == 1 else jnp.concatenate(parts, axis=0)

    def pool_project(y, H, WP, s_ref):
        # y: ((H+2)*WP, lanes) conv output on the padded grid (interior valid).
        # 2x2 max-pool, then one selection matmul that compacts the stride-2
        # columns AND embeds them in the next stage's zero-framed, zero-margined
        # flat layout.
        lanes = y.shape[1]
        hp = H // 2
        y3 = y.reshape(H + 2, WP, lanes)                    # WP % 8 == 0 -> free
        yi = y3[1:1 + H].reshape(hp, 2, WP, lanes)          # leading-dim ops only
        yh = jnp.maximum(yi[:, 0], yi[:, 1])                # max over row pairs
        ym = jnp.maximum(yh[:, 1:1 + H, :], yh[:, 2:2 + H, :])  # adjacent-col max
        rflat = ym.reshape(hp * H, lanes)                   # H % 8 == 0 -> free
        # pooled value (i, j) lives at rflat[i*H + 2*j, :]; s_ref selects it.
        return jnp.dot(s_ref[...], rflat, preferred_element_type=jnp.float32)

    def kernel(xim_ref, w1_ref, b1_ref, s1_ref, w2_ref, b2_ref, s2_ref,
               w3_ref, b3_ref, s3_ref, w4_ref, b4_ref,
               wf1_ref, bf1_ref, wf2_ref, bf2_ref, o_ref):
        # ---- stage 1: single im2col matmul (K padded to 64) + bias + relu ----
        y1 = jnp.maximum(
            jnp.dot(xim_ref[...], w1_ref[...], preferred_element_type=jnp.float32)
            + b1_ref[...], 0.0)                                  # (1360, B*C1)
        x2 = pool_project(y1, H1, WP1, s1_ref)                   # (528, B*C1)
        y2 = conv_stage(x2, w2_ref, b2_ref, H2, WP2, False)      # (432, B*C2)
        x3 = pool_project(y2, H2, WP2, s2_ref)                   # (224, B*C2)
        y3 = conv_stage(x3, w3_ref, b3_ref, H3, WP3, False)      # (160, B*C3)
        x4 = pool_project(y3, H3, WP3, s3_ref)                   # (80,  B*C3)
        y4 = conv_stage(x4, w4_ref, b4_ref, H4, WP4, True)       # (48,  B*C3)

        # ---- stage-4 2x2 pool + fused block-diag MLP head ----
        bc3 = batch * C3
        y43 = y4.reshape(H4 + 2, WP4, bc3)
        yp = y43[1:1 + H4].reshape(H4 // 2, 2, WP4, bc3)
        yr = jnp.maximum(yp[:, 0], yp[:, 1])                     # (2, WP4, B*C3)
        wf1 = wf1_ref[...]                                       # (4, B*C3, B*32)
        acc = None
        for hh in range(2):
            row = yr[hh]                                         # (WP4, B*C3)
            for ww in range(2):
                v = jnp.maximum(row[2 * ww + 1:2 * ww + 2, :],
                                row[2 * ww + 2:2 * ww + 3, :])   # (1, B*C3)
                part = jnp.dot(v, wf1[hh * 2 + ww],
                               preferred_element_type=jnp.float32)
                acc = part if acc is None else acc + part
        h1 = jnp.maximum(acc + bf1_ref[...], 0.0)                # (1, B*32)
        o_ref[...] = (jnp.dot(h1, wf2_ref[...],
                              preferred_element_type=jnp.float32) + bf2_ref[...])

    return kernel


# ------------------------------- JAX wrapper --------------------------------

def _block_diag(m, b):
    # (n, k) -> (b*n, b*k) block-diagonal over batch.
    eye = jnp.eye(b, dtype=m.dtype)
    return jnp.einsum('nk,bd->bndk', m, eye).reshape(b * m.shape[0],
                                                     b * m.shape[1])


def _conv_w_bd(w, b):
    # torch conv weight (Cout, Cin, 3, 3) -> (9, B*Cin, B*Cout), o = dy*3 + dx.
    cout, cin = w.shape[0], w.shape[1]
    wk = jnp.transpose(w, (2, 3, 1, 0)).reshape(9, cin, cout)
    return jnp.stack([_block_diag(wk[o], b) for o in range(9)], axis=0)


def _conv_b_bd(bv, b):
    return jnp.tile(bv, (b,)).reshape(1, b * bv.shape[0])


def _make_sel(h_in, wp_next):
    # 0/1 matrix: picks pooled value (i, j) at flat index i*h_in + 2*j and places
    # it at framed flat row (i + 1 + _MG)*wp_next + (j + 1); everything else
    # (zero frame, right pad, top/bottom shift margins) stays exactly 0.
    hp = h_in // 2
    wp = h_in // 2
    rows_next = (hp + 2 + 2 * _MG) * wp_next
    i = jnp.arange(hp)
    j = jnp.arange(wp)
    rr = ((i[:, None] + 1 + _MG) * wp_next + (j[None, :] + 1)).reshape(-1)
    cc = (i[:, None] * h_in + 2 * j[None, :]).reshape(-1)
    s = jnp.zeros((rows_next, hp * h_in), jnp.float32)
    return s.at[rr, cc].set(1.0)


def net_depth_forward(x_nchw, params):
    x = x_nchw.astype(jnp.float32)
    B, C0, H0, W0 = x.shape
    assert H0 == 32 and W0 == 32, "fc1 (n_chan3*2*2) implies 32x32 input"
    C1 = params["w1"].shape[0]
    C2 = params["w2"].shape[0]
    C3 = params["w3"].shape[0]
    assert B * C1 <= 128, "block-diag-over-batch folding requires B*C <= 128"

    hs = [H0, H0 // 2, H0 // 4, H0 // 8]                 # 32, 16, 8, 4
    wpads = [_round_up(h + 2, 8) for h in hs]            # 40, 24, 16, 8
    WP1 = wpads[0]

    # ---- stage-1 im2col (done once in XLA, ~290 KB): one dot with K=9*B*C0 ----
    ntot1 = (H0 + 2) * WP1
    m01 = 2 * WP1
    xt = jnp.transpose(x, (2, 3, 0, 1)).reshape(H0, W0, B * C0)     # lane = b*C0+c
    xg = jnp.pad(xt, ((1, 1), (1, WP1 - W0 - 1), (0, 0)))           # zero frame
    xflat = xg.reshape(ntot1, B * C0)
    xm = jnp.pad(xflat, ((m01, m01), (0, 0)))                       # shift margins
    pieces = []
    for dy in range(3):
        for dx in range(3):
            sh = (dy - 1) * WP1 + (dx - 1)
            pieces.append(xm[m01 + sh:m01 + sh + ntot1, :])
    xim = jnp.concatenate(pieces, axis=1)                           # (ntot1, 9*B*C0)
    k1 = _round_up(xim.shape[1], 64)
    xim = jnp.pad(xim, ((0, 0), (0, k1 - xim.shape[1]))).astype(jnp.bfloat16)

    w1_bd = _conv_w_bd(params["w1"], B)                             # (9, B*C0, B*C1)
    w1_im = w1_bd.reshape(9 * B * C0, B * C1)
    w1_im = jnp.pad(w1_im, ((0, k1 - w1_im.shape[0]), (0, 0))).astype(jnp.bfloat16)

    # ---- remaining conv weights / biases (block-diag over batch, bf16) ----
    w2 = _conv_w_bd(params["w2"], B).astype(jnp.bfloat16)
    w3 = _conv_w_bd(params["w3"], B).astype(jnp.bfloat16)
    w4 = _conv_w_bd(params["w4"], B).astype(jnp.bfloat16)
    b1 = _conv_b_bd(params["b1"], B)
    b2 = _conv_b_bd(params["b2"], B)
    b3 = _conv_b_bd(params["b3"], B)
    b4 = _conv_b_bd(params["b4"], B)

    # ---- pool-compaction / framing selection matrices ----
    s1 = _make_sel(hs[0], wpads[1])
    s2 = _make_sel(hs[1], wpads[2])
    s3 = _make_sel(hs[2], wpads[3])

    # ---- MLP head: per-spatial-position block-diag fc1, block-diag fc2 ----
    nf1 = params["fc1_w"].shape[0]                                  # 32
    nout = params["fc2_w"].shape[0]                                 # 2
    wf1_list = []
    for h in range(2):
        for w in range(2):
            cols = [c * 4 + h * 2 + w for c in range(C3)]           # torch (c,h,w)
            wp_ = params["fc1_w"][:, cols].T                        # (C3, 32)
            wf1_list.append(_block_diag(wp_, B))                    # (B*C3, B*32)
    wf1 = jnp.stack(wf1_list, axis=0)                               # (4, B*C3, B*32)
    bf1 = jnp.tile(params["fc1_b"], (B,)).reshape(1, B * nf1)
    wf2 = _block_diag(params["fc2_w"].T, B)                         # (B*32, B*nout)
    bf2 = jnp.tile(params["fc2_b"], (B,)).reshape(1, B * nout)

    kernel = _make_netdepth_kernel(B, (C0, C1, C2, C3), hs, wpads)
    out = pl.pallas_call(
        kernel,
        out_shape=jax.ShapeDtypeStruct((1, B * nout), jnp.float32),
        compiler_params=pltpu.CompilerParams(vmem_limit_bytes=32 * 1024 * 1024),
    )(xim, w1_im, b1, s1, w2, b2, s2, w3, b3, s3, w4, b4, wf1, bf1, wf2, bf2)
    return out.reshape(B, nout)


# ---------------------------- plain-JAX reference ----------------------------

def net_depth_reference(x, params):
    hi = jax.lax.Precision.HIGHEST

    def conv(v, w, b):
        y = jax.lax.conv_general_dilated(
            v, w, window_strides=(1, 1), padding=((1, 1), (1, 1)),
            dimension_numbers=("NCHW", "OIHW", "NCHW"), precision=hi)
        return y + b[None, :, None, None]

    def pool(v):
        return jax.lax.reduce_window(v, -jnp.inf, jax.lax.max,
                                     (1, 1, 2, 2), (1, 1, 2, 2), "VALID")

    o1 = pool(jax.nn.relu(conv(x, params["w1"], params["b1"])))
    o2 = pool(jax.nn.relu(conv(o1, params["w2"], params["b2"])))
    o3 = pool(jax.nn.relu(conv(o2, params["w3"], params["b3"])))
    o4 = pool(jax.nn.relu(conv(o3, params["w4"], params["b4"])) + o3)
    flat = o4.reshape(o4.shape[0], -1)
    h = jax.nn.relu(jnp.dot(flat, params["fc1_w"].T, precision=hi)
                    + params["fc1_b"])
    return jnp.dot(h, params["fc2_w"].T, precision=hi) + params["fc2_b"]


# ------------------------- deterministic parameters -------------------------

def init_params(key, n_chan1=32):
    n1 = n_chan1
    n2 = n1 // 2
    n3 = n2 // 2
    ks = jax.random.split(key, 12)

    def conv_w(k, co, ci):
        return 0.1 * jax.random.normal(k, (co, ci, 3, 3), jnp.float32)

    def vec(k, n):
        return 0.1 * jax.random.normal(k, (n,), jnp.float32)

    return {
        "w1": conv_w(ks[0], n1, 3),  "b1": vec(ks[1], n1),
        "w2": conv_w(ks[2], n2, n1), "b2": vec(ks[3], n2),
        "w3": conv_w(ks[4], n3, n2), "b3": vec(ks[5], n3),
        "w4": conv_w(ks[6], n3, n3), "b4": vec(ks[7], n3),
        "fc1_w": 0.1 * jax.random.normal(ks[8], (32, n3 * 2 * 2), jnp.float32),
        "fc1_b": vec(ks[9], 32),
        "fc2_w": 0.1 * jax.random.normal(ks[10], (2, 32), jnp.float32),
        "fc2_b": vec(ks[11], 2),
    }


if __name__ == "__main__":
    key = jax.random.PRNGKey(0)
    kx, kp = jax.random.split(key)
    # fc1 expects n_chan3 * 2 * 2 features -> 4 pools of stride 2 -> input 32x32
    x = jax.random.normal(kx, (2, 3, 32, 32), jnp.float32)
    params = init_params(kp, n_chan1=32)

    fwd = jax.jit(net_depth_forward)
    out = jax.block_until_ready(fwd(x, params))

    assert out.shape == (2, 2), out.shape
    assert bool(jnp.all(jnp.isfinite(out)))

    ref = jax.block_until_ready(jax.jit(net_depth_reference)(x, params))
    err = float(jnp.max(jnp.abs(out - ref)))
    # Loose tolerance: conv matmul operands are bf16 on the MXU (per perf review).
    tol = 5e-2 + 1.5e-1 * float(jnp.max(jnp.abs(ref)))
    assert err <= tol, (err, tol)

    print("KERNEL_OK")
</pallas_src>

<mosaic_0001>
module attributes {stable_mosaic.version = 11 : i64} {
  func.func @kernel(%arg0: memref<1360x64xbf16, #tpu.memory_space<vmem>>, %arg1: memref<64x64xbf16, #tpu.memory_space<vmem>>, %arg2: memref<1x64xf32, #tpu.memory_space<vmem>>, %arg3: memref<528x512xf32, #tpu.memory_space<vmem>>, %arg4: memref<9x64x32xbf16, #tpu.memory_space<vmem>>, %arg5: memref<1x32xf32, #tpu.memory_space<vmem>>, %arg6: memref<224x128xf32, #tpu.memory_space<vmem>>, %arg7: memref<9x32x16xbf16, #tpu.memory_space<vmem>>, %arg8: memref<1x16xf32, #tpu.memory_space<vmem>>, %arg9: memref<80x32xf32, #tpu.memory_space<vmem>>, %arg10: memref<9x16x16xbf16, #tpu.memory_space<vmem>>, %arg11: memref<1x16xf32, #tpu.memory_space<vmem>>, %arg12: memref<4x16x64xf32, #tpu.memory_space<vmem>>, %arg13: memref<1x64xf32, #tpu.memory_space<vmem>>, %arg14: memref<64x4xf32, #tpu.memory_space<vmem>>, %arg15: memref<1x4xf32, #tpu.memory_space<vmem>>, %arg16: memref<1x4xf32, #tpu.memory_space<vmem>>) attributes {dimension_semantics = [], scalar_prefetch = 0 : i64, scratch_operands = 0 : i64, tpu.core_type = #tpu.core_type<tc>} {
    %c0 = arith.constant 0 : index
    %c0_0 = arith.constant 0 : index
    %0 = vector.load %arg0[%c0, %c0_0] : memref<1360x64xbf16, #tpu.memory_space<vmem>>, vector<1360x64xbf16>
    %c0_1 = arith.constant 0 : index
    %c0_2 = arith.constant 0 : index
    %1 = vector.load %arg1[%c0_1, %c0_2] : memref<64x64xbf16, #tpu.memory_space<vmem>>, vector<64x64xbf16>
    %cst = arith.constant dense<0.000000e+00> : vector<1360x64xf32>
    %2 = tpu.matmul %0, %1, %cst {dimension_numbers = #tpu.dot_dimension_numbers<[1], [0], [0], [1], [0, 0, 1, 1], [], []>} : vector<1360x64xbf16>, vector<64x64xbf16>, vector<1360x64xf32> -> vector<1360x64xf32>
    %c0_3 = arith.constant 0 : index
    %c0_4 = arith.constant 0 : index
    %3 = vector.load %arg2[%c0_3, %c0_4] : memref<1x64xf32, #tpu.memory_space<vmem>>, vector<1x64xf32>
    %4 = vector.broadcast %3 : vector<1x64xf32> to vector<1360x64xf32>
    %5 = arith.addf %2, %4 : vector<1360x64xf32>
    %cst_5 = arith.constant 0.000000e+00 : f32
    %6 = vector.broadcast %cst_5 : f32 to vector<1360x64xf32>
    %7 = arith.maximumf %5, %6 : vector<1360x64xf32>
    %8 = vector.shape_cast %7 : vector<1360x64xf32> to vector<34x40x64xf32>
    %9 = vector.extract_strided_slice %8 {offsets = [1, 0, 0], sizes = [32, 40, 64], strides = [1, 1, 1]} : vector<34x40x64xf32> to vector<32x40x64xf32>
    %10 = vector.shape_cast %9 : vector<32x40x64xf32> to vector<16x2x40x64xf32>
    %11 = vector.extract_strided_slice %10 {offsets = [0, 0, 0, 0], sizes = [16, 1, 40, 64], strides = [1, 1, 1, 1]} : vector<16x2x40x64xf32> to vector<16x1x40x64xf32>
    %12 = vector.shape_cast %11 : vector<16x1x40x64xf32> to vector<16x40x64xf32>
    %13 = vector.extract_strided_slice %10 {offsets = [0, 1, 0, 0], sizes = [16, 1, 40, 64], strides = [1, 1, 1, 1]} : vector<16x2x40x64xf32> to vector<16x1x40x64xf32>
    %14 = vector.shape_cast %13 : vector<16x1x40x64xf32> to vector<16x40x64xf32>
    %15 = arith.maximumf %12, %14 : vector<16x40x64xf32>
    %16 = vector.extract_strided_slice %15 {offsets = [0, 1, 0], sizes = [16, 32, 64], strides = [1, 1, 1]} : vector<16x40x64xf32> to vector<16x32x64xf32>
    %17 = vector.extract_strided_slice %15 {offsets = [0, 2, 0], sizes = [16, 32, 64], strides = [1, 1, 1]} : vector<16x40x64xf32> to vector<16x32x64xf32>
    %18 = arith.maximumf %16, %17 : vector<16x32x64xf32>
    %19 = vector.shape_cast %18 : vector<16x32x64xf32> to vector<512x64xf32>
    %c0_6 = arith.constant 0 : index
    %c0_7 = arith.constant 0 : index
    %20 = vector.load %arg3[%c0_6, %c0_7] : memref<528x512xf32, #tpu.memory_space<vmem>>, vector<528x512xf32>
    %cst_8 = arith.constant dense<0.000000e+00> : vector<528x64xf32>
    %21 = tpu.matmul %20, %19, %cst_8 {dimension_numbers = #tpu.dot_dimension_numbers<[1], [0], [0], [1], [0, 0, 1, 1], [], []>} : vector<528x512xf32>, vector<512x64xf32>, vector<528x64xf32> -> vector<528x64xf32>
    %c0_9 = arith.constant 0 : index
    %c0_10 = arith.constant 0 : index
    %22 = vector.load %arg5[%c0_9, %c0_10] : memref<1x32xf32, #tpu.memory_space<vmem>>, vector<1x32xf32>
    %c0_11 = arith.constant 0 : index
    %c0_12 = arith.constant 0 : index
    %c0_13 = arith.constant 0 : index
    %23 = vector.load %arg4[%c0_11, %c0_12, %c0_13] : memref<9x64x32xbf16, #tpu.memory_space<vmem>>, vector<1x64x32xbf16>
    %24 = vector.shape_cast %23 : vector<1x64x32xbf16> to vector<64x32xbf16>
    %c1 = arith.constant 1 : index
    %c0_14 = arith.constant 0 : index
    %c0_15 = arith.constant 0 : index
    %25 = vector.load %arg4[%c1, %c0_14, %c0_15] : memref<9x64x32xbf16, #tpu.memory_space<vmem>>, vector<1x64x32xbf16>
    %26 = vector.shape_cast %25 : vector<1x64x32xbf16> to vector<64x32xbf16>
    %c2 = arith.constant 2 : index
    %c0_16 = arith.constant 0 : index
    %c0_17 = arith.constant 0 : index
    %27 = vector.load %arg4[%c2, %c0_16, %c0_17] : memref<9x64x32xbf16, #tpu.memory_space<vmem>>, vector<1x64x32xbf16>
    %28 = vector.shape_cast %27 : vector<1x64x32xbf16> to vector<64x32xbf16>
    %c3 = arith.constant 3 : index
    %c0_18 = arith.constant 0 : index
    %c0_19 = arith.constant 0 : index
    %29 = vector.load %arg4[%c3, %c0_18, %c0_19] : memref<9x64x32xbf16, #tpu.memory_space<vmem>>, vector<1x64x32xbf16>
    %30 = vector.shape_cast %29 : vector<1x64x32xbf16> to vector<64x32xbf16>
    %c4 = arith.constant 4 : index
    %c0_20 = arith.constant 0 : index
    %c0_21 = arith.constant 0 : index
    %31 = vector.load %arg4[%c4, %c0_20, %c0_21] : memref<9x64x32xbf16, #tpu.memory_space<vmem>>, vector<1x64x32xbf16>
    %32 = vector.shape_cast %31 : vector<1x64x32xbf16> to vector<64x32xbf16>
    %c5 = arith.constant 5 : index
    %c0_22 = arith.constant 0 : index
    %c0_23 = arith.constant 0 : index
    %33 = vector.load %arg4[%c5, %c0_22, %c0_23] : memref<9x64x32xbf16, #tpu.memory_space<vmem>>, vector<1x64x32xbf16>
    %34 = vector.shape_cast %33 : vector<1x64x32xbf16> to vector<64x32xbf16>
    %c6 = arith.constant 6 : index
    %c0_24 = arith.constant 0 : index
    %c0_25 = arith.constant 0 : index
    %35 = vector.load %arg4[%c6, %c0_24, %c0_25] : memref<9x64x32xbf16, #tpu.memory_space<vmem>>, vector<1x64x32xbf16>
    %36 = vector.shape_cast %35 : vector<1x64x32xbf16> to vector<64x32xbf16>
    %c7 = arith.constant 7 : index
    %c0_26 = arith.constant 0 : index
    %c0_27 = arith.constant 0 : index
    %37 = vector.load %arg4[%c7, %c0_26, %c0_27] : memref<9x64x32xbf16, #tpu.memory_space<vmem>>, vector<1x64x32xbf16>
    %38 = vector.shape_cast %37 : vector<1x64x32xbf16> to vector<64x32xbf16>
    %c8 = arith.constant 8 : index
    %c0_28 = arith.constant 0 : index
    %c0_29 = arith.constant 0 : index
    %39 = vector.load %arg4[%c8, %c0_28, %c0_29] : memref<9x64x32xbf16, #tpu.memory_space<vmem>>, vector<1x64x32xbf16>
    %40 = vector.shape_cast %39 : vector<1x64x32xbf16> to vector<64x32xbf16>
    %41 = vector.extract_strided_slice %21 {offsets = [23, 0], sizes = [216, 64], strides = [1, 1]} : vector<528x64xf32> to vector<216x64xf32>
    %42 = arith.truncf %41 : vector<216x64xf32> to vector<216x64xbf16>
    %cst_30 = arith.constant dense<0.000000e+00> : vector<216x32xf32>
    %43 = tpu.matmul %42, %24, %cst_30 {dimension_numbers = #tpu.dot_dimension_numbers<[1], [0], [0], [1], [0, 0, 1, 1], [], []>} : vector<216x64xbf16>, vector<64x32xbf16>, vector<216x32xf32> -> vector<216x32xf32>
    %44 = vector.extract_strided_slice %21 {offsets = [24, 0], sizes = [216, 64], strides = [1, 1]} : vector<528x64xf32> to vector<216x64xf32>
    %45 = arith.truncf %44 : vector<216x64xf32> to vector<216x64xbf16>
    %cst_31 = arith.constant dense<0.000000e+00> : vector<216x32xf32>
    %46 = tpu.matmul %45, %26, %cst_31 {dimension_numbers = #tpu.dot_dimension_numbers<[1], [0], [0], [1], [0, 0, 1, 1], [], []>} : vector<216x64xbf16>, vector<64x32xbf16>, vector<216x32xf32> -> vector<216x32xf32>
    %47 = arith.addf %43, %46 : vector<216x32xf32>
    %48 = vector.extract_strided_slice %21 {offsets = [25, 0], sizes = [216, 64], strides = [1, 1]} : vector<528x64xf32> to vector<216x64xf32>
    %49 = arith.truncf %48 : vector<216x64xf32> to vector<216x64xbf16>
    %cst_32 = arith.constant dense<0.000000e+00> : vector<216x32xf32>
    %50 = tpu.matmul %49, %28, %cst_32 {dimension_numbers = #tpu.dot_dimension_numbers<[1], [0], [0], [1], [0, 0, 1, 1], [], []>} : vector<216x64xbf16>, vector<64x32xbf16>, vector<216x32xf32> -> vector<216x32xf32>
    %51 = arith.addf %47, %50 : vector<216x32xf32>
    %52 = vector.extract_strided_slice %21 {offsets = [47, 0], sizes = [216, 64], strides = [1, 1]} : vector<528x64xf32> to vector<216x64xf32>
    %53 = arith.truncf %52 : vector<216x64xf32> to vector<216x64xbf16>
    %cst_33 = arith.constant dense<0.000000e+00> : vector<216x32xf32>
    %54 = tpu.matmul %53, %30, %cst_33 {dimension_numbers = #tpu.dot_dimension_numbers<[1], [0], [0], [1], [0, 0, 1, 1], [], []>} : vector<216x64xbf16>, vector<64x32xbf16>, vector<216x32xf32> -> vector<216x32xf32>
    %55 = arith.addf %51, %54 : vector<216x32xf32>
    %56 = vector.extract_strided_slice %21 {offsets = [48, 0], sizes = [216, 64], strides = [1, 1]} : vector<528x64xf32> to vector<216x64xf32>
    %57 = arith.truncf %56 : vector<216x64xf32> to vector<216x64xbf16>
    %cst_34 = arith.constant dense<0.000000e+00> : vector<216x32xf32>
    %58 = tpu.matmul %57, %32, %cst_34 {dimension_numbers = #tpu.dot_dimension_numbers<[1], [0], [0], [1], [0, 0, 1, 1], [], []>} : vector<216x64xbf16>, vector<64x32xbf16>, vector<216x32xf32> -> vector<216x32xf32>
    %59 = arith.addf %55, %58 : vector<216x32xf32>
    %60 = vector.extract_strided_slice %21 {offsets = [49, 0], sizes = [216, 64], strides = [1, 1]} : vector<528x64xf32> to vector<216x64xf32>
    %61 = arith.truncf %60 : vector<216x64xf32> to vector<216x64xbf16>
    %cst_35 = arith.constant dense<0.000000e+00> : vector<216x32xf32>
    %62 = tpu.matmul %61, %34, %cst_35 {dimension_numbers = #tpu.dot_dimension_numbers<[1], [0], [0], [1], [0, 0, 1, 1], [], []>} : vector<216x64xbf16>, vector<64x32xbf16>, vector<216x32xf32> -> vector<216x32xf32>
    %63 = arith.addf %59, %62 : vector<216x32xf32>
    %64 = vector.extract_strided_slice %21 {offsets = [71, 0], sizes = [216, 64], strides = [1, 1]} : vector<528x64xf32> to vector<216x64xf32>
    %65 = arith.truncf %64 : vector<216x64xf32> to vector<216x64xbf16>
    %cst_36 = arith.constant dense<0.000000e+00> : vector<216x32xf32>
    %66 = tpu.matmul %65, %36, %cst_36 {dimension_numbers = #tpu.dot_dimension_numbers<[1], [0], [0], [1], [0, 0, 1, 1], [], []>} : vector<216x64xbf16>, vector<64x32xbf16>, vector<216x32xf32> -> vector<216x32xf32>
    %67 = arith.addf %63, %66 : vector<216x32xf32>
    %68 = vector.extract_strided_slice %21 {offsets = [72, 0], sizes = [216, 64], strides = [1, 1]} : vector<528x64xf32> to vector<216x64xf32>
    %69 = arith.truncf %68 : vector<216x64xf32> to vector<216x64xbf16>
    %cst_37 = arith.constant dense<0.000000e+00> : vector<216x32xf32>
    %70 = tpu.matmul %69, %38, %cst_37 {dimension_numbers = #tpu.dot_dimension_numbers<[1], [0], [0], [1], [0, 0, 1, 1], [], []>} : vector<216x64xbf16>, vector<64x32xbf16>, vector<216x32xf32> -> vector<216x32xf32>
    %71 = arith.addf %67, %70 : vector<216x32xf32>
    %72 = vector.extract_strided_slice %21 {offsets = [73, 0], sizes = [216, 64], strides = [1, 1]} : vector<528x64xf32> to vector<216x64xf32>
    %73 = arith.truncf %72 : vector<216x64xf32> to vector<216x64xbf16>
    %cst_38 = arith.constant dense<0.000000e+00> : vector<216x32xf32>
    %74 = tpu.matmul %73, %40, %cst_38 {dimension_numbers = #tpu.dot_dimension_numbers<[1], [0], [0], [1], [0, 0, 1, 1], [], []>} : vector<216x64xbf16>, vector<64x32xbf16>, vector<216x32xf32> -> vector<216x32xf32>
    %75 = arith.addf %71, %74 : vector<216x32xf32>
    %76 = vector.broadcast %22 : vector<1x32xf32> to vector<216x32xf32>
    %77 = arith.addf %75, %76 : vector<216x32xf32>
    %cst_39 = arith.constant 0.000000e+00 : f32
    %78 = vector.broadcast %cst_39 : f32 to vector<216x32xf32>
    %79 = arith.maximumf %77, %78 : vector<216x32xf32>
    %80 = vector.extract_strided_slice %21 {offsets = [239, 0], sizes = [216, 64], strides = [1, 1]} : vector<528x64xf32> to vector<216x64xf32>
    %81 = arith.truncf %80 : vector<216x64xf32> to vector<216x64xbf16>
    %cst_40 = arith.constant dense<0.000000e+00> : vector<216x32xf32>
    %82 = tpu.matmul %81, %24, %cst_40 {dimension_numbers = #tpu.dot_dimension_numbers<[1], [0], [0], [1], [0, 0, 1, 1], [], []>} : vector<216x64xbf16>, vector<64x32xbf16>, vector<216x32xf32> -> vector<216x32xf32>
    %83 = vector.extract_strided_slice %21 {offsets = [240, 0], sizes = [216, 64], strides = [1, 1]} : vector<528x64xf32> to vector<216x64xf32>
    %84 = arith.truncf %83 : vector<216x64xf32> to vector<216x64xbf16>
    %cst_41 = arith.constant dense<0.000000e+00> : vector<216x32xf32>
    %85 = tpu.matmul %84, %26, %cst_41 {dimension_numbers = #tpu.dot_dimension_numbers<[1], [0], [0], [1], [0, 0, 1, 1], [], []>} : vector<216x64xbf16>, vector<64x32xbf16>, vector<216x32xf32> -> vector<216x32xf32>
    %86 = arith.addf %82, %85 : vector<216x32xf32>
    %87 = vector.extract_strided_slice %21 {offsets = [241, 0], sizes = [216, 64], strides = [1, 1]} : vector<528x64xf32> to vector<216x64xf32>
    %88 = arith.truncf %87 : vector<216x64xf32> to vector<216x64xbf16>
    %cst_42 = arith.constant dense<0.000000e+00> : vector<216x32xf32>
    %89 = tpu.matmul %88, %28, %cst_42 {dimension_numbers = #tpu.dot_dimension_numbers<[1], [0], [0], [1], [0, 0, 1, 1], [], []>} : vector<216x64xbf16>, vector<64x32xbf16>, vector<216x32xf32> -> vector<216x32xf32>
    %90 = arith.addf %86, %89 : vector<216x32xf32>
    %91 = vector.extract_strided_slice %21 {offsets = [263, 0], sizes = [216, 64], strides = [1, 1]} : vector<528x64xf32> to vector<216x64xf32>
    %92 = arith.truncf %91 : vector<216x64xf32> to vector<216x64xbf16>
    %cst_43 = arith.constant dense<0.000000e+00> : vector<216x32xf32>
    %93 = tpu.matmul %92, %30, %cst_43 {dimension_numbers = #tpu.dot_dimension_numbers<[1], [0], [0], [1], [0, 0, 1, 1], [], []>} : vector<216x64xbf16>, vector<64x32xbf16>, vector<216x32xf32> -> vector<216x32xf32>
    %94 = arith.addf %90, %93 : vector<216x32xf32>
    %95 = vector.extract_strided_slice %21 {offsets = [264, 0], sizes = [216, 64], strides = [1, 1]} : vector<528x64xf32> to vector<216x64xf32>
    %96 = arith.truncf %95 : vector<216x64xf32> to vector<216x64xbf16>
    %cst_44 = arith.constant dense<0.000000e+00> : vector<216x32xf32>
    %97 = tpu.matmul %96, %32, %cst_44 {dimension_numbers = #tpu.dot_dimension_numbers<[1], [0], [0], [1], [0, 0, 1, 1], [], []>} : vector<216x64xbf16>, vector<64x32xbf16>, vector<216x32xf32> -> vector<216x32xf32>
    %98 = arith.addf %94, %97 : vector<216x32xf32>
    %99 = vector.extract_strided_slice %21 {offsets = [265, 0], sizes = [216, 64], strides = [1, 1]} : vector<528x64xf32> to vector<216x64xf32>
    %100 = arith.truncf %99 : vector<216x64xf32> to vector<216x64xbf16>
    %cst_45 = arith.constant dense<0.000000e+00> : vector<216x32xf32>
    %101 = tpu.matmul %100, %34, %cst_45 {dimension_numbers = #tpu.dot_dimension_numbers<[1], [0], [0], [1], [0, 0, 1, 1], [], []>} : vector<216x64xbf16>, vector<64x32xbf16>, vector<216x32xf32> -> vector<216x32xf32>
    %102 = arith.addf %98, %101 : vector<216x32xf32>
    %103 = vector.extract_strided_slice %21 {offsets = [287, 0], sizes = [216, 64], strides = [1, 1]} : vector<528x64xf32> to vector<216x64xf32>
    %104 = arith.truncf %103 : vector<216x64xf32> to vector<216x64xbf16>
    %cst_46 = arith.constant dense<0.000000e+00> : vector<216x32xf32>
    %105 = tpu.matmul %104, %36, %cst_46 {dimension_numbers = #tpu.dot_dimension_numbers<[1], [0], [0], [1], [0, 0, 1, 1], [], []>} : vector<216x64xbf16>, vector<64x32xbf16>, vector<216x32xf32> -> vector<216x32xf32>
    %106 = arith.addf %102, %105 : vector<216x32xf32>
    %107 = vector.extract_strided_slice %21 {offsets = [288, 0], sizes = [216, 64], strides = [1, 1]} : vector<528x64xf32> to vector<216x64xf32>
    %108 = arith.truncf %107 : vector<216x64xf32> to vector<216x64xbf16>
    %cst_47 = arith.constant dense<0.000000e+00> : vector<216x32xf32>
    %109 = tpu.matmul %108, %38, %cst_47 {dimension_numbers = #tpu.dot_dimension_numbers<[1], [0], [0], [1], [0, 0, 1, 1], [], []>} : vector<216x64xbf16>, vector<64x32xbf16>, vector<216x32xf32> -> vector<216x32xf32>
    %110 = arith.addf %106, %109 : vector<216x32xf32>
    %111 = vector.extract_strided_slice %21 {offsets = [289, 0], sizes = [216, 64], strides = [1, 1]} : vector<528x64xf32> to vector<216x64xf32>
    %112 = arith.truncf %111 : vector<216x64xf32> to vector<216x64xbf16>
    %cst_48 = arith.constant dense<0.000000e+00> : vector<216x32xf32>
    %113 = tpu.matmul %112, %40, %cst_48 {dimension_numbers = #tpu.dot_dimension_numbers<[1], [0], [0], [1], [0, 0, 1, 1], [], []>} : vector<216x64xbf16>, vector<64x32xbf16>, vector<216x32xf32> -> vector<216x32xf32>
    %114 = arith.addf %110, %113 : vector<216x32xf32>
    %115 = vector.broadcast %22 : vector<1x32xf32> to vector<216x32xf32>
    %116 = arith.addf %114, %115 : vector<216x32xf32>
    %cst_49 = arith.constant 0.000000e+00 : f32
    %117 = vector.broadcast %cst_49 : f32 to vector<216x32xf32>
    %118 = arith.maximumf %116, %117 : vector<216x32xf32>
    %119 = tpu.concatenate %79, %118 in 0 : vector<216x32xf32>, vector<216x32xf32> -> vector<432x32xf32>
    %120 = vector.shape_cast %119 : vector<432x32xf32> to vector<18x24x32xf32>
    %121 = vector.extract_strided_slice %120 {offsets = [1, 0, 0], sizes = [16, 24, 32], strides = [1, 1, 1]} : vector<18x24x32xf32> to vector<16x24x32xf32>
    %122 = vector.shape_cast %121 : vector<16x24x32xf32> to vector<8x2x24x32xf32>
    %123 = vector.extract_strided_slice %122 {offsets = [0, 0, 0, 0], sizes = [8, 1, 24, 32], strides = [1, 1, 1, 1]} : vector<8x2x24x32xf32> to vector<8x1x24x32xf32>
    %124 = vector.shape_cast %123 : vector<8x1x24x32xf32> to vector<8x24x32xf32>
    %125 = vector.extract_strided_slice %122 {offsets = [0, 1, 0, 0], sizes = [8, 1, 24, 32], strides = [1, 1, 1, 1]} : vector<8x2x24x32xf32> to vector<8x1x24x32xf32>
    %126 = vector.shape_cast %125 : vector<8x1x24x32xf32> to vector<8x24x32xf32>
    %127 = arith.maximumf %124, %126 : vector<8x24x32xf32>
    %128 = vector.extract_strided_slice %127 {offsets = [0, 1, 0], sizes = [8, 16, 32], strides = [1, 1, 1]} : vector<8x24x32xf32> to vector<8x16x32xf32>
    %129 = vector.extract_strided_slice %127 {offsets = [0, 2, 0], sizes = [8, 16, 32], strides = [1, 1, 1]} : vector<8x24x32xf32> to vector<8x16x32xf32>
    %130 = arith.maximumf %128, %129 : vector<8x16x32xf32>
    %131 = vector.shape_cast %130 : vector<8x16x32xf32> to vector<128x32xf32>
    %c0_50 = arith.constant 0 : index
    %c0_51 = arith.constant 0 : index
    %132 = vector.load %arg6[%c0_50, %c0_51] : memref<224x128xf32, #tpu.memory_space<vmem>>, vector<224x128xf32>
    %cst_52 = arith.constant dense<0.000000e+00> : vector<224x32xf32>
    %133 = tpu.matmul %132, %131, %cst_52 {dimension_numbers = #tpu.dot_dimension_numbers<[1], [0], [0], [1], [0, 0, 1, 1], [], []>} : vector<224x128xf32>, vector<128x32xf32>, vector<224x32xf32> -> vector<224x32xf32>
    %c0_53 = arith.constant 0 : index
    %c0_54 = arith.constant 0 : index
    %134 = vector.load %arg8[%c0_53, %c0_54] : memref<1x16xf32, #tpu.memory_space<vmem>>, vector<1x16xf32>
    %c0_55 = arith.constant 0 : index
    %c0_56 = arith.constant 0 : index
    %c0_57 = arith.constant 0 : index
    %135 = vector.load %arg7[%c0_55, %c0_56, %c0_57] : memref<9x32x16xbf16, #tpu.memory_space<vmem>>, vector<1x32x16xbf16>
    %136 = vector.shape_cast %135 : vector<1x32x16xbf16> to vector<32x16xbf16>
    %c1_58 = arith.constant 1 : index
    %c0_59 = arith.constant 0 : index
    %c0_60 = arith.constant 0 : index
    %137 = vector.load %arg7[%c1_58, %c0_59, %c0_60] : memref<9x32x16xbf16, #tpu.memory_space<vmem>>, vector<1x32x16xbf16>
    %138 = vector.shape_cast %137 : vector<1x32x16xbf16> to vector<32x16xbf16>
    %c2_61 = arith.constant 2 : index
    %c0_62 = arith.constant 0 : index
    %c0_63 = arith.constant 0 : index
    %139 = vector.load %arg7[%c2_61, %c0_62, %c0_63] : memref<9x32x16xbf16, #tpu.memory_space<vmem>>, vector<1x32x16xbf16>
    %140 = vector.shape_cast %139 : vector<1x32x16xbf16> to vector<32x16xbf16>
    %c3_64 = arith.constant 3 : index
    %c0_65 = arith.constant 0 : index
    %c0_66 = arith.constant 0 : index
    %141 = vector.load %arg7[%c3_64, %c0_65, %c0_66] : memref<9x32x16xbf16, #tpu.memory_space<vmem>>, vector<1x32x16xbf16>
    %142 = vector.shape_cast %141 : vector<1x32x16xbf16> to vector<32x16xbf16>
    %c4_67 = arith.constant 4 : index
    %c0_68 = arith.constant 0 : index
    %c0_69 = arith.constant 0 : index
    %143 = vector.load %arg7[%c4_67, %c0_68, %c0_69] : memref<9x32x16xbf16, #tpu.memory_space<vmem>>, vector<1x32x16xbf16>
    %144 = vector.shape_cast %143 : vector<1x32x16xbf16> to vector<32x16xbf16>
    %c5_70 = arith.constant 5 : index
    %c0_71 = arith.constant 0 : index
    %c0_72 = arith.constant 0 : index
    %145 = vector.load %arg7[%c5_70, %c0_71, %c0_72] : memref<9x32x16xbf16, #tpu.memory_space<vmem>>, vector<1x32x16xbf16>
    %146 = vector.shape_cast %145 : vector<1x32x16xbf16> to vector<32x16xbf16>
    %c6_73 = arith.constant 6 : index
    %c0_74 = arith.constant 0 : index
    %c0_75 = arith.constant 0 : index
    %147 = vector.load %arg7[%c6_73, %c0_74, %c0_75] : memref<9x32x16xbf16, #tpu.memory_space<vmem>>, vector<1x32x16xbf16>
    %148 = vector.shape_cast %147 : vector<1x32x16xbf16> to vector<32x16xbf16>
    %c7_76 = arith.constant 7 : index
    %c0_77 = arith.constant 0 : index
    %c0_78 = arith.constant 0 : index
    %149 = vector.load %arg7[%c7_76, %c0_77, %c0_78] : memref<9x32x16xbf16, #tpu.memory_space<vmem>>, vector<1x32x16xbf16>
    %150 = vector.shape_cast %149 : vector<1x32x16xbf16> to vector<32x16xbf16>
    %c8_79 = arith.constant 8 : index
    %c0_80 = arith.constant 0 : index
    %c0_81 = arith.constant 0 : index
    %151 = vector.load %arg7[%c8_79, %c0_80, %c0_81] : memref<9x32x16xbf16, #tpu.memory_space<vmem>>, vector<1x32x16xbf16>
    %152 = vector.shape_cast %151 : vector<1x32x16xbf16> to vector<32x16xbf16>
    %153 = vector.extract_strided_slice %133 {offsets = [15, 0], sizes = [160, 32], strides = [1, 1]} : vector<224x32xf32> to vector<160x32xf32>
    %154 = arith.truncf %153 : vector<160x32xf32> to vector<160x32xbf16>
    %cst_82 = arith.constant dense<0.000000e+00> : vector<160x16xf32>
    %155 = tpu.matmul %154, %136, %cst_82 {dimension_numbers = #tpu.dot_dimension_numbers<[1], [0], [0], [1], [0, 0, 1, 1], [], []>} : vector<160x32xbf16>, vector<32x16xbf16>, vector<160x16xf32> -> vector<160x16xf32>
    %156 = vector.extract_strided_slice %133 {offsets = [16, 0], sizes = [160, 32], strides = [1, 1]} : vector<224x32xf32> to vector<160x32xf32>
    %157 = arith.truncf %156 : vector<160x32xf32> to vector<160x32xbf16>
    %cst_83 = arith.constant dense<0.000000e+00> : vector<160x16xf32>
    %158 = tpu.matmul %157, %138, %cst_83 {dimension_numbers = #tpu.dot_dimension_numbers<[1], [0], [0], [1], [0, 0, 1, 1], [], []>} : vector<160x32xbf16>, vector<32x16xbf16>, vector<160x16xf32> -> vector<160x16xf32>
    %159 = arith.addf %155, %158 : vector<160x16xf32>
    %160 = vector.extract_strided_slice %133 {offsets = [17, 0], sizes = [160, 32], strides = [1, 1]} : vector<224x32xf32> to vector<160x32xf32>
    %161 = arith.truncf %160 : vector<160x32xf32> to vector<160x32xbf16>
    %cst_84 = arith.constant dense<0.000000e+00> : vector<160x16xf32>
    %162 = tpu.matmul %161, %140, %cst_84 {dimension_numbers = #tpu.dot_dimension_numbers<[1], [0], [0], [1], [0, 0, 1, 1], [], []>} : vector<160x32xbf16>, vector<32x16xbf16>, vector<160x16xf32> -> vector<160x16xf32>
    %163 = arith.addf %159, %162 : vector<160x16xf32>
    %164 = vector.extract_strided_slice %133 {offsets = [31, 0], sizes = [160, 32], strides = [1, 1]} : vector<224x32xf32> to vector<160x32xf32>
    %165 = arith.truncf %164 : vector<160x32xf32> to vector<160x32xbf16>
    %cst_85 = arith.constant dense<0.000000e+00> : vector<160x16xf32>
    %166 = tpu.matmul %165, %142, %cst_85 {dimension_numbers = #tpu.dot_dimension_numbers<[1], [0], [0], [1], [0, 0, 1, 1], [], []>} : vector<160x32xbf16>, vector<32x16xbf16>, vector<160x16xf32> -> vector<160x16xf32>
    %167 = arith.addf %163, %166 : vector<160x16xf32>
    %168 = vector.extract_strided_slice %133 {offsets = [32, 0], sizes = [160, 32], strides = [1, 1]} : vector<224x32xf32> to vector<160x32xf32>
    %169 = arith.truncf %168 : vector<160x32xf32> to vector<160x32xbf16>
    %cst_86 = arith.constant dense<0.000000e+00> : vector<160x16xf32>
    %170 = tpu.matmul %169, %144, %cst_86 {dimension_numbers = #tpu.dot_dimension_numbers<[1], [0], [0], [1], [0, 0, 1, 1], [], []>} : vector<160x32xbf16>, vector<32x16xbf16>, vector<160x16xf32> -> vector<160x16xf32>
    %171 = arith.addf %167, %170 : vector<160x16xf32>
    %172 = vector.extract_strided_slice %133 {offsets = [33, 0], sizes = [160, 32], strides = [1, 1]} : vector<224x32xf32> to vector<160x32xf32>
    %173 = arith.truncf %172 : vector<160x32xf32> to vector<160x32xbf16>
    %cst_87 = arith.constant dense<0.000000e+00> : vector<160x16xf32>
    %174 = tpu.matmul %173, %146, %cst_87 {dimension_numbers = #tpu.dot_dimension_numbers<[1], [0], [0], [1], [0, 0, 1, 1], [], []>} : vector<160x32xbf16>, vector<32x16xbf16>, vector<160x16xf32> -> vector<160x16xf32>
    %175 = arith.addf %171, %174 : vector<160x16xf32>
    %176 = vector.extract_strided_slice %133 {offsets = [47, 0], sizes = [160, 32], strides = [1, 1]} : vector<224x32xf32> to vector<160x32xf32>
    %177 = arith.truncf %176 : vector<160x32xf32> to vector<160x32xbf16>
    %cst_88 = arith.constant dense<0.000000e+00> : vector<160x16xf32>
    %178 = tpu.matmul %177, %148, %cst_88 {dimension_numbers = #tpu.dot_dimension_numbers<[1], [0], [0], [1], [0, 0, 1, 1], [], []>} : vector<160x32xbf16>, vector<32x16xbf16>, vector<160x16xf32> -> vector<160x16xf32>
    %179 = arith.addf %175, %178 : vector<160x16xf32>
    %180 = vector.extract_strided_slice %133 {offsets = [48, 0], sizes = [160, 32], strides = [1, 1]} : vector<224x32xf32> to vector<160x32xf32>
    %181 = arith.truncf %180 : vector<160x32xf32> to vector<160x32xbf16>
    %cst_89 = arith.constant dense<0.000000e+00> : vector<160x16xf32>
    %182 = tpu.matmul %181, %150, %cst_89 {dimension_numbers = #tpu.dot_dimension_numbers<[1], [0], [0], [1], [0, 0, 1, 1], [], []>} : vector<160x32xbf16>, vector<32x16xbf16>, vector<160x16xf32> -> vector<160x16xf32>
    %183 = arith.addf %179, %182 : vector<160x16xf32>
    %184 = vector.extract_strided_slice %133 {offsets = [49, 0], sizes = [160, 32], strides = [1, 1]} : vector<224x32xf32> to vector<160x32xf32>
    %185 = arith.truncf %184 : vector<160x32xf32> to vector<160x32xbf16>
    %cst_90 = arith.constant dense<0.000000e+00> : vector<160x16xf32>
    %186 = tpu.matmul %185, %152, %cst_90 {dimension_numbers = #tpu.dot_dimension_numbers<[1], [0], [0], [1], [0, 0, 1, 1], [], []>} : vector<160x32xbf16>, vector<32x16xbf16>, vector<160x16xf32> -> vector<160x16xf32>
    %187 = arith.addf %183, %186 : vector<160x16xf32>
    %188 = vector.broadcast %134 : vector<1x16xf32> to vector<160x16xf32>
    %189 = arith.addf %187, %188 : vector<160x16xf32>
    %cst_91 = arith.constant 0.000000e+00 : f32
    %190 = vector.broadcast %cst_91 : f32 to vector<160x16xf32>
    %191 = arith.maximumf %189, %190 : vector<160x16xf32>
    %192 = vector.shape_cast %191 : vector<160x16xf32> to vector<10x16x16xf32>
    %193 = vector.extract_strided_slice %192 {offsets = [1, 0, 0], sizes = [8, 16, 16], strides = [1, 1, 1]} : vector<10x16x16xf32> to vector<8x16x16xf32>
    %194 = vector.shape_cast %193 : vector<8x16x16xf32> to vector<4x2x16x16xf32>
    %195 = vector.extract_strided_slice %194 {offsets = [0, 0, 0, 0], sizes = [4, 1, 16, 16], strides = [1, 1, 1, 1]} : vector<4x2x16x16xf32> to vector<4x1x16x16xf32>
    %196 = vector.shape_cast %195 : vector<4x1x16x16xf32> to vector<4x16x16xf32>
    %197 = vector.extract_strided_slice %194 {offsets = [0, 1, 0, 0], sizes = [4, 1, 16, 16], strides = [1, 1, 1, 1]} : vector<4x2x16x16xf32> to vector<4x1x16x16xf32>
    %198 = vector.shape_cast %197 : vector<4x1x16x16xf32> to vector<4x16x16xf32>
    %199 = arith.maximumf %196, %198 : vector<4x16x16xf32>
    %200 = vector.extract_strided_slice %199 {offsets = [0, 1, 0], sizes = [4, 8, 16], strides = [1, 1, 1]} : vector<4x16x16xf32> to vector<4x8x16xf32>
    %201 = vector.extract_strided_slice %199 {offsets = [0, 2, 0], sizes = [4, 8, 16], strides = [1, 1, 1]} : vector<4x16x16xf32> to vector<4x8x16xf32>
    %202 = arith.maximumf %200, %201 : vector<4x8x16xf32>
    %203 = vector.shape_cast %202 : vector<4x8x16xf32> to vector<32x16xf32>
    %c0_92 = arith.constant 0 : index
    %c0_93 = arith.constant 0 : index
    %204 = vector.load %arg9[%c0_92, %c0_93] : memref<80x32xf32, #tpu.memory_space<vmem>>, vector<80x32xf32>
    %cst_94 = arith.constant dense<0.000000e+00> : vector<80x16xf32>
    %205 = tpu.matmul %204, %203, %cst_94 {dimension_numbers = #tpu.dot_dimension_numbers<[1], [0], [0], [1], [0, 0, 1, 1], [], []>} : vector<80x32xf32>, vector<32x16xf32>, vector<80x16xf32> -> vector<80x16xf32>
    %c0_95 = arith.constant 0 : index
    %c0_96 = arith.constant 0 : index
    %206 = vector.load %arg11[%c0_95, %c0_96] : memref<1x16xf32, #tpu.memory_space<vmem>>, vector<1x16xf32>
    %c0_97 = arith.constant 0 : index
    %c0_98 = arith.constant 0 : index
    %c0_99 = arith.constant 0 : index
    %207 = vector.load %arg10[%c0_97, %c0_98, %c0_99] : memref<9x16x16xbf16, #tpu.memory_space<vmem>>, vector<1x16x16xbf16>
    %208 = vector.shape_cast %207 : vector<1x16x16xbf16> to vector<16x16xbf16>
    %c1_100 = arith.constant 1 : index
    %c0_101 = arith.constant 0 : index
    %c0_102 = arith.constant 0 : index
    %209 = vector.load %arg10[%c1_100, %c0_101, %c0_102] : memref<9x16x16xbf16, #tpu.memory_space<vmem>>, vector<1x16x16xbf16>
    %210 = vector.shape_cast %209 : vector<1x16x16xbf16> to vector<16x16xbf16>
    %c2_103 = arith.constant 2 : index
    %c0_104 = arith.constant 0 : index
    %c0_105 = arith.constant 0 : index
    %211 = vector.load %arg10[%c2_103, %c0_104, %c0_105] : memref<9x16x16xbf16, #tpu.memory_space<vmem>>, vector<1x16x16xbf16>
    %212 = vector.shape_cast %211 : vector<1x16x16xbf16> to vector<16x16xbf16>
    %c3_106 = arith.constant 3 : index
    %c0_107 = arith.constant 0 : index
    %c0_108 = arith.constant 0 : index
    %213 = vector.load %arg10[%c3_106, %c0_107, %c0_108] : memref<9x16x16xbf16, #tpu.memory_space<vmem>>, vector<1x16x16xbf16>
    %214 = vector.shape_cast %213 : vector<1x16x16xbf16> to vector<16x16xbf16>
    %c4_109 = arith.constant 4 : index
    %c0_110 = arith.constant 0 : index
    %c0_111 = arith.constant 0 : index
    %215 = vector.load %arg10[%c4_109, %c0_110, %c0_111] : memref<9x16x16xbf16, #tpu.memory_space<vmem>>, vector<1x16x16xbf16>
    %216 = vector.shape_cast %215 : vector<1x16x16xbf16> to vector<16x16xbf16>
    %c5_112 = arith.constant 5 : index
    %c0_113 = arith.constant 0 : index
    %c0_114 = arith.constant 0 : index
    %217 = vector.load %arg10[%c5_112, %c0_113, %c0_114] : memref<9x16x16xbf16, #tpu.memory_space<vmem>>, vector<1x16x16xbf16>
    %218 = vector.shape_cast %217 : vector<1x16x16xbf16> to vector<16x16xbf16>
    %c6_115 = arith.constant 6 : index
    %c0_116 = arith.constant 0 : index
    %c0_117 = arith.constant 0 : index
    %219 = vector.load %arg10[%c6_115, %c0_116, %c0_117] : memref<9x16x16xbf16, #tpu.memory_space<vmem>>, vector<1x16x16xbf16>
    %220 = vector.shape_cast %219 : vector<1x16x16xbf16> to vector<16x16xbf16>
    %c7_118 = arith.constant 7 : index
    %c0_119 = arith.constant 0 : index
    %c0_120 = arith.constant 0 : index
    %221 = vector.load %arg10[%c7_118, %c0_119, %c0_120] : memref<9x16x16xbf16, #tpu.memory_space<vmem>>, vector<1x16x16xbf16>
    %222 = vector.shape_cast %221 : vector<1x16x16xbf16> to vector<16x16xbf16>
    %c8_121 = arith.constant 8 : index
    %c0_122 = arith.constant 0 : index
    %c0_123 = arith.constant 0 : index
    %223 = vector.load %arg10[%c8_121, %c0_122, %c0_123] : memref<9x16x16xbf16, #tpu.memory_space<vmem>>, vector<1x16x16xbf16>
    %224 = vector.shape_cast %223 : vector<1x16x16xbf16> to vector<16x16xbf16>
    %225 = vector.extract_strided_slice %205 {offsets = [7, 0], sizes = [48, 16], strides = [1, 1]} : vector<80x16xf32> to vector<48x16xf32>
    %226 = arith.truncf %225 : vector<48x16xf32> to vector<48x16xbf16>
    %cst_124 = arith.constant dense<0.000000e+00> : vector<48x16xf32>
    %227 = tpu.matmul %226, %208, %cst_124 {dimension_numbers = #tpu.dot_dimension_numbers<[1], [0], [0], [1], [0, 0, 1, 1], [], []>} : vector<48x16xbf16>, vector<16x16xbf16>, vector<48x16xf32> -> vector<48x16xf32>
    %228 = vector.extract_strided_slice %205 {offsets = [8, 0], sizes = [48, 16], strides = [1, 1]} : vector<80x16xf32> to vector<48x16xf32>
    %229 = arith.truncf %228 : vector<48x16xf32> to vector<48x16xbf16>
    %cst_125 = arith.constant dense<0.000000e+00> : vector<48x16xf32>
    %230 = tpu.matmul %229, %210, %cst_125 {dimension_numbers = #tpu.dot_dimension_numbers<[1], [0], [0], [1], [0, 0, 1, 1], [], []>} : vector<48x16xbf16>, vector<16x16xbf16>, vector<48x16xf32> -> vector<48x16xf32>
    %231 = arith.addf %227, %230 : vector<48x16xf32>
    %232 = vector.extract_strided_slice %205 {offsets = [9, 0], sizes = [48, 16], strides = [1, 1]} : vector<80x16xf32> to vector<48x16xf32>
    %233 = arith.truncf %232 : vector<48x16xf32> to vector<48x16xbf16>
    %cst_126 = arith.constant dense<0.000000e+00> : vector<48x16xf32>
    %234 = tpu.matmul %233, %212, %cst_126 {dimension_numbers = #tpu.dot_dimension_numbers<[1], [0], [0], [1], [0, 0, 1, 1], [], []>} : vector<48x16xbf16>, vector<16x16xbf16>, vector<48x16xf32> -> vector<48x16xf32>
    %235 = arith.addf %231, %234 : vector<48x16xf32>
    %236 = vector.extract_strided_slice %205 {offsets = [15, 0], sizes = [48, 16], strides = [1, 1]} : vector<80x16xf32> to vector<48x16xf32>
    %237 = arith.truncf %236 : vector<48x16xf32> to vector<48x16xbf16>
    %cst_127 = arith.constant dense<0.000000e+00> : vector<48x16xf32>
    %238 = tpu.matmul %237, %214, %cst_127 {dimension_numbers = #tpu.dot_dimension_numbers<[1], [0], [0], [1], [0, 0, 1, 1], [], []>} : vector<48x16xbf16>, vector<16x16xbf16>, vector<48x16xf32> -> vector<48x16xf32>
    %239 = arith.addf %235, %238 : vector<48x16xf32>
    %240 = vector.extract_strided_slice %205 {offsets = [16, 0], sizes = [48, 16], strides = [1, 1]} : vector<80x16xf32> to vector<48x16xf32>
    %241 = arith.truncf %240 : vector<48x16xf32> to vector<48x16xbf16>
    %cst_128 = arith.constant dense<0.000000e+00> : vector<48x16xf32>
    %242 = tpu.matmul %241, %216, %cst_128 {dimension_numbers = #tpu.dot_dimension_numbers<[1], [0], [0], [1], [0, 0, 1, 1], [], []>} : vector<48x16xbf16>, vector<16x16xbf16>, vector<48x16xf32> -> vector<48x16xf32>
    %243 = arith.addf %239, %242 : vector<48x16xf32>
    %244 = vector.extract_strided_slice %205 {offsets = [17, 0], sizes = [48, 16], strides = [1, 1]} : vector<80x16xf32> to vector<48x16xf32>
    %245 = arith.truncf %244 : vector<48x16xf32> to vector<48x16xbf16>
    %cst_129 = arith.constant dense<0.000000e+00> : vector<48x16xf32>
    %246 = tpu.matmul %245, %218, %cst_129 {dimension_numbers = #tpu.dot_dimension_numbers<[1], [0], [0], [1], [0, 0, 1, 1], [], []>} : vector<48x16xbf16>, vector<16x16xbf16>, vector<48x16xf32> -> vector<48x16xf32>
    %247 = arith.addf %243, %246 : vector<48x16xf32>
    %248 = vector.extract_strided_slice %205 {offsets = [23, 0], sizes = [48, 16], strides = [1, 1]} : vector<80x16xf32> to vector<48x16xf32>
    %249 = arith.truncf %248 : vector<48x16xf32> to vector<48x16xbf16>
    %cst_130 = arith.constant dense<0.000000e+00> : vector<48x16xf32>
    %250 = tpu.matmul %249, %220, %cst_130 {dimension_numbers = #tpu.dot_dimension_numbers<[1], [0], [0], [1], [0, 0, 1, 1], [], []>} : vector<48x16xbf16>, vector<16x16xbf16>, vector<48x16xf32> -> vector<48x16xf32>
    %251 = arith.addf %247, %250 : vector<48x16xf32>
    %252 = vector.extract_strided_slice %205 {offsets = [24, 0], sizes = [48, 16], strides = [1, 1]} : vector<80x16xf32> to vector<48x16xf32>
    %253 = arith.truncf %252 : vector<48x16xf32> to vector<48x16xbf16>
    %cst_131 = arith.constant dense<0.000000e+00> : vector<48x16xf32>
    %254 = tpu.matmul %253, %222, %cst_131 {dimension_numbers = #tpu.dot_dimension_numbers<[1], [0], [0], [1], [0, 0, 1, 1], [], []>} : vector<48x16xbf16>, vector<16x16xbf16>, vector<48x16xf32> -> vector<48x16xf32>
    %255 = arith.addf %251, %254 : vector<48x16xf32>
    %256 = vector.extract_strided_slice %205 {offsets = [25, 0], sizes = [48, 16], strides = [1, 1]} : vector<80x16xf32> to vector<48x16xf32>
    %257 = arith.truncf %256 : vector<48x16xf32> to vector<48x16xbf16>
    %cst_132 = arith.constant dense<0.000000e+00> : vector<48x16xf32>
    %258 = tpu.matmul %257, %224, %cst_132 {dimension_numbers = #tpu.dot_dimension_numbers<[1], [0], [0], [1], [0, 0, 1, 1], [], []>} : vector<48x16xbf16>, vector<16x16xbf16>, vector<48x16xf32> -> vector<48x16xf32>
    %259 = arith.addf %255, %258 : vector<48x16xf32>
    %260 = vector.broadcast %206 : vector<1x16xf32> to vector<48x16xf32>
    %261 = arith.addf %259, %260 : vector<48x16xf32>
    %cst_133 = arith.constant 0.000000e+00 : f32
    %262 = vector.broadcast %cst_133 : f32 to vector<48x16xf32>
    %263 = arith.maximumf %261, %262 : vector<48x16xf32>
    %264 = vector.extract_strided_slice %205 {offsets = [16, 0], sizes = [48, 16], strides = [1, 1]} : vector<80x16xf32> to vector<48x16xf32>
    %265 = arith.addf %263, %264 : vector<48x16xf32>
    %266 = vector.shape_cast %265 : vector<48x16xf32> to vector<6x8x16xf32>
    %267 = vector.extract_strided_slice %266 {offsets = [1, 0, 0], sizes = [4, 8, 16], strides = [1, 1, 1]} : vector<6x8x16xf32> to vector<4x8x16xf32>
    %268 = vector.shape_cast %267 : vector<4x8x16xf32> to vector<2x2x8x16xf32>
    %269 = vector.extract_strided_slice %268 {offsets = [0, 0, 0, 0], sizes = [2, 1, 8, 16], strides = [1, 1, 1, 1]} : vector<2x2x8x16xf32> to vector<2x1x8x16xf32>
    %270 = vector.shape_cast %269 : vector<2x1x8x16xf32> to vector<2x8x16xf32>
    %271 = vector.extract_strided_slice %268 {offsets = [0, 1, 0, 0], sizes = [2, 1, 8, 16], strides = [1, 1, 1, 1]} : vector<2x2x8x16xf32> to vector<2x1x8x16xf32>
    %272 = vector.shape_cast %271 : vector<2x1x8x16xf32> to vector<2x8x16xf32>
    %273 = arith.maximumf %270, %272 : vector<2x8x16xf32>
    %c0_134 = arith.constant 0 : index
    %c0_135 = arith.constant 0 : index
    %c0_136 = arith.constant 0 : index
    %274 = vector.load %arg12[%c0_134, %c0_135, %c0_136] : memref<4x16x64xf32, #tpu.memory_space<vmem>>, vector<4x16x64xf32>
    %275 = vector.extract_strided_slice %273 {offsets = [0, 0, 0], sizes = [1, 8, 16], strides = [1, 1, 1]} : vector<2x8x16xf32> to vector<1x8x16xf32>
    %276 = vector.shape_cast %275 : vector<1x8x16xf32> to vector<8x16xf32>
    %277 = vector.extract_strided_slice %276 {offsets = [1, 0], sizes = [1, 16], strides = [1, 1]} : vector<8x16xf32> to vector<1x16xf32>
    %278 = vector.extract_strided_slice %276 {offsets = [2, 0], sizes = [1, 16], strides = [1, 1]} : vector<8x16xf32> to vector<1x16xf32>
    %279 = arith.maximumf %277, %278 : vector<1x16xf32>
    %280 = vector.extract_strided_slice %274 {offsets = [0, 0, 0], sizes = [1, 16, 64], strides = [1, 1, 1]} : vector<4x16x64xf32> to vector<1x16x64xf32>
    %281 = vector.shape_cast %280 : vector<1x16x64xf32> to vector<16x64xf32>
    %cst_137 = arith.constant dense<0.000000e+00> : vector<1x64xf32>
    %282 = tpu.matmul %279, %281, %cst_137 {dimension_numbers = #tpu.dot_dimension_numbers<[1], [0], [0], [1], [0, 0, 1, 1], [], []>} : vector<1x16xf32>, vector<16x64xf32>, vector<1x64xf32> -> vector<1x64xf32>
    %283 = vector.extract_strided_slice %276 {offsets = [3, 0], sizes = [1, 16], strides = [1, 1]} : vector<8x16xf32> to vector<1x16xf32>
    %284 = vector.extract_strided_slice %276 {offsets = [4, 0], sizes = [1, 16], strides = [1, 1]} : vector<8x16xf32> to vector<1x16xf32>
    %285 = arith.maximumf %283, %284 : vector<1x16xf32>
    %286 = vector.extract_strided_slice %274 {offsets = [1, 0, 0], sizes = [1, 16, 64], strides = [1, 1, 1]} : vector<4x16x64xf32> to vector<1x16x64xf32>
    %287 = vector.shape_cast %286 : vector<1x16x64xf32> to vector<16x64xf32>
    %cst_138 = arith.constant dense<0.000000e+00> : vector<1x64xf32>
    %288 = tpu.matmul %285, %287, %cst_138 {dimension_numbers = #tpu.dot_dimension_numbers<[1], [0], [0], [1], [0, 0, 1, 1], [], []>} : vector<1x16xf32>, vector<16x64xf32>, vector<1x64xf32> -> vector<1x64xf32>
    %289 = arith.addf %282, %288 : vector<1x64xf32>
    %290 = vector.extract_strided_slice %273 {offsets = [1, 0, 0], sizes = [1, 8, 16], strides = [1, 1, 1]} : vector<2x8x16xf32> to vector<1x8x16xf32>
    %291 = vector.shape_cast %290 : vector<1x8x16xf32> to vector<8x16xf32>
    %292 = vector.extract_strided_slice %291 {offsets = [1, 0], sizes = [1, 16], strides = [1, 1]} : vector<8x16xf32> to vector<1x16xf32>
    %293 = vector.extract_strided_slice %291 {offsets = [2, 0], sizes = [1, 16], strides = [1, 1]} : vector<8x16xf32> to vector<1x16xf32>
    %294 = arith.maximumf %292, %293 : vector<1x16xf32>
    %295 = vector.extract_strided_slice %274 {offsets = [2, 0, 0], sizes = [1, 16, 64], strides = [1, 1, 1]} : vector<4x16x64xf32> to vector<1x16x64xf32>
    %296 = vector.shape_cast %295 : vector<1x16x64xf32> to vector<16x64xf32>
    %cst_139 = arith.constant dense<0.000000e+00> : vector<1x64xf32>
    %297 = tpu.matmul %294, %296, %cst_139 {dimension_numbers = #tpu.dot_dimension_numbers<[1], [0], [0], [1], [0, 0, 1, 1], [], []>} : vector<1x16xf32>, vector<16x64xf32>, vector<1x64xf32> -> vector<1x64xf32>
    %298 = arith.addf %289, %297 : vector<1x64xf32>
    %299 = vector.extract_strided_slice %291 {offsets = [3, 0], sizes = [1, 16], strides = [1, 1]} : vector<8x16xf32> to vector<1x16xf32>
    %300 = vector.extract_strided_slice %291 {offsets = [4, 0], sizes = [1, 16], strides = [1, 1]} : vector<8x16xf32> to vector<1x16xf32>
    %301 = arith.maximumf %299, %300 : vector<1x16xf32>
    %302 = vector.extract_strided_slice %274 {offsets = [3, 0, 0], sizes = [1, 16, 64], strides = [1, 1, 1]} : vector<4x16x64xf32> to vector<1x16x64xf32>
    %303 = vector.shape_cast %302 : vector<1x16x64xf32> to vector<16x64xf32>
    %cst_140 = arith.constant dense<0.000000e+00> : vector<1x64xf32>
    %304 = tpu.matmul %301, %303, %cst_140 {dimension_numbers = #tpu.dot_dimension_numbers<[1], [0], [0], [1], [0, 0, 1, 1], [], []>} : vector<1x16xf32>, vector<16x64xf32>, vector<1x64xf32> -> vector<1x64xf32>
    %305 = arith.addf %298, %304 : vector<1x64xf32>
    %c0_141 = arith.constant 0 : index
    %c0_142 = arith.constant 0 : index
    %306 = vector.load %arg13[%c0_141, %c0_142] : memref<1x64xf32, #tpu.memory_space<vmem>>, vector<1x64xf32>
    %307 = arith.addf %305, %306 : vector<1x64xf32>
    %cst_143 = arith.constant 0.000000e+00 : f32
    %308 = vector.broadcast %cst_143 : f32 to vector<1x64xf32>
    %309 = arith.maximumf %307, %308 : vector<1x64xf32>
    %c0_144 = arith.constant 0 : index
    %c0_145 = arith.constant 0 : index
    %310 = vector.load %arg14[%c0_144, %c0_145] : memref<64x4xf32, #tpu.memory_space<vmem>>, vector<64x4xf32>
    %cst_146 = arith.constant dense<0.000000e+00> : vector<1x4xf32>
    %311 = tpu.matmul %309, %310, %cst_146 {dimension_numbers = #tpu.dot_dimension_numbers<[1], [0], [0], [1], [0, 0, 1, 1], [], []>} : vector<1x64xf32>, vector<64x4xf32>, vector<1x4xf32> -> vector<1x4xf32>
    %c0_147 = arith.constant 0 : index
    %c0_148 = arith.constant 0 : index
    %312 = vector.load %arg15[%c0_147, %c0_148] : memref<1x4xf32, #tpu.memory_space<vmem>>, vector<1x4xf32>
    %313 = arith.addf %311, %312 : vector<1x4xf32>
    %c0_149 = arith.constant 0 : index
    %c0_150 = arith.constant 0 : index
    %314 = vector.load %arg16[%c0_149, %c0_150] : memref<1x4xf32, #tpu.memory_space<vmem>>, vector<1x4xf32>
    tpu.vector_store %arg16[%c0_149, %c0_150], %313 {strides = array<i32>} : memref<1x4xf32, #tpu.memory_space<vmem>>, vector<1x4xf32>,
    return
  }
}

</mosaic_0001>

<llo_original>
// kernel: tile.33
$region0: #{tile.33}
  #allocation0 [shape = 's32[1]{0}', space=sflag, size = 0x4, scoped, tag = 'scoped memory for tile.33']
  %s0 = inlined_call_operand.vmem [shape: f32[32], index: 0, kind: input, shape index: {}]
  %s1 = inlined_call_operand.vmem [shape: f32[2,32], index: 1, kind: output, shape index: {}]
  // Predicated region
  $region2: #{tile.33} parent=0 // pred_check
    _
  $region3: #{tile.33} parent=0 // pred_check_branch
    %3 = sbr.rel (0) target = $region5
  $region4: #{tile.33} parent=0 // pred_region
    _
  $region5: #{tile.33} parent=0 // pred_fallthru
    _
  %v4 = vld [vmem:[%s0] ss:$0 sm:$0xff]
  %5 = vst [vmem:[%s1] sm:$0x3] %v4

// kernel: tile.34
$region0: #{tile.34}
  %s0 = inlined_call_operand.vmem [shape: f32[2,32], index: 0, kind: input, shape index: {}]
  %s1 = inlined_call_operand.vmem [shape: f32[1,64], index: 1, kind: output, shape index: {}]
  $region1: #{tile.34} parent=0
    #allocation0 [shape = 'u8[4096]{0}', space=vmem, size = 0x1000, scoped, tag = 'scoped mem for output reshape']
    #allocation1 [shape = 'u8[4096]{0}', space=vmem, size = 0x1000, scoped, tag = 'scoped mem for input reshape']
    %s3 = sshll.u32 1, 2
    %s4 = ssub.s32 %s3, 1
    %v5 = vld [vmem:[%s0] sm:%s4]
    %6 = vst [vmem:[#allocation1] sm:%s4] %v5
    %v7 = vld [vmem:[#allocation1] sm:$0x1]
    %vm8 = vcmask 261120
    %9 = vst.msk [vmem:[#allocation0] sm:$0x1] %vm8, %v7
    %s10 = scalar_lea.vmem [#allocation1], 1
    %v11 = vld [vmem:[%s10] sm:$0x1]
    %12 = vrot.lane.b32.xlu0 %v11, 32
    %v13 = vpop.permute.xlu0 %12
    %vm14 = vcmask 523520
    %15 = vst.msk [vmem:[#allocation0] sm:$0x1] %vm14, %v13
    %s17 = sshll.u32 1, 1
    %s18 = ssub.s32 %s17, 1
    %v20 = vld [vmem:[#allocation0] sm:%s18]
    %s21 = sshll.u32 1, 1
    %s22 = ssub.s32 %s21, 1
    %23 = vst [vmem:[%s1] sm:%s22] %v20

// kernel: tile.38
$region0: #{tile.38}
  #allocation0 [shape = 's32[1]{0}', space=sflag, size = 0x4, scoped, tag = 'scoped memory for tile.38']
  %s0 = inlined_call_operand.vmem [shape: f32[16], index: 0, kind: input, shape index: {}]
  %s1 = inlined_call_operand.vmem [shape: f32[2,16], index: 1, kind: output, shape index: {}]
  // Predicated region
  $region2: #{tile.38} parent=0 // pred_check
    _
  $region3: #{tile.38} parent=0 // pred_check_branch
    %3 = sbr.rel (0) target = $region5
  $region4: #{tile.38} parent=0 // pred_region
    _
  $region5: #{tile.38} parent=0 // pred_fallthru
    _
  %v4 = vld [vmem:[%s0] ss:$0 sm:$0xff]
  %5 = vst [vmem:[%s1] sm:$0x3] %v4

// kernel: tile.39
$region0: #{tile.39}
  %s0 = inlined_call_operand.vmem [shape: f32[2,16], index: 0, kind: input, shape index: {}]
  %s1 = inlined_call_operand.vmem [shape: f32[1,32], index: 1, kind: output, shape index: {}]
  $region1: #{tile.39} parent=0
    #allocation0 [shape = 'u8[4096]{0}', space=vmem, size = 0x1000, scoped, tag = 'scoped mem for output reshape']
    #allocation1 [shape = 'u8[4096]{0}', space=vmem, size = 0x1000, scoped, tag = 'scoped mem for input reshape']
    %s3 = sshll.u32 1, 2
    %s4 = ssub.s32 %s3, 1
    %v5 = vld [vmem:[%s0] sm:%s4]
    %6 = vst [vmem:[#allocation1] sm:%s4] %v5
    %v7 = vld [vmem:[#allocation1] sm:$0x1]
    %vm8 = vcmask 130048
    %9 = vst.msk [vmem:[#allocation0] sm:$0x1] %vm8, %v7
    %s10 = scalar_lea.vmem [#allocation1], 1
    %v11 = vld [vmem:[%s10] sm:$0x1]
    %12 = vrot.lane.b32.xlu0 %v11, 16
    %v13 = vpop.permute.xlu0 %12
    %vm14 = vcmask 261248
    %15 = vst.msk [vmem:[#allocation0] sm:$0x1] %vm14, %v13
    %s17 = sshll.u32 1, 1
    %s18 = ssub.s32 %s17, 1
    %v20 = vld [vmem:[#allocation0] sm:%s18]
    %s21 = sshll.u32 1, 1
    %s22 = ssub.s32 %s21, 1
    %23 = vst [vmem:[%s1] sm:%s22] %v20

// kernel: tile.43
$region0: #{tile.43}
  #allocation0 [shape = 's32[1]{0}', space=sflag, size = 0x4, scoped, tag = 'scoped memory for tile.43']
  %s0 = inlined_call_operand.vmem [shape: f32[8], index: 0, kind: input, shape index: {}]
  %s1 = inlined_call_operand.vmem [shape: f32[2,8], index: 1, kind: output, shape index: {}]
  // Predicated region
  $region2: #{tile.43} parent=0 // pred_check
    _
  $region3: #{tile.43} parent=0 // pred_check_branch
    %3 = sbr.rel (0) target = $region5
  $region4: #{tile.43} parent=0 // pred_region
    _
  $region5: #{tile.43} parent=0 // pred_fallthru
    _
  %v4 = vld [vmem:[%s0] ss:$0 sm:$0xff]
  %5 = vst [vmem:[%s1] sm:$0x3] %v4

// kernel: tile.44
$region0: #{tile.44}
  %s0 = inlined_call_operand.vmem [shape: f32[2,8], index: 0, kind: input, shape index: {}]
  %s1 = inlined_call_operand.vmem [shape: f32[1,16], index: 1, kind: output, shape index: {}]
  $region1: #{tile.44} parent=0
    #allocation0 [shape = 'u8[4096]{0}', space=vmem, size = 0x1000, scoped, tag = 'scoped mem for output reshape']
    #allocation1 [shape = 'u8[4096]{0}', space=vmem, size = 0x1000, scoped, tag = 'scoped mem for input reshape']
    %s3 = sshll.u32 1, 2
    %s4 = ssub.s32 %s3, 1
    %v5 = vld [vmem:[%s0] sm:%s4]
    %6 = vst [vmem:[#allocation1] sm:%s4] %v5
    %v7 = vld [vmem:[#allocation1] sm:$0x1]
    %vm8 = vcmask 64512
    %9 = vst.msk [vmem:[#allocation0] sm:$0x1] %vm8, %v7
    %s10 = scalar_lea.vmem [#allocation1], 1
    %v11 = vld [vmem:[%s10] sm:$0x1]
    %12 = vrot.lane.b32.xlu0 %v11, 8
    %v13 = vpop.permute.xlu0 %12
    %vm14 = vcmask 130112
    %15 = vst.msk [vmem:[#allocation0] sm:$0x1] %vm14, %v13
    %s17 = sshll.u32 1, 1
    %s18 = ssub.s32 %s17, 1
    %v20 = vld [vmem:[#allocation0] sm:%s18]
    %s21 = sshll.u32 1, 1
    %s22 = ssub.s32 %s21, 1
    %23 = vst [vmem:[%s1] sm:%s22] %v20

// kernel: tile.58
$region0: #{tile.58}
  #allocation0 [shape = 's32[1]{0}', space=sflag, size = 0x4, scoped, tag = 'scoped memory for tile.58']
  %s0 = inlined_call_operand.vmem [shape: f32[2], index: 0, kind: input, shape index: {}]
  %s1 = inlined_call_operand.vmem [shape: f32[2,2], index: 1, kind: output, shape index: {}]
  // Predicated region
  $region2: #{tile.58} parent=0 // pred_check
    _
  $region3: #{tile.58} parent=0 // pred_check_branch
    %3 = sbr.rel (0) target = $region5
  $region4: #{tile.58} parent=0 // pred_region
    _
  $region5: #{tile.58} parent=0 // pred_fallthru
    _
  %v4 = vld [vmem:[%s0] ss:$0 sm:$0xff]
  %5 = vst [vmem:[%s1] sm:$0x3] %v4

// kernel: tile.59
$region0: #{tile.59}
  %s0 = inlined_call_operand.vmem [shape: f32[2,2], index: 0, kind: input, shape index: {}]
  %s1 = inlined_call_operand.vmem [shape: f32[1,4], index: 1, kind: output, shape index: {}]
  $region1: #{tile.59} parent=0
    #allocation0 [shape = 'u8[4096]{0}', space=vmem, size = 0x1000, scoped, tag = 'scoped mem for output reshape']
    #allocation1 [shape = 'u8[4096]{0}', space=vmem, size = 0x1000, scoped, tag = 'scoped mem for input reshape']
    %s3 = sshll.u32 1, 2
    %s4 = ssub.s32 %s3, 1
    %v5 = vld [vmem:[%s0] sm:%s4]
    %6 = vst [vmem:[#allocation1] sm:%s4] %v5
    %v7 = vld [vmem:[#allocation1] sm:$0x1]
    %vm8 = vcmask 15360
    %9 = vst.msk [vmem:[#allocation0] sm:$0x1] %vm8, %v7
    %s10 = scalar_lea.vmem [#allocation1], 1
    %v11 = vld [vmem:[%s10] sm:$0x1]
    %12 = vrot.lane.b32.xlu0 %v11, 2
    %v13 = vpop.permute.xlu0 %12
    %vm14 = vcmask 31760
    %15 = vst.msk [vmem:[#allocation0] sm:$0x1] %vm14, %v13
    %s17 = sshll.u32 1, 1
    %s18 = ssub.s32 %s17, 1
    %v20 = vld [vmem:[#allocation0] sm:%s18]
    %s21 = sshll.u32 1, 1
    %s22 = ssub.s32 %s21, 1
    %23 = vst [vmem:[%s1] sm:%s22] %v20

// kernel: net_depth_forward.1
$region0: #{net_depth_forward.1}
  #allocation0 [shape = 'u32[]', space=smem, size = 0x4, offset = 0x4, fixed_abs, tag = 'smem constant byte address 0x4 - core index']
  #allocation1 [shape = 'u32[144,128]{1,0:T(1,128)}', space=vmem, size = 0x12000, scoped, tag = 'internal scratch']
  %s0 = inlined_call_operand.vmem [shape: bf16[1360,64], index: 0, kind: input, shape index: {}]
  %s1 = inlined_call_operand.vmem [shape: bf16[64,64], index: 1, kind: input, shape index: {}]
  %s2 = inlined_call_operand.vmem [shape: f32[1,64], index: 2, kind: input, shape index: {}]
  %s3 = inlined_call_operand.vmem [shape: f32[528,512], index: 3, kind: input, shape index: {}]
  %s4 = inlined_call_operand.vmem [shape: bf16[9,64,32], index: 4, kind: input, shape index: {}]
  %s5 = inlined_call_operand.vmem [shape: f32[1,32], index: 5, kind: input, shape index: {}]
  %s6 = inlined_call_operand.vmem [shape: f32[224,128], index: 6, kind: input, shape index: {}]
  %s7 = inlined_call_operand.vmem [shape: bf16[9,32,16], index: 7, kind: input, shape index: {}]
  %s8 = inlined_call_operand.vmem [shape: f32[1,16], index: 8, kind: input, shape index: {}]
  %s9 = inlined_call_operand.vmem [shape: f32[80,32], index: 9, kind: input, shape index: {}]
  %s10 = inlined_call_operand.vmem [shape: bf16[9,16,16], index: 10, kind: input, shape index: {}]
  %s11 = inlined_call_operand.vmem [shape: f32[1,16], index: 11, kind: input, shape index: {}]
  %s12 = inlined_call_operand.vmem [shape: f32[4,16,64], index: 12, kind: input, shape index: {}]
  %s13 = inlined_call_operand.vmem [shape: f32[1,64], index: 13, kind: input, shape index: {}]
  %s14 = inlined_call_operand.vmem [shape: f32[64,4], index: 14, kind: input, shape index: {}]
  %s15 = inlined_call_operand.vmem [shape: f32[1,4], index: 15, kind: input, shape index: {}]
  %s16 = inlined_call_operand.vmem [shape: f32[1,4], index: 16, kind: output, shape index: {}]
  %s17 = sld [smem:[#allocation0]]
  $region74: #{net_depth_forward.1} parent=0
    _
  %s19 = ssub.s32 1, %s17
  %s20 = scalar_select 0, %s19, %s17
  // Predicated region
  $region2: #{net_depth_forward.1} parent=0 // pred_check
    _
  $region3: #{net_depth_forward.1} parent=0 // pred_check_branch
    %22 = sbr.rel (0) target = $region5
  $region4: #{net_depth_forward.1} parent=0 // pred_region
    _
  $region5: #{net_depth_forward.1} parent=0 // pred_fallthru
    _
  // Predicated region
  $region6: #{net_depth_forward.1} parent=0 // pred_check
    _
  $region7: #{net_depth_forward.1} parent=0 // pred_check_branch
    %24 = sbr.rel (0) target = $region9
  $region8: #{net_depth_forward.1} parent=0 // pred_region
    _
  $region9: #{net_depth_forward.1} parent=0 // pred_fallthru
    _
  // Predicated region
  $region10: #{net_depth_forward.1} parent=0 // pred_check
    _
  $region11: #{net_depth_forward.1} parent=0 // pred_check_branch
    %26 = sbr.rel (0) target = $region13
  $region12: #{net_depth_forward.1} parent=0 // pred_region
    _
  $region13: #{net_depth_forward.1} parent=0 // pred_fallthru
    _
  // Predicated region
  $region14: #{net_depth_forward.1} parent=0 // pred_check
    _
  $region15: #{net_depth_forward.1} parent=0 // pred_check_branch
    %28 = sbr.rel (0) target = $region17
  $region16: #{net_depth_forward.1} parent=0 // pred_region
    _
  $region17: #{net_depth_forward.1} parent=0 // pred_fallthru
    _
  // Predicated region
  $region18: #{net_depth_forward.1} parent=0 // pred_check
    _
  $region19: #{net_depth_forward.1} parent=0 // pred_check_branch
    %30 = sbr.rel (0) target = $region21
  $region20: #{net_depth_forward.1} parent=0 // pred_region
    _
  $region21: #{net_depth_forward.1} parent=0 // pred_fallthru
    _
  // Predicated region
  $region22: #{net_depth_forward.1} parent=0 // pred_check
    _
  $region23: #{net_depth_forward.1} parent=0 // pred_check_branch
    %32 = sbr.rel (0) target = $region25
  $region24: #{net_depth_forward.1} parent=0 // pred_region
    _
  $region25: #{net_depth_forward.1} parent=0 // pred_fallthru
    _
  // Predicated region
  $region26: #{net_depth_forward.1} parent=0 // pred_check
    _
  $region27: #{net_depth_forward.1} parent=0 // pred_check_branch
    %34 = sbr.rel (0) target = $region29
  $region28: #{net_depth_forward.1} parent=0 // pred_region
    _
  $region29: #{net_depth_forward.1} parent=0 // pred_fallthru
    _
  // Predicated region
  $region30: #{net_depth_forward.1} parent=0 // pred_check
    _
  $region31: #{net_depth_forward.1} parent=0 // pred_check_branch
    %36 = sbr.rel (0) target = $region33
  $region32: #{net_depth_forward.1} parent=0 // pred_region
    _
  $region33: #{net_depth_forward.1} parent=0 // pred_fallthru
    _
  // Predicated region
  $region34: #{net_depth_forward.1} parent=0 // pred_check
    _
  $region35: #{net_depth_forward.1} parent=0 // pred_check_branch
    %38 = sbr.rel (0) target = $region37
  $region36: #{net_depth_forward.1} parent=0 // pred_region
    _
  $region37: #{net_depth_forward.1} parent=0 // pred_fallthru
    _
  // Predicated region
  $region38: #{net_depth_forward.1} parent=0 // pred_check
    _
  $region39: #{net_depth_forward.1} parent=0 // pred_check_branch
    %40 = sbr.rel (0) target = $region41
  $region40: #{net_depth_forward.1} parent=0 // pred_region
    _
  $region41: #{net_depth_forward.1} parent=0 // pred_fallthru
    _
  // Predicated region
  $region42: #{net_depth_forward.1} parent=0 // pred_check
    _
  $region43: #{net_depth_forward.1} parent=0 // pred_check_branch
    %42 = sbr.rel (0) target = $region45
  $region44: #{net_depth_forward.1} parent=0 // pred_region
    _
  $region45: #{net_depth_forward.1} parent=0 // pred_fallthru
    _
  // Predicated region
  $region46: #{net_depth_forward.1} parent=0 // pred_check
    _
  $region47: #{net_depth_forward.1} parent=0 // pred_check_branch
    %44 = sbr.rel (0) target = $region49
  $region48: #{net_depth_forward.1} parent=0 // pred_region
    _
  $region49: #{net_depth_forward.1} parent=0 // pred_fallthru
    _
  // Predicated region
  $region50: #{net_depth_forward.1} parent=0 // pred_check
    _
  $region51: #{net_depth_forward.1} parent=0 // pred_check_branch
    %46 = sbr.rel (0) target = $region53
  $region52: #{net_depth_forward.1} parent=0 // pred_region
    _
  $region53: #{net_depth_forward.1} parent=0 // pred_fallthru
    _
  // Predicated region
  $region54: #{net_depth_forward.1} parent=0 // pred_check
    _
  $region55: #{net_depth_forward.1} parent=0 // pred_check_branch
    %48 = sbr.rel (0) target = $region57
  $region56: #{net_depth_forward.1} parent=0 // pred_region
    _
  $region57: #{net_depth_forward.1} parent=0 // pred_fallthru
    _
  // Predicated region
  $region58: #{net_depth_forward.1} parent=0 // pred_check
    _
  $region59: #{net_depth_forward.1} parent=0 // pred_check_branch
    %50 = sbr.rel (0) target = $region61
  $region60: #{net_depth_forward.1} parent=0 // pred_region
    _
  $region61: #{net_depth_forward.1} parent=0 // pred_fallthru
    _
  // Predicated region
  $region62: #{net_depth_forward.1} parent=0 // pred_check
    _
  $region63: #{net_depth_forward.1} parent=0 // pred_check_branch
    %52 = sbr.rel (0) target = $region65
  $region64: #{net_depth_forward.1} parent=0 // pred_region
    _
  $region65: #{net_depth_forward.1} parent=0 // pred_fallthru
    _
  %v54 = vld [vmem:[%s0] sm:$0xf]
  %v55 = vld [vmem:[%s0 + $0x4] sm:$0xf]
  %v56 = vld [vmem:[%s0 + $0x8] sm:$0xf]
  %v57 = vld [vmem:[%s0 + $0xc] sm:$0xf]
  %v58 = vld [vmem:[%s0 + $0x10] sm:$0xf]
  %v59 = vld [vmem:[%s0 + $0x14] sm:$0xf]
  %v60 = vld [vmem:[%s0 + $0x18] sm:$0xf]
  %v61 = vld [vmem:[%s0 + $0x1c] sm:$0xf]
  %v62 = vld [vmem:[%s0 + $0x20] sm:$0xf]
  %v63 = vld [vmem:[%s0 + $0x24] sm:$0xf]
  %v64 = vld [vmem:[%s0 + $0x28] sm:$0xf]
  %v65 = vld [vmem:[%s0 + $0x2c] sm:$0xf]
  %v66 = vld [vmem:[%s0 + $0x30] sm:$0xf]
  %v67 = vld [vmem:[%s0 + $0x34] sm:$0xf]
  %v68 = vld [vmem:[%s0 + $0x38] sm:$0xf]
  %v69 = vld [vmem:[%s0 + $0x3c] sm:$0xf]
  %v70 = vld [vmem:[%s0 + $0x40] sm:$0xf]
  %v71 = vld [vmem:[%s0 + $0x44] sm:$0xf]
  %v72 = vld [vmem:[%s0 + $0x48] sm:$0xf]
  %v73 = vld [vmem:[%s0 + $0x4c] sm:$0xf]
  %v74 = vld [vmem:[%s0 + $0x50] sm:$0xf]
  %v75 = vld [vmem:[%s0 + $0x54] sm:$0xf]
  %v76 = vld [vmem:[%s0 + $0x58] sm:$0xf]
  %v77 = vld [vmem:[%s0 + $0x5c] sm:$0xf]
  %v78 = vld [vmem:[%s0 + $0x60] sm:$0xf]
  %v79 = vld [vmem:[%s0 + $0x64] sm:$0xf]
  %v80 = vld [vmem:[%s0 + $0x68] sm:$0xf]
  %v81 = vld [vmem:[%s0 + $0x6c] sm:$0xf]
  %v82 = vld [vmem:[%s0 + $0x70] sm:$0xf]
  %v83 = vld [vmem:[%s0 + $0x74] sm:$0xf]
  %v84 = vld [vmem:[%s0 + $0x78] sm:$0xf]
  %v85 = vld [vmem:[%s0 + $0x7c] sm:$0xf]
  %v86 = vld [vmem:[%s0 + $0x80] sm:$0xf]
  %v87 = vld [vmem:[%s0 + $0x84] sm:$0xf]
  %v88 = vld [vmem:[%s0 + $0x88] sm:$0xf]
  %v89 = vld [vmem:[%s0 + $0x8c] sm:$0xf]
  %v90 = vld [vmem:[%s0 + $0x90] sm:$0xf]
  %v91 = vld [vmem:[%s0 + $0x94] sm:$0xf]
  %v92 = vld [vmem:[%s0 + $0x98] sm:$0xf]
  %v93 = vld [vmem:[%s0 + $0x9c] sm:$0xf]
  %v94 = vld [vmem:[%s0 + $0xa0] sm:$0xf]
  %v95 = vld [vmem:[%s0 + $0xa4] sm:$0xf]
  %v96 = vld [vmem:[%s0 + $0xa8] sm:$0xf]
  %v97 = vld [vmem:[%s0 + $0xac] sm:$0xf]
  %v98 = vld [vmem:[%s0 + $0xb0] sm:$0xf]
  %v99 = vld [vmem:[%s0 + $0xb4] sm:$0xf]
  %v100 = vld [vmem:[%s0 + $0xb8] sm:$0xf]
  %v101 = vld [vmem:[%s0 + $0xbc] sm:$0xf]
  %v102 = vld [vmem:[%s0 + $0xc0] sm:$0xf]
  %v103 = vld [vmem:[%s0 + $0xc4] sm:$0xf]
  %v104 = vld [vmem:[%s0 + $0xc8] sm:$0xf]
  %v105 = vld [vmem:[%s0 + $0xcc] sm:$0xf]
  %v106 = vld [vmem:[%s0 + $0xd0] sm:$0xf]
  %v107 = vld [vmem:[%s0 + $0xd4] sm:$0xf]
  %v108 = vld [vmem:[%s0 + $0xd8] sm:$0xf]
  %v109 = vld [vmem:[%s0 + $0xdc] sm:$0xf]
  %v110 = vld [vmem:[%s0 + $0xe0] sm:$0xf]
  %v111 = vld [vmem:[%s0 + $0xe4] sm:$0xf]
  %v112 = vld [vmem:[%s0 + $0xe8] sm:$0xf]
  %v113 = vld [vmem:[%s0 + $0xec] sm:$0xf]
  %v114 = vld [vmem:[%s0 + $0xf0] sm:$0xf]
  %v115 = vld [vmem:[%s0 + $0xf4] sm:$0xf]
  %v116 = vld [vmem:[%s0 + $0xf8] sm:$0xf]
  %v117 = vld [vmem:[%s0 + $0xfc] sm:$0xf]
  %v118 = vld [vmem:[%s0 + $0x100] sm:$0xf]
  %v119 = vld [vmem:[%s0 + $0x104] sm:$0xf]
  %v120 = vld [vmem:[%s0 + $0x108] sm:$0xf]
  %v121 = vld [vmem:[%s0 + $0x10c] sm:$0xf]
  %v122 = vld [vmem:[%s0 + $0x110] sm:$0xf]
  %v123 = vld [vmem:[%s0 + $0x114] sm:$0xf]
  %v124 = vld [vmem:[%s0 + $0x118] sm:$0xf]
  %v125 = vld [vmem:[%s0 + $0x11c] sm:$0xf]
  %v126 = vld [vmem:[%s0 + $0x120] sm:$0xf]
  %v127 = vld [vmem:[%s0 + $0x124] sm:$0xf]
  %v128 = vld [vmem:[%s0 + $0x128] sm:$0xf]
  %v129 = vld [vmem:[%s0 + $0x12c] sm:$0xf]
  %v130 = vld [vmem:[%s0 + $0x130] sm:$0xf]
  %v131 = vld [vmem:[%s0 + $0x134] sm:$0xf]
  %v132 = vld [vmem:[%s0 + $0x138] sm:$0xf]
  %v133 = vld [vmem:[%s0 + $0x13c] sm:$0xf]
  %v134 = vld [vmem:[%s0 + $0x140] sm:$0xf]
  %v135 = vld [vmem:[%s0 + $0x144] sm:$0xf]
  %v136 = vld [vmem:[%s0 + $0x148] sm:$0xf]
  %v137 = vld [vmem:[%s0 + $0x14c] sm:$0xf]
  %v138 = vld [vmem:[%s0 + $0x150] sm:$0xf]
  %v139 = vld [vmem:[%s0 + $0x154] sm:$0xf]
  %v140 = vld [vmem:[%s0 + $0x158] sm:$0xf]
  %v141 = vld [vmem:[%s0 + $0x15c] sm:$0xf]
  %v142 = vld [vmem:[%s0 + $0x160] sm:$0xf]
  %v143 = vld [vmem:[%s0 + $0x164] sm:$0xf]
  %v144 = vld [vmem:[%s0 + $0x168] sm:$0xf]
  %v145 = vld [vmem:[%s0 + $0x16c] sm:$0xf]
  %v146 = vld [vmem:[%s0 + $0x170] sm:$0xf]
  %v147 = vld [vmem:[%s0 + $0x174] sm:$0xf]
  %v148 = vld [vmem:[%s0 + $0x178] sm:$0xf]
  %v149 = vld [vmem:[%s0 + $0x17c] sm:$0xf]
  %v150 = vld [vmem:[%s0 + $0x180] sm:$0xf]
  %v151 = vld [vmem:[%s0 + $0x184] sm:$0xf]
  %v152 = vld [vmem:[%s0 + $0x188] sm:$0xf]
  %v153 = vld [vmem:[%s0 + $0x18c] sm:$0xf]
  %v154 = vld [vmem:[%s0 + $0x190] sm:$0xf]
  %v155 = vld [vmem:[%s0 + $0x194] sm:$0xf]
  %v156 = vld [vmem:[%s0 + $0x198] sm:$0xf]
  %v157 = vld [vmem:[%s0 + $0x19c] sm:$0xf]
  %v158 = vld [vmem:[%s0 + $0x1a0] sm:$0xf]
  %v159 = vld [vmem:[%s0 + $0x1a4] sm:$0xf]
  %v160 = vld [vmem:[%s0 + $0x1a8] sm:$0xf]
  %v161 = vld [vmem:[%s0 + $0x1ac] sm:$0xf]
  %v162 = vld [vmem:[%s0 + $0x1b0] sm:$0xf]
  %v163 = vld [vmem:[%s0 + $0x1b4] sm:$0xf]
  %v164 = vld [vmem:[%s0 + $0x1b8] sm:$0xf]
  %v165 = vld [vmem:[%s0 + $0x1bc] sm:$0xf]
  %v166 = vld [vmem:[%s0 + $0x1c0] sm:$0xf]
  %v167 = vld [vmem:[%s0 + $0x1c4] sm:$0xf]
  %v168 = vld [vmem:[%s0 + $0x1c8] sm:$0xf]
  %v169 = vld [vmem:[%s0 + $0x1cc] sm:$0xf]
  %v170 = vld [vmem:[%s0 + $0x1d0] sm:$0xf]
  %v171 = vld [vmem:[%s0 + $0x1d4] sm:$0xf]
  %v172 = vld [vmem:[%s0 + $0x1d8] sm:$0xf]
  %v173 = vld [vmem:[%s0 + $0x1dc] sm:$0xf]
  %v174 = vld [vmem:[%s0 + $0x1e0] sm:$0xf]
  %v175 = vld [vmem:[%s0 + $0x1e4] sm:$0xf]
  %v176 = vld [vmem:[%s0 + $0x1e8] sm:$0xf]
  %v177 = vld [vmem:[%s0 + $0x1ec] sm:$0xf]
  %v178 = vld [vmem:[%s0 + $0x1f0] sm:$0xf]
  %v179 = vld [vmem:[%s0 + $0x1f4] sm:$0xf]
  %v180 = vld [vmem:[%s0 + $0x1f8] sm:$0xf]
  %v181 = vld [vmem:[%s0 + $0x1fc] sm:$0xf]
  %v182 = vld [vmem:[%s0 + $0x200] sm:$0xf]
  %v183 = vld [vmem:[%s0 + $0x204] sm:$0xf]
  %v184 = vld [vmem:[%s0 + $0x208] sm:$0xf]
  %v185 = vld [vmem:[%s0 + $0x20c] sm:$0xf]
  %v186 = vld [vmem:[%s0 + $0x210] sm:$0xf]
  %v187 = vld [vmem:[%s0 + $0x214] sm:$0xf]
  %v188 = vld [vmem:[%s0 + $0x218] sm:$0xf]
  %v189 = vld [vmem:[%s0 + $0x21c] sm:$0xf]
  %v190 = vld [vmem:[%s0 + $0x220] sm:$0xf]
  %v191 = vld [vmem:[%s0 + $0x224] sm:$0xf]
  %v192 = vld [vmem:[%s0 + $0x228] sm:$0xf]
  %v193 = vld [vmem:[%s0 + $0x22c] sm:$0xf]
  %v194 = vld [vmem:[%s0 + $0x230] sm:$0xf]
  %v195 = vld [vmem:[%s0 + $0x234] sm:$0xf]
  %v196 = vld [vmem:[%s0 + $0x238] sm:$0xf]
  %v197 = vld [vmem:[%s0 + $0x23c] sm:$0xf]
  %v198 = vld [vmem:[%s0 + $0x240] sm:$0xf]
  %v199 = vld [vmem:[%s0 + $0x244] sm:$0xf]
  %v200 = vld [vmem:[%s0 + $0x248] sm:$0xf]
  %v201 = vld [vmem:[%s0 + $0x24c] sm:$0xf]
  %v202 = vld [vmem:[%s0 + $0x250] sm:$0xf]
  %v203 = vld [vmem:[%s0 + $0x254] sm:$0xf]
  %v204 = vld [vmem:[%s0 + $0x258] sm:$0xf]
  %v205 = vld [vmem:[%s0 + $0x25c] sm:$0xf]
  %v206 = vld [vmem:[%s0 + $0x260] sm:$0xf]
  %v207 = vld [vmem:[%s0 + $0x264] sm:$0xf]
  %v208 = vld [vmem:[%s0 + $0x268] sm:$0xf]
  %v209 = vld [vmem:[%s0 + $0x26c] sm:$0xf]
  %v210 = vld [vmem:[%s0 + $0x270] sm:$0xf]
  %v211 = vld [vmem:[%s0 + $0x274] sm:$0xf]
  %v212 = vld [vmem:[%s0 + $0x278] sm:$0xf]
  %v213 = vld [vmem:[%s0 + $0x27c] sm:$0xf]
  %v214 = vld [vmem:[%s0 + $0x280] sm:$0xf]
  %v215 = vld [vmem:[%s0 + $0x284] sm:$0xf]
  %v216 = vld [vmem:[%s0 + $0x288] sm:$0xf]
  %v217 = vld [vmem:[%s0 + $0x28c] sm:$0xf]
  %v218 = vld [vmem:[%s0 + $0x290] sm:$0xf]
  %v219 = vld [vmem:[%s0 + $0x294] sm:$0xf]
  %v220 = vld [vmem:[%s0 + $0x298] sm:$0xf]
  %v221 = vld [vmem:[%s0 + $0x29c] sm:$0xf]
  %v222 = vld [vmem:[%s0 + $0x2a0] sm:$0xf]
  %v223 = vld [vmem:[%s0 + $0x2a4] sm:$0xf]
  %v224 = vld [vmem:[%s1] sm:$0xf]
  %v225 = vld [vmem:[%s1 + $0x4] sm:$0xf]
  %v226 = vld [vmem:[%s1 + $0x8] sm:$0xf]
  %v227 = vld [vmem:[%s1 + $0xc] sm:$0xf]
  %v228 = vld [vmem:[%s1 + $0x10] sm:$0xf]
  %v229 = vld [vmem:[%s1 + $0x14] sm:$0xf]
  %v230 = vld [vmem:[%s1 + $0x18] sm:$0xf]
  %v231 = vld [vmem:[%s1 + $0x1c] sm:$0xf]
  %v232 = vld [vmem:[%s2] sm:$0x1]
  %v234 = vlaneseq
  %v235 = vshrl.u32 %v234, 7
  %v236 = vsub.s32 0, %v235
  %v237 = vrot.slane %v232, %v236
  %v409 = vunpack.c.l.b16 %v54
  %v410 = vunpack.c.l.b16 %v55
  %v411 = vunpack.c.l.b16 %v56
  %v412 = vunpack.c.l.b16 %v57
  %v413 = vunpack.c.l.b16 %v58
  %v414 = vunpack.c.l.b16 %v59
  %v415 = vunpack.c.l.b16 %v60
  %v416 = vunpack.c.l.b16 %v61
  %v417 = vunpack.c.l.b16 %v62
  %v418 = vunpack.c.l.b16 %v63
  %v419 = vunpack.c.l.b16 %v64
  %v420 = vunpack.c.l.b16 %v65
  %v421 = vunpack.c.l.b16 %v66
  %v422 = vunpack.c.l.b16 %v67
  %v423 = vunpack.c.l.b16 %v68
  %v424 = vunpack.c.l.b16 %v69
  %v425 = vunpack.c.l.b16 %v70
  %v426 = vunpack.c.l.b16 %v71
  %v427 = vunpack.c.l.b16 %v72
  %v428 = vunpack.c.l.b16 %v73
  %v429 = vunpack.c.l.b16 %v74
  %v430 = vunpack.c.l.b16 %v75
  %v431 = vunpack.c.l.b16 %v76
  %v432 = vunpack.c.l.b16 %v77
  %v433 = vunpack.c.l.b16 %v78
  %v434 = vunpack.c.l.b16 %v79
  %v435 = vunpack.c.l.b16 %v80
  %v436 = vunpack.c.l.b16 %v81
  %v437 = vunpack.c.l.b16 %v82
  %v438 = vunpack.c.l.b16 %v83
  %v439 = vunpack.c.l.b16 %v84
  %v440 = vunpack.c.l.b16 %v85
  %v441 = vunpack.c.l.b16 %v86
  %v442 = vunpack.c.l.b16 %v87
  %v443 = vunpack.c.l.b16 %v88
  %v444 = vunpack.c.l.b16 %v89
  %v445 = vunpack.c.l.b16 %v90
  %v446 = vunpack.c.l.b16 %v91
  %v447 = vunpack.c.l.b16 %v92
  %v448 = vunpack.c.l.b16 %v93
  %v449 = vunpack.c.l.b16 %v94
  %v450 = vunpack.c.l.b16 %v95
  %v451 = vunpack.c.l.b16 %v96
  %v452 = vunpack.c.l.b16 %v97
  %v453 = vunpack.c.l.b16 %v98
  %v454 = vunpack.c.l.b16 %v99
  %v455 = vunpack.c.l.b16 %v100
  %v456 = vunpack.c.l.b16 %v101
  %v457 = vunpack.c.l.b16 %v102
  %v458 = vunpack.c.l.b16 %v103
  %v459 = vunpack.c.l.b16 %v104
  %v460 = vunpack.c.l.b16 %v105
  %v461 = vunpack.c.l.b16 %v106
  %v462 = vunpack.c.l.b16 %v107
  %v463 = vunpack.c.l.b16 %v108
  %v464 = vunpack.c.l.b16 %v109
  %v465 = vunpack.c.l.b16 %v110
  %v466 = vunpack.c.l.b16 %v111
  %v467 = vunpack.c.l.b16 %v112
  %v468 = vunpack.c.l.b16 %v113
  %v469 = vunpack.c.l.b16 %v114
  %v470 = vunpack.c.l.b16 %v115
  %v471 = vunpack.c.l.b16 %v116
  %v472 = vunpack.c.l.b16 %v117
  %v473 = vunpack.c.l.b16 %v118
  %v474 = vunpack.c.l.b16 %v119
  %v475 = vunpack.c.l.b16 %v120
  %v476 = vunpack.c.l.b16 %v121
  %v477 = vunpack.c.l.b16 %v122
  %v478 = vunpack.c.l.b16 %v123
  %v479 = vunpack.c.l.b16 %v124
  %v480 = vunpack.c.l.b16 %v125
  %v481 = vunpack.c.l.b16 %v126
  %v482 = vunpack.c.l.b16 %v127
  %v483 = vunpack.c.l.b16 %v128
  %v484 = vunpack.c.l.b16 %v129
  %v485 = vunpack.c.l.b16 %v130
  %v486 = vunpack.c.l.b16 %v131
  %v487 = vunpack.c.l.b16 %v132
  %v488 = vunpack.c.l.b16 %v133
  %v489 = vunpack.c.l.b16 %v134
  %v490 = vunpack.c.l.b16 %v135
  %v491 = vunpack.c.l.b16 %v136
  %v492 = vunpack.c.l.b16 %v137
  %v493 = vunpack.c.l.b16 %v138
  %v494 = vunpack.c.l.b16 %v139
  %v495 = vunpack.c.l.b16 %v140
  %v496 = vunpack.c.l.b16 %v141
  %v497 = vunpack.c.l.b16 %v142
  %v498 = vunpack.c.l.b16 %v143
  %v499 = vunpack.c.l.b16 %v144
  %v500 = vunpack.c.l.b16 %v145
  %v501 = vunpack.c.l.b16 %v146
  %v502 = vunpack.c.l.b16 %v147
  %v503 = vunpack.c.l.b16 %v148
  %v504 = vunpack.c.l.b16 %v149
  %v505 = vunpack.c.l.b16 %v150
  %v506 = vunpack.c.l.b16 %v151
  %v507 = vunpack.c.l.b16 %v152
  %v508 = vunpack.c.l.b16 %v153
  %v509 = vunpack.c.l.b16 %v154
  %v510 = vunpack.c.l.b16 %v155
  %v511 = vunpack.c.l.b16 %v156
  %v512 = vunpack.c.l.b16 %v157
  %v513 = vunpack.c.l.b16 %v158
  %v514 = vunpack.c.l.b16 %v159
  %v515 = vunpack.c.l.b16 %v160
  %v516 = vunpack.c.l.b16 %v161
  %v517 = vunpack.c.l.b16 %v162
  %v518 = vunpack.c.l.b16 %v163
  %v519 = vunpack.c.l.b16 %v164
  %v520 = vunpack.c.l.b16 %v165
  %v521 = vunpack.c.l.b16 %v166
  %v522 = vunpack.c.l.b16 %v167
  %v523 = vunpack.c.l.b16 %v168
  %v524 = vunpack.c.l.b16 %v169
  %v525 = vunpack.c.l.b16 %v170
  %v526 = vunpack.c.l.b16 %v171
  %v527 = vunpack.c.l.b16 %v172
  %v528 = vunpack.c.l.b16 %v173
  %v529 = vunpack.c.l.b16 %v174
  %v530 = vunpack.c.l.b16 %v175
  %v531 = vunpack.c.l.b16 %v176
  %v532 = vunpack.c.l.b16 %v177
  %v533 = vunpack.c.l.b16 %v178
  %v534 = vunpack.c.l.b16 %v179
  %v535 = vunpack.c.l.b16 %v180
  %v536 = vunpack.c.l.b16 %v181
  %v537 = vunpack.c.l.b16 %v182
  %v538 = vunpack.c.l.b16 %v183
  %v539 = vunpack.c.l.b16 %v184
  %v540 = vunpack.c.l.b16 %v185
  %v541 = vunpack.c.l.b16 %v186
  %v542 = vunpack.c.l.b16 %v187
  %v543 = vunpack.c.l.b16 %v188
  %v544 = vunpack.c.l.b16 %v189
  %v545 = vunpack.c.l.b16 %v190
  %v546 = vunpack.c.l.b16 %v191
  %v547 = vunpack.c.l.b16 %v192
  %v548 = vunpack.c.l.b16 %v193
  %v549 = vunpack.c.l.b16 %v194
  %v550 = vunpack.c.l.b16 %v195
  %v551 = vunpack.c.l.b16 %v196
  %v552 = vunpack.c.l.b16 %v197
  %v553 = vunpack.c.l.b16 %v198
  %v554 = vunpack.c.l.b16 %v199
  %v555 = vunpack.c.l.b16 %v200
  %v556 = vunpack.c.l.b16 %v201
  %v557 = vunpack.c.l.b16 %v202
  %v558 = vunpack.c.l.b16 %v203
  %v559 = vunpack.c.l.b16 %v204
  %v560 = vunpack.c.l.b16 %v205
  %v561 = vunpack.c.l.b16 %v206
  %v562 = vunpack.c.l.b16 %v207
  %v563 = vunpack.c.l.b16 %v208
  %v564 = vunpack.c.l.b16 %v209
  %v565 = vunpack.c.l.b16 %v210
  %v566 = vunpack.c.l.b16 %v211
  %v567 = vunpack.c.l.b16 %v212
  %v568 = vunpack.c.l.b16 %v213
  %v569 = vunpack.c.l.b16 %v214
  %v570 = vunpack.c.l.b16 %v215
  %v571 = vunpack.c.l.b16 %v216
  %v572 = vunpack.c.l.b16 %v217
  %v573 = vunpack.c.l.b16 %v218
  %v574 = vunpack.c.l.b16 %v219
  %v575 = vunpack.c.l.b16 %v220
  %v576 = vunpack.c.l.b16 %v221
  %v577 = vunpack.c.l.b16 %v222
  %v578 = vunpack.c.l.b16 %v223
  %v579 = vpack.c.b16 %v410, %v409
  %v580 = vpack.c.b16 %v412, %v411
  %v581 = vpack.c.b16 %v414, %v413
  %v582 = vpack.c.b16 %v416, %v415
  %v583 = vpack.c.b16 %v418, %v417
  %v584 = vpack.c.b16 %v420, %v419
  %v585 = vpack.c.b16 %v422, %v421
  %v586 = vpack.c.b16 %v424, %v423
  %v587 = vpack.c.b16 %v426, %v425
  %v588 = vpack.c.b16 %v428, %v427
  %v589 = vpack.c.b16 %v430, %v429
  %v590 = vpack.c.b16 %v432, %v431
  %v591 = vpack.c.b16 %v434, %v433
  %v592 = vpack.c.b16 %v436, %v435
  %v593 = vpack.c.b16 %v438, %v437
  %v594 = vpack.c.b16 %v440, %v439
  %v595 = vpack.c.b16 %v442, %v441
  %v596 = vpack.c.b16 %v444, %v443
  %v597 = vpack.c.b16 %v446, %v445
  %v598 = vpack.c.b16 %v448, %v447
  %v599 = vpack.c.b16 %v450, %v449
  %v600 = vpack.c.b16 %v452, %v451
  %v601 = vpack.c.b16 %v454, %v453
  %v602 = vpack.c.b16 %v456, %v455
  %v603 = vpack.c.b16 %v458, %v457
  %v604 = vpack.c.b16 %v460, %v459
  %v605 = vpack.c.b16 %v462, %v461
  %v606 = vpack.c.b16 %v464, %v463
  %v607 = vpack.c.b16 %v466, %v465
  %v608 = vpack.c.b16 %v468, %v467
  %v609 = vpack.c.b16 %v470, %v469
  %v610 = vpack.c.b16 %v472, %v471
  %v611 = vpack.c.b16 %v474, %v473
  %v612 = vpack.c.b16 %v476, %v475
  %v613 = vpack.c.b16 %v478, %v477
  %v614 = vpack.c.b16 %v480, %v479
  %v615 = vpack.c.b16 %v482, %v481
  %v616 = vpack.c.b16 %v484, %v483
  %v617 = vpack.c.b16 %v486, %v485
  %v618 = vpack.c.b16 %v488, %v487
  %v619 = vpack.c.b16 %v490, %v489
  %v620 = vpack.c.b16 %v492, %v491
  %v621 = vpack.c.b16 %v494, %v493
  %v622 = vpack.c.b16 %v496, %v495
  %v623 = vpack.c.b16 %v498, %v497
  %v624 = vpack.c.b16 %v500, %v499
  %v625 = vpack.c.b16 %v502, %v501
  %v626 = vpack.c.b16 %v504, %v503
  %v627 = vpack.c.b16 %v506, %v505
  %v628 = vpack.c.b16 %v508, %v507
  %v629 = vpack.c.b16 %v510, %v509
  %v630 = vpack.c.b16 %v512, %v511
  %v631 = vpack.c.b16 %v514, %v513
  %v632 = vpack.c.b16 %v516, %v515
  %v633 = vpack.c.b16 %v518, %v517
  %v634 = vpack.c.b16 %v520, %v519
  %v635 = vpack.c.b16 %v522, %v521
  %v636 = vpack.c.b16 %v524, %v523
  %v637 = vpack.c.b16 %v526, %v525
  %v638 = vpack.c.b16 %v528, %v527
  %v639 = vpack.c.b16 %v530, %v529
  %v640 = vpack.c.b16 %v532, %v531
  %v641 = vpack.c.b16 %v534, %v533
  %v642 = vpack.c.b16 %v536, %v535
  %v643 = vpack.c.b16 %v538, %v537
  %v644 = vpack.c.b16 %v540, %v539
  %v645 = vpack.c.b16 %v542, %v541
  %v646 = vpack.c.b16 %v544, %v543
  %v647 = vpack.c.b16 %v546, %v545
  %v648 = vpack.c.b16 %v548, %v547
  %v649 = vpack.c.b16 %v550, %v549
  %v650 = vpack.c.b16 %v552, %v551
  %v651 = vpack.c.b16 %v554, %v553
  %v652 = vpack.c.b16 %v556, %v555
  %v653 = vpack.c.b16 %v558, %v557
  %v654 = vpack.c.b16 %v560, %v559
  %v655 = vpack.c.b16 %v562, %v561
  %v656 = vpack.c.b16 %v564, %v563
  %v657 = vpack.c.b16 %v566, %v565
  %v658 = vpack.c.b16 %v568, %v567
  %v659 = vpack.c.b16 %v570, %v569
  %v660 = vpack.c.b16 %v572, %v571
  %v661 = vpack.c.b16 %v574, %v573
  %v662 = vpack.c.b16 %v576, %v575
  %v663 = vpack.c.b16 %v578, %v577
  %v672 = vunpack.c.l.b16 %v224
  %v673 = vunpack.c.l.b16 %v225
  %v674 = vunpack.c.l.b16 %v226
  %v675 = vunpack.c.l.b16 %v227
  %v676 = vunpack.c.l.b16 %v228
  %v677 = vunpack.c.l.b16 %v229
  %v678 = vunpack.c.l.b16 %v230
  %v679 = vunpack.c.l.b16 %v231
  %v680 = vpack.c.b16 %v673, %v672
  %v681 = vpack.c.b16 %v675, %v674
  %v682 = vpack.c.b16 %v677, %v676
  %v683 = vpack.c.b16 %v679, %v678
  %vm688 = vcmask 523264
  %v690 = vsel %vm688, %v579, 0
  %v693 = vsel %vm688, %v580, 0
  %v696 = vsel %vm688, %v581, 0
  %v699 = vsel %vm688, %v582, 0
  %v702 = vsel %vm688, %v583, 0
  %v705 = vsel %vm688, %v584, 0
  %v708 = vsel %vm688, %v585, 0
  %v711 = vsel %vm688, %v586, 0
  %v714 = vsel %vm688, %v587, 0
  %v717 = vsel %vm688, %v588, 0
  %v720 = vsel %vm688, %v589, 0
  %v723 = vsel %vm688, %v590, 0
  %v726 = vsel %vm688, %v591, 0
  %v729 = vsel %vm688, %v592, 0
  %v732 = vsel %vm688, %v593, 0
  %v735 = vsel %vm688, %v594, 0
  %v738 = vsel %vm688, %v595, 0
  %v741 = vsel %vm688, %v596, 0
  %v744 = vsel %vm688, %v597, 0
  %v747 = vsel %vm688, %v598, 0
  %v750 = vsel %vm688, %v599, 0
  %v753 = vsel %vm688, %v600, 0
  %v756 = vsel %vm688, %v601, 0
  %v759 = vsel %vm688, %v602, 0
  %v762 = vsel %vm688, %v603, 0
  %v765 = vsel %vm688, %v604, 0
  %v768 = vsel %vm688, %v605, 0
  %v771 = vsel %vm688, %v606, 0
  %v774 = vsel %vm688, %v607, 0
  %v777 = vsel %vm688, %v608, 0
  %v780 = vsel %vm688, %v609, 0
  %v783 = vsel %vm688, %v610, 0
  %v786 = vsel %vm688, %v611, 0
  %v789 = vsel %vm688, %v612, 0
  %v792 = vsel %vm688, %v613, 0
  %v795 = vsel %vm688, %v614, 0
  %v798 = vsel %vm688, %v615, 0
  %v801 = vsel %vm688, %v616, 0
  %v804 = vsel %vm688, %v617, 0
  %v807 = vsel %vm688, %v618, 0
  %v810 = vsel %vm688, %v619, 0
  %v813 = vsel %vm688, %v620, 0
  %v816 = vsel %vm688, %v621, 0
  %v819 = vsel %vm688, %v622, 0
  %v822 = vsel %vm688, %v623, 0
  %v825 = vsel %vm688, %v624, 0
  %v828 = vsel %vm688, %v625, 0
  %v831 = vsel %vm688, %v626, 0
  %v834 = vsel %vm688, %v627, 0
  %v837 = vsel %vm688, %v628, 0
  %v840 = vsel %vm688, %v629, 0
  %v843 = vsel %vm688, %v630, 0
  %v846 = vsel %vm688, %v631, 0
  %v849 = vsel %vm688, %v632, 0
  %v852 = vsel %vm688, %v633, 0
  %v855 = vsel %vm688, %v634, 0
  %v858 = vsel %vm688, %v635, 0
  %v861 = vsel %vm688, %v636, 0
  %v864 = vsel %vm688, %v637, 0
  %v867 = vsel %vm688, %v638, 0
  %v870 = vsel %vm688, %v639, 0
  %v873 = vsel %vm688, %v640, 0
  %v876 = vsel %vm688, %v641, 0
  %v879 = vsel %vm688, %v642, 0
  %v882 = vsel %vm688, %v643, 0
  %v885 = vsel %vm688, %v644, 0
  %v888 = vsel %vm688, %v645, 0
  %v891 = vsel %vm688, %v646, 0
  %v894 = vsel %vm688, %v647, 0
  %v897 = vsel %vm688, %v648, 0
  %v900 = vsel %vm688, %v649, 0
  %v903 = vsel %vm688, %v650, 0
  %v906 = vsel %vm688, %v651, 0
  %v909 = vsel %vm688, %v652, 0
  %v912 = vsel %vm688, %v653, 0
  %v915 = vsel %vm688, %v654, 0
  %v918 = vsel %vm688, %v655, 0
  %v921 = vsel %vm688, %v656, 0
  %v924 = vsel %vm688, %v657, 0
  %v927 = vsel %vm688, %v658, 0
  %v930 = vsel %vm688, %v659, 0
  %v933 = vsel %vm688, %v660, 0
  %v936 = vsel %vm688, %v661, 0
  %v939 = vsel %vm688, %v662, 0
  %v942 = vsel %vm688, %v663, 0
  %944 = vmatprep.subr.bf16.mxu0 0
  %945 = vmatpush1.bf16.msra.mxu0 0
  %946 = vmatprep.subr.bf16.mxu0 0
  %947 = vmatpush1.bf16.msra.mxu0 0
  %948 = vmatprep.subr.bf16.mxu0 0
  %949 = vmatpush1.bf16.msra.mxu0 0
  %950 = vmatprep.subr.bf16.mxu0 0
  %951 = vmatpush1.bf16.msra.mxu0 0
  %952 = vmatprep.subr.bf16.mxu0 0
  %953 = vmatpush1.bf16.msra.mxu0 %v683
  %954 = vmatprep.subr.bf16.mxu0 0
  %955 = vmatpush1.bf16.msra.mxu0 %v682
  %956 = vmatprep.subr.bf16.mxu0 0
  %957 = vmatpush1.bf16.msra.mxu0 %v681
  %958 = vmatprep.subr.bf16.mxu0 0
  %959 = vmatpush1.bf16.msra.mxu0 %v680
  %960 = vmatprep.subr.bf16.mxu0 0
  %961 = vmatpush2.bf16.msra.mxu0 0
  %962 = vmatprep.subr.bf16.mxu0 0
  %963 = vmatpush2.bf16.msra.mxu0 0
  %964 = vmatprep.subr.bf16.mxu0 0
  %965 = vmatpush2.bf16.msra.mxu0 0
  %966 = vmatprep.subr.bf16.mxu0 0
  %967 = vmatpush2.bf16.msra.mxu0 0
  %968 = vmatprep.subr.bf16.mxu0 0
  %969 = vmatpush2.bf16.msra.mxu0 0
  %970 = vmatprep.subr.bf16.mxu0 0
  %971 = vmatpush2.bf16.msra.mxu0 0
  %972 = vmatprep.subr.bf16.mxu0 0
  %973 = vmatpush2.bf16.msra.mxu0 0
  %974 = vmatprep.subr.bf16.mxu0 0
  %975 = vmatpush2.bf16.msra.mxu0 0
  %976 = vmatprep.mubr.bf16.mxu0 0
  %977 = vmatmul.mubr.bf16.gmra.mxu0 %v690
  %v978 = vpop.f32.mrf.mxu0
  %v979 = vpop.f32.mrf.mxu0
  %v980 = vpop.f32.mrf.mxu0
  %v981 = vpop.f32.mrf.mxu0
  %982 = vmatprep.mubr.bf16.mxu0 0
  %983 = vmatmul.mubr.bf16.gmra.mxu0 %v693
  %v984 = vpop.f32.mrf.mxu0
  %v985 = vpop.f32.mrf.mxu0
  %v986 = vpop.f32.mrf.mxu0
  %v987 = vpop.f32.mrf.mxu0
  %988 = vmatprep.mubr.bf16.mxu0 0
  %989 = vmatmul.mubr.bf16.gmra.mxu0 %v696
  %v990 = vpop.f32.mrf.mxu0
  %v991 = vpop.f32.mrf.mxu0
  %v992 = vpop.f32.mrf.mxu0
  %v993 = vadd.f32 %v237, %v992
  %v994 = vpop.f32.mrf.mxu0
  %995 = vmatprep.mubr.bf16.mxu0 0
  %996 = vmatmul.mubr.bf16.gmra.mxu0 %v699
  %v997 = vpop.f32.mrf.mxu0
  %v998 = vadd.f32 %v237, %v997
  %v999 = vpop.f32.mrf.mxu0
  %v1000 = vpop.f32.mrf.mxu0
  %v1001 = vadd.f32 %v237, %v1000
  %v1002 = vpop.f32.mrf.mxu0
  %1003 = vmatprep.mubr.bf16.mxu0 0
  %1004 = vmatmul.mubr.bf16.gmra.mxu0 %v702
  %v1005 = vpop.f32.mrf.mxu0
  %v1006 = vadd.f32 %v237, %v1005
  %v1007 = vpop.f32.mrf.mxu0
  %v1008 = vpop.f32.mrf.mxu0
  %v1009 = vadd.f32 %v237, %v1008
  %v1010 = vpop.f32.mrf.mxu0
  %1011 = vmatprep.mubr.bf16.mxu0 0
  %1012 = vmatmul.mubr.bf16.gmra.mxu0 %v705
  %v1013 = vpop.f32.mrf.mxu0
  %v1014 = vadd.f32 %v237, %v1013
  %v1015 = vpop.f32.mrf.mxu0
  %v1016 = vpop.f32.mrf.mxu0
  %v1017 = vadd.f32 %v237, %v1016
  %v1018 = vpop.f32.mrf.mxu0
  %1019 = vmatprep.mubr.bf16.mxu0 0
  %1020 = vmatmul.mubr.bf16.gmra.mxu0 %v708
  %v1021 = vpop.f32.mrf.mxu0
  %v1022 = vadd.f32 %v237, %v1021
  %v1023 = vpop.f32.mrf.mxu0
  %v1024 = vpop.f32.mrf.mxu0
  %v1025 = vadd.f32 %v237, %v1024
  %v1026 = vpop.f32.mrf.mxu0
  %1027 = vmatprep.mubr.bf16.mxu0 0
  %1028 = vmatmul.mubr.bf16.gmra.mxu0 %v711
  %v1029 = vpop.f32.mrf.mxu0
  %v1030 = vadd.f32 %v237, %v1029
  %v1031 = vpop.f32.mrf.mxu0
  %v1032 = vpop.f32.mrf.mxu0
  %v1033 = vadd.f32 %v237, %v1032
  %v1034 = vpop.f32.mrf.mxu0
  %1035 = vmatprep.mubr.bf16.mxu0 0
  %1036 = vmatmul.mubr.bf16.gmra.mxu0 %v714
  %v1037 = vpop.f32.mrf.mxu0
  %v1038 = vadd.f32 %v237, %v1037
  %v1039 = vpop.f32.mrf.mxu0
  %v1040 = vpop.f32.mrf.mxu0
  %v1041 = vadd.f32 %v237, %v1040
  %v1042 = vpop.f32.mrf.mxu0
  %1043 = vmatprep.mubr.bf16.mxu0 0
  %1044 = vmatmul.mubr.bf16.gmra.mxu0 %v717
  %v1045 = vpop.f32.mrf.mxu0
  %v1046 = vadd.f32 %v237, %v1045
  %v1047 = vpop.f32.mrf.mxu0
  %v1048 = vpop.f32.mrf.mxu0
  %v1049 = vadd.f32 %v237, %v1048
  %v1050 = vpop.f32.mrf.mxu0
  %1051 = vmatprep.mubr.bf16.mxu0 0
  %1052 = vmatmul.mubr.bf16.gmra.mxu0 %v720
  %v1053 = vpop.f32.mrf.mxu0
  %v1054 = vadd.f32 %v237, %v1053
  %v1055 = vpop.f32.mrf.mxu0
  %v1056 = vpop.f32.mrf.mxu0
  %v1057 = vadd.f32 %v237, %v1056
  %v1058 = vpop.f32.mrf.mxu0
  %1059 = vmatprep.mubr.bf16.mxu0 0
  %1060 = vmatmul.mubr.bf16.gmra.mxu0 %v723
  %v1061 = vpop.f32.mrf.mxu0
  %v1062 = vadd.f32 %v237, %v1061
  %v1063 = vpop.f32.mrf.mxu0
  %v1064 = vpop.f32.mrf.mxu0
  %v1065 = vadd.f32 %v237, %v1064
  %v1066 = vpop.f32.mrf.mxu0
  %1067 = vmatprep.mubr.bf16.mxu0 0
  %1068 = vmatmul.mubr.bf16.gmra.mxu0 %v726
  %v1069 = vpop.f32.mrf.mxu0
  %v1070 = vadd.f32 %v237, %v1069
  %v1071 = vpop.f32.mrf.mxu0
  %v1072 = vpop.f32.mrf.mxu0
  %v1073 = vadd.f32 %v237, %v1072
  %v1074 = vpop.f32.mrf.mxu0
  %1075 = vmatprep.mubr.bf16.mxu0 0
  %1076 = vmatmul.mubr.bf16.gmra.mxu0 %v729
  %v1077 = vpop.f32.mrf.mxu0
  %v1078 = vadd.f32 %v237, %v1077
  %v1079 = vpop.f32.mrf.mxu0
  %v1080 = vpop.f32.mrf.mxu0
  %v1081 = vadd.f32 %v237, %v1080
  %v1082 = vpop.f32.mrf.mxu0
  %1083 = vmatprep.mubr.bf16.mxu0 0
  %1084 = vmatmul.mubr.bf16.gmra.mxu0 %v732
  %v1085 = vpop.f32.mrf.mxu0
  %v1086 = vadd.f32 %v237, %v1085
  %v1087 = vpop.f32.mrf.mxu0
  %v1088 = vpop.f32.mrf.mxu0
  %v1089 = vadd.f32 %v237, %v1088
  %v1090 = vpop.f32.mrf.mxu0
  %1091 = vmatprep.mubr.bf16.mxu0 0
  %1092 = vmatmul.mubr.bf16.gmra.mxu0 %v735
  %v1093 = vpop.f32.mrf.mxu0
  %v1094 = vadd.f32 %v237, %v1093
  %v1095 = vpop.f32.mrf.mxu0
  %v1096 = vpop.f32.mrf.mxu0
  %v1097 = vadd.f32 %v237, %v1096
  %v1098 = vpop.f32.mrf.mxu0
  %1099 = vmatprep.mubr.bf16.mxu0 0
  %1100 = vmatmul.mubr.bf16.gmra.mxu0 %v738
  %v1101 = vpop.f32.mrf.mxu0
  %v1102 = vadd.f32 %v237, %v1101
  %v1103 = vpop.f32.mrf.mxu0
  %v1104 = vpop.f32.mrf.mxu0
  %v1105 = vadd.f32 %v237, %v1104
  %v1106 = vpop.f32.mrf.mxu0
  %1107 = vmatprep.mubr.bf16.mxu0 0
  %1108 = vmatmul.mubr.bf16.gmra.mxu0 %v741
  %v1109 = vpop.f32.mrf.mxu0
  %v1110 = vadd.f32 %v237, %v1109
  %v1111 = vpop.f32.mrf.mxu0
  %v1112 = vpop.f32.mrf.mxu0
  %v1113 = vadd.f32 %v237, %v1112
  %v1114 = vpop.f32.mrf.mxu0
  %1115 = vmatprep.mubr.bf16.mxu0 0
  %1116 = vmatmul.mubr.bf16.gmra.mxu0 %v744
  %v1117 = vpop.f32.mrf.mxu0
  %v1118 = vadd.f32 %v237, %v1117
  %v1119 = vpop.f32.mrf.mxu0
  %v1120 = vpop.f32.mrf.mxu0
  %v1121 = vadd.f32 %v237, %v1120
  %v1122 = vpop.f32.mrf.mxu0
  %1123 = vmatprep.mubr.bf16.mxu0 0
  %1124 = vmatmul.mubr.bf16.gmra.mxu0 %v747
  %v1125 = vpop.f32.mrf.mxu0
  %v1126 = vadd.f32 %v237, %v1125
  %v1127 = vpop.f32.mrf.mxu0
  %v1128 = vpop.f32.mrf.mxu0
  %v1129 = vadd.f32 %v237, %v1128
  %v1130 = vpop.f32.mrf.mxu0
  %1131 = vmatprep.mubr.bf16.mxu0 0
  %1132 = vmatmul.mubr.bf16.gmra.mxu0 %v750
  %v1133 = vpop.f32.mrf.mxu0
  %v1134 = vadd.f32 %v237, %v1133
  %v1135 = vpop.f32.mrf.mxu0
  %v1136 = vpop.f32.mrf.mxu0
  %v1137 = vadd.f32 %v237, %v1136
  %v1138 = vpop.f32.mrf.mxu0
  %1139 = vmatprep.mubr.bf16.mxu0 0
  %1140 = vmatmul.mubr.bf16.gmra.mxu0 %v753
  %v1141 = vpop.f32.mrf.mxu0
  %v1142 = vadd.f32 %v237, %v1141
  %v1143 = vpop.f32.mrf.mxu0
  %v1144 = vpop.f32.mrf.mxu0
  %v1145 = vadd.f32 %v237, %v1144
  %v1146 = vpop.f32.mrf.mxu0
  %1147 = vmatprep.mubr.bf16.mxu0 0
  %1148 = vmatmul.mubr.bf16.gmra.mxu0 %v756
  %v1149 = vpop.f32.mrf.mxu0
  %v1150 = vadd.f32 %v237, %v1149
  %v1151 = vpop.f32.mrf.mxu0
  %v1152 = vpop.f32.mrf.mxu0
  %v1153 = vadd.f32 %v237, %v1152
  %v1154 = vpop.f32.mrf.mxu0
  %1155 = vmatprep.mubr.bf16.mxu0 0
  %1156 = vmatmul.mubr.bf16.gmra.mxu0 %v759
  %v1157 = vpop.f32.mrf.mxu0
  %v1158 = vadd.f32 %v237, %v1157
  %v1159 = vpop.f32.mrf.mxu0
  %v1160 = vpop.f32.mrf.mxu0
  %v1161 = vadd.f32 %v237, %v1160
  %v1162 = vpop.f32.mrf.mxu0
  %1163 = vmatprep.mubr.bf16.mxu0 0
  %1164 = vmatmul.mubr.bf16.gmra.mxu0 %v762
  %v1165 = vpop.f32.mrf.mxu0
  %v1166 = vadd.f32 %v237, %v1165
  %v1167 = vpop.f32.mrf.mxu0
  %v1168 = vpop.f32.mrf.mxu0
  %v1169 = vadd.f32 %v237, %v1168
  %v1170 = vpop.f32.mrf.mxu0
  %1171 = vmatprep.mubr.bf16.mxu0 0
  %1172 = vmatmul.mubr.bf16.gmra.mxu0 %v765
  %v1173 = vpop.f32.mrf.mxu0
  %v1174 = vadd.f32 %v237, %v1173
  %v1175 = vpop.f32.mrf.mxu0
  %v1176 = vpop.f32.mrf.mxu0
  %v1177 = vadd.f32 %v237, %v1176
  %v1178 = vpop.f32.mrf.mxu0
  %1179 = vmatprep.mubr.bf16.mxu0 0
  %1180 = vmatmul.mubr.bf16.gmra.mxu0 %v768
  %v1181 = vpop.f32.mrf.mxu0
  %v1182 = vadd.f32 %v237, %v1181
  %v1183 = vpop.f32.mrf.mxu0
  %v1184 = vpop.f32.mrf.mxu0
  %v1185 = vadd.f32 %v237, %v1184
  %v1186 = vpop.f32.mrf.mxu0
  %1187 = vmatprep.mubr.bf16.mxu0 0
  %1188 = vmatmul.mubr.bf16.gmra.mxu0 %v771
  %v1189 = vpop.f32.mrf.mxu0
  %v1190 = vadd.f32 %v237, %v1189
  %v1191 = vpop.f32.mrf.mxu0
  %v1192 = vpop.f32.mrf.mxu0
  %v1193 = vadd.f32 %v237, %v1192
  %v1194 = vpop.f32.mrf.mxu0
  %1195 = vmatprep.mubr.bf16.mxu0 0
  %1196 = vmatmul.mubr.bf16.gmra.mxu0 %v774
  %v1197 = vpop.f32.mrf.mxu0
  %v1198 = vadd.f32 %v237, %v1197
  %v1199 = vpop.f32.mrf.mxu0
  %v1200 = vpop.f32.mrf.mxu0
  %v1201 = vadd.f32 %v237, %v1200
  %v1202 = vpop.f32.mrf.mxu0
  %1203 = vmatprep.mubr.bf16.mxu0 0
  %1204 = vmatmul.mubr.bf16.gmra.mxu0 %v777
  %v1205 = vpop.f32.mrf.mxu0
  %v1206 = vadd.f32 %v237, %v1205
  %v1207 = vpop.f32.mrf.mxu0
  %v1208 = vpop.f32.mrf.mxu0
  %v1209 = vadd.f32 %v237, %v1208
  %v1210 = vpop.f32.mrf.mxu0
  %1211 = vmatprep.mubr.bf16.mxu0 0
  %1212 = vmatmul.mubr.bf16.gmra.mxu0 %v780
  %v1213 = vpop.f32.mrf.mxu0
  %v1214 = vadd.f32 %v237, %v1213
  %v1215 = vpop.f32.mrf.mxu0
  %v1216 = vpop.f32.mrf.mxu0
  %v1217 = vadd.f32 %v237, %v1216
  %v1218 = vpop.f32.mrf.mxu0
  %1219 = vmatprep.mubr.bf16.mxu0 0
  %1220 = vmatmul.mubr.bf16.gmra.mxu0 %v783
  %v1221 = vpop.f32.mrf.mxu0
  %v1222 = vadd.f32 %v237, %v1221
  %v1223 = vpop.f32.mrf.mxu0
  %v1224 = vpop.f32.mrf.mxu0
  %v1225 = vadd.f32 %v237, %v1224
  %v1226 = vpop.f32.mrf.mxu0
  %1227 = vmatprep.mubr.bf16.mxu0 0
  %1228 = vmatmul.mubr.bf16.gmra.mxu0 %v786
  %v1229 = vpop.f32.mrf.mxu0
  %v1230 = vadd.f32 %v237, %v1229
  %v1231 = vpop.f32.mrf.mxu0
  %v1232 = vpop.f32.mrf.mxu0
  %v1233 = vadd.f32 %v237, %v1232
  %v1234 = vpop.f32.mrf.mxu0
  %1235 = vmatprep.mubr.bf16.mxu0 0
  %1236 = vmatmul.mubr.bf16.gmra.mxu0 %v789
  %v1237 = vpop.f32.mrf.mxu0
  %v1238 = vadd.f32 %v237, %v1237
  %v1239 = vpop.f32.mrf.mxu0
  %v1240 = vpop.f32.mrf.mxu0
  %v1241 = vadd.f32 %v237, %v1240
  %v1242 = vpop.f32.mrf.mxu0
  %1243 = vmatprep.mubr.bf16.mxu0 0
  %1244 = vmatmul.mubr.bf16.gmra.mxu0 %v792
  %v1245 = vpop.f32.mrf.mxu0
  %v1246 = vadd.f32 %v237, %v1245
  %v1247 = vpop.f32.mrf.mxu0
  %v1248 = vpop.f32.mrf.mxu0
  %v1249 = vadd.f32 %v237, %v1248
  %v1250 = vpop.f32.mrf.mxu0
  %1251 = vmatprep.mubr.bf16.mxu0 0
  %1252 = vmatmul.mubr.bf16.gmra.mxu0 %v795
  %v1253 = vpop.f32.mrf.mxu0
  %v1254 = vadd.f32 %v237, %v1253
  %v1255 = vpop.f32.mrf.mxu0
  %v1256 = vpop.f32.mrf.mxu0
  %v1257 = vadd.f32 %v237, %v1256
  %v1258 = vpop.f32.mrf.mxu0
  %1259 = vmatprep.mubr.bf16.mxu0 0
  %1260 = vmatmul.mubr.bf16.gmra.mxu0 %v798
  %v1261 = vpop.f32.mrf.mxu0
  %v1262 = vadd.f32 %v237, %v1261
  %v1263 = vpop.f32.mrf.mxu0
  %v1264 = vpop.f32.mrf.mxu0
  %v1265 = vadd.f32 %v237, %v1264
  %v1266 = vpop.f32.mrf.mxu0
  %1267 = vmatprep.mubr.bf16.mxu0 0
  %1268 = vmatmul.mubr.bf16.gmra.mxu0 %v801
  %v1269 = vpop.f32.mrf.mxu0
  %v1270 = vadd.f32 %v237, %v1269
  %v1271 = vpop.f32.mrf.mxu0
  %v1272 = vpop.f32.mrf.mxu0
  %v1273 = vadd.f32 %v237, %v1272
  %v1274 = vpop.f32.mrf.mxu0
  %1275 = vmatprep.mubr.bf16.mxu0 0
  %1276 = vmatmul.mubr.bf16.gmra.mxu0 %v804
  %v1277 = vpop.f32.mrf.mxu0
  %v1278 = vadd.f32 %v237, %v1277
  %v1279 = vpop.f32.mrf.mxu0
  %v1280 = vpop.f32.mrf.mxu0
  %v1281 = vadd.f32 %v237, %v1280
  %v1282 = vpop.f32.mrf.mxu0
  %1283 = vmatprep.mubr.bf16.mxu0 0
  %1284 = vmatmul.mubr.bf16.gmra.mxu0 %v807
  %v1285 = vpop.f32.mrf.mxu0
  %v1286 = vadd.f32 %v237, %v1285
  %v1287 = vpop.f32.mrf.mxu0
  %v1288 = vpop.f32.mrf.mxu0
  %v1289 = vadd.f32 %v237, %v1288
  %v1290 = vpop.f32.mrf.mxu0
  %1291 = vmatprep.mubr.bf16.mxu0 0
  %1292 = vmatmul.mubr.bf16.gmra.mxu0 %v810
  %v1293 = vpop.f32.mrf.mxu0
  %v1294 = vadd.f32 %v237, %v1293
  %v1295 = vpop.f32.mrf.mxu0
  %v1296 = vpop.f32.mrf.mxu0
  %v1297 = vadd.f32 %v237, %v1296
  %v1298 = vpop.f32.mrf.mxu0
  %1299 = vmatprep.mubr.bf16.mxu0 0
  %1300 = vmatmul.mubr.bf16.gmra.mxu0 %v813
  %v1301 = vpop.f32.mrf.mxu0
  %v1302 = vadd.f32 %v237, %v1301
  %v1303 = vpop.f32.mrf.mxu0
  %v1304 = vpop.f32.mrf.mxu0
  %v1305 = vadd.f32 %v237, %v1304
  %v1306 = vpop.f32.mrf.mxu0
  %1307 = vmatprep.mubr.bf16.mxu0 0
  %1308 = vmatmul.mubr.bf16.gmra.mxu0 %v816
  %v1309 = vpop.f32.mrf.mxu0
  %v1310 = vadd.f32 %v237, %v1309
  %v1311 = vpop.f32.mrf.mxu0
  %v1312 = vpop.f32.mrf.mxu0
  %v1313 = vadd.f32 %v237, %v1312
  %v1314 = vpop.f32.mrf.mxu0
  %1315 = vmatprep.mubr.bf16.mxu0 0
  %1316 = vmatmul.mubr.bf16.gmra.mxu0 %v819
  %v1317 = vpop.f32.mrf.mxu0
  %v1318 = vadd.f32 %v237, %v1317
  %v1319 = vpop.f32.mrf.mxu0
  %v1320 = vpop.f32.mrf.mxu0
  %v1321 = vadd.f32 %v237, %v1320
  %v1322 = vpop.f32.mrf.mxu0
  %1323 = vmatprep.mubr.bf16.mxu0 0
  %1324 = vmatmul.mubr.bf16.gmra.mxu0 %v822
  %v1325 = vpop.f32.mrf.mxu0
  %v1326 = vadd.f32 %v237, %v1325
  %v1327 = vpop.f32.mrf.mxu0
  %v1328 = vpop.f32.mrf.mxu0
  %v1329 = vadd.f32 %v237, %v1328
  %v1330 = vpop.f32.mrf.mxu0
  %1331 = vmatprep.mubr.bf16.mxu0 0
  %1332 = vmatmul.mubr.bf16.gmra.mxu0 %v825
  %v1333 = vpop.f32.mrf.mxu0
  %v1334 = vadd.f32 %v237, %v1333
  %v1335 = vpop.f32.mrf.mxu0
  %v1336 = vpop.f32.mrf.mxu0
  %v1337 = vadd.f32 %v237, %v1336
  %v1338 = vpop.f32.mrf.mxu0
  %1339 = vmatprep.mubr.bf16.mxu0 0
  %1340 = vmatmul.mubr.bf16.gmra.mxu0 %v828
  %v1341 = vpop.f32.mrf.mxu0
  %v1342 = vadd.f32 %v237, %v1341
  %v1343 = vpop.f32.mrf.mxu0
  %v1344 = vpop.f32.mrf.mxu0
  %v1345 = vadd.f32 %v237, %v1344
  %v1346 = vpop.f32.mrf.mxu0
  %1347 = vmatprep.mubr.bf16.mxu0 0
  %1348 = vmatmul.mubr.bf16.gmra.mxu0 %v831
  %v1349 = vpop.f32.mrf.mxu0
  %v1350 = vadd.f32 %v237, %v1349
  %v1351 = vpop.f32.mrf.mxu0
  %v1352 = vpop.f32.mrf.mxu0
  %v1353 = vadd.f32 %v237, %v1352
  %v1354 = vpop.f32.mrf.mxu0
  %1355 = vmatprep.mubr.bf16.mxu0 0
  %1356 = vmatmul.mubr.bf16.gmra.mxu0 %v834
  %v1357 = vpop.f32.mrf.mxu0
  %v1358 = vadd.f32 %v237, %v1357
  %v1359 = vpop.f32.mrf.mxu0
  %v1360 = vpop.f32.mrf.mxu0
  %v1361 = vadd.f32 %v237, %v1360
  %v1362 = vpop.f32.mrf.mxu0
  %1363 = vmatprep.mubr.bf16.mxu0 0
  %1364 = vmatmul.mubr.bf16.gmra.mxu0 %v837
  %v1365 = vpop.f32.mrf.mxu0
  %v1366 = vadd.f32 %v237, %v1365
  %v1367 = vpop.f32.mrf.mxu0
  %v1368 = vpop.f32.mrf.mxu0
  %v1369 = vadd.f32 %v237, %v1368
  %v1370 = vpop.f32.mrf.mxu0
  %1371 = vmatprep.mubr.bf16.mxu0 0
  %1372 = vmatmul.mubr.bf16.gmra.mxu0 %v840
  %v1373 = vpop.f32.mrf.mxu0
  %v1374 = vadd.f32 %v237, %v1373
  %v1375 = vpop.f32.mrf.mxu0
  %v1376 = vpop.f32.mrf.mxu0
  %v1377 = vadd.f32 %v237, %v1376
  %v1378 = vpop.f32.mrf.mxu0
  %1379 = vmatprep.mubr.bf16.mxu0 0
  %1380 = vmatmul.mubr.bf16.gmra.mxu0 %v843
  %v1381 = vpop.f32.mrf.mxu0
  %v1382 = vadd.f32 %v237, %v1381
  %v1383 = vpop.f32.mrf.mxu0
  %v1384 = vpop.f32.mrf.mxu0
  %v1385 = vadd.f32 %v237, %v1384
  %v1386 = vpop.f32.mrf.mxu0
  %1387 = vmatprep.mubr.bf16.mxu0 0
  %1388 = vmatmul.mubr.bf16.gmra.mxu0 %v846
  %v1389 = vpop.f32.mrf.mxu0
  %v1390 = vadd.f32 %v237, %v1389
  %v1391 = vpop.f32.mrf.mxu0
  %v1392 = vpop.f32.mrf.mxu0
  %v1393 = vadd.f32 %v237, %v1392
  %v1394 = vpop.f32.mrf.mxu0
  %1395 = vmatprep.mubr.bf16.mxu0 0
  %1396 = vmatmul.mubr.bf16.gmra.mxu0 %v849
  %v1397 = vpop.f32.mrf.mxu0
  %v1398 = vadd.f32 %v237, %v1397
  %v1399 = vpop.f32.mrf.mxu0
  %v1400 = vpop.f32.mrf.mxu0
  %v1401 = vadd.f32 %v237, %v1400
  %v1402 = vpop.f32.mrf.mxu0
  %1403 = vmatprep.mubr.bf16.mxu0 0
  %1404 = vmatmul.mubr.bf16.gmra.mxu0 %v852
  %v1405 = vpop.f32.mrf.mxu0
  %v1406 = vadd.f32 %v237, %v1405
  %v1407 = vpop.f32.mrf.mxu0
  %v1408 = vpop.f32.mrf.mxu0
  %v1409 = vadd.f32 %v237, %v1408
  %v1410 = vpop.f32.mrf.mxu0
  %1411 = vmatprep.mubr.bf16.mxu0 0
  %1412 = vmatmul.mubr.bf16.gmra.mxu0 %v855
  %v1413 = vpop.f32.mrf.mxu0
  %v1414 = vadd.f32 %v237, %v1413
  %v1415 = vpop.f32.mrf.mxu0
  %v1416 = vpop.f32.mrf.mxu0
  %v1417 = vadd.f32 %v237, %v1416
  %v1418 = vpop.f32.mrf.mxu0
  %1419 = vmatprep.mubr.bf16.mxu0 0
  %1420 = vmatmul.mubr.bf16.gmra.mxu0 %v858
  %v1421 = vpop.f32.mrf.mxu0
  %v1422 = vadd.f32 %v237, %v1421
  %v1423 = vpop.f32.mrf.mxu0
  %v1424 = vpop.f32.mrf.mxu0
  %v1425 = vadd.f32 %v237, %v1424
  %v1426 = vpop.f32.mrf.mxu0
  %1427 = vmatprep.mubr.bf16.mxu0 0
  %1428 = vmatmul.mubr.bf16.gmra.mxu0 %v861
  %v1429 = vpop.f32.mrf.mxu0
  %v1430 = vadd.f32 %v237, %v1429
  %v1431 = vpop.f32.mrf.mxu0
  %v1432 = vpop.f32.mrf.mxu0
  %v1433 = vadd.f32 %v237, %v1432
  %v1434 = vpop.f32.mrf.mxu0
  %1435 = vmatprep.mubr.bf16.mxu0 0
  %1436 = vmatmul.mubr.bf16.gmra.mxu0 %v864
  %v1437 = vpop.f32.mrf.mxu0
  %v1438 = vadd.f32 %v237, %v1437
  %v1439 = vpop.f32.mrf.mxu0
  %v1440 = vpop.f32.mrf.mxu0
  %v1441 = vadd.f32 %v237, %v1440
  %v1442 = vpop.f32.mrf.mxu0
  %1443 = vmatprep.mubr.bf16.mxu0 0
  %1444 = vmatmul.mubr.bf16.gmra.mxu0 %v867
  %v1445 = vpop.f32.mrf.mxu0
  %v1446 = vadd.f32 %v237, %v1445
  %v1447 = vpop.f32.mrf.mxu0
  %v1448 = vpop.f32.mrf.mxu0
  %v1449 = vadd.f32 %v237, %v1448
  %v1450 = vpop.f32.mrf.mxu0
  %1451 = vmatprep.mubr.bf16.mxu0 0
  %1452 = vmatmul.mubr.bf16.gmra.mxu0 %v870
  %v1453 = vpop.f32.mrf.mxu0
  %v1454 = vadd.f32 %v237, %v1453
  %v1455 = vpop.f32.mrf.mxu0
  %v1456 = vpop.f32.mrf.mxu0
  %v1457 = vadd.f32 %v237, %v1456
  %v1458 = vpop.f32.mrf.mxu0
  %1459 = vmatprep.mubr.bf16.mxu0 0
  %1460 = vmatmul.mubr.bf16.gmra.mxu0 %v873
  %v1461 = vpop.f32.mrf.mxu0
  %v1462 = vadd.f32 %v237, %v1461
  %v1463 = vpop.f32.mrf.mxu0
  %v1464 = vpop.f32.mrf.mxu0
  %v1465 = vadd.f32 %v237, %v1464
  %v1466 = vpop.f32.mrf.mxu0
  %1467 = vmatprep.mubr.bf16.mxu0 0
  %1468 = vmatmul.mubr.bf16.gmra.mxu0 %v876
  %v1469 = vpop.f32.mrf.mxu0
  %v1470 = vadd.f32 %v237, %v1469
  %v1471 = vpop.f32.mrf.mxu0
  %v1472 = vpop.f32.mrf.mxu0
  %v1473 = vadd.f32 %v237, %v1472
  %v1474 = vpop.f32.mrf.mxu0
  %1475 = vmatprep.mubr.bf16.mxu0 0
  %1476 = vmatmul.mubr.bf16.gmra.mxu0 %v879
  %v1477 = vpop.f32.mrf.mxu0
  %v1478 = vadd.f32 %v237, %v1477
  %v1479 = vpop.f32.mrf.mxu0
  %v1480 = vpop.f32.mrf.mxu0
  %v1481 = vadd.f32 %v237, %v1480
  %v1482 = vpop.f32.mrf.mxu0
  %1483 = vmatprep.mubr.bf16.mxu0 0
  %1484 = vmatmul.mubr.bf16.gmra.mxu0 %v882
  %v1485 = vpop.f32.mrf.mxu0
  %v1486 = vadd.f32 %v237, %v1485
  %v1487 = vpop.f32.mrf.mxu0
  %v1488 = vpop.f32.mrf.mxu0
  %v1489 = vadd.f32 %v237, %v1488
  %v1490 = vpop.f32.mrf.mxu0
  %1491 = vmatprep.mubr.bf16.mxu0 0
  %1492 = vmatmul.mubr.bf16.gmra.mxu0 %v885
  %v1493 = vpop.f32.mrf.mxu0
  %v1494 = vadd.f32 %v237, %v1493
  %v1495 = vpop.f32.mrf.mxu0
  %v1496 = vpop.f32.mrf.mxu0
  %v1497 = vadd.f32 %v237, %v1496
  %v1498 = vpop.f32.mrf.mxu0
  %1499 = vmatprep.mubr.bf16.mxu0 0
  %1500 = vmatmul.mubr.bf16.gmra.mxu0 %v888
  %v1501 = vpop.f32.mrf.mxu0
  %v1502 = vadd.f32 %v237, %v1501
  %v1503 = vpop.f32.mrf.mxu0
  %v1504 = vpop.f32.mrf.mxu0
  %v1505 = vadd.f32 %v237, %v1504
  %v1506 = vpop.f32.mrf.mxu0
  %1507 = vmatprep.mubr.bf16.mxu0 0
  %1508 = vmatmul.mubr.bf16.gmra.mxu0 %v891
  %v1509 = vpop.f32.mrf.mxu0
  %v1510 = vadd.f32 %v237, %v1509
  %v1511 = vpop.f32.mrf.mxu0
  %v1512 = vpop.f32.mrf.mxu0
  %v1513 = vadd.f32 %v237, %v1512
  %v1514 = vpop.f32.mrf.mxu0
  %1515 = vmatprep.mubr.bf16.mxu0 0
  %1516 = vmatmul.mubr.bf16.gmra.mxu0 %v894
  %v1517 = vpop.f32.mrf.mxu0
  %v1518 = vadd.f32 %v237, %v1517
  %v1519 = vpop.f32.mrf.mxu0
  %v1520 = vpop.f32.mrf.mxu0
  %v1521 = vadd.f32 %v237, %v1520
  %v1522 = vpop.f32.mrf.mxu0
  %1523 = vmatprep.mubr.bf16.mxu0 0
  %1524 = vmatmul.mubr.bf16.gmra.mxu0 %v897
  %v1525 = vpop.f32.mrf.mxu0
  %v1526 = vadd.f32 %v237, %v1525
  %v1527 = vpop.f32.mrf.mxu0
  %v1528 = vpop.f32.mrf.mxu0
  %v1529 = vadd.f32 %v237, %v1528
  %v1530 = vpop.f32.mrf.mxu0
  %1531 = vmatprep.mubr.bf16.mxu0 0
  %1532 = vmatmul.mubr.bf16.gmra.mxu0 %v900
  %v1533 = vpop.f32.mrf.mxu0
  %v1534 = vadd.f32 %v237, %v1533
  %v1535 = vpop.f32.mrf.mxu0
  %v1536 = vpop.f32.mrf.mxu0
  %v1537 = vadd.f32 %v237, %v1536
  %v1538 = vpop.f32.mrf.mxu0
  %1539 = vmatprep.mubr.bf16.mxu0 0
  %1540 = vmatmul.mubr.bf16.gmra.mxu0 %v903
  %v1541 = vpop.f32.mrf.mxu0
  %v1542 = vadd.f32 %v237, %v1541
  %v1543 = vpop.f32.mrf.mxu0
  %v1544 = vpop.f32.mrf.mxu0
  %v1545 = vadd.f32 %v237, %v1544
  %v1546 = vpop.f32.mrf.mxu0
  %1547 = vmatprep.mubr.bf16.mxu0 0
  %1548 = vmatmul.mubr.bf16.gmra.mxu0 %v906
  %v1549 = vpop.f32.mrf.mxu0
  %v1550 = vadd.f32 %v237, %v1549
  %v1551 = vpop.f32.mrf.mxu0
  %v1552 = vpop.f32.mrf.mxu0
  %v1553 = vadd.f32 %v237, %v1552
  %v1554 = vpop.f32.mrf.mxu0
  %1555 = vmatprep.mubr.bf16.mxu0 0
  %1556 = vmatmul.mubr.bf16.gmra.mxu0 %v909
  %v1557 = vpop.f32.mrf.mxu0
  %v1558 = vadd.f32 %v237, %v1557
  %v1559 = vpop.f32.mrf.mxu0
  %v1560 = vpop.f32.mrf.mxu0
  %v1561 = vadd.f32 %v237, %v1560
  %v1562 = vpop.f32.mrf.mxu0
  %1563 = vmatprep.mubr.bf16.mxu0 0
  %1564 = vmatmul.mubr.bf16.gmra.mxu0 %v912
  %v1565 = vpop.f32.mrf.mxu0
  %v1566 = vadd.f32 %v237, %v1565
  %v1567 = vpop.f32.mrf.mxu0
  %v1568 = vpop.f32.mrf.mxu0
  %v1569 = vadd.f32 %v237, %v1568
  %v1570 = vpop.f32.mrf.mxu0
  %1571 = vmatprep.mubr.bf16.mxu0 0
  %1572 = vmatmul.mubr.bf16.gmra.mxu0 %v915
  %v1573 = vpop.f32.mrf.mxu0
  %v1574 = vadd.f32 %v237, %v1573
  %v1575 = vpop.f32.mrf.mxu0
  %v1576 = vpop.f32.mrf.mxu0
  %v1577 = vadd.f32 %v237, %v1576
  %v1578 = vpop.f32.mrf.mxu0
  %1579 = vmatprep.mubr.bf16.mxu0 0
  %1580 = vmatmul.mubr.bf16.gmra.mxu0 %v918
  %v1581 = vpop.f32.mrf.mxu0
  %v1582 = vadd.f32 %v237, %v1581
  %v1583 = vpop.f32.mrf.mxu0
  %v1584 = vpop.f32.mrf.mxu0
  %v1585 = vadd.f32 %v237, %v1584
  %v1586 = vpop.f32.mrf.mxu0
  %1587 = vmatprep.mubr.bf16.mxu0 0
  %1588 = vmatmul.mubr.bf16.gmra.mxu0 %v921
  %v1589 = vpop.f32.mrf.mxu0
  %v1590 = vadd.f32 %v237, %v1589
  %v1591 = vpop.f32.mrf.mxu0
  %v1592 = vpop.f32.mrf.mxu0
  %v1593 = vadd.f32 %v237, %v1592
  %v1594 = vpop.f32.mrf.mxu0
  %1595 = vmatprep.mubr.bf16.mxu0 0
  %1596 = vmatmul.mubr.bf16.gmra.mxu0 %v924
  %v1597 = vpop.f32.mrf.mxu0
  %v1598 = vadd.f32 %v237, %v1597
  %v1599 = vpop.f32.mrf.mxu0
  %v1600 = vpop.f32.mrf.mxu0
  %v1601 = vadd.f32 %v237, %v1600
  %v1602 = vpop.f32.mrf.mxu0
  %1603 = vmatprep.mubr.bf16.mxu0 0
  %1604 = vmatmul.mubr.bf16.gmra.mxu0 %v927
  %v1605 = vpop.f32.mrf.mxu0
  %v1606 = vadd.f32 %v237, %v1605
  %v1607 = vpop.f32.mrf.mxu0
  %v1608 = vpop.f32.mrf.mxu0
  %v1609 = vadd.f32 %v237, %v1608
  %v1610 = vpop.f32.mrf.mxu0
  %1611 = vmatprep.mubr.bf16.mxu0 0
  %1612 = vmatmul.mubr.bf16.gmra.mxu0 %v930
  %v1613 = vpop.f32.mrf.mxu0
  %v1614 = vadd.f32 %v237, %v1613
  %v1615 = vpop.f32.mrf.mxu0
  %v1616 = vpop.f32.mrf.mxu0
  %v1617 = vadd.f32 %v237, %v1616
  %v1618 = vpop.f32.mrf.mxu0
  %1619 = vmatprep.mubr.bf16.mxu0 0
  %1620 = vmatmul.mubr.bf16.gmra.mxu0 %v933
  %v1621 = vpop.f32.mrf.mxu0
  %v1622 = vadd.f32 %v237, %v1621
  %v1623 = vpop.f32.mrf.mxu0
  %v1624 = vpop.f32.mrf.mxu0
  %v1625 = vadd.f32 %v237, %v1624
  %v1626 = vpop.f32.mrf.mxu0
  %1627 = vmatprep.mubr.bf16.mxu0 0
  %1628 = vmatmul.mubr.bf16.gmra.mxu0 %v936
  %v1629 = vpop.f32.mrf.mxu0
  %v1630 = vadd.f32 %v237, %v1629
  %v1631 = vpop.f32.mrf.mxu0
  %v1632 = vpop.f32.mrf.mxu0
  %v1633 = vpop.f32.mrf.mxu0
  %1634 = vmatprep.mubr.bf16.mxu0 0
  %1635 = vmatmul.mubr.bf16.gmra.mxu0 %v939
  %v1636 = vpop.f32.mrf.mxu0
  %v1637 = vpop.f32.mrf.mxu0
  %v1638 = vpop.f32.mrf.mxu0
  %v1639 = vpop.f32.mrf.mxu0
  %1640 = vmatprep.mubr.bf16.mxu0 0
  %1641 = vmatmul.mubr.bf16.gmra.mxu0 %v942
  %v1642 = vpop.f32.mrf.mxu0
  %v1643 = vpop.f32.mrf.mxu0
  %v1644 = vpop.f32.mrf.mxu0
  %v1645 = vpop.f32.mrf.mxu0
  %1646 = vdwg.mxu0
  %v1647 = vmax.f32 %v993, 0.0
  %v1648 = vmax.f32 %v998, 0.0
  %v1649 = vmax.f32 %v1001, 0.0
  %v1650 = vmax.f32 %v1006, 0.0
  %v1651 = vmax.f32 %v1009, 0.0
  %v1652 = vmax.f32 %v1014, 0.0
  %v1653 = vmax.f32 %v1017, 0.0
  %v1654 = vmax.f32 %v1022, 0.0
  %v1655 = vmax.f32 %v1025, 0.0
  %v1656 = vmax.f32 %v1030, 0.0
  %v1657 = vmax.f32 %v1033, 0.0
  %v1658 = vmax.f32 %v1038, 0.0
  %v1659 = vmax.f32 %v1041, 0.0
  %v1660 = vmax.f32 %v1046, 0.0
  %v1661 = vmax.f32 %v1049, 0.0
  %v1662 = vmax.f32 %v1054, 0.0
  %v1663 = vmax.f32 %v1057, 0.0
  %v1664 = vmax.f32 %v1062, 0.0
  %v1665 = vmax.f32 %v1065, 0.0
  %v1666 = vmax.f32 %v1070, 0.0
  %v1667 = vmax.f32 %v1073, 0.0
  %v1668 = vmax.f32 %v1078, 0.0
  %v1669 = vmax.f32 %v1081, 0.0
  %v1670 = vmax.f32 %v1086, 0.0
  %v1671 = vmax.f32 %v1089, 0.0
  %v1672 = vmax.f32 %v1094, 0.0
  %v1673 = vmax.f32 %v1097, 0.0
  %v1674 = vmax.f32 %v1102, 0.0
  %v1675 = vmax.f32 %v1105, 0.0
  %v1676 = vmax.f32 %v1110, 0.0
  %v1677 = vmax.f32 %v1113, 0.0
  %v1678 = vmax.f32 %v1118, 0.0
  %v1679 = vmax.f32 %v1121, 0.0
  %v1680 = vmax.f32 %v1126, 0.0
  %v1681 = vmax.f32 %v1129, 0.0
  %v1682 = vmax.f32 %v1134, 0.0
  %v1683 = vmax.f32 %v1137, 0.0
  %v1684 = vmax.f32 %v1142, 0.0
  %v1685 = vmax.f32 %v1145, 0.0
  %v1686 = vmax.f32 %v1150, 0.0
  %v1687 = vmax.f32 %v1153, 0.0
  %v1688 = vmax.f32 %v1158, 0.0
  %v1689 = vmax.f32 %v1161, 0.0
  %v1690 = vmax.f32 %v1166, 0.0
  %v1691 = vmax.f32 %v1169, 0.0
  %v1692 = vmax.f32 %v1174, 0.0
  %v1693 = vmax.f32 %v1177, 0.0
  %v1694 = vmax.f32 %v1182, 0.0
  %v1695 = vmax.f32 %v1185, 0.0
  %v1696 = vmax.f32 %v1190, 0.0
  %v1697 = vmax.f32 %v1193, 0.0
  %v1698 = vmax.f32 %v1198, 0.0
  %v1699 = vmax.f32 %v1201, 0.0
  %v1700 = vmax.f32 %v1206, 0.0
  %v1701 = vmax.f32 %v1209, 0.0
  %v1702 = vmax.f32 %v1214, 0.0
  %v1703 = vmax.f32 %v1217, 0.0
  %v1704 = vmax.f32 %v1222, 0.0
  %v1705 = vmax.f32 %v1225, 0.0
  %v1706 = vmax.f32 %v1230, 0.0
  %v1707 = vmax.f32 %v1233, 0.0
  %v1708 = vmax.f32 %v1238, 0.0
  %v1709 = vmax.f32 %v1241, 0.0
  %v1710 = vmax.f32 %v1246, 0.0
  %v1711 = vmax.f32 %v1249, 0.0
  %v1712 = vmax.f32 %v1254, 0.0
  %v1713 = vmax.f32 %v1257, 0.0
  %v1714 = vmax.f32 %v1262, 0.0
  %v1715 = vmax.f32 %v1265, 0.0
  %v1716 = vmax.f32 %v1270, 0.0
  %v1717 = vmax.f32 %v1273, 0.0
  %v1718 = vmax.f32 %v1278, 0.0
  %v1719 = vmax.f32 %v1281, 0.0
  %v1720 = vmax.f32 %v1286, 0.0
  %v1721 = vmax.f32 %v1289, 0.0
  %v1722 = vmax.f32 %v1294, 0.0
  %v1723 = vmax.f32 %v1297, 0.0
  %v1724 = vmax.f32 %v1302, 0.0
  %v1725 = vmax.f32 %v1305, 0.0
  %v1726 = vmax.f32 %v1310, 0.0
  %v1727 = vmax.f32 %v1313, 0.0
  %v1728 = vmax.f32 %v1318, 0.0
  %v1729 = vmax.f32 %v1321, 0.0
  %v1730 = vmax.f32 %v1326, 0.0
  %v1731 = vmax.f32 %v1329, 0.0
  %v1732 = vmax.f32 %v1334, 0.0
  %v1733 = vmax.f32 %v1337, 0.0
  %v1734 = vmax.f32 %v1342, 0.0
  %v1735 = vmax.f32 %v1345, 0.0
  %v1736 = vmax.f32 %v1350, 0.0
  %v1737 = vmax.f32 %v1353, 0.0
  %v1738 = vmax.f32 %v1358, 0.0
  %v1739 = vmax.f32 %v1361, 0.0
  %v1740 = vmax.f32 %v1366, 0.0
  %v1741 = vmax.f32 %v1369, 0.0
  %v1742 = vmax.f32 %v1374, 0.0
  %v1743 = vmax.f32 %v1377, 0.0
  %v1744 = vmax.f32 %v1382, 0.0
  %v1745 = vmax.f32 %v1385, 0.0
  %v1746 = vmax.f32 %v1390, 0.0
  %v1747 = vmax.f32 %v1393, 0.0
  %v1748 = vmax.f32 %v1398, 0.0
  %v1749 = vmax.f32 %v1401, 0.0
  %v1750 = vmax.f32 %v1406, 0.0
  %v1751 = vmax.f32 %v1409, 0.0
  %v1752 = vmax.f32 %v1414, 0.0
  %v1753 = vmax.f32 %v1417, 0.0
  %v1754 = vmax.f32 %v1422, 0.0
  %v1755 = vmax.f32 %v1425, 0.0
  %v1756 = vmax.f32 %v1430, 0.0
  %v1757 = vmax.f32 %v1433, 0.0
  %v1758 = vmax.f32 %v1438, 0.0
  %v1759 = vmax.f32 %v1441, 0.0
  %v1760 = vmax.f32 %v1446, 0.0
  %v1761 = vmax.f32 %v1449, 0.0
  %v1762 = vmax.f32 %v1454, 0.0
  %v1763 = vmax.f32 %v1457, 0.0
  %v1764 = vmax.f32 %v1462, 0.0
  %v1765 = vmax.f32 %v1465, 0.0
  %v1766 = vmax.f32 %v1470, 0.0
  %v1767 = vmax.f32 %v1473, 0.0
  %v1768 = vmax.f32 %v1478, 0.0
  %v1769 = vmax.f32 %v1481, 0.0
  %v1770 = vmax.f32 %v1486, 0.0
  %v1771 = vmax.f32 %v1489, 0.0
  %v1772 = vmax.f32 %v1494, 0.0
  %v1773 = vmax.f32 %v1497, 0.0
  %v1774 = vmax.f32 %v1502, 0.0
  %v1775 = vmax.f32 %v1505, 0.0
  %v1776 = vmax.f32 %v1510, 0.0
  %v1777 = vmax.f32 %v1513, 0.0
  %v1778 = vmax.f32 %v1518, 0.0
  %v1779 = vmax.f32 %v1521, 0.0
  %v1780 = vmax.f32 %v1526, 0.0
  %v1781 = vmax.f32 %v1529, 0.0
  %v1782 = vmax.f32 %v1534, 0.0
  %v1783 = vmax.f32 %v1537, 0.0
  %v1784 = vmax.f32 %v1542, 0.0
  %v1785 = vmax.f32 %v1545, 0.0
  %v1786 = vmax.f32 %v1550, 0.0
  %v1787 = vmax.f32 %v1553, 0.0
  %v1788 = vmax.f32 %v1558, 0.0
  %v1789 = vmax.f32 %v1561, 0.0
  %v1790 = vmax.f32 %v1566, 0.0
  %v1791 = vmax.f32 %v1569, 0.0
  %v1792 = vmax.f32 %v1574, 0.0
  %v1793 = vmax.f32 %v1577, 0.0
  %v1794 = vmax.f32 %v1582, 0.0
  %v1795 = vmax.f32 %v1585, 0.0
  %v1796 = vmax.f32 %v1590, 0.0
  %v1797 = vmax.f32 %v1593, 0.0
  %v1798 = vmax.f32 %v1598, 0.0
  %v1799 = vmax.f32 %v1601, 0.0
  %v1800 = vmax.f32 %v1606, 0.0
  %v1801 = vmax.f32 %v1609, 0.0
  %v1802 = vmax.f32 %v1614, 0.0
  %v1803 = vmax.f32 %v1617, 0.0
  %v1804 = vmax.f32 %v1622, 0.0
  %v1805 = vmax.f32 %v1625, 0.0
  %v1806 = vmax.f32 %v1630, 0.0
  %v1807 = vmax.f32 %v1647, %v1652
  %v1808 = vmax.f32 %v1648, %v1653
  %v1809 = vmax.f32 %v1649, %v1654
  %v1810 = vmax.f32 %v1650, %v1655
  %v1811 = vmax.f32 %v1651, %v1656
  %v1812 = vmax.f32 %v1657, %v1662
  %v1813 = vmax.f32 %v1658, %v1663
  %v1814 = vmax.f32 %v1659, %v1664
  %v1815 = vmax.f32 %v1660, %v1665
  %v1816 = vmax.f32 %v1661, %v1666
  %v1817 = vmax.f32 %v1667, %v1672
  %v1818 = vmax.f32 %v1668, %v1673
  %v1819 = vmax.f32 %v1669, %v1674
  %v1820 = vmax.f32 %v1670, %v1675
  %v1821 = vmax.f32 %v1671, %v1676
  %v1822 = vmax.f32 %v1677, %v1682
  %v1823 = vmax.f32 %v1678, %v1683
  %v1824 = vmax.f32 %v1679, %v1684
  %v1825 = vmax.f32 %v1680, %v1685
  %v1826 = vmax.f32 %v1681, %v1686
  %v1827 = vmax.f32 %v1687, %v1692
  %v1828 = vmax.f32 %v1688, %v1693
  %v1829 = vmax.f32 %v1689, %v1694
  %v1830 = vmax.f32 %v1690, %v1695
  %v1831 = vmax.f32 %v1691, %v1696
  %v1832 = vmax.f32 %v1697, %v1702
  %v1833 = vmax.f32 %v1698, %v1703
  %v1834 = vmax.f32 %v1699, %v1704
  %v1835 = vmax.f32 %v1700, %v1705
  %v1836 = vmax.f32 %v1701, %v1706
  %v1837 = vmax.f32 %v1707, %v1712
  %v1838 = vmax.f32 %v1708, %v1713
  %v1839 = vmax.f32 %v1709, %v1714
  %v1840 = vmax.f32 %v1710, %v1715
  %v1841 = vmax.f32 %v1711, %v1716
  %v1842 = vmax.f32 %v1717, %v1722
  %v1843 = vmax.f32 %v1718, %v1723
  %v1844 = vmax.f32 %v1719, %v1724
  %v1845 = vmax.f32 %v1720, %v1725
  %v1846 = vmax.f32 %v1721, %v1726
  %v1847 = vmax.f32 %v1727, %v1732
  %v1848 = vmax.f32 %v1728, %v1733
  %v1849 = vmax.f32 %v1729, %v1734
  %v1850 = vmax.f32 %v1730, %v1735
  %v1851 = vmax.f32 %v1731, %v1736
  %v1852 = vmax.f32 %v1737, %v1742
  %v1853 = vmax.f32 %v1738, %v1743
  %v1854 = vmax.f32 %v1739, %v1744
  %v1855 = vmax.f32 %v1740, %v1745
  %v1856 = vmax.f32 %v1741, %v1746
  %v1857 = vmax.f32 %v1747, %v1752
  %v1858 = vmax.f32 %v1748, %v1753
  %v1859 = vmax.f32 %v1749, %v1754
  %v1860 = vmax.f32 %v1750, %v1755
  %v1861 = vmax.f32 %v1751, %v1756
  %v1862 = vmax.f32 %v1757, %v1762
  %v1863 = vmax.f32 %v1758, %v1763
  %v1864 = vmax.f32 %v1759, %v1764
  %v1865 = vmax.f32 %v1760, %v1765
  %v1866 = vmax.f32 %v1761, %v1766
  %v1867 = vmax.f32 %v1767, %v1772
  %v1868 = vmax.f32 %v1768, %v1773
  %v1869 = vmax.f32 %v1769, %v1774
  %v1870 = vmax.f32 %v1770, %v1775
  %v1871 = vmax.f32 %v1771, %v1776
  %v1872 = vmax.f32 %v1777, %v1782
  %v1873 = vmax.f32 %v1778, %v1783
  %v1874 = vmax.f32 %v1779, %v1784
  %v1875 = vmax.f32 %v1780, %v1785
  %v1876 = vmax.f32 %v1781, %v1786
  %v1877 = vmax.f32 %v1787, %v1792
  %v1878 = vmax.f32 %v1788, %v1793
  %v1879 = vmax.f32 %v1789, %v1794
  %v1880 = vmax.f32 %v1790, %v1795
  %v1881 = vmax.f32 %v1791, %v1796
  %v1882 = vmax.f32 %v1797, %v1802
  %v1883 = vmax.f32 %v1798, %v1803
  %v1884 = vmax.f32 %v1799, %v1804
  %v1885 = vmax.f32 %v1800, %v1805
  %v1886 = vmax.f32 %v1801, %v1806
  %vm1967 = vcmask 1046528
  %v1968 = vrot.slane %v1807, 1
  %v1969 = vrot.slane %v1808, 1
  %v1970 = vsel %vm1967, %v1968, %v1969
  %v1971 = vrot.slane %v1809, 1
  %v1972 = vsel %vm1967, %v1969, %v1971
  %v1973 = vrot.slane %v1810, 1
  %v1974 = vsel %vm1967, %v1971, %v1973
  %v1975 = vrot.slane %v1811, 1
  %v1976 = vsel %vm1967, %v1973, %v1975
  %v1977 = vrot.slane %v1812, 1
  %v1978 = vrot.slane %v1813, 1
  %v1979 = vsel %vm1967, %v1977, %v1978
  %v1980 = vrot.slane %v1814, 1
  %v1981 = vsel %vm1967, %v1978, %v1980
  %v1982 = vrot.slane %v1815, 1
  %v1983 = vsel %vm1967, %v1980, %v1982
  %v1984 = vrot.slane %v1816, 1
  %v1985 = vsel %vm1967, %v1982, %v1984
  %v1986 = vrot.slane %v1817, 1
  %v1987 = vrot.slane %v1818, 1
  %v1988 = vsel %vm1967, %v1986, %v1987
  %v1989 = vrot.slane %v1819, 1
  %v1990 = vsel %vm1967, %v1987, %v1989
  %v1991 = vrot.slane %v1820, 1
  %v1992 = vsel %vm1967, %v1989, %v1991
  %v1993 = vrot.slane %v1821, 1
  %v1994 = vsel %vm1967, %v1991, %v1993
  %v1995 = vrot.slane %v1822, 1
  %v1996 = vrot.slane %v1823, 1
  %v1997 = vsel %vm1967, %v1995, %v1996
  %v1998 = vrot.slane %v1824, 1
  %v1999 = vsel %vm1967, %v1996, %v1998
  %v2000 = vrot.slane %v1825, 1
  %v2001 = vsel %vm1967, %v1998, %v2000
  %v2002 = vrot.slane %v1826, 1
  %v2003 = vsel %vm1967, %v2000, %v2002
  %v2004 = vrot.slane %v1827, 1
  %v2005 = vrot.slane %v1828, 1
  %v2006 = vsel %vm1967, %v2004, %v2005
  %v2007 = vrot.slane %v1829, 1
  %v2008 = vsel %vm1967, %v2005, %v2007
  %v2009 = vrot.slane %v1830, 1
  %v2010 = vsel %vm1967, %v2007, %v2009
  %v2011 = vrot.slane %v1831, 1
  %v2012 = vsel %vm1967, %v2009, %v2011
  %v2013 = vrot.slane %v1832, 1
  %v2014 = vrot.slane %v1833, 1
  %v2015 = vsel %vm1967, %v2013, %v2014
  %v2016 = vrot.slane %v1834, 1
  %v2017 = vsel %vm1967, %v2014, %v2016
  %v2018 = vrot.slane %v1835, 1
  %v2019 = vsel %vm1967, %v2016, %v2018
  %v2020 = vrot.slane %v1836, 1
  %v2021 = vsel %vm1967, %v2018, %v2020
  %v2022 = vrot.slane %v1837, 1
  %v2023 = vrot.slane %v1838, 1
  %v2024 = vsel %vm1967, %v2022, %v2023
  %v2025 = vrot.slane %v1839, 1
  %v2026 = vsel %vm1967, %v2023, %v2025
  %v2027 = vrot.slane %v1840, 1
  %v2028 = vsel %vm1967, %v2025, %v2027
  %v2029 = vrot.slane %v1841, 1
  %v2030 = vsel %vm1967, %v2027, %v2029
  %v2031 = vrot.slane %v1842, 1
  %v2032 = vrot.slane %v1843, 1
  %v2033 = vsel %vm1967, %v2031, %v2032
  %v2034 = vrot.slane %v1844, 1
  %v2035 = vsel %vm1967, %v2032, %v2034
  %v2036 = vrot.slane %v1845, 1
  %v2037 = vsel %vm1967, %v2034, %v2036
  %v2038 = vrot.slane %v1846, 1
  %v2039 = vsel %vm1967, %v2036, %v2038
  %v2040 = vrot.slane %v1847, 1
  %v2041 = vrot.slane %v1848, 1
  %v2042 = vsel %vm1967, %v2040, %v2041
  %v2043 = vrot.slane %v1849, 1
  %v2044 = vsel %vm1967, %v2041, %v2043
  %v2045 = vrot.slane %v1850, 1
  %v2046 = vsel %vm1967, %v2043, %v2045
  %v2047 = vrot.slane %v1851, 1
  %v2048 = vsel %vm1967, %v2045, %v2047
  %v2049 = vrot.slane %v1852, 1
  %v2050 = vrot.slane %v1853, 1
  %v2051 = vsel %vm1967, %v2049, %v2050
  %v2052 = vrot.slane %v1854, 1
  %v2053 = vsel %vm1967, %v2050, %v2052
  %v2054 = vrot.slane %v1855, 1
  %v2055 = vsel %vm1967, %v2052, %v2054
  %v2056 = vrot.slane %v1856, 1
  %v2057 = vsel %vm1967, %v2054, %v2056
  %v2058 = vrot.slane %v1857, 1
  %v2059 = vrot.slane %v1858, 1
  %v2060 = vsel %vm1967, %v2058, %v2059
  %v2061 = vrot.slane %v1859, 1
  %v2062 = vsel %vm1967, %v2059, %v2061
  %v2063 = vrot.slane %v1860, 1
  %v2064 = vsel %vm1967, %v2061, %v2063
  %v2065 = vrot.slane %v1861, 1
  %v2066 = vsel %vm1967, %v2063, %v2065
  %v2067 = vrot.slane %v1862, 1
  %v2068 = vrot.slane %v1863, 1
  %v2069 = vsel %vm1967, %v2067, %v2068
  %v2070 = vrot.slane %v1864, 1
  %v2071 = vsel %vm1967, %v2068, %v2070
  %v2072 = vrot.slane %v1865, 1
  %v2073 = vsel %vm1967, %v2070, %v2072
  %v2074 = vrot.slane %v1866, 1
  %v2075 = vsel %vm1967, %v2072, %v2074
  %v2076 = vrot.slane %v1867, 1
  %v2077 = vrot.slane %v1868, 1
  %v2078 = vsel %vm1967, %v2076, %v2077
  %v2079 = vrot.slane %v1869, 1
  %v2080 = vsel %vm1967, %v2077, %v2079
  %v2081 = vrot.slane %v1870, 1
  %v2082 = vsel %vm1967, %v2079, %v2081
  %v2083 = vrot.slane %v1871, 1
  %v2084 = vsel %vm1967, %v2081, %v2083
  %v2085 = vrot.slane %v1872, 1
  %v2086 = vrot.slane %v1873, 1
  %v2087 = vsel %vm1967, %v2085, %v2086
  %v2088 = vrot.slane %v1874, 1
  %v2089 = vsel %vm1967, %v2086, %v2088
  %v2090 = vrot.slane %v1875, 1
  %v2091 = vsel %vm1967, %v2088, %v2090
  %v2092 = vrot.slane %v1876, 1
  %v2093 = vsel %vm1967, %v2090, %v2092
  %v2094 = vrot.slane %v1877, 1
  %v2095 = vrot.slane %v1878, 1
  %v2096 = vsel %vm1967, %v2094, %v2095
  %v2097 = vrot.slane %v1879, 1
  %v2098 = vsel %vm1967, %v2095, %v2097
  %v2099 = vrot.slane %v1880, 1
  %v2100 = vsel %vm1967, %v2097, %v2099
  %v2101 = vrot.slane %v1881, 1
  %v2102 = vsel %vm1967, %v2099, %v2101
  %v2103 = vrot.slane %v1882, 1
  %v2104 = vrot.slane %v1883, 1
  %v2105 = vsel %vm1967, %v2103, %v2104
  %v2106 = vrot.slane %v1884, 1
  %v2107 = vsel %vm1967, %v2104, %v2106
  %v2108 = vrot.slane %v1885, 1
  %v2109 = vsel %vm1967, %v2106, %v2108
  %v2110 = vrot.slane %v1886, 1
  %v2111 = vsel %vm1967, %v2108, %v2110
  %v2192 = vmax.f32 %v1807, %v1970
  %v2193 = vmax.f32 %v1808, %v1972
  %v2194 = vmax.f32 %v1809, %v1974
  %v2195 = vmax.f32 %v1810, %v1976
  %v2196 = vmax.f32 %v1811, %v1975
  %v2197 = vmax.f32 %v1812, %v1979
  %v2198 = vmax.f32 %v1813, %v1981
  %v2199 = vmax.f32 %v1814, %v1983
  %v2200 = vmax.f32 %v1815, %v1985
  %v2201 = vmax.f32 %v1816, %v1984
  %v2202 = vmax.f32 %v1817, %v1988
  %v2203 = vmax.f32 %v1818, %v1990
  %v2204 = vmax.f32 %v1819, %v1992
  %v2205 = vmax.f32 %v1820, %v1994
  %v2206 = vmax.f32 %v1821, %v1993
  %v2207 = vmax.f32 %v1822, %v1997
  %v2208 = vmax.f32 %v1823, %v1999
  %v2209 = vmax.f32 %v1824, %v2001
  %v2210 = vmax.f32 %v1825, %v2003
  %v2211 = vmax.f32 %v1826, %v2002
  %v2212 = vmax.f32 %v1827, %v2006
  %v2213 = vmax.f32 %v1828, %v2008
  %v2214 = vmax.f32 %v1829, %v2010
  %v2215 = vmax.f32 %v1830, %v2012
  %v2216 = vmax.f32 %v1831, %v2011
  %v2217 = vmax.f32 %v1832, %v2015
  %v2218 = vmax.f32 %v1833, %v2017
  %v2219 = vmax.f32 %v1834, %v2019
  %v2220 = vmax.f32 %v1835, %v2021
  %v2221 = vmax.f32 %v1836, %v2020
  %v2222 = vmax.f32 %v1837, %v2024
  %v2223 = vmax.f32 %v1838, %v2026
  %v2224 = vmax.f32 %v1839, %v2028
  %v2225 = vmax.f32 %v1840, %v2030
  %v2226 = vmax.f32 %v1841, %v2029
  %v2227 = vmax.f32 %v1842, %v2033
  %v2228 = vmax.f32 %v1843, %v2035
  %v2229 = vmax.f32 %v1844, %v2037
  %v2230 = vmax.f32 %v1845, %v2039
  %v2231 = vmax.f32 %v1846, %v2038
  %v2232 = vmax.f32 %v1847, %v2042
  %v2233 = vmax.f32 %v1848, %v2044
  %v2234 = vmax.f32 %v1849, %v2046
  %v2235 = vmax.f32 %v1850, %v2048
  %v2236 = vmax.f32 %v1851, %v2047
  %v2237 = vmax.f32 %v1852, %v2051
  %v2238 = vmax.f32 %v1853, %v2053
  %v2239 = vmax.f32 %v1854, %v2055
  %v2240 = vmax.f32 %v1855, %v2057
  %v2241 = vmax.f32 %v1856, %v2056
  %v2242 = vmax.f32 %v1857, %v2060
  %v2243 = vmax.f32 %v1858, %v2062
  %v2244 = vmax.f32 %v1859, %v2064
  %v2245 = vmax.f32 %v1860, %v2066
  %v2246 = vmax.f32 %v1861, %v2065
  %v2247 = vmax.f32 %v1862, %v2069
  %v2248 = vmax.f32 %v1863, %v2071
  %v2249 = vmax.f32 %v1864, %v2073
  %v2250 = vmax.f32 %v1865, %v2075
  %v2251 = vmax.f32 %v1866, %v2074
  %v2252 = vmax.f32 %v1867, %v2078
  %v2253 = vmax.f32 %v1868, %v2080
  %v2254 = vmax.f32 %v1869, %v2082
  %v2255 = vmax.f32 %v1870, %v2084
  %v2256 = vmax.f32 %v1871, %v2083
  %v2257 = vmax.f32 %v1872, %v2087
  %v2258 = vmax.f32 %v1873, %v2089
  %v2259 = vmax.f32 %v1874, %v2091
  %v2260 = vmax.f32 %v1875, %v2093
  %v2261 = vmax.f32 %v1876, %v2092
  %v2262 = vmax.f32 %v1877, %v2096
  %v2263 = vmax.f32 %v1878, %v2098
  %v2264 = vmax.f32 %v1879, %v2100
  %v2265 = vmax.f32 %v1880, %v2102
  %v2266 = vmax.f32 %v1881, %v2101
  %v2267 = vmax.f32 %v1882, %v2105
  %v2268 = vmax.f32 %v1883, %v2107
  %v2269 = vmax.f32 %v1884, %v2109
  %v2270 = vmax.f32 %v1885, %v2111
  %v2271 = vmax.f32 %v1886, %v2110
  %v2352 = vrot.slane %v2192, 1
  %v2353 = vrot.slane %v2193, 1
  %v2354 = vsel %vm1967, %v2352, %v2353
  %v2355 = vrot.slane %v2194, 1
  %v2356 = vsel %vm1967, %v2353, %v2355
  %v2357 = vrot.slane %v2195, 1
  %v2358 = vsel %vm1967, %v2355, %v2357
  %v2359 = vrot.slane %v2196, 1
  %v2360 = vsel %vm1967, %v2357, %v2359
  %v2361 = vrot.slane %v2197, 1
  %v2362 = vrot.slane %v2198, 1
  %v2363 = vsel %vm1967, %v2361, %v2362
  %v2364 = vrot.slane %v2199, 1
  %v2365 = vsel %vm1967, %v2362, %v2364
  %v2366 = vrot.slane %v2200, 1
  %v2367 = vsel %vm1967, %v2364, %v2366
  %v2368 = vrot.slane %v2201, 1
  %v2369 = vsel %vm1967, %v2366, %v2368
  %v2370 = vrot.slane %v2202, 1
  %v2371 = vrot.slane %v2203, 1
  %v2372 = vsel %vm1967, %v2370, %v2371
  %v2373 = vrot.slane %v2204, 1
  %v2374 = vsel %vm1967, %v2371, %v2373
  %v2375 = vrot.slane %v2205, 1
  %v2376 = vsel %vm1967, %v2373, %v2375
  %v2377 = vrot.slane %v2206, 1
  %v2378 = vsel %vm1967, %v2375, %v2377
  %v2379 = vrot.slane %v2207, 1
  %v2380 = vrot.slane %v2208, 1
  %v2381 = vsel %vm1967, %v2379, %v2380
  %v2382 = vrot.slane %v2209, 1
  %v2383 = vsel %vm1967, %v2380, %v2382
  %v2384 = vrot.slane %v2210, 1
  %v2385 = vsel %vm1967, %v2382, %v2384
  %v2386 = vrot.slane %v2211, 1
  %v2387 = vsel %vm1967, %v2384, %v2386
  %v2388 = vrot.slane %v2212, 1
  %v2389 = vrot.slane %v2213, 1
  %v2390 = vsel %vm1967, %v2388, %v2389
  %v2391 = vrot.slane %v2214, 1
  %v2392 = vsel %vm1967, %v2389, %v2391
  %v2393 = vrot.slane %v2215, 1
  %v2394 = vsel %vm1967, %v2391, %v2393
  %v2395 = vrot.slane %v2216, 1
  %v2396 = vsel %vm1967, %v2393, %v2395
  %v2397 = vrot.slane %v2217, 1
  %v2398 = vrot.slane %v2218, 1
  %v2399 = vsel %vm1967, %v2397, %v2398
  %v2400 = vrot.slane %v2219, 1
  %v2401 = vsel %vm1967, %v2398, %v2400
  %v2402 = vrot.slane %v2220, 1
  %v2403 = vsel %vm1967, %v2400, %v2402
  %v2404 = vrot.slane %v2221, 1
  %v2405 = vsel %vm1967, %v2402, %v2404
  %v2406 = vrot.slane %v2222, 1
  %v2407 = vrot.slane %v2223, 1
  %v2408 = vsel %vm1967, %v2406, %v2407
  %v2409 = vrot.slane %v2224, 1
  %v2410 = vsel %vm1967, %v2407, %v2409
  %v2411 = vrot.slane %v2225, 1
  %v2412 = vsel %vm1967, %v2409, %v2411
  %v2413 = vrot.slane %v2226, 1
  %v2414 = vsel %vm1967, %v2411, %v2413
  %v2415 = vrot.slane %v2227, 1
  %v2416 = vrot.slane %v2228, 1
  %v2417 = vsel %vm1967, %v2415, %v2416
  %v2418 = vrot.slane %v2229, 1
  %v2419 = vsel %vm1967, %v2416, %v2418
  %v2420 = vrot.slane %v2230, 1
  %v2421 = vsel %vm1967, %v2418, %v2420
  %v2422 = vrot.slane %v2231, 1
  %v2423 = vsel %vm1967, %v2420, %v2422
  %v2424 = vrot.slane %v2232, 1
  %v2425 = vrot.slane %v2233, 1
  %v2426 = vsel %vm1967, %v2424, %v2425
  %v2427 = vrot.slane %v2234, 1
  %v2428 = vsel %vm1967, %v2425, %v2427
  %v2429 = vrot.slane %v2235, 1
  %v2430 = vsel %vm1967, %v2427, %v2429
  %v2431 = vrot.slane %v2236, 1
  %v2432 = vsel %vm1967, %v2429, %v2431
  %v2433 = vrot.slane %v2237, 1
  %v2434 = vrot.slane %v2238, 1
  %v2435 = vsel %vm1967, %v2433, %v2434
  %v2436 = vrot.slane %v2239, 1
  %v2437 = vsel %vm1967, %v2434, %v2436
  %v2438 = vrot.slane %v2240, 1
  %v2439 = vsel %vm1967, %v2436, %v2438
  %v2440 = vrot.slane %v2241, 1
  %v2441 = vsel %vm1967, %v2438, %v2440
  %v2442 = vrot.slane %v2242, 1
  %v2443 = vrot.slane %v2243, 1
  %v2444 = vsel %vm1967, %v2442, %v2443
  %v2445 = vrot.slane %v2244, 1
  %v2446 = vsel %vm1967, %v2443, %v2445
  %v2447 = vrot.slane %v2245, 1
  %v2448 = vsel %vm1967, %v2445, %v2447
  %v2449 = vrot.slane %v2246, 1
  %v2450 = vsel %vm1967, %v2447, %v2449
  %v2451 = vrot.slane %v2247, 1
  %v2452 = vrot.slane %v2248, 1
  %v2453 = vsel %vm1967, %v2451, %v2452
  %v2454 = vrot.slane %v2249, 1
  %v2455 = vsel %vm1967, %v2452, %v2454
  %v2456 = vrot.slane %v2250, 1
  %v2457 = vsel %vm1967, %v2454, %v2456
  %v2458 = vrot.slane %v2251, 1
  %v2459 = vsel %vm1967, %v2456, %v2458
  %v2460 = vrot.slane %v2252, 1
  %v2461 = vrot.slane %v2253, 1
  %v2462 = vsel %vm1967, %v2460, %v2461
  %v2463 = vrot.slane %v2254, 1
  %v2464 = vsel %vm1967, %v2461, %v2463
  %v2465 = vrot.slane %v2255, 1
  %v2466 = vsel %vm1967, %v2463, %v2465
  %v2467 = vrot.slane %v2256, 1
  %v2468 = vsel %vm1967, %v2465, %v2467
  %v2469 = vrot.slane %v2257, 1
  %v2470 = vrot.slane %v2258, 1
  %v2471 = vsel %vm1967, %v2469, %v2470
  %v2472 = vrot.slane %v2259, 1
  %v2473 = vsel %vm1967, %v2470, %v2472
  %v2474 = vrot.slane %v2260, 1
  %v2475 = vsel %vm1967, %v2472, %v2474
  %v2476 = vrot.slane %v2261, 1
  %v2477 = vsel %vm1967, %v2474, %v2476
  %v2478 = vrot.slane %v2262, 1
  %v2479 = vrot.slane %v2263, 1
  %v2480 = vsel %vm1967, %v2478, %v2479
  %v2481 = vrot.slane %v2264, 1
  %v2482 = vsel %vm1967, %v2479, %v2481
  %v2483 = vrot.slane %v2265, 1
  %v2484 = vsel %vm1967, %v2481, %v2483
  %v2485 = vrot.slane %v2266, 1
  %v2486 = vsel %vm1967, %v2483, %v2485
  %v2487 = vrot.slane %v2267, 1
  %v2488 = vrot.slane %v2268, 1
  %v2489 = vsel %vm1967, %v2487, %v2488
  %v2490 = vrot.slane %v2269, 1
  %v2491 = vsel %vm1967, %v2488, %v2490
  %v2492 = vrot.slane %v2270, 1
  %v2493 = vsel %vm1967, %v2490, %v2492
  %v2494 = vrot.slane %v2271, 1
  %v2495 = vsel %vm1967, %v2492, %v2494
  %v2560 = vld [vmem:[%s3] sm:$0xff]
  %v2561 = vld [vmem:[%s3 + $0x8] sm:$0xff]
  %v2562 = vld [vmem:[%s3 + $0x10] sm:$0xff]
  %v2563 = vld [vmem:[%s3 + $0x18] sm:$0xff]
  %v2564 = vld [vmem:[%s3 + $0x20] sm:$0xff]
  %v2565 = vld [vmem:[%s3 + $0x28] sm:$0xff]
  %v2566 = vld [vmem:[%s3 + $0x30] sm:$0xff]
  %v2567 = vld [vmem:[%s3 + $0x38] sm:$0xff]
  %v2568 = vld [vmem:[%s3 + $0x40] sm:$0xff]
  %v2569 = vld [vmem:[%s3 + $0x48] sm:$0xff]
  %v2570 = vld [vmem:[%s3 + $0x50] sm:$0xff]
  %v2571 = vld [vmem:[%s3 + $0x58] sm:$0xff]
  %v2572 = vld [vmem:[%s3 + $0x60] sm:$0xff]
  %v2573 = vld [vmem:[%s3 + $0x68] sm:$0xff]
  %v2574 = vld [vmem:[%s3 + $0x70] sm:$0xff]
  %v2575 = vld [vmem:[%s3 + $0x78] sm:$0xff]
  %v2576 = vld [vmem:[%s3 + $0x80] sm:$0xff]
  %v2577 = vld [vmem:[%s3 + $0x88] sm:$0xff]
  %v2578 = vld [vmem:[%s3 + $0x90] sm:$0xff]
  %v2579 = vld [vmem:[%s3 + $0x98] sm:$0xff]
  %v2580 = vld [vmem:[%s3 + $0xa0] sm:$0xff]
  %v2581 = vld [vmem:[%s3 + $0xa8] sm:$0xff]
  %v2582 = vld [vmem:[%s3 + $0xb0] sm:$0xff]
  %v2583 = vld [vmem:[%s3 + $0xb8] sm:$0xff]
  %v2584 = vld [vmem:[%s3 + $0xc0] sm:$0xff]
  %v2585 = vld [vmem:[%s3 + $0xc8] sm:$0xff]
  %v2586 = vld [vmem:[%s3 + $0xd0] sm:$0xff]
  %v2587 = vld [vmem:[%s3 + $0xd8] sm:$0xff]
  %v2588 = vld [vmem:[%s3 + $0xe0] sm:$0xff]
  %v2589 = vld [vmem:[%s3 + $0xe8] sm:$0xff]
  %v2590 = vld [vmem:[%s3 + $0xf0] sm:$0xff]
  %v2591 = vld [vmem:[%s3 + $0xf8] sm:$0xff]
  %v2592 = vld [vmem:[%s3 + $0x100] sm:$0xff]
  %v2593 = vld [vmem:[%s3 + $0x108] sm:$0xff]
  %v2594 = vld [vmem:[%s3 + $0x110] sm:$0xff]
  %v2595 = vld [vmem:[%s3 + $0x118] sm:$0xff]
  %v2596 = vld [vmem:[%s3 + $0x120] sm:$0xff]
  %v2597 = vld [vmem:[%s3 + $0x128] sm:$0xff]
  %v2598 = vld [vmem:[%s3 + $0x130] sm:$0xff]
  %v2599 = vld [vmem:[%s3 + $0x138] sm:$0xff]
  %v2600 = vld [vmem:[%s3 + $0x140] sm:$0xff]
  %v2601 = vld [vmem:[%s3 + $0x148] sm:$0xff]
  %v2602 = vld [vmem:[%s3 + $0x150] sm:$0xff]
  %v2603 = vld [vmem:[%s3 + $0x158] sm:$0xff]
  %v2604 = vld [vmem:[%s3 + $0x160] sm:$0xff]
  %v2605 = vld [vmem:[%s3 + $0x168] sm:$0xff]
  %v2606 = vld [vmem:[%s3 + $0x170] sm:$0xff]
  %v2607 = vld [vmem:[%s3 + $0x178] sm:$0xff]
  %v2608 = vld [vmem:[%s3 + $0x180] sm:$0xff]
  %v2609 = vld [vmem:[%s3 + $0x188] sm:$0xff]
  %v2610 = vld [vmem:[%s3 + $0x190] sm:$0xff]
  %v2611 = vld [vmem:[%s3 + $0x198] sm:$0xff]
  %v2612 = vld [vmem:[%s3 + $0x1a0] sm:$0xff]
  %v2613 = vld [vmem:[%s3 + $0x1a8] sm:$0xff]
  %v2614 = vld [vmem:[%s3 + $0x1b0] sm:$0xff]
  %v2615 = vld [vmem:[%s3 + $0x1b8] sm:$0xff]
  %v2616 = vld [vmem:[%s3 + $0x1c0] sm:$0xff]
  %v2617 = vld [vmem:[%s3 + $0x1c8] sm:$0xff]
  %v2618 = vld [vmem:[%s3 + $0x1d0] sm:$0xff]
  %v2619 = vld [vmem:[%s3 + $0x1d8] sm:$0xff]
  %v2620 = vld [vmem:[%s3 + $0x1e0] sm:$0xff]
  %v2621 = vld [vmem:[%s3 + $0x1e8] sm:$0xff]
  %v2622 = vld [vmem:[%s3 + $0x1f0] sm:$0xff]
  %v2623 = vld [vmem:[%s3 + $0x1f8] sm:$0xff]
  %v2624 = vld [vmem:[%s3 + $0x200] sm:$0xff]
  %v2625 = vld [vmem:[%s3 + $0x208] sm:$0xff]
  %v2626 = vld [vmem:[%s3 + $0x210] sm:$0xff]
  %v2627 = vld [vmem:[%s3 + $0x218] sm:$0xff]
  %v2628 = vld [vmem:[%s3 + $0x220] sm:$0xff]
  %v2629 = vld [vmem:[%s3 + $0x228] sm:$0xff]
  %v2630 = vld [vmem:[%s3 + $0x230] sm:$0xff]
  %v2631 = vld [vmem:[%s3 + $0x238] sm:$0xff]
  %v2632 = vld [vmem:[%s3 + $0x240] sm:$0xff]
  %v2633 = vld [vmem:[%s3 + $0x248] sm:$0xff]
  %v2634 = vld [vmem:[%s3 + $0x250] sm:$0xff]
  %v2635 = vld [vmem:[%s3 + $0x258] sm:$0xff]
  %v2636 = vld [vmem:[%s3 + $0x260] sm:$0xff]
  %v2637 = vld [vmem:[%s3 + $0x268] sm:$0xff]
  %v2638 = vld [vmem:[%s3 + $0x270] sm:$0xff]
  %v2639 = vld [vmem:[%s3 + $0x278] sm:$0xff]
  %v2640 = vld [vmem:[%s3 + $0x280] sm:$0xff]
  %v2641 = vld [vmem:[%s3 + $0x288] sm:$0xff]
  %v2642 = vld [vmem:[%s3 + $0x290] sm:$0xff]
  %v2643 = vld [vmem:[%s3 + $0x298] sm:$0xff]
  %v2644 = vld [vmem:[%s3 + $0x2a0] sm:$0xff]
  %v2645 = vld [vmem:[%s3 + $0x2a8] sm:$0xff]
  %v2646 = vld [vmem:[%s3 + $0x2b0] sm:$0xff]
  %v2647 = vld [vmem:[%s3 + $0x2b8] sm:$0xff]
  %v2648 = vld [vmem:[%s3 + $0x2c0] sm:$0xff]
  %v2649 = vld [vmem:[%s3 + $0x2c8] sm:$0xff]
  %v2650 = vld [vmem:[%s3 + $0x2d0] sm:$0xff]
  %v2651 = vld [vmem:[%s3 + $0x2d8] sm:$0xff]
  %v2652 = vld [vmem:[%s3 + $0x2e0] sm:$0xff]
  %v2653 = vld [vmem:[%s3 + $0x2e8] sm:$0xff]
  %v2654 = vld [vmem:[%s3 + $0x2f0] sm:$0xff]
  %v2655 = vld [vmem:[%s3 + $0x2f8] sm:$0xff]
  %v2656 = vld [vmem:[%s3 + $0x300] sm:$0xff]
  %v2657 = vld [vmem:[%s3 + $0x308] sm:$0xff]
  %v2658 = vld [vmem:[%s3 + $0x310] sm:$0xff]
  %v2659 = vld [vmem:[%s3 + $0x318] sm:$0xff]
  %v2660 = vld [vmem:[%s3 + $0x320] sm:$0xff]
  %v2661 = vld [vmem:[%s3 + $0x328] sm:$0xff]
  %v2662 = vld [vmem:[%s3 + $0x330] sm:$0xff]
  %v2663 = vld [vmem:[%s3 + $0x338] sm:$0xff]
  %v2664 = vld [vmem:[%s3 + $0x340] sm:$0xff]
  %v2665 = vld [vmem:[%s3 + $0x348] sm:$0xff]
  %v2666 = vld [vmem:[%s3 + $0x350] sm:$0xff]
  %v2667 = vld [vmem:[%s3 + $0x358] sm:$0xff]
  %v2668 = vld [vmem:[%s3 + $0x360] sm:$0xff]
  %v2669 = vld [vmem:[%s3 + $0x368] sm:$0xff]
  %v2670 = vld [vmem:[%s3 + $0x370] sm:$0xff]
  %v2671 = vld [vmem:[%s3 + $0x378] sm:$0xff]
  %v2672 = vld [vmem:[%s3 + $0x380] sm:$0xff]
  %v2673 = vld [vmem:[%s3 + $0x388] sm:$0xff]
  %v2674 = vld [vmem:[%s3 + $0x390] sm:$0xff]
  %v2675 = vld [vmem:[%s3 + $0x398] sm:$0xff]
  %v2676 = vld [vmem:[%s3 + $0x3a0] sm:$0xff]
  %v2677 = vld [vmem:[%s3 + $0x3a8] sm:$0xff]
  %v2678 = vld [vmem:[%s3 + $0x3b0] sm:$0xff]
  %v2679 = vld [vmem:[%s3 + $0x3b8] sm:$0xff]
  %v2680 = vld [vmem:[%s3 + $0x3c0] sm:$0xff]
  %v2681 = vld [vmem:[%s3 + $0x3c8] sm:$0xff]
  %v2682 = vld [vmem:[%s3 + $0x3d0] sm:$0xff]
  %v2683 = vld [vmem:[%s3 + $0x3d8] sm:$0xff]
  %v2684 = vld [vmem:[%s3 + $0x3e0] sm:$0xff]
  %v2685 = vld [vmem:[%s3 + $0x3e8] sm:$0xff]
  %v2686 = vld [vmem:[%s3 + $0x3f0] sm:$0xff]
  %v2687 = vld [vmem:[%s3 + $0x3f8] sm:$0xff]
  %v2688 = vld [vmem:[%s3 + $0x400] sm:$0xff]
  %v2689 = vld [vmem:[%s3 + $0x408] sm:$0xff]
  %v2690 = vld [vmem:[%s3 + $0x410] sm:$0xff]
  %v2691 = vld [vmem:[%s3 + $0x418] sm:$0xff]
  %v2692 = vld [vmem:[%s3 + $0x420] sm:$0xff]
  %v2693 = vld [vmem:[%s3 + $0x428] sm:$0xff]
  %v2694 = vld [vmem:[%s3 + $0x430] sm:$0xff]
  %v2695 = vld [vmem:[%s3 + $0x438] sm:$0xff]
  %v2696 = vld [vmem:[%s3 + $0x440] sm:$0xff]
  %v2697 = vld [vmem:[%s3 + $0x448] sm:$0xff]
  %v2698 = vld [vmem:[%s3 + $0x450] sm:$0xff]
  %v2699 = vld [vmem:[%s3 + $0x458] sm:$0xff]
  %v2700 = vld [vmem:[%s3 + $0x460] sm:$0xff]
  %v2701 = vld [vmem:[%s3 + $0x468] sm:$0xff]
  %v2702 = vld [vmem:[%s3 + $0x470] sm:$0xff]
  %v2703 = vld [vmem:[%s3 + $0x478] sm:$0xff]
  %v2704 = vld [vmem:[%s3 + $0x480] sm:$0xff]
  %v2705 = vld [vmem:[%s3 + $0x488] sm:$0xff]
  %v2706 = vld [vmem:[%s3 + $0x490] sm:$0xff]
  %v2707 = vld [vmem:[%s3 + $0x498] sm:$0xff]
  %v2708 = vld [vmem:[%s3 + $0x4a0] sm:$0xff]
  %v2709 = vld [vmem:[%s3 + $0x4a8] sm:$0xff]
  %v2710 = vld [vmem:[%s3 + $0x4b0] sm:$0xff]
  %v2711 = vld [vmem:[%s3 + $0x4b8] sm:$0xff]
  %v2712 = vld [vmem:[%s3 + $0x4c0] sm:$0xff]
  %v2713 = vld [vmem:[%s3 + $0x4c8] sm:$0xff]
  %v2714 = vld [vmem:[%s3 + $0x4d0] sm:$0xff]
  %v2715 = vld [vmem:[%s3 + $0x4d8] sm:$0xff]
  %v2716 = vld [vmem:[%s3 + $0x4e0] sm:$0xff]
  %v2717 = vld [vmem:[%s3 + $0x4e8] sm:$0xff]
  %v2718 = vld [vmem:[%s3 + $0x4f0] sm:$0xff]
  %v2719 = vld [vmem:[%s3 + $0x4f8] sm:$0xff]
  %v2720 = vld [vmem:[%s3 + $0x500] sm:$0xff]
  %v2721 = vld [vmem:[%s3 + $0x508] sm:$0xff]
  %v2722 = vld [vmem:[%s3 + $0x510] sm:$0xff]
  %v2723 = vld [vmem:[%s3 + $0x518] sm:$0xff]
  %v2724 = vld [vmem:[%s3 + $0x520] sm:$0xff]
  %v2725 = vld [vmem:[%s3 + $0x528] sm:$0xff]
  %v2726 = vld [vmem:[%s3 + $0x530] sm:$0xff]
  %v2727 = vld [vmem:[%s3 + $0x538] sm:$0xff]
  %v2728 = vld [vmem:[%s3 + $0x540] sm:$0xff]
  %v2729 = vld [vmem:[%s3 + $0x548] sm:$0xff]
  %v2730 = vld [vmem:[%s3 + $0x550] sm:$0xff]
  %v2731 = vld [vmem:[%s3 + $0x558] sm:$0xff]
  %v2732 = vld [vmem:[%s3 + $0x560] sm:$0xff]
  %v2733 = vld [vmem:[%s3 + $0x568] sm:$0xff]
  %v2734 = vld [vmem:[%s3 + $0x570] sm:$0xff]
  %v2735 = vld [vmem:[%s3 + $0x578] sm:$0xff]
  %v2736 = vld [vmem:[%s3 + $0x580] sm:$0xff]
  %v2737 = vld [vmem:[%s3 + $0x588] sm:$0xff]
  %v2738 = vld [vmem:[%s3 + $0x590] sm:$0xff]
  %v2739 = vld [vmem:[%s3 + $0x598] sm:$0xff]
  %v2740 = vld [vmem:[%s3 + $0x5a0] sm:$0xff]
  %v2741 = vld [vmem:[%s3 + $0x5a8] sm:$0xff]
  %v2742 = vld [vmem:[%s3 + $0x5b0] sm:$0xff]
  %v2743 = vld [vmem:[%s3 + $0x5b8] sm:$0xff]
  %v2744 = vld [vmem:[%s3 + $0x5c0] sm:$0xff]
  %v2745 = vld [vmem:[%s3 + $0x5c8] sm:$0xff]
  %v2746 = vld [vmem:[%s3 + $0x5d0] sm:$0xff]
  %v2747 = vld [vmem:[%s3 + $0x5d8] sm:$0xff]
  %v2748 = vld [vmem:[%s3 + $0x5e0] sm:$0xff]
  %v2749 = vld [vmem:[%s3 + $0x5e8] sm:$0xff]
  %v2750 = vld [vmem:[%s3 + $0x5f0] sm:$0xff]
  %v2751 = vld [vmem:[%s3 + $0x5f8] sm:$0xff]
  %v2752 = vld [vmem:[%s3 + $0x600] sm:$0xff]
  %v2753 = vld [vmem:[%s3 + $0x608] sm:$0xff]
  %v2754 = vld [vmem:[%s3 + $0x610] sm:$0xff]
  %v2755 = vld [vmem:[%s3 + $0x618] sm:$0xff]
  %v2756 = vld [vmem:[%s3 + $0x620] sm:$0xff]
  %v2757 = vld [vmem:[%s3 + $0x628] sm:$0xff]
  %v2758 = vld [vmem:[%s3 + $0x630] sm:$0xff]
  %v2759 = vld [vmem:[%s3 + $0x638] sm:$0xff]
  %v2760 = vld [vmem:[%s3 + $0x640] sm:$0xff]
  %v2761 = vld [vmem:[%s3 + $0x648] sm:$0xff]
  %v2762 = vld [vmem:[%s3 + $0x650] sm:$0xff]
  %v2763 = vld [vmem:[%s3 + $0x658] sm:$0xff]
  %v2764 = vld [vmem:[%s3 + $0x660] sm:$0xff]
  %v2765 = vld [vmem:[%s3 + $0x668] sm:$0xff]
  %v2766 = vld [vmem:[%s3 + $0x670] sm:$0xff]
  %v2767 = vld [vmem:[%s3 + $0x678] sm:$0xff]
  %v2768 = vld [vmem:[%s3 + $0x680] sm:$0xff]
  %v2769 = vld [vmem:[%s3 + $0x688] sm:$0xff]
  %v2770 = vld [vmem:[%s3 + $0x690] sm:$0xff]
  %v2771 = vld [vmem:[%s3 + $0x698] sm:$0xff]
  %v2772 = vld [vmem:[%s3 + $0x6a0] sm:$0xff]
  %v2773 = vld [vmem:[%s3 + $0x6a8] sm:$0xff]
  %v2774 = vld [vmem:[%s3 + $0x6b0] sm:$0xff]
  %v2775 = vld [vmem:[%s3 + $0x6b8] sm:$0xff]
  %v2776 = vld [vmem:[%s3 + $0x6c0] sm:$0xff]
  %v2777 = vld [vmem:[%s3 + $0x6c8] sm:$0xff]
  %v2778 = vld [vmem:[%s3 + $0x6d0] sm:$0xff]
  %v2779 = vld [vmem:[%s3 + $0x6d8] sm:$0xff]
  %v2780 = vld [vmem:[%s3 + $0x6e0] sm:$0xff]
  %v2781 = vld [vmem:[%s3 + $0x6e8] sm:$0xff]
  %v2782 = vld [vmem:[%s3 + $0x6f0] sm:$0xff]
  %v2783 = vld [vmem:[%s3 + $0x6f8] sm:$0xff]
  %v2784 = vld [vmem:[%s3 + $0x700] sm:$0xff]
  %v2785 = vld [vmem:[%s3 + $0x708] sm:$0xff]
  %v2786 = vld [vmem:[%s3 + $0x710] sm:$0xff]
  %v2787 = vld [vmem:[%s3 + $0x718] sm:$0xff]
  %v2788 = vld [vmem:[%s3 + $0x720] sm:$0xff]
  %v2789 = vld [vmem:[%s3 + $0x728] sm:$0xff]
  %v2790 = vld [vmem:[%s3 + $0x730] sm:$0xff]
  %v2791 = vld [vmem:[%s3 + $0x738] sm:$0xff]
  %v2792 = vld [vmem:[%s3 + $0x740] sm:$0xff]
  %v2793 = vld [vmem:[%s3 + $0x748] sm:$0xff]
  %v2794 = vld [vmem:[%s3 + $0x750] sm:$0xff]
  %v2795 = vld [vmem:[%s3 + $0x758] sm:$0xff]
  %v2796 = vld [vmem:[%s3 + $0x760] sm:$0xff]
  %v2797 = vld [vmem:[%s3 + $0x768] sm:$0xff]
  %v2798 = vld [vmem:[%s3 + $0x770] sm:$0xff]
  %v2799 = vld [vmem:[%s3 + $0x778] sm:$0xff]
  %v2800 = vld [vmem:[%s3 + $0x780] sm:$0xff]
  %v2801 = vld [vmem:[%s3 + $0x788] sm:$0xff]
  %v2802 = vld [vmem:[%s3 + $0x790] sm:$0xff]
  %v2803 = vld [vmem:[%s3 + $0x798] sm:$0xff]
  %v2804 = vld [vmem:[%s3 + $0x7a0] sm:$0xff]
  %v2805 = vld [vmem:[%s3 + $0x7a8] sm:$0xff]
  %v2806 = vld [vmem:[%s3 + $0x7b0] sm:$0xff]
  %v2807 = vld [vmem:[%s3 + $0x7b8] sm:$0xff]
  %v2808 = vld [vmem:[%s3 + $0x7c0] sm:$0xff]
  %v2809 = vld [vmem:[%s3 + $0x7c8] sm:$0xff]
  %v2810 = vld [vmem:[%s3 + $0x7d0] sm:$0xff]
  %v2811 = vld [vmem:[%s3 + $0x7d8] sm:$0xff]
  %v2812 = vld [vmem:[%s3 + $0x7e0] sm:$0xff]
  %v2813 = vld [vmem:[%s3 + $0x7e8] sm:$0xff]
  %v2814 = vld [vmem:[%s3 + $0x7f0] sm:$0xff]
  %v2815 = vld [vmem:[%s3 + $0x7f8] sm:$0xff]
  %v2816 = vld [vmem:[%s3 + $0x800] sm:$0xff]
  %v2817 = vld [vmem:[%s3 + $0x808] sm:$0xff]
  %v2818 = vld [vmem:[%s3 + $0x810] sm:$0xff]
  %v2819 = vld [vmem:[%s3 + $0x818] sm:$0xff]
  %v2820 = vld [vmem:[%s3 + $0x820] sm:$0xff]
  %v2821 = vld [vmem:[%s3 + $0x828] sm:$0xff]
  %v2822 = vld [vmem:[%s3 + $0x830] sm:$0xff]
  %v2823 = vld [vmem:[%s3 + $0x838] sm:$0xff]
  %2824 = vmatprep.subr.mxu0 0.0
  %2825 = vmatpush1.msra.mxu0 %v2387
  %2826 = vmatprep.subr.mxu0 0.0
  %2827 = vmatpush1.msra.mxu0 %v2385
  %2828 = vmatprep.subr.mxu0 0.0
  %2829 = vmatpush1.msra.mxu0 %v2383
  %2830 = vmatprep.subr.mxu0 0.0
  %2831 = vmatpush1.msra.mxu0 %v2381
  %2832 = vmatprep.subr.mxu0 0.0
  %2833 = vmatpush1.msra.mxu0 %v2378
  %2834 = vmatprep.subr.mxu0 0.0
  %2835 = vmatpush1.msra.mxu0 %v2376
  %2836 = vmatprep.subr.mxu0 0.0
  %2837 = vmatpush1.msra.mxu0 %v2374
  %2838 = vmatprep.subr.mxu0 0.0
  %2839 = vmatpush1.msra.mxu0 %v2372
  %2840 = vmatprep.subr.mxu0 0.0
  %2841 = vmatpush1.msra.mxu0 %v2369
  %2842 = vmatprep.subr.mxu0 0.0
  %2843 = vmatpush1.msra.mxu0 %v2367
  %2844 = vmatprep.subr.mxu0 0.0
  %2845 = vmatpush1.msra.mxu0 %v2365
  %2846 = vmatprep.subr.mxu0 0.0
  %2847 = vmatpush1.msra.mxu0 %v2363
  %2848 = vmatprep.subr.mxu0 0.0
  %2849 = vmatpush1.msra.mxu0 %v2360
  %2850 = vmatprep.subr.mxu0 0.0
  %2851 = vmatpush1.msra.mxu0 %v2358
  %2852 = vmatprep.subr.mxu0 0.0
  %2853 = vmatpush1.msra.mxu0 %v2356
  %2854 = vmatprep.subr.mxu0 0.0
  %2855 = vmatpush1.msra.mxu0 %v2354
  %2856 = vmatprep.subr.mxu0 0.0
  %2857 = vmatpush2.msra.mxu0 %v2423
  %2858 = vmatprep.subr.mxu0 0.0
  %2859 = vmatpush2.msra.mxu0 %v2421
  %2860 = vmatprep.subr.mxu0 0.0
  %2861 = vmatpush2.msra.mxu0 %v2419
  %2862 = vmatprep.subr.mxu0 0.0
  %2863 = vmatpush2.msra.mxu0 %v2417
  %2864 = vmatprep.subr.mxu0 0.0
  %2865 = vmatpush2.msra.mxu0 %v2414
  %2866 = vmatprep.subr.mxu0 0.0
  %2867 = vmatpush2.msra.mxu0 %v2412
  %2868 = vmatprep.subr.mxu0 0.0
  %2869 = vmatpush2.msra.mxu0 %v2410
  %2870 = vmatprep.subr.mxu0 0.0
  %2871 = vmatpush2.msra.mxu0 %v2408
  %2872 = vmatprep.subr.mxu0 0.0
  %2873 = vmatpush2.msra.mxu0 %v2405
  %2874 = vmatprep.subr.mxu0 0.0
  %2875 = vmatpush2.msra.mxu0 %v2403
  %2876 = vmatprep.subr.mxu0 0.0
  %2877 = vmatpush2.msra.mxu0 %v2401
  %2878 = vmatprep.subr.mxu0 0.0
  %2879 = vmatpush2.msra.mxu0 %v2399
  %2880 = vmatprep.subr.mxu0 0.0
  %2881 = vmatpush2.msra.mxu0 %v2396
  %2882 = vmatprep.subr.mxu0 0.0
  %2883 = vmatpush2.msra.mxu0 %v2394
  %2884 = vmatprep.subr.mxu0 0.0
  %2885 = vmatpush2.msra.mxu0 %v2392
  %2886 = vmatprep.subr.mxu0 0.0
  %2887 = vmatpush2.msra.mxu0 %v2390
  %2888 = vmatprep.mubr.f32.mxu0 %v2561
  %2889 = vmatmul.mubr.f32.gmra.mxu0 %v2560
  %v2890 = vpop.f32.mrf.mxu0
  %v2891 = vpop.f32.mrf.mxu0
  %2892 = vmatprep.mubr.f32.mxu0 %v2565
  %2893 = vmatmul.mubr.f32.gmra.mxu0 %v2564
  %v2894 = vpop.f32.mrf.mxu0
  %v2895 = vpop.f32.mrf.mxu0
  %2896 = vmatprep.mubr.f32.mxu0 %v2569
  %2897 = vmatmul.mubr.f32.gmra.mxu0 %v2568
  %v2898 = vpop.f32.mrf.mxu0
  %v2899 = vadd.f32 0.0, %v2898
  %v2900 = vpop.f32.mrf.mxu0
  %2901 = vmatprep.mubr.f32.mxu0 %v2573
  %2902 = vmatmul.mubr.f32.gmra.mxu0 %v2572
  %v2903 = vpop.f32.mrf.mxu0
  %v2904 = vadd.f32 0.0, %v2903
  %v2905 = vpop.f32.mrf.mxu0
  %2906 = vmatprep.mubr.f32.mxu0 %v2577
  %2907 = vmatmul.mubr.f32.gmra.mxu0 %v2576
  %v2908 = vpop.f32.mrf.mxu0
  %v2909 = vadd.f32 0.0, %v2908
  %v2910 = vpop.f32.mrf.mxu0
  %2911 = vmatprep.mubr.f32.mxu0 %v2581
  %2912 = vmatmul.mubr.f32.gmra.mxu0 %v2580
  %v2913 = vpop.f32.mrf.mxu0
  %v2914 = vadd.f32 0.0, %v2913
  %v2915 = vpop.f32.mrf.mxu0
  %2916 = vmatprep.mubr.f32.mxu0 %v2585
  %2917 = vmatmul.mubr.f32.gmra.mxu0 %v2584
  %v2918 = vpop.f32.mrf.mxu0
  %v2919 = vadd.f32 0.0, %v2918
  %v2920 = vpop.f32.mrf.mxu0
  %2921 = vmatprep.mubr.f32.mxu0 %v2589
  %2922 = vmatmul.mubr.f32.gmra.mxu0 %v2588
  %v2923 = vpop.f32.mrf.mxu0
  %v2924 = vadd.f32 0.0, %v2923
  %v2925 = vpop.f32.mrf.mxu0
  %2926 = vmatprep.mubr.f32.mxu0 %v2593
  %2927 = vmatmul.mubr.f32.gmra.mxu0 %v2592
  %v2928 = vpop.f32.mrf.mxu0
  %v2929 = vadd.f32 0.0, %v2928
  %v2930 = vpop.f32.mrf.mxu0
  %2931 = vmatprep.mubr.f32.mxu0 %v2597
  %2932 = vmatmul.mubr.f32.gmra.mxu0 %v2596
  %v2933 = vpop.f32.mrf.mxu0
  %v2934 = vadd.f32 0.0, %v2933
  %v2935 = vpop.f32.mrf.mxu0
  %2936 = vmatprep.mubr.f32.mxu0 %v2601
  %2937 = vmatmul.mubr.f32.gmra.mxu0 %v2600
  %v2938 = vpop.f32.mrf.mxu0
  %v2939 = vadd.f32 0.0, %v2938
  %v2940 = vpop.f32.mrf.mxu0
  %2941 = vmatprep.mubr.f32.mxu0 %v2605
  %2942 = vmatmul.mubr.f32.gmra.mxu0 %v2604
  %v2943 = vpop.f32.mrf.mxu0
  %v2944 = vadd.f32 0.0, %v2943
  %v2945 = vpop.f32.mrf.mxu0
  %2946 = vmatprep.mubr.f32.mxu0 %v2609
  %2947 = vmatmul.mubr.f32.gmra.mxu0 %v2608
  %v2948 = vpop.f32.mrf.mxu0
  %v2949 = vadd.f32 0.0, %v2948
  %v2950 = vpop.f32.mrf.mxu0
  %2951 = vmatprep.mubr.f32.mxu0 %v2613
  %2952 = vmatmul.mubr.f32.gmra.mxu0 %v2612
  %v2953 = vpop.f32.mrf.mxu0
  %v2954 = vadd.f32 0.0, %v2953
  %v2955 = vpop.f32.mrf.mxu0
  %2956 = vmatprep.mubr.f32.mxu0 %v2617
  %2957 = vmatmul.mubr.f32.gmra.mxu0 %v2616
  %v2958 = vpop.f32.mrf.mxu0
  %v2959 = vadd.f32 0.0, %v2958
  %v2960 = vpop.f32.mrf.mxu0
  %2961 = vmatprep.mubr.f32.mxu0 %v2621
  %2962 = vmatmul.mubr.f32.gmra.mxu0 %v2620
  %v2963 = vpop.f32.mrf.mxu0
  %v2964 = vadd.f32 0.0, %v2963
  %v2965 = vpop.f32.mrf.mxu0
  %2966 = vmatprep.mubr.f32.mxu0 %v2625
  %2967 = vmatmul.mubr.f32.gmra.mxu0 %v2624
  %v2968 = vpop.f32.mrf.mxu0
  %v2969 = vadd.f32 0.0, %v2968
  %v2970 = vpop.f32.mrf.mxu0
  %2971 = vmatprep.mubr.f32.mxu0 %v2629
  %2972 = vmatmul.mubr.f32.gmra.mxu0 %v2628
  %v2973 = vpop.f32.mrf.mxu0
  %v2974 = vadd.f32 0.0, %v2973
  %v2975 = vpop.f32.mrf.mxu0
  %2976 = vmatprep.mubr.f32.mxu0 %v2633
  %2977 = vmatmul.mubr.f32.gmra.mxu0 %v2632
  %v2978 = vpop.f32.mrf.mxu0
  %v2979 = vadd.f32 0.0, %v2978
  %v2980 = vpop.f32.mrf.mxu0
  %2981 = vmatprep.mubr.f32.mxu0 %v2637
  %2982 = vmatmul.mubr.f32.gmra.mxu0 %v2636
  %v2983 = vpop.f32.mrf.mxu0
  %v2984 = vadd.f32 0.0, %v2983
  %v2985 = vpop.f32.mrf.mxu0
  %2986 = vmatprep.mubr.f32.mxu0 %v2641
  %2987 = vmatmul.mubr.f32.gmra.mxu0 %v2640
  %v2988 = vpop.f32.mrf.mxu0
  %v2989 = vadd.f32 0.0, %v2988
  %v2990 = vpop.f32.mrf.mxu0
  %2991 = vmatprep.mubr.f32.mxu0 %v2645
  %2992 = vmatmul.mubr.f32.gmra.mxu0 %v2644
  %v2993 = vpop.f32.mrf.mxu0
  %v2994 = vadd.f32 0.0, %v2993
  %v2995 = vpop.f32.mrf.mxu0
  %2996 = vmatprep.mubr.f32.mxu0 %v2649
  %2997 = vmatmul.mubr.f32.gmra.mxu0 %v2648
  %v2998 = vpop.f32.mrf.mxu0
  %v2999 = vadd.f32 0.0, %v2998
  %v3000 = vpop.f32.mrf.mxu0
  %3001 = vmatprep.mubr.f32.mxu0 %v2653
  %3002 = vmatmul.mubr.f32.gmra.mxu0 %v2652
  %v3003 = vpop.f32.mrf.mxu0
  %v3004 = vadd.f32 0.0, %v3003
  %v3005 = vpop.f32.mrf.mxu0
  %3006 = vmatprep.mubr.f32.mxu0 %v2657
  %3007 = vmatmul.mubr.f32.gmra.mxu0 %v2656
  %v3008 = vpop.f32.mrf.mxu0
  %v3009 = vadd.f32 0.0, %v3008
  %v3010 = vpop.f32.mrf.mxu0
  %3011 = vmatprep.mubr.f32.mxu0 %v2661
  %3012 = vmatmul.mubr.f32.gmra.mxu0 %v2660
  %v3013 = vpop.f32.mrf.mxu0
  %v3014 = vadd.f32 0.0, %v3013
  %v3015 = vpop.f32.mrf.mxu0
  %3016 = vmatprep.mubr.f32.mxu0 %v2665
  %3017 = vmatmul.mubr.f32.gmra.mxu0 %v2664
  %v3018 = vpop.f32.mrf.mxu0
  %v3019 = vadd.f32 0.0, %v3018
  %v3020 = vpop.f32.mrf.mxu0
  %3021 = vmatprep.mubr.f32.mxu0 %v2669
  %3022 = vmatmul.mubr.f32.gmra.mxu0 %v2668
  %v3023 = vpop.f32.mrf.mxu0
  %v3024 = vadd.f32 0.0, %v3023
  %v3025 = vpop.f32.mrf.mxu0
  %3026 = vmatprep.mubr.f32.mxu0 %v2673
  %3027 = vmatmul.mubr.f32.gmra.mxu0 %v2672
  %v3028 = vpop.f32.mrf.mxu0
  %v3029 = vadd.f32 0.0, %v3028
  %v3030 = vpop.f32.mrf.mxu0
  %3031 = vmatprep.mubr.f32.mxu0 %v2677
  %3032 = vmatmul.mubr.f32.gmra.mxu0 %v2676
  %v3033 = vpop.f32.mrf.mxu0
  %v3034 = vadd.f32 0.0, %v3033
  %v3035 = vpop.f32.mrf.mxu0
  %3036 = vmatprep.mubr.f32.mxu0 %v2681
  %3037 = vmatmul.mubr.f32.gmra.mxu0 %v2680
  %v3038 = vpop.f32.mrf.mxu0
  %v3039 = vadd.f32 0.0, %v3038
  %v3040 = vpop.f32.mrf.mxu0
  %3041 = vmatprep.mubr.f32.mxu0 %v2685
  %3042 = vmatmul.mubr.f32.gmra.mxu0 %v2684
  %v3043 = vpop.f32.mrf.mxu0
  %v3044 = vadd.f32 0.0, %v3043
  %v3045 = vpop.f32.mrf.mxu0
  %3046 = vmatprep.mubr.f32.mxu0 %v2689
  %3047 = vmatmul.mubr.f32.gmra.mxu0 %v2688
  %v3048 = vpop.f32.mrf.mxu0
  %v3049 = vadd.f32 0.0, %v3048
  %v3050 = vpop.f32.mrf.mxu0
  %3051 = vmatprep.mubr.f32.mxu0 %v2693
  %3052 = vmatmul.mubr.f32.gmra.mxu0 %v2692
  %v3053 = vpop.f32.mrf.mxu0
  %v3054 = vadd.f32 0.0, %v3053
  %v3055 = vpop.f32.mrf.mxu0
  %3056 = vmatprep.mubr.f32.mxu0 %v2697
  %3057 = vmatmul.mubr.f32.gmra.mxu0 %v2696
  %v3058 = vpop.f32.mrf.mxu0
  %v3059 = vadd.f32 0.0, %v3058
  %v3060 = vpop.f32.mrf.mxu0
  %3061 = vmatprep.mubr.f32.mxu0 %v2701
  %3062 = vmatmul.mubr.f32.gmra.mxu0 %v2700
  %v3063 = vpop.f32.mrf.mxu0
  %v3064 = vadd.f32 0.0, %v3063
  %v3065 = vpop.f32.mrf.mxu0
  %3066 = vmatprep.mubr.f32.mxu0 %v2705
  %3067 = vmatmul.mubr.f32.gmra.mxu0 %v2704
  %v3068 = vpop.f32.mrf.mxu0
  %v3069 = vadd.f32 0.0, %v3068
  %v3070 = vpop.f32.mrf.mxu0
  %3071 = vmatprep.mubr.f32.mxu0 %v2709
  %3072 = vmatmul.mubr.f32.gmra.mxu0 %v2708
  %v3073 = vpop.f32.mrf.mxu0
  %v3074 = vadd.f32 0.0, %v3073
  %v3075 = vpop.f32.mrf.mxu0
  %3076 = vmatprep.mubr.f32.mxu0 %v2713
  %3077 = vmatmul.mubr.f32.gmra.mxu0 %v2712
  %v3078 = vpop.f32.mrf.mxu0
  %v3079 = vadd.f32 0.0, %v3078
  %v3080 = vpop.f32.mrf.mxu0
  %3081 = vmatprep.mubr.f32.mxu0 %v2717
  %3082 = vmatmul.mubr.f32.gmra.mxu0 %v2716
  %v3083 = vpop.f32.mrf.mxu0
  %v3084 = vadd.f32 0.0, %v3083
  %v3085 = vpop.f32.mrf.mxu0
  %3086 = vmatprep.mubr.f32.mxu0 %v2721
  %3087 = vmatmul.mubr.f32.gmra.mxu0 %v2720
  %v3088 = vpop.f32.mrf.mxu0
  %v3089 = vadd.f32 0.0, %v3088
  %v3090 = vpop.f32.mrf.mxu0
  %3091 = vmatprep.mubr.f32.mxu0 %v2725
  %3092 = vmatmul.mubr.f32.gmra.mxu0 %v2724
  %v3093 = vpop.f32.mrf.mxu0
  %v3094 = vadd.f32 0.0, %v3093
  %v3095 = vpop.f32.mrf.mxu0
  %3096 = vmatprep.mubr.f32.mxu0 %v2729
  %3097 = vmatmul.mubr.f32.gmra.mxu0 %v2728
  %v3098 = vpop.f32.mrf.mxu0
  %v3099 = vadd.f32 0.0, %v3098
  %v3100 = vpop.f32.mrf.mxu0
  %3101 = vmatprep.mubr.f32.mxu0 %v2733
  %3102 = vmatmul.mubr.f32.gmra.mxu0 %v2732
  %v3103 = vpop.f32.mrf.mxu0
  %v3104 = vadd.f32 0.0, %v3103
  %v3105 = vpop.f32.mrf.mxu0
  %3106 = vmatprep.mubr.f32.mxu0 %v2737
  %3107 = vmatmul.mubr.f32.gmra.mxu0 %v2736
  %v3108 = vpop.f32.mrf.mxu0
  %v3109 = vadd.f32 0.0, %v3108
  %v3110 = vpop.f32.mrf.mxu0
  %3111 = vmatprep.mubr.f32.mxu0 %v2741
  %3112 = vmatmul.mubr.f32.gmra.mxu0 %v2740
  %v3113 = vpop.f32.mrf.mxu0
  %v3114 = vadd.f32 0.0, %v3113
  %v3115 = vpop.f32.mrf.mxu0
  %3116 = vmatprep.mubr.f32.mxu0 %v2745
  %3117 = vmatmul.mubr.f32.gmra.mxu0 %v2744
  %v3118 = vpop.f32.mrf.mxu0
  %v3119 = vadd.f32 0.0, %v3118
  %v3120 = vpop.f32.mrf.mxu0
  %3121 = vmatprep.mubr.f32.mxu0 %v2749
  %3122 = vmatmul.mubr.f32.gmra.mxu0 %v2748
  %v3123 = vpop.f32.mrf.mxu0
  %v3124 = vadd.f32 0.0, %v3123
  %v3125 = vpop.f32.mrf.mxu0
  %3126 = vmatprep.mubr.f32.mxu0 %v2753
  %3127 = vmatmul.mubr.f32.gmra.mxu0 %v2752
  %v3128 = vpop.f32.mrf.mxu0
  %v3129 = vadd.f32 0.0, %v3128
  %v3130 = vpop.f32.mrf.mxu0
  %3131 = vmatprep.mubr.f32.mxu0 %v2757
  %3132 = vmatmul.mubr.f32.gmra.mxu0 %v2756
  %v3133 = vpop.f32.mrf.mxu0
  %v3134 = vadd.f32 0.0, %v3133
  %v3135 = vpop.f32.mrf.mxu0
  %3136 = vmatprep.mubr.f32.mxu0 %v2761
  %3137 = vmatmul.mubr.f32.gmra.mxu0 %v2760
  %v3138 = vpop.f32.mrf.mxu0
  %v3139 = vadd.f32 0.0, %v3138
  %v3140 = vpop.f32.mrf.mxu0
  %3141 = vmatprep.mubr.f32.mxu0 %v2765
  %3142 = vmatmul.mubr.f32.gmra.mxu0 %v2764
  %v3143 = vpop.f32.mrf.mxu0
  %v3144 = vadd.f32 0.0, %v3143
  %v3145 = vpop.f32.mrf.mxu0
  %3146 = vmatprep.mubr.f32.mxu0 %v2769
  %3147 = vmatmul.mubr.f32.gmra.mxu0 %v2768
  %v3148 = vpop.f32.mrf.mxu0
  %v3149 = vadd.f32 0.0, %v3148
  %v3150 = vpop.f32.mrf.mxu0
  %3151 = vmatprep.mubr.f32.mxu0 %v2773
  %3152 = vmatmul.mubr.f32.gmra.mxu0 %v2772
  %v3153 = vpop.f32.mrf.mxu0
  %v3154 = vadd.f32 0.0, %v3153
  %v3155 = vpop.f32.mrf.mxu0
  %3156 = vmatprep.mubr.f32.mxu0 %v2777
  %3157 = vmatmul.mubr.f32.gmra.mxu0 %v2776
  %v3158 = vpop.f32.mrf.mxu0
  %v3159 = vadd.f32 0.0, %v3158
  %v3160 = vpop.f32.mrf.mxu0
  %3161 = vmatprep.mubr.f32.mxu0 %v2781
  %3162 = vmatmul.mubr.f32.gmra.mxu0 %v2780
  %v3163 = vpop.f32.mrf.mxu0
  %v3164 = vadd.f32 0.0, %v3163
  %v3165 = vpop.f32.mrf.mxu0
  %3166 = vmatprep.mubr.f32.mxu0 %v2785
  %3167 = vmatmul.mubr.f32.gmra.mxu0 %v2784
  %v3168 = vpop.f32.mrf.mxu0
  %v3169 = vadd.f32 0.0, %v3168
  %v3170 = vpop.f32.mrf.mxu0
  %3171 = vmatprep.mubr.f32.mxu0 %v2789
  %3172 = vmatmul.mubr.f32.gmra.mxu0 %v2788
  %v3173 = vpop.f32.mrf.mxu0
  %v3174 = vadd.f32 0.0, %v3173
  %v3175 = vpop.f32.mrf.mxu0
  %3176 = vmatprep.mubr.f32.mxu0 %v2793
  %3177 = vmatmul.mubr.f32.gmra.mxu0 %v2792
  %v3178 = vpop.f32.mrf.mxu0
  %v3179 = vadd.f32 0.0, %v3178
  %v3180 = vpop.f32.mrf.mxu0
  %3181 = vmatprep.mubr.f32.mxu0 %v2797
  %3182 = vmatmul.mubr.f32.gmra.mxu0 %v2796
  %v3183 = vpop.f32.mrf.mxu0
  %v3184 = vadd.f32 0.0, %v3183
  %v3185 = vpop.f32.mrf.mxu0
  %3186 = vmatprep.mubr.f32.mxu0 %v2801
  %3187 = vmatmul.mubr.f32.gmra.mxu0 %v2800
  %v3188 = vpop.f32.mrf.mxu0
  %v3189 = vadd.f32 0.0, %v3188
  %v3190 = vpop.f32.mrf.mxu0
  %3191 = vmatprep.mubr.f32.mxu0 %v2805
  %3192 = vmatmul.mubr.f32.gmra.mxu0 %v2804
  %v3193 = vpop.f32.mrf.mxu0
  %v3194 = vadd.f32 0.0, %v3193
  %v3195 = vpop.f32.mrf.mxu0
  %3196 = vmatprep.mubr.f32.mxu0 %v2809
  %3197 = vmatmul.mubr.f32.gmra.mxu0 %v2808
  %v3198 = vpop.f32.mrf.mxu0
  %v3199 = vadd.f32 0.0, %v3198
  %v3200 = vpop.f32.mrf.mxu0
  %3201 = vmatprep.mubr.f32.mxu0 %v2813
  %3202 = vmatmul.mubr.f32.gmra.mxu0 %v2812
  %v3203 = vpop.f32.mrf.mxu0
  %v3204 = vadd.f32 0.0, %v3203
  %v3205 = vpop.f32.mrf.mxu0
  %3206 = vmatprep.mubr.f32.mxu0 %v2817
  %3207 = vmatmul.mubr.f32.gmra.mxu0 %v2816
  %v3208 = vpop.f32.mrf.mxu0
  %v3209 = vpop.f32.mrf.mxu0
  %3210 = vmatprep.mubr.f32.mxu0 %v2821
  %3211 = vmatmul.mubr.f32.gmra.mxu0 %v2820
  %v3212 = vpop.f32.mrf.mxu0
  %v3213 = vpop.f32.mrf.mxu0
  %3214 = vdwg.mxu0
  %3215 = vmatprep.subr.mxu0 0.0
  %3216 = vmatpush1.msra.mxu0 %v2459
  %3217 = vmatprep.subr.mxu0 0.0
  %3218 = vmatpush1.msra.mxu0 %v2457
  %3219 = vmatprep.subr.mxu0 0.0
  %3220 = vmatpush1.msra.mxu0 %v2455
  %3221 = vmatprep.subr.mxu0 0.0
  %3222 = vmatpush1.msra.mxu0 %v2453
  %3223 = vmatprep.subr.mxu0 0.0
  %3224 = vmatpush1.msra.mxu0 %v2450
  %3225 = vmatprep.subr.mxu0 0.0
  %3226 = vmatpush1.msra.mxu0 %v2448
  %3227 = vmatprep.subr.mxu0 0.0
  %3228 = vmatpush1.msra.mxu0 %v2446
  %3229 = vmatprep.subr.mxu0 0.0
  %3230 = vmatpush1.msra.mxu0 %v2444
  %3231 = vmatprep.subr.mxu0 0.0
  %3232 = vmatpush1.msra.mxu0 %v2441
  %3233 = vmatprep.subr.mxu0 0.0
  %3234 = vmatpush1.msra.mxu0 %v2439
  %3235 = vmatprep.subr.mxu0 0.0
  %3236 = vmatpush1.msra.mxu0 %v2437
  %3237 = vmatprep.subr.mxu0 0.0
  %3238 = vmatpush1.msra.mxu0 %v2435
  %3239 = vmatprep.subr.mxu0 0.0
  %3240 = vmatpush1.msra.mxu0 %v2432
  %3241 = vmatprep.subr.mxu0 0.0
  %3242 = vmatpush1.msra.mxu0 %v2430
  %3243 = vmatprep.subr.mxu0 0.0
  %3244 = vmatpush1.msra.mxu0 %v2428
  %3245 = vmatprep.subr.mxu0 0.0
  %3246 = vmatpush1.msra.mxu0 %v2426
  %3247 = vmatprep.subr.mxu0 0.0
  %3248 = vmatpush2.msra.mxu0 %v2495
  %3249 = vmatprep.subr.mxu0 0.0
  %3250 = vmatpush2.msra.mxu0 %v2493
  %3251 = vmatprep.subr.mxu0 0.0
  %3252 = vmatpush2.msra.mxu0 %v2491
  %3253 = vmatprep.subr.mxu0 0.0
  %3254 = vmatpush2.msra.mxu0 %v2489
  %3255 = vmatprep.subr.mxu0 0.0
  %3256 = vmatpush2.msra.mxu0 %v2486
  %3257 = vmatprep.subr.mxu0 0.0
  %3258 = vmatpush2.msra.mxu0 %v2484
  %3259 = vmatprep.subr.mxu0 0.0
  %3260 = vmatpush2.msra.mxu0 %v2482
  %3261 = vmatprep.subr.mxu0 0.0
  %3262 = vmatpush2.msra.mxu0 %v2480
  %3263 = vmatprep.subr.mxu0 0.0
  %3264 = vmatpush2.msra.mxu0 %v2477
  %3265 = vmatprep.subr.mxu0 0.0
  %3266 = vmatpush2.msra.mxu0 %v2475
  %3267 = vmatprep.subr.mxu0 0.0
  %3268 = vmatpush2.msra.mxu0 %v2473
  %3269 = vmatprep.subr.mxu0 0.0
  %3270 = vmatpush2.msra.mxu0 %v2471
  %3271 = vmatprep.subr.mxu0 0.0
  %3272 = vmatpush2.msra.mxu0 %v2468
  %3273 = vmatprep.subr.mxu0 0.0
  %3274 = vmatpush2.msra.mxu0 %v2466
  %3275 = vmatprep.subr.mxu0 0.0
  %3276 = vmatpush2.msra.mxu0 %v2464
  %3277 = vmatprep.subr.mxu0 0.0
  %3278 = vmatpush2.msra.mxu0 %v2462
  %3279 = vmatprep.mubr.f32.mxu0 %v2563
  %3280 = vmatmul.mubr.f32.gmra.mxu0 %v2562
  %v3281 = vpop.f32.mrf.mxu0
  %v3282 = vpop.f32.mrf.mxu0
  %3283 = vmatprep.mubr.f32.mxu0 %v2567
  %3284 = vmatmul.mubr.f32.gmra.mxu0 %v2566
  %v3285 = vpop.f32.mrf.mxu0
  %v3286 = vpop.f32.mrf.mxu0
  %3287 = vmatprep.mubr.f32.mxu0 %v2571
  %3288 = vmatmul.mubr.f32.gmra.mxu0 %v2570
  %v3289 = vpop.f32.mrf.mxu0
  %v3290 = vadd.f32 %v2899, %v3289
  %v3291 = vpop.f32.mrf.mxu0
  %3292 = vmatprep.mubr.f32.mxu0 %v2575
  %3293 = vmatmul.mubr.f32.gmra.mxu0 %v2574
  %v3294 = vpop.f32.mrf.mxu0
  %v3295 = vadd.f32 %v2904, %v3294
  %v3296 = vpop.f32.mrf.mxu0
  %3297 = vmatprep.mubr.f32.mxu0 %v2579
  %3298 = vmatmul.mubr.f32.gmra.mxu0 %v2578
  %v3299 = vpop.f32.mrf.mxu0
  %v3300 = vadd.f32 %v2909, %v3299
  %v3301 = vpop.f32.mrf.mxu0
  %3302 = vmatprep.mubr.f32.mxu0 %v2583
  %3303 = vmatmul.mubr.f32.gmra.mxu0 %v2582
  %v3304 = vpop.f32.mrf.mxu0
  %v3305 = vadd.f32 %v2914, %v3304
  %v3306 = vpop.f32.mrf.mxu0
  %3307 = vmatprep.mubr.f32.mxu0 %v2587
  %3308 = vmatmul.mubr.f32.gmra.mxu0 %v2586
  %v3309 = vpop.f32.mrf.mxu0
  %v3310 = vadd.f32 %v2919, %v3309
  %v3311 = vpop.f32.mrf.mxu0
  %3312 = vmatprep.mubr.f32.mxu0 %v2591
  %3313 = vmatmul.mubr.f32.gmra.mxu0 %v2590
  %v3314 = vpop.f32.mrf.mxu0
  %v3315 = vadd.f32 %v2924, %v3314
  %v3316 = vpop.f32.mrf.mxu0
  %3317 = vmatprep.mubr.f32.mxu0 %v2595
  %3318 = vmatmul.mubr.f32.gmra.mxu0 %v2594
  %v3319 = vpop.f32.mrf.mxu0
  %v3320 = vadd.f32 %v2929, %v3319
  %v3321 = vpop.f32.mrf.mxu0
  %3322 = vmatprep.mubr.f32.mxu0 %v2599
  %3323 = vmatmul.mubr.f32.gmra.mxu0 %v2598
  %v3324 = vpop.f32.mrf.mxu0
  %v3325 = vadd.f32 %v2934, %v3324
  %v3326 = vpop.f32.mrf.mxu0
  %3327 = vmatprep.mubr.f32.mxu0 %v2603
  %3328 = vmatmul.mubr.f32.gmra.mxu0 %v2602
  %v3329 = vpop.f32.mrf.mxu0
  %v3330 = vadd.f32 %v2939, %v3329
  %v3331 = vpop.f32.mrf.mxu0
  %3332 = vmatprep.mubr.f32.mxu0 %v2607
  %3333 = vmatmul.mubr.f32.gmra.mxu0 %v2606
  %v3334 = vpop.f32.mrf.mxu0
  %v3335 = vadd.f32 %v2944, %v3334
  %v3336 = vpop.f32.mrf.mxu0
  %3337 = vmatprep.mubr.f32.mxu0 %v2611
  %3338 = vmatmul.mubr.f32.gmra.mxu0 %v2610
  %v3339 = vpop.f32.mrf.mxu0
  %v3340 = vadd.f32 %v2949, %v3339
  %v3341 = vpop.f32.mrf.mxu0
  %3342 = vmatprep.mubr.f32.mxu0 %v2615
  %3343 = vmatmul.mubr.f32.gmra.mxu0 %v2614
  %v3344 = vpop.f32.mrf.mxu0
  %v3345 = vadd.f32 %v2954, %v3344
  %v3346 = vpop.f32.mrf.mxu0
  %3347 = vmatprep.mubr.f32.mxu0 %v2619
  %3348 = vmatmul.mubr.f32.gmra.mxu0 %v2618
  %v3349 = vpop.f32.mrf.mxu0
  %v3350 = vadd.f32 %v2959, %v3349
  %v3351 = vpop.f32.mrf.mxu0
  %3352 = vmatprep.mubr.f32.mxu0 %v2623
  %3353 = vmatmul.mubr.f32.gmra.mxu0 %v2622
  %v3354 = vpop.f32.mrf.mxu0
  %v3355 = vadd.f32 %v2964, %v3354
  %v3356 = vpop.f32.mrf.mxu0
  %3357 = vmatprep.mubr.f32.mxu0 %v2627
  %3358 = vmatmul.mubr.f32.gmra.mxu0 %v2626
  %v3359 = vpop.f32.mrf.mxu0
  %v3360 = vadd.f32 %v2969, %v3359
  %v3361 = vpop.f32.mrf.mxu0
  %3362 = vmatprep.mubr.f32.mxu0 %v2631
  %3363 = vmatmul.mubr.f32.gmra.mxu0 %v2630
  %v3364 = vpop.f32.mrf.mxu0
  %v3365 = vadd.f32 %v2974, %v3364
  %v3366 = vpop.f32.mrf.mxu0
  %3367 = vmatprep.mubr.f32.mxu0 %v2635
  %3368 = vmatmul.mubr.f32.gmra.mxu0 %v2634
  %v3369 = vpop.f32.mrf.mxu0
  %v3370 = vadd.f32 %v2979, %v3369
  %v3371 = vpop.f32.mrf.mxu0
  %3372 = vmatprep.mubr.f32.mxu0 %v2639
  %3373 = vmatmul.mubr.f32.gmra.mxu0 %v2638
  %v3374 = vpop.f32.mrf.mxu0
  %v3375 = vadd.f32 %v2984, %v3374
  %v3376 = vpop.f32.mrf.mxu0
  %3377 = vmatprep.mubr.f32.mxu0 %v2643
  %3378 = vmatmul.mubr.f32.gmra.mxu0 %v2642
  %v3379 = vpop.f32.mrf.mxu0
  %v3380 = vadd.f32 %v2989, %v3379
  %v3381 = vpop.f32.mrf.mxu0
  %3382 = vmatprep.mubr.f32.mxu0 %v2647
  %3383 = vmatmul.mubr.f32.gmra.mxu0 %v2646
  %v3384 = vpop.f32.mrf.mxu0
  %v3385 = vadd.f32 %v2994, %v3384
  %v3386 = vpop.f32.mrf.mxu0
  %3387 = vmatprep.mubr.f32.mxu0 %v2651
  %3388 = vmatmul.mubr.f32.gmra.mxu0 %v2650
  %v3389 = vpop.f32.mrf.mxu0
  %v3390 = vadd.f32 %v2999, %v3389
  %v3391 = vpop.f32.mrf.mxu0
  %3392 = vmatprep.mubr.f32.mxu0 %v2655
  %3393 = vmatmul.mubr.f32.gmra.mxu0 %v2654
  %v3394 = vpop.f32.mrf.mxu0
  %v3395 = vadd.f32 %v3004, %v3394
  %v3396 = vpop.f32.mrf.mxu0
  %3397 = vmatprep.mubr.f32.mxu0 %v2659
  %3398 = vmatmul.mubr.f32.gmra.mxu0 %v2658
  %v3399 = vpop.f32.mrf.mxu0
  %v3400 = vadd.f32 %v3009, %v3399
  %v3401 = vpop.f32.mrf.mxu0
  %3402 = vmatprep.mubr.f32.mxu0 %v2663
  %3403 = vmatmul.mubr.f32.gmra.mxu0 %v2662
  %v3404 = vpop.f32.mrf.mxu0
  %v3405 = vadd.f32 %v3014, %v3404
  %v3406 = vpop.f32.mrf.mxu0
  %3407 = vmatprep.mubr.f32.mxu0 %v2667
  %3408 = vmatmul.mubr.f32.gmra.mxu0 %v2666
  %v3409 = vpop.f32.mrf.mxu0
  %v3410 = vadd.f32 %v3019, %v3409
  %v3411 = vpop.f32.mrf.mxu0
  %3412 = vmatprep.mubr.f32.mxu0 %v2671
  %3413 = vmatmul.mubr.f32.gmra.mxu0 %v2670
  %v3414 = vpop.f32.mrf.mxu0
  %v3415 = vadd.f32 %v3024, %v3414
  %v3416 = vpop.f32.mrf.mxu0
  %3417 = vmatprep.mubr.f32.mxu0 %v2675
  %3418 = vmatmul.mubr.f32.gmra.mxu0 %v2674
  %v3419 = vpop.f32.mrf.mxu0
  %v3420 = vadd.f32 %v3029, %v3419
  %v3421 = vpop.f32.mrf.mxu0
  %3422 = vmatprep.mubr.f32.mxu0 %v2679
  %3423 = vmatmul.mubr.f32.gmra.mxu0 %v2678
  %v3424 = vpop.f32.mrf.mxu0
  %v3425 = vadd.f32 %v3034, %v3424
  %v3426 = vpop.f32.mrf.mxu0
  %3427 = vmatprep.mubr.f32.mxu0 %v2683
  %3428 = vmatmul.mubr.f32.gmra.mxu0 %v2682
  %v3429 = vpop.f32.mrf.mxu0
  %v3430 = vadd.f32 %v3039, %v3429
  %v3431 = vpop.f32.mrf.mxu0
  %3432 = vmatprep.mubr.f32.mxu0 %v2687
  %3433 = vmatmul.mubr.f32.gmra.mxu0 %v2686
  %v3434 = vpop.f32.mrf.mxu0
  %v3435 = vadd.f32 %v3044, %v3434
  %v3436 = vpop.f32.mrf.mxu0
  %3437 = vmatprep.mubr.f32.mxu0 %v2691
  %3438 = vmatmul.mubr.f32.gmra.mxu0 %v2690
  %v3439 = vpop.f32.mrf.mxu0
  %v3440 = vadd.f32 %v3049, %v3439
  %v3441 = vpop.f32.mrf.mxu0
  %3442 = vmatprep.mubr.f32.mxu0 %v2695
  %3443 = vmatmul.mubr.f32.gmra.mxu0 %v2694
  %v3444 = vpop.f32.mrf.mxu0
  %v3445 = vadd.f32 %v3054, %v3444
  %v3446 = vpop.f32.mrf.mxu0
  %3447 = vmatprep.mubr.f32.mxu0 %v2699
  %3448 = vmatmul.mubr.f32.gmra.mxu0 %v2698
  %v3449 = vpop.f32.mrf.mxu0
  %v3450 = vadd.f32 %v3059, %v3449
  %v3451 = vpop.f32.mrf.mxu0
  %3452 = vmatprep.mubr.f32.mxu0 %v2703
  %3453 = vmatmul.mubr.f32.gmra.mxu0 %v2702
  %v3454 = vpop.f32.mrf.mxu0
  %v3455 = vadd.f32 %v3064, %v3454
  %v3456 = vpop.f32.mrf.mxu0
  %3457 = vmatprep.mubr.f32.mxu0 %v2707
  %3458 = vmatmul.mubr.f32.gmra.mxu0 %v2706
  %v3459 = vpop.f32.mrf.mxu0
  %v3460 = vadd.f32 %v3069, %v3459
  %v3461 = vpop.f32.mrf.mxu0
  %3462 = vmatprep.mubr.f32.mxu0 %v2711
  %3463 = vmatmul.mubr.f32.gmra.mxu0 %v2710
  %v3464 = vpop.f32.mrf.mxu0
  %v3465 = vadd.f32 %v3074, %v3464
  %v3466 = vpop.f32.mrf.mxu0
  %3467 = vmatprep.mubr.f32.mxu0 %v2715
  %3468 = vmatmul.mubr.f32.gmra.mxu0 %v2714
  %v3469 = vpop.f32.mrf.mxu0
  %v3470 = vadd.f32 %v3079, %v3469
  %v3471 = vpop.f32.mrf.mxu0
  %3472 = vmatprep.mubr.f32.mxu0 %v2719
  %3473 = vmatmul.mubr.f32.gmra.mxu0 %v2718
  %v3474 = vpop.f32.mrf.mxu0
  %v3475 = vadd.f32 %v3084, %v3474
  %v3476 = vpop.f32.mrf.mxu0
  %3477 = vmatprep.mubr.f32.mxu0 %v2723
  %3478 = vmatmul.mubr.f32.gmra.mxu0 %v2722
  %v3479 = vpop.f32.mrf.mxu0
  %v3480 = vadd.f32 %v3089, %v3479
  %v3481 = vpop.f32.mrf.mxu0
  %3482 = vmatprep.mubr.f32.mxu0 %v2727
  %3483 = vmatmul.mubr.f32.gmra.mxu0 %v2726
  %v3484 = vpop.f32.mrf.mxu0
  %v3485 = vadd.f32 %v3094, %v3484
  %v3486 = vpop.f32.mrf.mxu0
  %3487 = vmatprep.mubr.f32.mxu0 %v2731
  %3488 = vmatmul.mubr.f32.gmra.mxu0 %v2730
  %v3489 = vpop.f32.mrf.mxu0
  %v3490 = vadd.f32 %v3099, %v3489
  %v3491 = vpop.f32.mrf.mxu0
  %3492 = vmatprep.mubr.f32.mxu0 %v2735
  %3493 = vmatmul.mubr.f32.gmra.mxu0 %v2734
  %v3494 = vpop.f32.mrf.mxu0
  %v3495 = vadd.f32 %v3104, %v3494
  %v3496 = vpop.f32.mrf.mxu0
  %3497 = vmatprep.mubr.f32.mxu0 %v2739
  %3498 = vmatmul.mubr.f32.gmra.mxu0 %v2738
  %v3499 = vpop.f32.mrf.mxu0
  %v3500 = vadd.f32 %v3109, %v3499
  %v3501 = vpop.f32.mrf.mxu0
  %3502 = vmatprep.mubr.f32.mxu0 %v2743
  %3503 = vmatmul.mubr.f32.gmra.mxu0 %v2742
  %v3504 = vpop.f32.mrf.mxu0
  %v3505 = vadd.f32 %v3114, %v3504
  %v3506 = vpop.f32.mrf.mxu0
  %3507 = vmatprep.mubr.f32.mxu0 %v2747
  %3508 = vmatmul.mubr.f32.gmra.mxu0 %v2746
  %v3509 = vpop.f32.mrf.mxu0
  %v3510 = vadd.f32 %v3119, %v3509
  %v3511 = vpop.f32.mrf.mxu0
  %3512 = vmatprep.mubr.f32.mxu0 %v2751
  %3513 = vmatmul.mubr.f32.gmra.mxu0 %v2750
  %v3514 = vpop.f32.mrf.mxu0
  %v3515 = vadd.f32 %v3124, %v3514
  %v3516 = vpop.f32.mrf.mxu0
  %3517 = vmatprep.mubr.f32.mxu0 %v2755
  %3518 = vmatmul.mubr.f32.gmra.mxu0 %v2754
  %v3519 = vpop.f32.mrf.mxu0
  %v3520 = vadd.f32 %v3129, %v3519
  %v3521 = vpop.f32.mrf.mxu0
  %3522 = vmatprep.mubr.f32.mxu0 %v2759
  %3523 = vmatmul.mubr.f32.gmra.mxu0 %v2758
  %v3524 = vpop.f32.mrf.mxu0
  %v3525 = vadd.f32 %v3134, %v3524
  %v3526 = vpop.f32.mrf.mxu0
  %3527 = vmatprep.mubr.f32.mxu0 %v2763
  %3528 = vmatmul.mubr.f32.gmra.mxu0 %v2762
  %v3529 = vpop.f32.mrf.mxu0
  %v3530 = vadd.f32 %v3139, %v3529
  %v3531 = vpop.f32.mrf.mxu0
  %3532 = vmatprep.mubr.f32.mxu0 %v2767
  %3533 = vmatmul.mubr.f32.gmra.mxu0 %v2766
  %v3534 = vpop.f32.mrf.mxu0
  %v3535 = vadd.f32 %v3144, %v3534
  %v3536 = vpop.f32.mrf.mxu0
  %3537 = vmatprep.mubr.f32.mxu0 %v2771
  %3538 = vmatmul.mubr.f32.gmra.mxu0 %v2770
  %v3539 = vpop.f32.mrf.mxu0
  %v3540 = vadd.f32 %v3149, %v3539
  %v3541 = vpop.f32.mrf.mxu0
  %3542 = vmatprep.mubr.f32.mxu0 %v2775
  %3543 = vmatmul.mubr.f32.gmra.mxu0 %v2774
  %v3544 = vpop.f32.mrf.mxu0
  %v3545 = vadd.f32 %v3154, %v3544
  %v3546 = vpop.f32.mrf.mxu0
  %3547 = vmatprep.mubr.f32.mxu0 %v2779
  %3548 = vmatmul.mubr.f32.gmra.mxu0 %v2778
  %v3549 = vpop.f32.mrf.mxu0
  %v3550 = vadd.f32 %v3159, %v3549
  %v3551 = vpop.f32.mrf.mxu0
  %3552 = vmatprep.mubr.f32.mxu0 %v2783
  %3553 = vmatmul.mubr.f32.gmra.mxu0 %v2782
  %v3554 = vpop.f32.mrf.mxu0
  %v3555 = vadd.f32 %v3164, %v3554
  %v3556 = vpop.f32.mrf.mxu0
  %3557 = vmatprep.mubr.f32.mxu0 %v2787
  %3558 = vmatmul.mubr.f32.gmra.mxu0 %v2786
  %v3559 = vpop.f32.mrf.mxu0
  %v3560 = vadd.f32 %v3169, %v3559
  %v3561 = vpop.f32.mrf.mxu0
  %3562 = vmatprep.mubr.f32.mxu0 %v2791
  %3563 = vmatmul.mubr.f32.gmra.mxu0 %v2790
  %v3564 = vpop.f32.mrf.mxu0
  %v3565 = vadd.f32 %v3174, %v3564
  %v3566 = vpop.f32.mrf.mxu0
  %3567 = vmatprep.mubr.f32.mxu0 %v2795
  %3568 = vmatmul.mubr.f32.gmra.mxu0 %v2794
  %v3569 = vpop.f32.mrf.mxu0
  %v3570 = vadd.f32 %v3179, %v3569
  %v3571 = vpop.f32.mrf.mxu0
  %3572 = vmatprep.mubr.f32.mxu0 %v2799
  %3573 = vmatmul.mubr.f32.gmra.mxu0 %v2798
  %v3574 = vpop.f32.mrf.mxu0
  %v3575 = vadd.f32 %v3184, %v3574
  %v3576 = vpop.f32.mrf.mxu0
  %3577 = vmatprep.mubr.f32.mxu0 %v2803
  %3578 = vmatmul.mubr.f32.gmra.mxu0 %v2802
  %v3579 = vpop.f32.mrf.mxu0
  %v3580 = vadd.f32 %v3189, %v3579
  %v3581 = vpop.f32.mrf.mxu0
  %3582 = vmatprep.mubr.f32.mxu0 %v2807
  %3583 = vmatmul.mubr.f32.gmra.mxu0 %v2806
  %v3584 = vpop.f32.mrf.mxu0
  %v3585 = vadd.f32 %v3194, %v3584
  %v3586 = vpop.f32.mrf.mxu0
  %3587 = vmatprep.mubr.f32.mxu0 %v2811
  %3588 = vmatmul.mubr.f32.gmra.mxu0 %v2810
  %v3589 = vpop.f32.mrf.mxu0
  %v3590 = vadd.f32 %v3199, %v3589
  %v3591 = vpop.f32.mrf.mxu0
  %3592 = vmatprep.mubr.f32.mxu0 %v2815
  %3593 = vmatmul.mubr.f32.gmra.mxu0 %v2814
  %v3594 = vpop.f32.mrf.mxu0
  %v3595 = vadd.f32 %v3204, %v3594
  %v3596 = vpop.f32.mrf.mxu0
  %3597 = vmatprep.mubr.f32.mxu0 %v2819
  %3598 = vmatmul.mubr.f32.gmra.mxu0 %v2818
  %v3599 = vpop.f32.mrf.mxu0
  %v3600 = vpop.f32.mrf.mxu0
  %3601 = vmatprep.mubr.f32.mxu0 %v2823
  %3602 = vmatmul.mubr.f32.gmra.mxu0 %v2822
  %v3603 = vpop.f32.mrf.mxu0
  %v3604 = vpop.f32.mrf.mxu0
  %3605 = vdwg.mxu0
  %v3606 = vld [vmem:[%s5] sm:$0x1]
  %v3607 = vld [vmem:[%s4] sm:$0xf]
  %v3608 = vld [vmem:[%s4 + $0x4] sm:$0xf]
  %v3609 = vld [vmem:[%s4 + $0x8] sm:$0xf]
  %v3610 = vld [vmem:[%s4 + $0xc] sm:$0xf]
  %v3611 = vld [vmem:[%s4 + $0x10] sm:$0xf]
  %v3612 = vld [vmem:[%s4 + $0x14] sm:$0xf]
  %v3613 = vld [vmem:[%s4 + $0x18] sm:$0xf]
  %v3614 = vld [vmem:[%s4 + $0x1c] sm:$0xf]
  %s3615 = scalar_lea.vmem %s4, 32
  %v3616 = vld [vmem:[%s3615] sm:$0xf]
  %v3617 = vld [vmem:[%s3615 + $0x4] sm:$0xf]
  %v3618 = vld [vmem:[%s3615 + $0x8] sm:$0xf]
  %v3619 = vld [vmem:[%s3615 + $0xc] sm:$0xf]
  %v3620 = vld [vmem:[%s3615 + $0x10] sm:$0xf]
  %v3621 = vld [vmem:[%s3615 + $0x14] sm:$0xf]
  %v3622 = vld [vmem:[%s3615 + $0x18] sm:$0xf]
  %v3623 = vld [vmem:[%s3615 + $0x1c] sm:$0xf]
  %s3624 = scalar_lea.vmem %s4, 64
  %v3625 = vld [vmem:[%s3624] sm:$0xf]
  %v3626 = vld [vmem:[%s3624 + $0x4] sm:$0xf]
  %v3627 = vld [vmem:[%s3624 + $0x8] sm:$0xf]
  %v3628 = vld [vmem:[%s3624 + $0xc] sm:$0xf]
  %v3629 = vld [vmem:[%s3624 + $0x10] sm:$0xf]
  %v3630 = vld [vmem:[%s3624 + $0x14] sm:$0xf]
  %v3631 = vld [vmem:[%s3624 + $0x18] sm:$0xf]
  %v3632 = vld [vmem:[%s3624 + $0x1c] sm:$0xf]
  %s3633 = scalar_lea.vmem %s4, 96
  %v3634 = vld [vmem:[%s3633] sm:$0xf]
  %v3635 = vld [vmem:[%s3633 + $0x4] sm:$0xf]
  %v3636 = vld [vmem:[%s3633 + $0x8] sm:$0xf]
  %v3637 = vld [vmem:[%s3633 + $0xc] sm:$0xf]
  %v3638 = vld [vmem:[%s3633 + $0x10] sm:$0xf]
  %v3639 = vld [vmem:[%s3633 + $0x14] sm:$0xf]
  %v3640 = vld [vmem:[%s3633 + $0x18] sm:$0xf]
  %v3641 = vld [vmem:[%s3633 + $0x1c] sm:$0xf]
  %s3642 = scalar_lea.vmem %s4, 128
  %v3643 = vld [vmem:[%s3642] sm:$0xf]
  %v3644 = vld [vmem:[%s3642 + $0x4] sm:$0xf]
  %v3645 = vld [vmem:[%s3642 + $0x8] sm:$0xf]
  %v3646 = vld [vmem:[%s3642 + $0xc] sm:$0xf]
  %v3647 = vld [vmem:[%s3642 + $0x10] sm:$0xf]
  %v3648 = vld [vmem:[%s3642 + $0x14] sm:$0xf]
  %v3649 = vld [vmem:[%s3642 + $0x18] sm:$0xf]
  %v3650 = vld [vmem:[%s3642 + $0x1c] sm:$0xf]
  %s3651 = scalar_lea.vmem %s4, 160
  %v3652 = vld [vmem:[%s3651] sm:$0xf]
  %v3653 = vld [vmem:[%s3651 + $0x4] sm:$0xf]
  %v3654 = vld [vmem:[%s3651 + $0x8] sm:$0xf]
  %v3655 = vld [vmem:[%s3651 + $0xc] sm:$0xf]
  %v3656 = vld [vmem:[%s3651 + $0x10] sm:$0xf]
  %v3657 = vld [vmem:[%s3651 + $0x14] sm:$0xf]
  %v3658 = vld [vmem:[%s3651 + $0x18] sm:$0xf]
  %v3659 = vld [vmem:[%s3651 + $0x1c] sm:$0xf]
  %s3660 = scalar_lea.vmem %s4, 192
  %v3661 = vld [vmem:[%s3660] sm:$0xf]
  %v3662 = vld [vmem:[%s3660 + $0x4] sm:$0xf]
  %v3663 = vld [vmem:[%s3660 + $0x8] sm:$0xf]
  %v3664 = vld [vmem:[%s3660 + $0xc] sm:$0xf]
  %v3665 = vld [vmem:[%s3660 + $0x10] sm:$0xf]
  %v3666 = vld [vmem:[%s3660 + $0x14] sm:$0xf]
  %v3667 = vld [vmem:[%s3660 + $0x18] sm:$0xf]
  %v3668 = vld [vmem:[%s3660 + $0x1c] sm:$0xf]
  %s3669 = scalar_lea.vmem %s4, 224
  %v3670 = vld [vmem:[%s3669] sm:$0xf]
  %v3671 = vld [vmem:[%s3669 + $0x4] sm:$0xf]
  %v3672 = vld [vmem:[%s3669 + $0x8] sm:$0xf]
  %v3673 = vld [vmem:[%s3669 + $0xc] sm:$0xf]
  %v3674 = vld [vmem:[%s3669 + $0x10] sm:$0xf]
  %v3675 = vld [vmem:[%s3669 + $0x14] sm:$0xf]
  %v3676 = vld [vmem:[%s3669 + $0x18] sm:$0xf]
  %v3677 = vld [vmem:[%s3669 + $0x1c] sm:$0xf]
  %s3678 = scalar_lea.vmem %s4, 256
  %v3679 = vld [vmem:[%s3678] sm:$0xf]
  %v3680 = vld [vmem:[%s3678 + $0x4] sm:$0xf]
  %v3681 = vld [vmem:[%s3678 + $0x8] sm:$0xf]
  %v3682 = vld [vmem:[%s3678 + $0xc] sm:$0xf]
  %v3683 = vld [vmem:[%s3678 + $0x10] sm:$0xf]
  %v3684 = vld [vmem:[%s3678 + $0x14] sm:$0xf]
  %v3685 = vld [vmem:[%s3678 + $0x18] sm:$0xf]
  %v3686 = vld [vmem:[%s3678 + $0x1c] sm:$0xf]
  %v3687 = vpack.c.bf16 %v3295, %v3290
  %v3688 = vpack.c.bf16 %v3305, %v3300
  %v3689 = vpack.c.bf16 %v3315, %v3310
  %v3690 = vpack.c.bf16 %v3325, %v3320
  %v3691 = vpack.c.bf16 %v3335, %v3330
  %v3692 = vpack.c.bf16 %v3345, %v3340
  %v3693 = vpack.c.bf16 %v3355, %v3350
  %v3694 = vpack.c.bf16 %v3365, %v3360
  %v3695 = vpack.c.bf16 %v3375, %v3370
  %v3696 = vpack.c.bf16 %v3385, %v3380
  %v3697 = vpack.c.bf16 %v3395, %v3390
  %v3698 = vpack.c.bf16 %v3405, %v3400
  %v3699 = vpack.c.bf16 %v3415, %v3410
  %v3700 = vpack.c.bf16 %v3425, %v3420
  %v3701 = vpack.c.bf16 %v3300, %v3295
  %v3702 = vpack.c.bf16 %v3310, %v3305
  %v3703 = vpack.c.bf16 %v3320, %v3315
  %v3704 = vpack.c.bf16 %v3330, %v3325
  %v3705 = vpack.c.bf16 %v3340, %v3335
  %v3706 = vpack.c.bf16 %v3350, %v3345
  %v3707 = vpack.c.bf16 %v3360, %v3355
  %v3708 = vpack.c.bf16 %v3370, %v3365
  %v3709 = vpack.c.bf16 %v3380, %v3375
  %v3710 = vpack.c.bf16 %v3390, %v3385
  %v3711 = vpack.c.bf16 %v3400, %v3395
  %v3712 = vpack.c.bf16 %v3410, %v3405
  %v3713 = vpack.c.bf16 %v3420, %v3415
  %v3714 = vpack.c.bf16 %v3425, %v3425
  %v3723 = vunpack.c.l.b16 %v3616
  %v3724 = vunpack.c.l.b16 %v3617
  %v3725 = vunpack.c.l.b16 %v3618
  %v3726 = vunpack.c.l.b16 %v3619
  %v3727 = vunpack.c.l.b16 %v3620
  %v3728 = vunpack.c.l.b16 %v3621
  %v3729 = vunpack.c.l.b16 %v3622
  %v3730 = vunpack.c.l.b16 %v3623
  %v3731 = vpack.c.b16 %v3724, %v3723
  %v3732 = vpack.c.b16 %v3726, %v3725
  %v3733 = vpack.c.b16 %v3728, %v3727
  %v3734 = vpack.c.b16 %v3730, %v3729
  %v3740 = vsel %vm688, %v3701, 0
  %v3743 = vsel %vm688, %v3702, 0
  %v3746 = vsel %vm688, %v3703, 0
  %v3749 = vsel %vm688, %v3704, 0
  %v3752 = vsel %vm688, %v3705, 0
  %v3755 = vsel %vm688, %v3706, 0
  %v3758 = vsel %vm688, %v3707, 0
  %v3761 = vsel %vm688, %v3708, 0
  %v3764 = vsel %vm688, %v3709, 0
  %v3767 = vsel %vm688, %v3710, 0
  %v3770 = vsel %vm688, %v3711, 0
  %v3773 = vsel %vm688, %v3712, 0
  %v3776 = vsel %vm688, %v3713, 0
  %v3779 = vsel %vm688, %v3714, 0
  %3781 = vmatprep.subr.bf16.mxu0 0
  %3782 = vmatpush1.bf16.msra.mxu0 0
  %3783 = vmatprep.subr.bf16.mxu0 0
  %3784 = vmatpush1.bf16.msra.mxu0 0
  %3785 = vmatprep.subr.bf16.mxu0 0
  %3786 = vmatpush1.bf16.msra.mxu0 0
  %3787 = vmatprep.subr.bf16.mxu0 0
  %3788 = vmatpush1.bf16.msra.mxu0 0
  %3789 = vmatprep.subr.bf16.mxu0 0
  %3790 = vmatpush1.bf16.msra.mxu0 %v3734
  %3791 = vmatprep.subr.bf16.mxu0 0
  %3792 = vmatpush1.bf16.msra.mxu0 %v3733
  %3793 = vmatprep.subr.bf16.mxu0 0
  %3794 = vmatpush1.bf16.msra.mxu0 %v3732
  %3795 = vmatprep.subr.bf16.mxu0 0
  %3796 = vmatpush1.bf16.msra.mxu0 %v3731
  %3797 = vmatprep.subr.bf16.mxu0 0
  %3798 = vmatpush2.bf16.msra.mxu0 0
  %3799 = vmatprep.subr.bf16.mxu0 0
  %3800 = vmatpush2.bf16.msra.mxu0 0
  %3801 = vmatprep.subr.bf16.mxu0 0
  %3802 = vmatpush2.bf16.msra.mxu0 0
  %3803 = vmatprep.subr.bf16.mxu0 0
  %3804 = vmatpush2.bf16.msra.mxu0 0
  %3805 = vmatprep.subr.bf16.mxu0 0
  %3806 = vmatpush2.bf16.msra.mxu0 0
  %3807 = vmatprep.subr.bf16.mxu0 0
  %3808 = vmatpush2.bf16.msra.mxu0 0
  %3809 = vmatprep.subr.bf16.mxu0 0
  %3810 = vmatpush2.bf16.msra.mxu0 0
  %3811 = vmatprep.subr.bf16.mxu0 0
  %3812 = vmatpush2.bf16.msra.mxu0 0
  %3813 = vmatprep.mubr.bf16.mxu0 0
  %3814 = vmatmul.mubr.bf16.gmra.mxu0 %v3740
  %v3815 = vpop.f32.mrf.mxu0
  %v3816 = vpop.f32.mrf.mxu0
  %v3817 = vpop.f32.mrf.mxu0
  %v3818 = vpop.f32.mrf.mxu0
  %3819 = vmatprep.mubr.bf16.mxu0 0
  %3820 = vmatmul.mubr.bf16.gmra.mxu0 %v3743
  %v3821 = vpop.f32.mrf.mxu0
  %v3822 = vpop.f32.mrf.mxu0
  %v3823 = vpop.f32.mrf.mxu0
  %v3824 = vadd.f32 0.0, %v3823
  %v3825 = vpop.f32.mrf.mxu0
  %3826 = vmatprep.mubr.bf16.mxu0 0
  %3827 = vmatmul.mubr.bf16.gmra.mxu0 %v3746
  %v3828 = vpop.f32.mrf.mxu0
  %v3829 = vadd.f32 0.0, %v3828
  %v3830 = vpop.f32.mrf.mxu0
  %v3831 = vpop.f32.mrf.mxu0
  %v3832 = vadd.f32 0.0, %v3831
  %v3833 = vpop.f32.mrf.mxu0
  %3834 = vmatprep.mubr.bf16.mxu0 0
  %3835 = vmatmul.mubr.bf16.gmra.mxu0 %v3749
  %v3836 = vpop.f32.mrf.mxu0
  %v3837 = vadd.f32 0.0, %v3836
  %v3838 = vpop.f32.mrf.mxu0
  %v3839 = vpop.f32.mrf.mxu0
  %v3840 = vadd.f32 0.0, %v3839
  %v3841 = vpop.f32.mrf.mxu0
  %3842 = vmatprep.mubr.bf16.mxu0 0
  %3843 = vmatmul.mubr.bf16.gmra.mxu0 %v3752
  %v3844 = vpop.f32.mrf.mxu0
  %v3845 = vadd.f32 0.0, %v3844
  %v3846 = vpop.f32.mrf.mxu0
  %v3847 = vpop.f32.mrf.mxu0
  %v3848 = vadd.f32 0.0, %v3847
  %v3849 = vpop.f32.mrf.mxu0
  %3850 = vmatprep.mubr.bf16.mxu0 0
  %3851 = vmatmul.mubr.bf16.gmra.mxu0 %v3755
  %v3852 = vpop.f32.mrf.mxu0
  %v3853 = vadd.f32 0.0, %v3852
  %v3854 = vpop.f32.mrf.mxu0
  %v3855 = vpop.f32.mrf.mxu0
  %v3856 = vadd.f32 0.0, %v3855
  %v3857 = vpop.f32.mrf.mxu0
  %3858 = vmatprep.mubr.bf16.mxu0 0
  %3859 = vmatmul.mubr.bf16.gmra.mxu0 %v3758
  %v3860 = vpop.f32.mrf.mxu0
  %v3861 = vadd.f32 0.0, %v3860
  %v3862 = vpop.f32.mrf.mxu0
  %v3863 = vpop.f32.mrf.mxu0
  %v3864 = vadd.f32 0.0, %v3863
  %v3865 = vpop.f32.mrf.mxu0
  %3866 = vmatprep.mubr.bf16.mxu0 0
  %3867 = vmatmul.mubr.bf16.gmra.mxu0 %v3761
  %v3868 = vpop.f32.mrf.mxu0
  %v3869 = vadd.f32 0.0, %v3868
  %v3870 = vpop.f32.mrf.mxu0
  %v3871 = vpop.f32.mrf.mxu0
  %v3872 = vadd.f32 0.0, %v3871
  %v3873 = vpop.f32.mrf.mxu0
  %3874 = vmatprep.mubr.bf16.mxu0 0
  %3875 = vmatmul.mubr.bf16.gmra.mxu0 %v3764
  %v3876 = vpop.f32.mrf.mxu0
  %v3877 = vadd.f32 0.0, %v3876
  %v3878 = vpop.f32.mrf.mxu0
  %v3879 = vpop.f32.mrf.mxu0
  %v3880 = vadd.f32 0.0, %v3879
  %v3881 = vpop.f32.mrf.mxu0
  %3882 = vmatprep.mubr.bf16.mxu0 0
  %3883 = vmatmul.mubr.bf16.gmra.mxu0 %v3767
  %v3884 = vpop.f32.mrf.mxu0
  %v3885 = vadd.f32 0.0, %v3884
  %v3886 = vpop.f32.mrf.mxu0
  %v3887 = vpop.f32.mrf.mxu0
  %v3888 = vadd.f32 0.0, %v3887
  %v3889 = vpop.f32.mrf.mxu0
  %3890 = vmatprep.mubr.bf16.mxu0 0
  %3891 = vmatmul.mubr.bf16.gmra.mxu0 %v3770
  %v3892 = vpop.f32.mrf.mxu0
  %v3893 = vadd.f32 0.0, %v3892
  %v3894 = vpop.f32.mrf.mxu0
  %v3895 = vpop.f32.mrf.mxu0
  %v3896 = vadd.f32 0.0, %v3895
  %v3897 = vpop.f32.mrf.mxu0
  %3898 = vmatprep.mubr.bf16.mxu0 0
  %3899 = vmatmul.mubr.bf16.gmra.mxu0 %v3773
  %v3900 = vpop.f32.mrf.mxu0
  %v3901 = vadd.f32 0.0, %v3900
  %v3902 = vpop.f32.mrf.mxu0
  %v3903 = vpop.f32.mrf.mxu0
  %v3904 = vadd.f32 0.0, %v3903
  %v3905 = vpop.f32.mrf.mxu0
  %3906 = vmatprep.mubr.bf16.mxu0 0
  %3907 = vmatmul.mubr.bf16.gmra.mxu0 %v3776
  %v3908 = vpop.f32.mrf.mxu0
  %v3909 = vadd.f32 0.0, %v3908
  %v3910 = vpop.f32.mrf.mxu0
  %v3911 = vpop.f32.mrf.mxu0
  %v3912 = vadd.f32 0.0, %v3911
  %v3913 = vpop.f32.mrf.mxu0
  %3914 = vmatprep.mubr.bf16.mxu0 0
  %3915 = vmatmul.mubr.bf16.gmra.mxu0 %v3779
  %v3916 = vpop.f32.mrf.mxu0
  %v3917 = vadd.f32 0.0, %v3916
  %v3918 = vpop.f32.mrf.mxu0
  %v3919 = vpop.f32.mrf.mxu0
  %v3920 = vpop.f32.mrf.mxu0
  %3921 = vdwg.mxu0
  %vm3922 = vsmask.f32 4352
  %v3924 = vshrl.u32 %v3687, 16
  %v3926 = vrot.slane %v3924, 3
  %v3927 = vshll.u32 %v3687, 16
  %v3929 = vrot.slane %v3927, 4
  %v3930 = vor.u32 %v3926, %v3929
  %v3932 = vshrl.u32 %v3688, 16
  %v3934 = vrot.slane %v3932, 3
  %v3935 = vshll.u32 %v3688, 16
  %v3937 = vrot.slane %v3935, 4
  %v3938 = vor.u32 %v3934, %v3937
  %v3939 = vsel %vm3922, %v3930, %v3938
  %v3941 = vshrl.u32 %v3689, 16
  %v3943 = vrot.slane %v3941, 3
  %v3944 = vshll.u32 %v3689, 16
  %v3946 = vrot.slane %v3944, 4
  %v3947 = vor.u32 %v3943, %v3946
  %v3948 = vsel %vm3922, %v3938, %v3947
  %v3950 = vshrl.u32 %v3690, 16
  %v3952 = vrot.slane %v3950, 3
  %v3953 = vshll.u32 %v3690, 16
  %v3955 = vrot.slane %v3953, 4
  %v3956 = vor.u32 %v3952, %v3955
  %v3957 = vsel %vm3922, %v3947, %v3956
  %v3959 = vshrl.u32 %v3691, 16
  %v3961 = vrot.slane %v3959, 3
  %v3962 = vshll.u32 %v3691, 16
  %v3964 = vrot.slane %v3962, 4
  %v3965 = vor.u32 %v3961, %v3964
  %v3966 = vsel %vm3922, %v3956, %v3965
  %v3968 = vshrl.u32 %v3692, 16
  %v3970 = vrot.slane %v3968, 3
  %v3971 = vshll.u32 %v3692, 16
  %v3973 = vrot.slane %v3971, 4
  %v3974 = vor.u32 %v3970, %v3973
  %v3975 = vsel %vm3922, %v3965, %v3974
  %v3977 = vshrl.u32 %v3693, 16
  %v3979 = vrot.slane %v3977, 3
  %v3980 = vshll.u32 %v3693, 16
  %v3982 = vrot.slane %v3980, 4
  %v3983 = vor.u32 %v3979, %v3982
  %v3984 = vsel %vm3922, %v3974, %v3983
  %v3986 = vshrl.u32 %v3694, 16
  %v3988 = vrot.slane %v3986, 3
  %v3989 = vshll.u32 %v3694, 16
  %v3991 = vrot.slane %v3989, 4
  %v3992 = vor.u32 %v3988, %v3991
  %v3993 = vsel %vm3922, %v3983, %v3992
  %v3995 = vshrl.u32 %v3695, 16
  %v3997 = vrot.slane %v3995, 3
  %v3998 = vshll.u32 %v3695, 16
  %v4000 = vrot.slane %v3998, 4
  %v4001 = vor.u32 %v3997, %v4000
  %v4002 = vsel %vm3922, %v3992, %v4001
  %v4004 = vshrl.u32 %v3696, 16
  %v4006 = vrot.slane %v4004, 3
  %v4007 = vshll.u32 %v3696, 16
  %v4009 = vrot.slane %v4007, 4
  %v4010 = vor.u32 %v4006, %v4009
  %v4011 = vsel %vm3922, %v4001, %v4010
  %v4013 = vshrl.u32 %v3697, 16
  %v4015 = vrot.slane %v4013, 3
  %v4016 = vshll.u32 %v3697, 16
  %v4018 = vrot.slane %v4016, 4
  %v4019 = vor.u32 %v4015, %v4018
  %v4020 = vsel %vm3922, %v4010, %v4019
  %v4022 = vshrl.u32 %v3698, 16
  %v4024 = vrot.slane %v4022, 3
  %v4025 = vshll.u32 %v3698, 16
  %v4027 = vrot.slane %v4025, 4
  %v4028 = vor.u32 %v4024, %v4027
  %v4029 = vsel %vm3922, %v4019, %v4028
  %v4031 = vshrl.u32 %v3699, 16
  %v4033 = vrot.slane %v4031, 3
  %v4034 = vshll.u32 %v3699, 16
  %v4036 = vrot.slane %v4034, 4
  %v4037 = vor.u32 %v4033, %v4036
  %v4038 = vsel %vm3922, %v4028, %v4037
  %v4040 = vshrl.u32 %v3700, 16
  %v4042 = vrot.slane %v4040, 3
  %v4043 = vshll.u32 %v3700, 16
  %v4045 = vrot.slane %v4043, 4
  %v4046 = vor.u32 %v4042, %v4045
  %v4047 = vsel %vm3922, %v4037, %v4046
  %v4056 = vunpack.c.l.b16 %v3607
  %v4057 = vunpack.c.l.b16 %v3608
  %v4058 = vunpack.c.l.b16 %v3609
  %v4059 = vunpack.c.l.b16 %v3610
  %v4060 = vunpack.c.l.b16 %v3611
  %v4061 = vunpack.c.l.b16 %v3612
  %v4062 = vunpack.c.l.b16 %v3613
  %v4063 = vunpack.c.l.b16 %v3614
  %v4064 = vpack.c.b16 %v4057, %v4056
  %v4065 = vpack.c.b16 %v4059, %v4058
  %v4066 = vpack.c.b16 %v4061, %v4060
  %v4067 = vpack.c.b16 %v4063, %v4062
  %v4073 = vsel %vm688, %v3939, 0
  %v4076 = vsel %vm688, %v3948, 0
  %v4079 = vsel %vm688, %v3957, 0
  %v4082 = vsel %vm688, %v3966, 0
  %v4085 = vsel %vm688, %v3975, 0
  %v4088 = vsel %vm688, %v3984, 0
  %v4091 = vsel %vm688, %v3993, 0
  %v4094 = vsel %vm688, %v4002, 0
  %v4097 = vsel %vm688, %v4011, 0
  %v4100 = vsel %vm688, %v4020, 0
  %v4103 = vsel %vm688, %v4029, 0
  %v4106 = vsel %vm688, %v4038, 0
  %v4109 = vsel %vm688, %v4047, 0
  %v4112 = vsel %vm688, %v4046, 0
  %4114 = vmatprep.subr.bf16.mxu0 0
  %4115 = vmatpush1.bf16.msra.mxu0 0
  %4116 = vmatprep.subr.bf16.mxu0 0
  %4117 = vmatpush1.bf16.msra.mxu0 0
  %4118 = vmatprep.subr.bf16.mxu0 0
  %4119 = vmatpush1.bf16.msra.mxu0 0
  %4120 = vmatprep.subr.bf16.mxu0 0
  %4121 = vmatpush1.bf16.msra.mxu0 0
  %4122 = vmatprep.subr.bf16.mxu0 0
  %4123 = vmatpush1.bf16.msra.mxu0 %v4067
  %4124 = vmatprep.subr.bf16.mxu0 0
  %4125 = vmatpush1.bf16.msra.mxu0 %v4066
  %4126 = vmatprep.subr.bf16.mxu0 0
  %4127 = vmatpush1.bf16.msra.mxu0 %v4065
  %4128 = vmatprep.subr.bf16.mxu0 0
  %4129 = vmatpush1.bf16.msra.mxu0 %v4064
  %4130 = vmatprep.subr.bf16.mxu0 0
  %4131 = vmatpush2.bf16.msra.mxu0 0
  %4132 = vmatprep.subr.bf16.mxu0 0
  %4133 = vmatpush2.bf16.msra.mxu0 0
  %4134 = vmatprep.subr.bf16.mxu0 0
  %4135 = vmatpush2.bf16.msra.mxu0 0
  %4136 = vmatprep.subr.bf16.mxu0 0
  %4137 = vmatpush2.bf16.msra.mxu0 0
  %4138 = vmatprep.subr.bf16.mxu0 0
  %4139 = vmatpush2.bf16.msra.mxu0 0
  %4140 = vmatprep.subr.bf16.mxu0 0
  %4141 = vmatpush2.bf16.msra.mxu0 0
  %4142 = vmatprep.subr.bf16.mxu0 0
  %4143 = vmatpush2.bf16.msra.mxu0 0
  %4144 = vmatprep.subr.bf16.mxu0 0
  %4145 = vmatpush2.bf16.msra.mxu0 0
  %4146 = vmatprep.mubr.bf16.mxu0 0
  %4147 = vmatmul.mubr.bf16.gmra.mxu0 %v4073
  %v4148 = vpop.f32.mrf.mxu0
  %v4149 = vpop.f32.mrf.mxu0
  %v4150 = vpop.f32.mrf.mxu0
  %v4151 = vpop.f32.mrf.mxu0
  %4152 = vmatprep.mubr.bf16.mxu0 0
  %4153 = vmatmul.mubr.bf16.gmra.mxu0 %v4076
  %v4154 = vpop.f32.mrf.mxu0
  %v4155 = vpop.f32.mrf.mxu0
  %v4156 = vpop.f32.mrf.mxu0
  %v4157 = vadd.f32 %v3824, %v4156
  %v4158 = vpop.f32.mrf.mxu0
  %4159 = vmatprep.mubr.bf16.mxu0 0
  %4160 = vmatmul.mubr.bf16.gmra.mxu0 %v4079
  %v4161 = vpop.f32.mrf.mxu0
  %v4162 = vadd.f32 %v3829, %v4161
  %v4163 = vpop.f32.mrf.mxu0
  %v4164 = vpop.f32.mrf.mxu0
  %v4165 = vadd.f32 %v3832, %v4164
  %v4166 = vpop.f32.mrf.mxu0
  %4167 = vmatprep.mubr.bf16.mxu0 0
  %4168 = vmatmul.mubr.bf16.gmra.mxu0 %v4082
  %v4169 = vpop.f32.mrf.mxu0
  %v4170 = vadd.f32 %v3837, %v4169
  %v4171 = vpop.f32.mrf.mxu0
  %v4172 = vpop.f32.mrf.mxu0
  %v4173 = vadd.f32 %v3840, %v4172
  %v4174 = vpop.f32.mrf.mxu0
  %4175 = vmatprep.mubr.bf16.mxu0 0
  %4176 = vmatmul.mubr.bf16.gmra.mxu0 %v4085
  %v4177 = vpop.f32.mrf.mxu0
  %v4178 = vadd.f32 %v3845, %v4177
  %v4179 = vpop.f32.mrf.mxu0
  %v4180 = vpop.f32.mrf.mxu0
  %v4181 = vadd.f32 %v3848, %v4180
  %v4182 = vpop.f32.mrf.mxu0
  %4183 = vmatprep.mubr.bf16.mxu0 0
  %4184 = vmatmul.mubr.bf16.gmra.mxu0 %v4088
  %v4185 = vpop.f32.mrf.mxu0
  %v4186 = vadd.f32 %v3853, %v4185
  %v4187 = vpop.f32.mrf.mxu0
  %v4188 = vpop.f32.mrf.mxu0
  %v4189 = vadd.f32 %v3856, %v4188
  %v4190 = vpop.f32.mrf.mxu0
  %4191 = vmatprep.mubr.bf16.mxu0 0
  %4192 = vmatmul.mubr.bf16.gmra.mxu0 %v4091
  %v4193 = vpop.f32.mrf.mxu0
  %v4194 = vadd.f32 %v3861, %v4193
  %v4195 = vpop.f32.mrf.mxu0
  %v4196 = vpop.f32.mrf.mxu0
  %v4197 = vadd.f32 %v3864, %v4196
  %v4198 = vpop.f32.mrf.mxu0
  %4199 = vmatprep.mubr.bf16.mxu0 0
  %4200 = vmatmul.mubr.bf16.gmra.mxu0 %v4094
  %v4201 = vpop.f32.mrf.mxu0
  %v4202 = vadd.f32 %v3869, %v4201
  %v4203 = vpop.f32.mrf.mxu0
  %v4204 = vpop.f32.mrf.mxu0
  %v4205 = vadd.f32 %v3872, %v4204
  %v4206 = vpop.f32.mrf.mxu0
  %4207 = vmatprep.mubr.bf16.mxu0 0
  %4208 = vmatmul.mubr.bf16.gmra.mxu0 %v4097
  %v4209 = vpop.f32.mrf.mxu0
  %v4210 = vadd.f32 %v3877, %v4209
  %v4211 = vpop.f32.mrf.mxu0
  %v4212 = vpop.f32.mrf.mxu0
  %v4213 = vadd.f32 %v3880, %v4212
  %v4214 = vpop.f32.mrf.mxu0
  %4215 = vmatprep.mubr.bf16.mxu0 0
  %4216 = vmatmul.mubr.bf16.gmra.mxu0 %v4100
  %v4217 = vpop.f32.mrf.mxu0
  %v4218 = vadd.f32 %v3885, %v4217
  %v4219 = vpop.f32.mrf.mxu0
  %v4220 = vpop.f32.mrf.mxu0
  %v4221 = vadd.f32 %v3888, %v4220
  %v4222 = vpop.f32.mrf.mxu0
  %4223 = vmatprep.mubr.bf16.mxu0 0
  %4224 = vmatmul.mubr.bf16.gmra.mxu0 %v4103
  %v4225 = vpop.f32.mrf.mxu0
  %v4226 = vadd.f32 %v3893, %v4225
  %v4227 = vpop.f32.mrf.mxu0
  %v4228 = vpop.f32.mrf.mxu0
  %v4229 = vadd.f32 %v3896, %v4228
  %v4230 = vpop.f32.mrf.mxu0
  %4231 = vmatprep.mubr.bf16.mxu0 0
  %4232 = vmatmul.mubr.bf16.gmra.mxu0 %v4106
  %v4233 = vpop.f32.mrf.mxu0
  %v4234 = vadd.f32 %v3901, %v4233
  %v4235 = vpop.f32.mrf.mxu0
  %v4236 = vpop.f32.mrf.mxu0
  %v4237 = vadd.f32 %v3904, %v4236
  %v4238 = vpop.f32.mrf.mxu0
  %4239 = vmatprep.mubr.bf16.mxu0 0
  %4240 = vmatmul.mubr.bf16.gmra.mxu0 %v4109
  %v4241 = vpop.f32.mrf.mxu0
  %v4242 = vadd.f32 %v3909, %v4241
  %v4243 = vpop.f32.mrf.mxu0
  %v4244 = vpop.f32.mrf.mxu0
  %v4245 = vadd.f32 %v3912, %v4244
  %v4246 = vpop.f32.mrf.mxu0
  %4247 = vmatprep.mubr.bf16.mxu0 0
  %4248 = vmatmul.mubr.bf16.gmra.mxu0 %v4112
  %v4249 = vpop.f32.mrf.mxu0
  %v4250 = vadd.f32 %v3917, %v4249
  %v4251 = vpop.f32.mrf.mxu0
  %v4252 = vpop.f32.mrf.mxu0
  %v4253 = vpop.f32.mrf.mxu0
  %4254 = vdwg.mxu0
  %v4255 = vpack.c.bf16 %v3430, %v3425
  %vm4256 = vsmask.f32 7424
  %v4257 = vshrl.u32 %v3701, 16
  %v4259 = vshll.u32 %v3701, 16
  %v4261 = vrot.slane %v4259, 1
  %v4262 = vor.u32 %v4257, %v4261
  %v4263 = vshll.u32 %v3702, 16
  %v4265 = vrot.slane %v4263, 1
  %v4266 = vsel %vm4256, %v4262, %v4265
  %v4267 = vshrl.u32 %v3702, 16
  %v4269 = vor.u32 %v4267, %v4265
  %v4270 = vshll.u32 %v3703, 16
  %v4272 = vrot.slane %v4270, 1
  %v4273 = vsel %vm4256, %v4269, %v4272
  %v4274 = vshrl.u32 %v3703, 16
  %v4276 = vor.u32 %v4274, %v4272
  %v4277 = vshll.u32 %v3704, 16
  %v4279 = vrot.slane %v4277, 1
  %v4280 = vsel %vm4256, %v4276, %v4279
  %v4281 = vshrl.u32 %v3704, 16
  %v4283 = vor.u32 %v4281, %v4279
  %v4284 = vshll.u32 %v3705, 16
  %v4286 = vrot.slane %v4284, 1
  %v4287 = vsel %vm4256, %v4283, %v4286
  %v4288 = vshrl.u32 %v3705, 16
  %v4290 = vor.u32 %v4288, %v4286
  %v4291 = vshll.u32 %v3706, 16
  %v4293 = vrot.slane %v4291, 1
  %v4294 = vsel %vm4256, %v4290, %v4293
  %v4295 = vshrl.u32 %v3706, 16
  %v4297 = vor.u32 %v4295, %v4293
  %v4298 = vshll.u32 %v3707, 16
  %v4300 = vrot.slane %v4298, 1
  %v4301 = vsel %vm4256, %v4297, %v4300
  %v4302 = vshrl.u32 %v3707, 16
  %v4304 = vor.u32 %v4302, %v4300
  %v4305 = vshll.u32 %v3708, 16
  %v4307 = vrot.slane %v4305, 1
  %v4308 = vsel %vm4256, %v4304, %v4307
  %v4309 = vshrl.u32 %v3708, 16
  %v4311 = vor.u32 %v4309, %v4307
  %v4312 = vshll.u32 %v3709, 16
  %v4314 = vrot.slane %v4312, 1
  %v4315 = vsel %vm4256, %v4311, %v4314
  %v4316 = vshrl.u32 %v3709, 16
  %v4318 = vor.u32 %v4316, %v4314
  %v4319 = vshll.u32 %v3710, 16
  %v4321 = vrot.slane %v4319, 1
  %v4322 = vsel %vm4256, %v4318, %v4321
  %v4323 = vshrl.u32 %v3710, 16
  %v4325 = vor.u32 %v4323, %v4321
  %v4326 = vshll.u32 %v3711, 16
  %v4328 = vrot.slane %v4326, 1
  %v4329 = vsel %vm4256, %v4325, %v4328
  %v4330 = vshrl.u32 %v3711, 16
  %v4332 = vor.u32 %v4330, %v4328
  %v4333 = vshll.u32 %v3712, 16
  %v4335 = vrot.slane %v4333, 1
  %v4336 = vsel %vm4256, %v4332, %v4335
  %v4337 = vshrl.u32 %v3712, 16
  %v4339 = vor.u32 %v4337, %v4335
  %v4340 = vshll.u32 %v3713, 16
  %v4342 = vrot.slane %v4340, 1
  %v4343 = vsel %vm4256, %v4339, %v4342
  %v4344 = vshrl.u32 %v3713, 16
  %v4346 = vor.u32 %v4344, %v4342
  %v4348 = vshll.u32 %v4255, 16
  %v4350 = vrot.slane %v4348, 1
  %v4351 = vsel %vm4256, %v4346, %v4350
  %v4352 = vshrl.u32 %v4255, 16
  %v4354 = vor.u32 %v4352, %v4350
  %v4363 = vunpack.c.l.b16 %v3625
  %v4364 = vunpack.c.l.b16 %v3626
  %v4365 = vunpack.c.l.b16 %v3627
  %v4366 = vunpack.c.l.b16 %v3628
  %v4367 = vunpack.c.l.b16 %v3629
  %v4368 = vunpack.c.l.b16 %v3630
  %v4369 = vunpack.c.l.b16 %v3631
  %v4370 = vunpack.c.l.b16 %v3632
  %v4371 = vpack.c.b16 %v4364, %v4363
  %v4372 = vpack.c.b16 %v4366, %v4365
  %v4373 = vpack.c.b16 %v4368, %v4367
  %v4374 = vpack.c.b16 %v4370, %v4369
  %v4380 = vsel %vm688, %v4266, 0
  %v4383 = vsel %vm688, %v4273, 0
  %v4386 = vsel %vm688, %v4280, 0
  %v4389 = vsel %vm688, %v4287, 0
  %v4392 = vsel %vm688, %v4294, 0
  %v4395 = vsel %vm688, %v4301, 0
  %v4398 = vsel %vm688, %v4308, 0
  %v4401 = vsel %vm688, %v4315, 0
  %v4404 = vsel %vm688, %v4322, 0
  %v4407 = vsel %vm688, %v4329, 0
  %v4410 = vsel %vm688, %v4336, 0
  %v4413 = vsel %vm688, %v4343, 0
  %v4416 = vsel %vm688, %v4351, 0
  %v4419 = vsel %vm688, %v4354, 0
  %4421 = vmatprep.subr.bf16.mxu0 0
  %4422 = vmatpush1.bf16.msra.mxu0 0
  %4423 = vmatprep.subr.bf16.mxu0 0
  %4424 = vmatpush1.bf16.msra.mxu0 0
  %4425 = vmatprep.subr.bf16.mxu0 0
  %4426 = vmatpush1.bf16.msra.mxu0 0
  %4427 = vmatprep.subr.bf16.mxu0 0
  %4428 = vmatpush1.bf16.msra.mxu0 0
  %4429 = vmatprep.subr.bf16.mxu0 0
  %4430 = vmatpush1.bf16.msra.mxu0 %v4374
  %4431 = vmatprep.subr.bf16.mxu0 0
  %4432 = vmatpush1.bf16.msra.mxu0 %v4373
  %4433 = vmatprep.subr.bf16.mxu0 0
  %4434 = vmatpush1.bf16.msra.mxu0 %v4372
  %4435 = vmatprep.subr.bf16.mxu0 0
  %4436 = vmatpush1.bf16.msra.mxu0 %v4371
  %4437 = vmatprep.subr.bf16.mxu0 0
  %4438 = vmatpush2.bf16.msra.mxu0 0
  %4439 = vmatprep.subr.bf16.mxu0 0
  %4440 = vmatpush2.bf16.msra.mxu0 0
  %4441 = vmatprep.subr.bf16.mxu0 0
  %4442 = vmatpush2.bf16.msra.mxu0 0
  %4443 = vmatprep.subr.bf16.mxu0 0
  %4444 = vmatpush2.bf16.msra.mxu0 0
  %4445 = vmatprep.subr.bf16.mxu0 0
  %4446 = vmatpush2.bf16.msra.mxu0 0
  %4447 = vmatprep.subr.bf16.mxu0 0
  %4448 = vmatpush2.bf16.msra.mxu0 0
  %4449 = vmatprep.subr.bf16.mxu0 0
  %4450 = vmatpush2.bf16.msra.mxu0 0
  %4451 = vmatprep.subr.bf16.mxu0 0
  %4452 = vmatpush2.bf16.msra.mxu0 0
  %4453 = vmatprep.mubr.bf16.mxu0 0
  %4454 = vmatmul.mubr.bf16.gmra.mxu0 %v4380
  %v4455 = vpop.f32.mrf.mxu0
  %v4456 = vpop.f32.mrf.mxu0
  %v4457 = vpop.f32.mrf.mxu0
  %v4458 = vpop.f32.mrf.mxu0
  %4459 = vmatprep.mubr.bf16.mxu0 0
  %4460 = vmatmul.mubr.bf16.gmra.mxu0 %v4383
  %v4461 = vpop.f32.mrf.mxu0
  %v4462 = vpop.f32.mrf.mxu0
  %v4463 = vpop.f32.mrf.mxu0
  %v4464 = vadd.f32 0.0, %v4463
  %v4465 = vpop.f32.mrf.mxu0
  %4466 = vmatprep.mubr.bf16.mxu0 0
  %4467 = vmatmul.mubr.bf16.gmra.mxu0 %v4386
  %v4468 = vpop.f32.mrf.mxu0
  %v4469 = vadd.f32 0.0, %v4468
  %v4470 = vpop.f32.mrf.mxu0
  %v4471 = vpop.f32.mrf.mxu0
  %v4472 = vadd.f32 0.0, %v4471
  %v4473 = vpop.f32.mrf.mxu0
  %4474 = vmatprep.mubr.bf16.mxu0 0
  %4475 = vmatmul.mubr.bf16.gmra.mxu0 %v4389
  %v4476 = vpop.f32.mrf.mxu0
  %v4477 = vadd.f32 0.0, %v4476
  %v4478 = vpop.f32.mrf.mxu0
  %v4479 = vpop.f32.mrf.mxu0
  %v4480 = vadd.f32 0.0, %v4479
  %v4481 = vpop.f32.mrf.mxu0
  %4482 = vmatprep.mubr.bf16.mxu0 0
  %4483 = vmatmul.mubr.bf16.gmra.mxu0 %v4392
  %v4484 = vpop.f32.mrf.mxu0
  %v4485 = vadd.f32 0.0, %v4484
  %v4486 = vpop.f32.mrf.mxu0
  %v4487 = vpop.f32.mrf.mxu0
  %v4488 = vadd.f32 0.0, %v4487
  %v4489 = vpop.f32.mrf.mxu0
  %4490 = vmatprep.mubr.bf16.mxu0 0
  %4491 = vmatmul.mubr.bf16.gmra.mxu0 %v4395
  %v4492 = vpop.f32.mrf.mxu0
  %v4493 = vadd.f32 0.0, %v4492
  %v4494 = vpop.f32.mrf.mxu0
  %v4495 = vpop.f32.mrf.mxu0
  %v4496 = vadd.f32 0.0, %v4495
  %v4497 = vpop.f32.mrf.mxu0
  %4498 = vmatprep.mubr.bf16.mxu0 0
  %4499 = vmatmul.mubr.bf16.gmra.mxu0 %v4398
  %v4500 = vpop.f32.mrf.mxu0
  %v4501 = vadd.f32 0.0, %v4500
  %v4502 = vpop.f32.mrf.mxu0
  %v4503 = vpop.f32.mrf.mxu0
  %v4504 = vadd.f32 0.0, %v4503
  %v4505 = vpop.f32.mrf.mxu0
  %4506 = vmatprep.mubr.bf16.mxu0 0
  %4507 = vmatmul.mubr.bf16.gmra.mxu0 %v4401
  %v4508 = vpop.f32.mrf.mxu0
  %v4509 = vadd.f32 0.0, %v4508
  %v4510 = vpop.f32.mrf.mxu0
  %v4511 = vpop.f32.mrf.mxu0
  %v4512 = vadd.f32 0.0, %v4511
  %v4513 = vpop.f32.mrf.mxu0
  %4514 = vmatprep.mubr.bf16.mxu0 0
  %4515 = vmatmul.mubr.bf16.gmra.mxu0 %v4404
  %v4516 = vpop.f32.mrf.mxu0
  %v4517 = vadd.f32 0.0, %v4516
  %v4518 = vpop.f32.mrf.mxu0
  %v4519 = vpop.f32.mrf.mxu0
  %v4520 = vadd.f32 0.0, %v4519
  %v4521 = vpop.f32.mrf.mxu0
  %4522 = vmatprep.mubr.bf16.mxu0 0
  %4523 = vmatmul.mubr.bf16.gmra.mxu0 %v4407
  %v4524 = vpop.f32.mrf.mxu0
  %v4525 = vadd.f32 0.0, %v4524
  %v4526 = vpop.f32.mrf.mxu0
  %v4527 = vpop.f32.mrf.mxu0
  %v4528 = vadd.f32 0.0, %v4527
  %v4529 = vpop.f32.mrf.mxu0
  %4530 = vmatprep.mubr.bf16.mxu0 0
  %4531 = vmatmul.mubr.bf16.gmra.mxu0 %v4410
  %v4532 = vpop.f32.mrf.mxu0
  %v4533 = vadd.f32 0.0, %v4532
  %v4534 = vpop.f32.mrf.mxu0
  %v4535 = vpop.f32.mrf.mxu0
  %v4536 = vadd.f32 0.0, %v4535
  %v4537 = vpop.f32.mrf.mxu0
  %4538 = vmatprep.mubr.bf16.mxu0 0
  %4539 = vmatmul.mubr.bf16.gmra.mxu0 %v4413
  %v4540 = vpop.f32.mrf.mxu0
  %v4541 = vadd.f32 0.0, %v4540
  %v4542 = vpop.f32.mrf.mxu0
  %v4543 = vpop.f32.mrf.mxu0
  %v4544 = vadd.f32 0.0, %v4543
  %v4545 = vpop.f32.mrf.mxu0
  %4546 = vmatprep.mubr.bf16.mxu0 0
  %4547 = vmatmul.mubr.bf16.gmra.mxu0 %v4416
  %v4548 = vpop.f32.mrf.mxu0
  %v4549 = vadd.f32 0.0, %v4548
  %v4550 = vpop.f32.mrf.mxu0
  %v4551 = vpop.f32.mrf.mxu0
  %v4552 = vadd.f32 0.0, %v4551
  %v4553 = vpop.f32.mrf.mxu0
  %4554 = vmatprep.mubr.bf16.mxu0 0
  %4555 = vmatmul.mubr.bf16.gmra.mxu0 %v4419
  %v4556 = vpop.f32.mrf.mxu0
  %v4557 = vadd.f32 0.0, %v4556
  %v4558 = vpop.f32.mrf.mxu0
  %v4559 = vpop.f32.mrf.mxu0
  %v4560 = vpop.f32.mrf.mxu0
  %4561 = vdwg.mxu0
  %v4562 = vadd.f32 %v4157, %v4464
  %v4563 = vadd.f32 %v4162, %v4469
  %v4564 = vadd.f32 %v4165, %v4472
  %v4565 = vadd.f32 %v4170, %v4477
  %v4566 = vadd.f32 %v4173, %v4480
  %v4567 = vadd.f32 %v4178, %v4485
  %v4568 = vadd.f32 %v4181, %v4488
  %v4569 = vadd.f32 %v4186, %v4493
  %v4570 = vadd.f32 %v4189, %v4496
  %v4571 = vadd.f32 %v4194, %v4501
  %v4572 = vadd.f32 %v4197, %v4504
  %v4573 = vadd.f32 %v4202, %v4509
  %v4574 = vadd.f32 %v4205, %v4512
  %v4575 = vadd.f32 %v4210, %v4517
  %v4576 = vadd.f32 %v4213, %v4520
  %v4577 = vadd.f32 %v4218, %v4525
  %v4578 = vadd.f32 %v4221, %v4528
  %v4579 = vadd.f32 %v4226, %v4533
  %v4580 = vadd.f32 %v4229, %v4536
  %v4581 = vadd.f32 %v4234, %v4541
  %v4582 = vadd.f32 %v4237, %v4544
  %v4583 = vadd.f32 %v4242, %v4549
  %v4584 = vadd.f32 %v4245, %v4552
  %v4585 = vadd.f32 %v4250, %v4557
  %v4586 = vpack.c.bf16 %v3440, %v3435
  %v4587 = vrot.slane %v4267, 3
  %v4588 = vrot.slane %v4263, 4
  %v4589 = vor.u32 %v4587, %v4588
  %v4590 = vrot.slane %v4274, 3
  %v4591 = vrot.slane %v4270, 4
  %v4592 = vor.u32 %v4590, %v4591
  %v4593 = vsel %vm3922, %v4589, %v4592
  %v4594 = vrot.slane %v4281, 3
  %v4595 = vrot.slane %v4277, 4
  %v4596 = vor.u32 %v4594, %v4595
  %v4597 = vsel %vm3922, %v4592, %v4596
  %v4598 = vrot.slane %v4288, 3
  %v4599 = vrot.slane %v4284, 4
  %v4600 = vor.u32 %v4598, %v4599
  %v4601 = vsel %vm3922, %v4596, %v4600
  %v4602 = vrot.slane %v4295, 3
  %v4603 = vrot.slane %v4291, 4
  %v4604 = vor.u32 %v4602, %v4603
  %v4605 = vsel %vm3922, %v4600, %v4604
  %v4606 = vrot.slane %v4302, 3
  %v4607 = vrot.slane %v4298, 4
  %v4608 = vor.u32 %v4606, %v4607
  %v4609 = vsel %vm3922, %v4604, %v4608
  %v4610 = vrot.slane %v4309, 3
  %v4611 = vrot.slane %v4305, 4
  %v4612 = vor.u32 %v4610, %v4611
  %v4613 = vsel %vm3922, %v4608, %v4612
  %v4614 = vrot.slane %v4316, 3
  %v4615 = vrot.slane %v4312, 4
  %v4616 = vor.u32 %v4614, %v4615
  %v4617 = vsel %vm3922, %v4612, %v4616
  %v4618 = vrot.slane %v4323, 3
  %v4619 = vrot.slane %v4319, 4
  %v4620 = vor.u32 %v4618, %v4619
  %v4621 = vsel %vm3922, %v4616, %v4620
  %v4622 = vrot.slane %v4330, 3
  %v4623 = vrot.slane %v4326, 4
  %v4624 = vor.u32 %v4622, %v4623
  %v4625 = vsel %vm3922, %v4620, %v4624
  %v4626 = vrot.slane %v4337, 3
  %v4627 = vrot.slane %v4333, 4
  %v4628 = vor.u32 %v4626, %v4627
  %v4629 = vsel %vm3922, %v4624, %v4628
  %v4630 = vrot.slane %v4344, 3
  %v4631 = vrot.slane %v4340, 4
  %v4632 = vor.u32 %v4630, %v4631
  %v4633 = vsel %vm3922, %v4628, %v4632
  %v4634 = vrot.slane %v4352, 3
  %v4635 = vrot.slane %v4348, 4
  %v4636 = vor.u32 %v4634, %v4635
  %v4637 = vsel %vm3922, %v4632, %v4636
  %v4639 = vshrl.u32 %v4586, 16
  %v4641 = vrot.slane %v4639, 3
  %v4642 = vshll.u32 %v4586, 16
  %v4644 = vrot.slane %v4642, 4
  %v4645 = vor.u32 %v4641, %v4644
  %v4646 = vsel %vm3922, %v4636, %v4645
  %v4655 = vunpack.c.l.b16 %v3634
  %v4656 = vunpack.c.l.b16 %v3635
  %v4657 = vunpack.c.l.b16 %v3636
  %v4658 = vunpack.c.l.b16 %v3637
  %v4659 = vunpack.c.l.b16 %v3638
  %v4660 = vunpack.c.l.b16 %v3639
  %v4661 = vunpack.c.l.b16 %v3640
  %v4662 = vunpack.c.l.b16 %v3641
  %v4663 = vpack.c.b16 %v4656, %v4655
  %v4664 = vpack.c.b16 %v4658, %v4657
  %v4665 = vpack.c.b16 %v4660, %v4659
  %v4666 = vpack.c.b16 %v4662, %v4661
  %v4672 = vsel %vm688, %v4593, 0
  %v4675 = vsel %vm688, %v4597, 0
  %v4678 = vsel %vm688, %v4601, 0
  %v4681 = vsel %vm688, %v4605, 0
  %v4684 = vsel %vm688, %v4609, 0
  %v4687 = vsel %vm688, %v4613, 0
  %v4690 = vsel %vm688, %v4617, 0
  %v4693 = vsel %vm688, %v4621, 0
  %v4696 = vsel %vm688, %v4625, 0
  %v4699 = vsel %vm688, %v4629, 0
  %v4702 = vsel %vm688, %v4633, 0
  %v4705 = vsel %vm688, %v4637, 0
  %v4708 = vsel %vm688, %v4646, 0
  %v4711 = vsel %vm688, %v4645, 0
  %4713 = vmatprep.subr.bf16.mxu0 0
  %4714 = vmatpush1.bf16.msra.mxu0 0
  %4715 = vmatprep.subr.bf16.mxu0 0
  %4716 = vmatpush1.bf16.msra.mxu0 0
  %4717 = vmatprep.subr.bf16.mxu0 0
  %4718 = vmatpush1.bf16.msra.mxu0 0
  %4719 = vmatprep.subr.bf16.mxu0 0
  %4720 = vmatpush1.bf16.msra.mxu0 0
  %4721 = vmatprep.subr.bf16.mxu0 0
  %4722 = vmatpush1.bf16.msra.mxu0 %v4666
  %4723 = vmatprep.subr.bf16.mxu0 0
  %4724 = vmatpush1.bf16.msra.mxu0 %v4665
  %4725 = vmatprep.subr.bf16.mxu0 0
  %4726 = vmatpush1.bf16.msra.mxu0 %v4664
  %4727 = vmatprep.subr.bf16.mxu0 0
  %4728 = vmatpush1.bf16.msra.mxu0 %v4663
  %4729 = vmatprep.subr.bf16.mxu0 0
  %4730 = vmatpush2.bf16.msra.mxu0 0
  %4731 = vmatprep.subr.bf16.mxu0 0
  %4732 = vmatpush2.bf16.msra.mxu0 0
  %4733 = vmatprep.subr.bf16.mxu0 0
  %4734 = vmatpush2.bf16.msra.mxu0 0
  %4735 = vmatprep.subr.bf16.mxu0 0
  %4736 = vmatpush2.bf16.msra.mxu0 0
  %4737 = vmatprep.subr.bf16.mxu0 0
  %4738 = vmatpush2.bf16.msra.mxu0 0
  %4739 = vmatprep.subr.bf16.mxu0 0
  %4740 = vmatpush2.bf16.msra.mxu0 0
  %4741 = vmatprep.subr.bf16.mxu0 0
  %4742 = vmatpush2.bf16.msra.mxu0 0
  %4743 = vmatprep.subr.bf16.mxu0 0
  %4744 = vmatpush2.bf16.msra.mxu0 0
  %4745 = vmatprep.mubr.bf16.mxu0 0
  %4746 = vmatmul.mubr.bf16.gmra.mxu0 %v4672
  %v4747 = vpop.f32.mrf.mxu0
  %v4748 = vpop.f32.mrf.mxu0
  %v4749 = vpop.f32.mrf.mxu0
  %v4750 = vpop.f32.mrf.mxu0
  %4751 = vmatprep.mubr.bf16.mxu0 0
  %4752 = vmatmul.mubr.bf16.gmra.mxu0 %v4675
  %v4753 = vpop.f32.mrf.mxu0
  %v4754 = vpop.f32.mrf.mxu0
  %v4755 = vpop.f32.mrf.mxu0
  %v4756 = vadd.f32 0.0, %v4755
  %v4757 = vpop.f32.mrf.mxu0
  %4758 = vmatprep.mubr.bf16.mxu0 0
  %4759 = vmatmul.mubr.bf16.gmra.mxu0 %v4678
  %v4760 = vpop.f32.mrf.mxu0
  %v4761 = vadd.f32 0.0, %v4760
  %v4762 = vpop.f32.mrf.mxu0
  %v4763 = vpop.f32.mrf.mxu0
  %v4764 = vadd.f32 0.0, %v4763
  %v4765 = vpop.f32.mrf.mxu0
  %4766 = vmatprep.mubr.bf16.mxu0 0
  %4767 = vmatmul.mubr.bf16.gmra.mxu0 %v4681
  %v4768 = vpop.f32.mrf.mxu0
  %v4769 = vadd.f32 0.0, %v4768
  %v4770 = vpop.f32.mrf.mxu0
  %v4771 = vpop.f32.mrf.mxu0
  %v4772 = vadd.f32 0.0, %v4771
  %v4773 = vpop.f32.mrf.mxu0
  %4774 = vmatprep.mubr.bf16.mxu0 0
  %4775 = vmatmul.mubr.bf16.gmra.mxu0 %v4684
  %v4776 = vpop.f32.mrf.mxu0
  %v4777 = vadd.f32 0.0, %v4776
  %v4778 = vpop.f32.mrf.mxu0
  %v4779 = vpop.f32.mrf.mxu0
  %v4780 = vadd.f32 0.0, %v4779
  %v4781 = vpop.f32.mrf.mxu0
  %4782 = vmatprep.mubr.bf16.mxu0 0
  %4783 = vmatmul.mubr.bf16.gmra.mxu0 %v4687
  %v4784 = vpop.f32.mrf.mxu0
  %v4785 = vadd.f32 0.0, %v4784
  %v4786 = vpop.f32.mrf.mxu0
  %v4787 = vpop.f32.mrf.mxu0
  %v4788 = vadd.f32 0.0, %v4787
  %v4789 = vpop.f32.mrf.mxu0
  %4790 = vmatprep.mubr.bf16.mxu0 0
  %4791 = vmatmul.mubr.bf16.gmra.mxu0 %v4690
  %v4792 = vpop.f32.mrf.mxu0
  %v4793 = vadd.f32 0.0, %v4792
  %v4794 = vpop.f32.mrf.mxu0
  %v4795 = vpop.f32.mrf.mxu0
  %v4796 = vadd.f32 0.0, %v4795
  %v4797 = vpop.f32.mrf.mxu0
  %4798 = vmatprep.mubr.bf16.mxu0 0
  %4799 = vmatmul.mubr.bf16.gmra.mxu0 %v4693
  %v4800 = vpop.f32.mrf.mxu0
  %v4801 = vadd.f32 0.0, %v4800
  %v4802 = vpop.f32.mrf.mxu0
  %v4803 = vpop.f32.mrf.mxu0
  %v4804 = vadd.f32 0.0, %v4803
  %v4805 = vpop.f32.mrf.mxu0
  %4806 = vmatprep.mubr.bf16.mxu0 0
  %4807 = vmatmul.mubr.bf16.gmra.mxu0 %v4696
  %v4808 = vpop.f32.mrf.mxu0
  %v4809 = vadd.f32 0.0, %v4808
  %v4810 = vpop.f32.mrf.mxu0
  %v4811 = vpop.f32.mrf.mxu0
  %v4812 = vadd.f32 0.0, %v4811
  %v4813 = vpop.f32.mrf.mxu0
  %4814 = vmatprep.mubr.bf16.mxu0 0
  %4815 = vmatmul.mubr.bf16.gmra.mxu0 %v4699
  %v4816 = vpop.f32.mrf.mxu0
  %v4817 = vadd.f32 0.0, %v4816
  %v4818 = vpop.f32.mrf.mxu0
  %v4819 = vpop.f32.mrf.mxu0
  %v4820 = vadd.f32 0.0, %v4819
  %v4821 = vpop.f32.mrf.mxu0
  %4822 = vmatprep.mubr.bf16.mxu0 0
  %4823 = vmatmul.mubr.bf16.gmra.mxu0 %v4702
  %v4824 = vpop.f32.mrf.mxu0
  %v4825 = vadd.f32 0.0, %v4824
  %v4826 = vpop.f32.mrf.mxu0
  %v4827 = vpop.f32.mrf.mxu0
  %v4828 = vadd.f32 0.0, %v4827
  %v4829 = vpop.f32.mrf.mxu0
  %4830 = vmatprep.mubr.bf16.mxu0 0
  %4831 = vmatmul.mubr.bf16.gmra.mxu0 %v4705
  %v4832 = vpop.f32.mrf.mxu0
  %v4833 = vadd.f32 0.0, %v4832
  %v4834 = vpop.f32.mrf.mxu0
  %v4835 = vpop.f32.mrf.mxu0
  %v4836 = vadd.f32 0.0, %v4835
  %v4837 = vpop.f32.mrf.mxu0
  %4838 = vmatprep.mubr.bf16.mxu0 0
  %4839 = vmatmul.mubr.bf16.gmra.mxu0 %v4708
  %v4840 = vpop.f32.mrf.mxu0
  %v4841 = vadd.f32 0.0, %v4840
  %v4842 = vpop.f32.mrf.mxu0
  %v4843 = vpop.f32.mrf.mxu0
  %v4844 = vadd.f32 0.0, %v4843
  %v4845 = vpop.f32.mrf.mxu0
  %4846 = vmatprep.mubr.bf16.mxu0 0
  %4847 = vmatmul.mubr.bf16.gmra.mxu0 %v4711
  %v4848 = vpop.f32.mrf.mxu0
  %v4849 = vadd.f32 0.0, %v4848
  %v4850 = vpop.f32.mrf.mxu0
  %v4851 = vpop.f32.mrf.mxu0
  %v4852 = vpop.f32.mrf.mxu0
  %4853 = vdwg.mxu0
  %v4854 = vadd.f32 %v4562, %v4756
  %v4855 = vadd.f32 %v4563, %v4761
  %v4856 = vadd.f32 %v4564, %v4764
  %v4857 = vadd.f32 %v4565, %v4769
  %v4858 = vadd.f32 %v4566, %v4772
  %v4859 = vadd.f32 %v4567, %v4777
  %v4860 = vadd.f32 %v4568, %v4780
  %v4861 = vadd.f32 %v4569, %v4785
  %v4862 = vadd.f32 %v4570, %v4788
  %v4863 = vadd.f32 %v4571, %v4793
  %v4864 = vadd.f32 %v4572, %v4796
  %v4865 = vadd.f32 %v4573, %v4801
  %v4866 = vadd.f32 %v4574, %v4804
  %v4867 = vadd.f32 %v4575, %v4809
  %v4868 = vadd.f32 %v4576, %v4812
  %v4869 = vadd.f32 %v4577, %v4817
  %v4870 = vadd.f32 %v4578, %v4820
  %v4871 = vadd.f32 %v4579, %v4825
  %v4872 = vadd.f32 %v4580, %v4828
  %v4873 = vadd.f32 %v4581, %v4833
  %v4874 = vadd.f32 %v4582, %v4836
  %v4875 = vadd.f32 %v4583, %v4841
  %v4876 = vadd.f32 %v4584, %v4844
  %v4877 = vadd.f32 %v4585, %v4849
  %v4878 = vpack.c.bf16 %v3435, %v3430
  %v4879 = vpack.c.bf16 %v3440, %v3440
  %v4888 = vunpack.c.l.b16 %v3643
  %v4889 = vunpack.c.l.b16 %v3644
  %v4890 = vunpack.c.l.b16 %v3645
  %v4891 = vunpack.c.l.b16 %v3646
  %v4892 = vunpack.c.l.b16 %v3647
  %v4893 = vunpack.c.l.b16 %v3648
  %v4894 = vunpack.c.l.b16 %v3649
  %v4895 = vunpack.c.l.b16 %v3650
  %v4896 = vpack.c.b16 %v4889, %v4888
  %v4897 = vpack.c.b16 %v4891, %v4890
  %v4898 = vpack.c.b16 %v4893, %v4892
  %v4899 = vpack.c.b16 %v4895, %v4894
  %v4904 = vsel %vm688, %v3689, 0
  %v4906 = vsel %vm688, %v3690, 0
  %v4908 = vsel %vm688, %v3691, 0
  %v4910 = vsel %vm688, %v3692, 0
  %v4912 = vsel %vm688, %v3693, 0
  %v4914 = vsel %vm688, %v3694, 0
  %v4916 = vsel %vm688, %v3695, 0
  %v4918 = vsel %vm688, %v3696, 0
  %v4920 = vsel %vm688, %v3697, 0
  %v4922 = vsel %vm688, %v3698, 0
  %v4924 = vsel %vm688, %v3699, 0
  %v4926 = vsel %vm688, %v3700, 0
  %v4929 = vsel %vm688, %v4878, 0
  %v4932 = vsel %vm688, %v4879, 0
  %4934 = vmatprep.subr.bf16.mxu0 0
  %4935 = vmatpush1.bf16.msra.mxu0 0
  %4936 = vmatprep.subr.bf16.mxu0 0
  %4937 = vmatpush1.bf16.msra.mxu0 0
  %4938 = vmatprep.subr.bf16.mxu0 0
  %4939 = vmatpush1.bf16.msra.mxu0 0
  %4940 = vmatprep.subr.bf16.mxu0 0
  %4941 = vmatpush1.bf16.msra.mxu0 0
  %4942 = vmatprep.subr.bf16.mxu0 0
  %4943 = vmatpush1.bf16.msra.mxu0 %v4899
  %4944 = vmatprep.subr.bf16.mxu0 0
  %4945 = vmatpush1.bf16.msra.mxu0 %v4898
  %4946 = vmatprep.subr.bf16.mxu0 0
  %4947 = vmatpush1.bf16.msra.mxu0 %v4897
  %4948 = vmatprep.subr.bf16.mxu0 0
  %4949 = vmatpush1.bf16.msra.mxu0 %v4896
  %4950 = vmatprep.subr.bf16.mxu0 0
  %4951 = vmatpush2.bf16.msra.mxu0 0
  %4952 = vmatprep.subr.bf16.mxu0 0
  %4953 = vmatpush2.bf16.msra.mxu0 0
  %4954 = vmatprep.subr.bf16.mxu0 0
  %4955 = vmatpush2.bf16.msra.mxu0 0
  %4956 = vmatprep.subr.bf16.mxu0 0
  %4957 = vmatpush2.bf16.msra.mxu0 0
  %4958 = vmatprep.subr.bf16.mxu0 0
  %4959 = vmatpush2.bf16.msra.mxu0 0
  %4960 = vmatprep.subr.bf16.mxu0 0
  %4961 = vmatpush2.bf16.msra.mxu0 0
  %4962 = vmatprep.subr.bf16.mxu0 0
  %4963 = vmatpush2.bf16.msra.mxu0 0
  %4964 = vmatprep.subr.bf16.mxu0 0
  %4965 = vmatpush2.bf16.msra.mxu0 0
  %4966 = vmatprep.mubr.bf16.mxu0 0
  %4967 = vmatmul.mubr.bf16.gmra.mxu0 %v4904
  %v4968 = vpop.f32.mrf.mxu0
  %v4969 = vpop.f32.mrf.mxu0
  %v4970 = vpop.f32.mrf.mxu0
  %v4971 = vpop.f32.mrf.mxu0
  %4972 = vmatprep.mubr.bf16.mxu0 0
  %4973 = vmatmul.mubr.bf16.gmra.mxu0 %v4906
  %v4974 = vpop.f32.mrf.mxu0
  %v4975 = vpop.f32.mrf.mxu0
  %v4976 = vpop.f32.mrf.mxu0
  %v4977 = vadd.f32 0.0, %v4976
  %v4978 = vpop.f32.mrf.mxu0
  %4979 = vmatprep.mubr.bf16.mxu0 0
  %4980 = vmatmul.mubr.bf16.gmra.mxu0 %v4908
  %v4981 = vpop.f32.mrf.mxu0
  %v4982 = vadd.f32 0.0, %v4981
  %v4983 = vpop.f32.mrf.mxu0
  %v4984 = vpop.f32.mrf.mxu0
  %v4985 = vadd.f32 0.0, %v4984
  %v4986 = vpop.f32.mrf.mxu0
  %4987 = vmatprep.mubr.bf16.mxu0 0
  %4988 = vmatmul.mubr.bf16.gmra.mxu0 %v4910
  %v4989 = vpop.f32.mrf.mxu0
  %v4990 = vadd.f32 0.0, %v4989
  %v4991 = vpop.f32.mrf.mxu0
  %v4992 = vpop.f32.mrf.mxu0
  %v4993 = vadd.f32 0.0, %v4992
  %v4994 = vpop.f32.mrf.mxu0
  %4995 = vmatprep.mubr.bf16.mxu0 0
  %4996 = vmatmul.mubr.bf16.gmra.mxu0 %v4912
  %v4997 = vpop.f32.mrf.mxu0
  %v4998 = vadd.f32 0.0, %v4997
  %v4999 = vpop.f32.mrf.mxu0
  %v5000 = vpop.f32.mrf.mxu0
  %v5001 = vadd.f32 0.0, %v5000
  %v5002 = vpop.f32.mrf.mxu0
  %5003 = vmatprep.mubr.bf16.mxu0 0
  %5004 = vmatmul.mubr.bf16.gmra.mxu0 %v4914
  %v5005 = vpop.f32.mrf.mxu0
  %v5006 = vadd.f32 0.0, %v5005
  %v5007 = vpop.f32.mrf.mxu0
  %v5008 = vpop.f32.mrf.mxu0
  %v5009 = vadd.f32 0.0, %v5008
  %v5010 = vpop.f32.mrf.mxu0
  %5011 = vmatprep.mubr.bf16.mxu0 0
  %5012 = vmatmul.mubr.bf16.gmra.mxu0 %v4916
  %v5013 = vpop.f32.mrf.mxu0
  %v5014 = vadd.f32 0.0, %v5013
  %v5015 = vpop.f32.mrf.mxu0
  %v5016 = vpop.f32.mrf.mxu0
  %v5017 = vadd.f32 0.0, %v5016
  %v5018 = vpop.f32.mrf.mxu0
  %5019 = vmatprep.mubr.bf16.mxu0 0
  %5020 = vmatmul.mubr.bf16.gmra.mxu0 %v4918
  %v5021 = vpop.f32.mrf.mxu0
  %v5022 = vadd.f32 0.0, %v5021
  %v5023 = vpop.f32.mrf.mxu0
  %v5024 = vpop.f32.mrf.mxu0
  %v5025 = vadd.f32 0.0, %v5024
  %v5026 = vpop.f32.mrf.mxu0
  %5027 = vmatprep.mubr.bf16.mxu0 0
  %5028 = vmatmul.mubr.bf16.gmra.mxu0 %v4920
  %v5029 = vpop.f32.mrf.mxu0
  %v5030 = vadd.f32 0.0, %v5029
  %v5031 = vpop.f32.mrf.mxu0
  %v5032 = vpop.f32.mrf.mxu0
  %v5033 = vadd.f32 0.0, %v5032
  %v5034 = vpop.f32.mrf.mxu0
  %5035 = vmatprep.mubr.bf16.mxu0 0
  %5036 = vmatmul.mubr.bf16.gmra.mxu0 %v4922
  %v5037 = vpop.f32.mrf.mxu0
  %v5038 = vadd.f32 0.0, %v5037
  %v5039 = vpop.f32.mrf.mxu0
  %v5040 = vpop.f32.mrf.mxu0
  %v5041 = vadd.f32 0.0, %v5040
  %v5042 = vpop.f32.mrf.mxu0
  %5043 = vmatprep.mubr.bf16.mxu0 0
  %5044 = vmatmul.mubr.bf16.gmra.mxu0 %v4924
  %v5045 = vpop.f32.mrf.mxu0
  %v5046 = vadd.f32 0.0, %v5045
  %v5047 = vpop.f32.mrf.mxu0
  %v5048 = vpop.f32.mrf.mxu0
  %v5049 = vadd.f32 0.0, %v5048
  %v5050 = vpop.f32.mrf.mxu0
  %5051 = vmatprep.mubr.bf16.mxu0 0
  %5052 = vmatmul.mubr.bf16.gmra.mxu0 %v4926
  %v5053 = vpop.f32.mrf.mxu0
  %v5054 = vadd.f32 0.0, %v5053
  %v5055 = vpop.f32.mrf.mxu0
  %v5056 = vpop.f32.mrf.mxu0
  %v5057 = vadd.f32 0.0, %v5056
  %v5058 = vpop.f32.mrf.mxu0
  %5059 = vmatprep.mubr.bf16.mxu0 0
  %5060 = vmatmul.mubr.bf16.gmra.mxu0 %v4929
  %v5061 = vpop.f32.mrf.mxu0
  %v5062 = vadd.f32 0.0, %v5061
  %v5063 = vpop.f32.mrf.mxu0
  %v5064 = vpop.f32.mrf.mxu0
  %v5065 = vadd.f32 0.0, %v5064
  %v5066 = vpop.f32.mrf.mxu0
  %5067 = vmatprep.mubr.bf16.mxu0 0
  %5068 = vmatmul.mubr.bf16.gmra.mxu0 %v4932
  %v5069 = vpop.f32.mrf.mxu0
  %v5070 = vadd.f32 0.0, %v5069
  %v5071 = vpop.f32.mrf.mxu0
  %v5072 = vpop.f32.mrf.mxu0
  %v5073 = vpop.f32.mrf.mxu0
  %5074 = vdwg.mxu0
  %v5075 = vadd.f32 %v4854, %v4977
  %v5076 = vadd.f32 %v4855, %v4982
  %v5077 = vadd.f32 %v4856, %v4985
  %v5078 = vadd.f32 %v4857, %v4990
  %v5079 = vadd.f32 %v4858, %v4993
  %v5080 = vadd.f32 %v4859, %v4998
  %v5081 = vadd.f32 %v4860, %v5001
  %v5082 = vadd.f32 %v4861, %v5006
  %v5083 = vadd.f32 %v4862, %v5009
  %v5084 = vadd.f32 %v4863, %v5014
  %v5085 = vadd.f32 %v4864, %v5017
  %v5086 = vadd.f32 %v4865, %v5022
  %v5087 = vadd.f32 %v4866, %v5025
  %v5088 = vadd.f32 %v4867, %v5030
  %v5089 = vadd.f32 %v4868, %v5033
  %v5090 = vadd.f32 %v4869, %v5038
  %v5091 = vadd.f32 %v4870, %v5041
  %v5092 = vadd.f32 %v4871, %v5046
  %v5093 = vadd.f32 %v4872, %v5049
  %v5094 = vadd.f32 %v4873, %v5054
  %v5095 = vadd.f32 %v4874, %v5057
  %v5096 = vadd.f32 %v4875, %v5062
  %v5097 = vadd.f32 %v4876, %v5065
  %v5098 = vadd.f32 %v4877, %v5070
  %v5099 = vpack.c.bf16 %v3445, %v3440
  %v5100 = vrot.slane %v3944, 1
  %v5101 = vor.u32 %v3941, %v5100
  %v5102 = vrot.slane %v3953, 1
  %v5103 = vsel %vm4256, %v5101, %v5102
  %v5104 = vor.u32 %v3950, %v5102
  %v5105 = vrot.slane %v3962, 1
  %v5106 = vsel %vm4256, %v5104, %v5105
  %v5107 = vor.u32 %v3959, %v5105
  %v5108 = vrot.slane %v3971, 1
  %v5109 = vsel %vm4256, %v5107, %v5108
  %v5110 = vor.u32 %v3968, %v5108
  %v5111 = vrot.slane %v3980, 1
  %v5112 = vsel %vm4256, %v5110, %v5111
  %v5113 = vor.u32 %v3977, %v5111
  %v5114 = vrot.slane %v3989, 1
  %v5115 = vsel %vm4256, %v5113, %v5114
  %v5116 = vor.u32 %v3986, %v5114
  %v5117 = vrot.slane %v3998, 1
  %v5118 = vsel %vm4256, %v5116, %v5117
  %v5119 = vor.u32 %v3995, %v5117
  %v5120 = vrot.slane %v4007, 1
  %v5121 = vsel %vm4256, %v5119, %v5120
  %v5122 = vor.u32 %v4004, %v5120
  %v5123 = vrot.slane %v4016, 1
  %v5124 = vsel %vm4256, %v5122, %v5123
  %v5125 = vor.u32 %v4013, %v5123
  %v5126 = vrot.slane %v4025, 1
  %v5127 = vsel %vm4256, %v5125, %v5126
  %v5128 = vor.u32 %v4022, %v5126
  %v5129 = vrot.slane %v4034, 1
  %v5130 = vsel %vm4256, %v5128, %v5129
  %v5131 = vor.u32 %v4031, %v5129
  %v5132 = vrot.slane %v4043, 1
  %v5133 = vsel %vm4256, %v5131, %v5132
  %v5134 = vor.u32 %v4040, %v5132
  %v5135 = vshll.u32 %v4878, 16
  %v5137 = vrot.slane %v5135, 1
  %v5138 = vsel %vm4256, %v5134, %v5137
  %v5139 = vshrl.u32 %v4878, 16
  %v5141 = vor.u32 %v5139, %v5137
  %v5143 = vshll.u32 %v5099, 16
  %v5145 = vrot.slane %v5143, 1
  %v5146 = vsel %vm4256, %v5141, %v5145
  %v5147 = vshrl.u32 %v5099, 16
  %v5149 = vor.u32 %v5147, %v5145
  %v5158 = vunpack.c.l.b16 %v3652
  %v5159 = vunpack.c.l.b16 %v3653
  %v5160 = vunpack.c.l.b16 %v3654
  %v5161 = vunpack.c.l.b16 %v3655
  %v5162 = vunpack.c.l.b16 %v3656
  %v5163 = vunpack.c.l.b16 %v3657
  %v5164 = vunpack.c.l.b16 %v3658
  %v5165 = vunpack.c.l.b16 %v3659
  %v5166 = vpack.c.b16 %v5159, %v5158
  %v5167 = vpack.c.b16 %v5161, %v5160
  %v5168 = vpack.c.b16 %v5163, %v5162
  %v5169 = vpack.c.b16 %v5165, %v5164
  %v5175 = vsel %vm688, %v5103, 0
  %v5178 = vsel %vm688, %v5106, 0
  %v5181 = vsel %vm688, %v5109, 0
  %v5184 = vsel %vm688, %v5112, 0
  %v5187 = vsel %vm688, %v5115, 0
  %v5190 = vsel %vm688, %v5118, 0
  %v5193 = vsel %vm688, %v5121, 0
  %v5196 = vsel %vm688, %v5124, 0
  %v5199 = vsel %vm688, %v5127, 0
  %v5202 = vsel %vm688, %v5130, 0
  %v5205 = vsel %vm688, %v5133, 0
  %v5208 = vsel %vm688, %v5138, 0
  %v5211 = vsel %vm688, %v5146, 0
  %v5214 = vsel %vm688, %v5149, 0
  %5216 = vmatprep.subr.bf16.mxu0 0
  %5217 = vmatpush1.bf16.msra.mxu0 0
  %5218 = vmatprep.subr.bf16.mxu0 0
  %5219 = vmatpush1.bf16.msra.mxu0 0
  %5220 = vmatprep.subr.bf16.mxu0 0
  %5221 = vmatpush1.bf16.msra.mxu0 0
  %5222 = vmatprep.subr.bf16.mxu0 0
  %5223 = vmatpush1.bf16.msra.mxu0 0
  %5224 = vmatprep.subr.bf16.mxu0 0
  %5225 = vmatpush1.bf16.msra.mxu0 %v5169
  %5226 = vmatprep.subr.bf16.mxu0 0
  %5227 = vmatpush1.bf16.msra.mxu0 %v5168
  %5228 = vmatprep.subr.bf16.mxu0 0
  %5229 = vmatpush1.bf16.msra.mxu0 %v5167
  %5230 = vmatprep.subr.bf16.mxu0 0
  %5231 = vmatpush1.bf16.msra.mxu0 %v5166
  %5232 = vmatprep.subr.bf16.mxu0 0
  %5233 = vmatpush2.bf16.msra.mxu0 0
  %5234 = vmatprep.subr.bf16.mxu0 0
  %5235 = vmatpush2.bf16.msra.mxu0 0
  %5236 = vmatprep.subr.bf16.mxu0 0
  %5237 = vmatpush2.bf16.msra.mxu0 0
  %5238 = vmatprep.subr.bf16.mxu0 0
  %5239 = vmatpush2.bf16.msra.mxu0 0
  %5240 = vmatprep.subr.bf16.mxu0 0
  %5241 = vmatpush2.bf16.msra.mxu0 0
  %5242 = vmatprep.subr.bf16.mxu0 0
  %5243 = vmatpush2.bf16.msra.mxu0 0
  %5244 = vmatprep.subr.bf16.mxu0 0
  %5245 = vmatpush2.bf16.msra.mxu0 0
  %5246 = vmatprep.subr.bf16.mxu0 0
  %5247 = vmatpush2.bf16.msra.mxu0 0
  %5248 = vmatprep.mubr.bf16.mxu0 0
  %5249 = vmatmul.mubr.bf16.gmra.mxu0 %v5175
  %v5250 = vpop.f32.mrf.mxu0
  %v5251 = vpop.f32.mrf.mxu0
  %v5252 = vpop.f32.mrf.mxu0
  %v5253 = vpop.f32.mrf.mxu0
  %5254 = vmatprep.mubr.bf16.mxu0 0
  %5255 = vmatmul.mubr.bf16.gmra.mxu0 %v5178
  %v5256 = vpop.f32.mrf.mxu0
  %v5257 = vpop.f32.mrf.mxu0
  %v5258 = vpop.f32.mrf.mxu0
  %v5259 = vadd.f32 0.0, %v5258
  %v5260 = vpop.f32.mrf.mxu0
  %5261 = vmatprep.mubr.bf16.mxu0 0
  %5262 = vmatmul.mubr.bf16.gmra.mxu0 %v5181
  %v5263 = vpop.f32.mrf.mxu0
  %v5264 = vadd.f32 0.0, %v5263
  %v5265 = vpop.f32.mrf.mxu0
  %v5266 = vpop.f32.mrf.mxu0
  %v5267 = vadd.f32 0.0, %v5266
  %v5268 = vpop.f32.mrf.mxu0
  %5269 = vmatprep.mubr.bf16.mxu0 0
  %5270 = vmatmul.mubr.bf16.gmra.mxu0 %v5184
  %v5271 = vpop.f32.mrf.mxu0
  %v5272 = vadd.f32 0.0, %v5271
  %v5273 = vpop.f32.mrf.mxu0
  %v5274 = vpop.f32.mrf.mxu0
  %v5275 = vadd.f32 0.0, %v5274
  %v5276 = vpop.f32.mrf.mxu0
  %5277 = vmatprep.mubr.bf16.mxu0 0
  %5278 = vmatmul.mubr.bf16.gmra.mxu0 %v5187
  %v5279 = vpop.f32.mrf.mxu0
  %v5280 = vadd.f32 0.0, %v5279
  %v5281 = vpop.f32.mrf.mxu0
  %v5282 = vpop.f32.mrf.mxu0
  %v5283 = vadd.f32 0.0, %v5282
  %v5284 = vpop.f32.mrf.mxu0
  %5285 = vmatprep.mubr.bf16.mxu0 0
  %5286 = vmatmul.mubr.bf16.gmra.mxu0 %v5190
  %v5287 = vpop.f32.mrf.mxu0
  %v5288 = vadd.f32 0.0, %v5287
  %v5289 = vpop.f32.mrf.mxu0
  %v5290 = vpop.f32.mrf.mxu0
  %v5291 = vadd.f32 0.0, %v5290
  %v5292 = vpop.f32.mrf.mxu0
  %5293 = vmatprep.mubr.bf16.mxu0 0
  %5294 = vmatmul.mubr.bf16.gmra.mxu0 %v5193
  %v5295 = vpop.f32.mrf.mxu0
  %v5296 = vadd.f32 0.0, %v5295
  %v5297 = vpop.f32.mrf.mxu0
  %v5298 = vpop.f32.mrf.mxu0
  %v5299 = vadd.f32 0.0, %v5298
  %v5300 = vpop.f32.mrf.mxu0
  %5301 = vmatprep.mubr.bf16.mxu0 0
  %5302 = vmatmul.mubr.bf16.gmra.mxu0 %v5196
  %v5303 = vpop.f32.mrf.mxu0
  %v5304 = vadd.f32 0.0, %v5303
  %v5305 = vpop.f32.mrf.mxu0
  %v5306 = vpop.f32.mrf.mxu0
  %v5307 = vadd.f32 0.0, %v5306
  %v5308 = vpop.f32.mrf.mxu0
  %5309 = vmatprep.mubr.bf16.mxu0 0
  %5310 = vmatmul.mubr.bf16.gmra.mxu0 %v5199
  %v5311 = vpop.f32.mrf.mxu0
  %v5312 = vadd.f32 0.0, %v5311
  %v5313 = vpop.f32.mrf.mxu0
  %v5314 = vpop.f32.mrf.mxu0
  %v5315 = vadd.f32 0.0, %v5314
  %v5316 = vpop.f32.mrf.mxu0
  %5317 = vmatprep.mubr.bf16.mxu0 0
  %5318 = vmatmul.mubr.bf16.gmra.mxu0 %v5202
  %v5319 = vpop.f32.mrf.mxu0
  %v5320 = vadd.f32 0.0, %v5319
  %v5321 = vpop.f32.mrf.mxu0
  %v5322 = vpop.f32.mrf.mxu0
  %v5323 = vadd.f32 0.0, %v5322
  %v5324 = vpop.f32.mrf.mxu0
  %5325 = vmatprep.mubr.bf16.mxu0 0
  %5326 = vmatmul.mubr.bf16.gmra.mxu0 %v5205
  %v5327 = vpop.f32.mrf.mxu0
  %v5328 = vadd.f32 0.0, %v5327
  %v5329 = vpop.f32.mrf.mxu0
  %v5330 = vpop.f32.mrf.mxu0
  %v5331 = vadd.f32 0.0, %v5330
  %v5332 = vpop.f32.mrf.mxu0
  %5333 = vmatprep.mubr.bf16.mxu0 0
  %5334 = vmatmul.mubr.bf16.gmra.mxu0 %v5208
  %v5335 = vpop.f32.mrf.mxu0
  %v5336 = vadd.f32 0.0, %v5335
  %v5337 = vpop.f32.mrf.mxu0
  %v5338 = vpop.f32.mrf.mxu0
  %v5339 = vadd.f32 0.0, %v5338
  %v5340 = vpop.f32.mrf.mxu0
  %5341 = vmatprep.mubr.bf16.mxu0 0
  %5342 = vmatmul.mubr.bf16.gmra.mxu0 %v5211
  %v5343 = vpop.f32.mrf.mxu0
  %v5344 = vadd.f32 0.0, %v5343
  %v5345 = vpop.f32.mrf.mxu0
  %v5346 = vpop.f32.mrf.mxu0
  %v5347 = vadd.f32 0.0, %v5346
  %v5348 = vpop.f32.mrf.mxu0
  %5349 = vmatprep.mubr.bf16.mxu0 0
  %5350 = vmatmul.mubr.bf16.gmra.mxu0 %v5214
  %v5351 = vpop.f32.mrf.mxu0
  %v5352 = vadd.f32 0.0, %v5351
  %v5353 = vpop.f32.mrf.mxu0
  %v5354 = vpop.f32.mrf.mxu0
  %v5355 = vpop.f32.mrf.mxu0
  %5356 = vdwg.mxu0
  %v5357 = vadd.f32 %v5075, %v5259
  %v5358 = vadd.f32 %v5076, %v5264
  %v5359 = vadd.f32 %v5077, %v5267
  %v5360 = vadd.f32 %v5078, %v5272
  %v5361 = vadd.f32 %v5079, %v5275
  %v5362 = vadd.f32 %v5080, %v5280
  %v5363 = vadd.f32 %v5081, %v5283
  %v5364 = vadd.f32 %v5082, %v5288
  %v5365 = vadd.f32 %v5083, %v5291
  %v5366 = vadd.f32 %v5084, %v5296
  %v5367 = vadd.f32 %v5085, %v5299
  %v5368 = vadd.f32 %v5086, %v5304
  %v5369 = vadd.f32 %v5087, %v5307
  %v5370 = vadd.f32 %v5088, %v5312
  %v5371 = vadd.f32 %v5089, %v5315
  %v5372 = vadd.f32 %v5090, %v5320
  %v5373 = vadd.f32 %v5091, %v5323
  %v5374 = vadd.f32 %v5092, %v5328
  %v5375 = vadd.f32 %v5093, %v5331
  %v5376 = vadd.f32 %v5094, %v5336
  %v5377 = vadd.f32 %v5095, %v5339
  %v5378 = vadd.f32 %v5096, %v5344
  %v5379 = vadd.f32 %v5097, %v5347
  %v5380 = vadd.f32 %v5098, %v5352
  %v5381 = vpack.c.bf16 %v3455, %v3450
  %v5382 = vrot.slane %v5139, 3
  %v5383 = vrot.slane %v5135, 4
  %v5384 = vor.u32 %v5382, %v5383
  %v5385 = vsel %vm3922, %v4046, %v5384
  %v5386 = vrot.slane %v5147, 3
  %v5387 = vrot.slane %v5143, 4
  %v5388 = vor.u32 %v5386, %v5387
  %v5389 = vsel %vm3922, %v5384, %v5388
  %v5391 = vshrl.u32 %v5381, 16
  %v5393 = vrot.slane %v5391, 3
  %v5394 = vshll.u32 %v5381, 16
  %v5396 = vrot.slane %v5394, 4
  %v5397 = vor.u32 %v5393, %v5396
  %v5398 = vsel %vm3922, %v5388, %v5397
  %v5407 = vunpack.c.l.b16 %v3661
  %v5408 = vunpack.c.l.b16 %v3662
  %v5409 = vunpack.c.l.b16 %v3663
  %v5410 = vunpack.c.l.b16 %v3664
  %v5411 = vunpack.c.l.b16 %v3665
  %v5412 = vunpack.c.l.b16 %v3666
  %v5413 = vunpack.c.l.b16 %v3667
  %v5414 = vunpack.c.l.b16 %v3668
  %v5415 = vpack.c.b16 %v5408, %v5407
  %v5416 = vpack.c.b16 %v5410, %v5409
  %v5417 = vpack.c.b16 %v5412, %v5411
  %v5418 = vpack.c.b16 %v5414, %v5413
  %v5424 = vsel %vm688, %v5385, 0
  %v5427 = vsel %vm688, %v5389, 0
  %v5430 = vsel %vm688, %v5398, 0
  %v5433 = vsel %vm688, %v5397, 0
  %5435 = vmatprep.subr.bf16.mxu0 0
  %5436 = vmatpush1.bf16.msra.mxu0 0
  %5437 = vmatprep.subr.bf16.mxu0 0
  %5438 = vmatpush1.bf16.msra.mxu0 0
  %5439 = vmatprep.subr.bf16.mxu0 0
  %5440 = vmatpush1.bf16.msra.mxu0 0
  %5441 = vmatprep.subr.bf16.mxu0 0
  %5442 = vmatpush1.bf16.msra.mxu0 0
  %5443 = vmatprep.subr.bf16.mxu0 0
  %5444 = vmatpush1.bf16.msra.mxu0 %v5418
  %5445 = vmatprep.subr.bf16.mxu0 0
  %5446 = vmatpush1.bf16.msra.mxu0 %v5417
  %5447 = vmatprep.subr.bf16.mxu0 0
  %5448 = vmatpush1.bf16.msra.mxu0 %v5416
  %5449 = vmatprep.subr.bf16.mxu0 0
  %5450 = vmatpush1.bf16.msra.mxu0 %v5415
  %5451 = vmatprep.subr.bf16.mxu0 0
  %5452 = vmatpush2.bf16.msra.mxu0 0
  %5453 = vmatprep.subr.bf16.mxu0 0
  %5454 = vmatpush2.bf16.msra.mxu0 0
  %5455 = vmatprep.subr.bf16.mxu0 0
  %5456 = vmatpush2.bf16.msra.mxu0 0
  %5457 = vmatprep.subr.bf16.mxu0 0
  %5458 = vmatpush2.bf16.msra.mxu0 0
  %5459 = vmatprep.subr.bf16.mxu0 0
  %5460 = vmatpush2.bf16.msra.mxu0 0
  %5461 = vmatprep.subr.bf16.mxu0 0
  %5462 = vmatpush2.bf16.msra.mxu0 0
  %5463 = vmatprep.subr.bf16.mxu0 0
  %5464 = vmatpush2.bf16.msra.mxu0 0
  %5465 = vmatprep.subr.bf16.mxu0 0
  %5466 = vmatpush2.bf16.msra.mxu0 0
  %5467 = vmatprep.mubr.bf16.mxu0 0
  %5468 = vmatmul.mubr.bf16.gmra.mxu0 %v4082
  %v5469 = vpop.f32.mrf.mxu0
  %v5470 = vpop.f32.mrf.mxu0
  %v5471 = vpop.f32.mrf.mxu0
  %v5472 = vpop.f32.mrf.mxu0
  %5473 = vmatprep.mubr.bf16.mxu0 0
  %5474 = vmatmul.mubr.bf16.gmra.mxu0 %v4085
  %v5475 = vpop.f32.mrf.mxu0
  %v5476 = vpop.f32.mrf.mxu0
  %v5477 = vpop.f32.mrf.mxu0
  %v5478 = vadd.f32 0.0, %v5477
  %v5479 = vpop.f32.mrf.mxu0
  %5480 = vmatprep.mubr.bf16.mxu0 0
  %5481 = vmatmul.mubr.bf16.gmra.mxu0 %v4088
  %v5482 = vpop.f32.mrf.mxu0
  %v5483 = vadd.f32 0.0, %v5482
  %v5484 = vpop.f32.mrf.mxu0
  %v5485 = vpop.f32.mrf.mxu0
  %v5486 = vadd.f32 0.0, %v5485
  %v5487 = vpop.f32.mrf.mxu0
  %5488 = vmatprep.mubr.bf16.mxu0 0
  %5489 = vmatmul.mubr.bf16.gmra.mxu0 %v4091
  %v5490 = vpop.f32.mrf.mxu0
  %v5491 = vadd.f32 0.0, %v5490
  %v5492 = vpop.f32.mrf.mxu0
  %v5493 = vpop.f32.mrf.mxu0
  %v5494 = vadd.f32 0.0, %v5493
  %v5495 = vpop.f32.mrf.mxu0
  %5496 = vmatprep.mubr.bf16.mxu0 0
  %5497 = vmatmul.mubr.bf16.gmra.mxu0 %v4094
  %v5498 = vpop.f32.mrf.mxu0
  %v5499 = vadd.f32 0.0, %v5498
  %v5500 = vpop.f32.mrf.mxu0
  %v5501 = vpop.f32.mrf.mxu0
  %v5502 = vadd.f32 0.0, %v5501
  %v5503 = vpop.f32.mrf.mxu0
  %5504 = vmatprep.mubr.bf16.mxu0 0
  %5505 = vmatmul.mubr.bf16.gmra.mxu0 %v4097
  %v5506 = vpop.f32.mrf.mxu0
  %v5507 = vadd.f32 0.0, %v5506
  %v5508 = vpop.f32.mrf.mxu0
  %v5509 = vpop.f32.mrf.mxu0
  %v5510 = vadd.f32 0.0, %v5509
  %v5511 = vpop.f32.mrf.mxu0
  %5512 = vmatprep.mubr.bf16.mxu0 0
  %5513 = vmatmul.mubr.bf16.gmra.mxu0 %v4100
  %v5514 = vpop.f32.mrf.mxu0
  %v5515 = vadd.f32 0.0, %v5514
  %v5516 = vpop.f32.mrf.mxu0
  %v5517 = vpop.f32.mrf.mxu0
  %v5518 = vadd.f32 0.0, %v5517
  %v5519 = vpop.f32.mrf.mxu0
  %5520 = vmatprep.mubr.bf16.mxu0 0
  %5521 = vmatmul.mubr.bf16.gmra.mxu0 %v4103
  %v5522 = vpop.f32.mrf.mxu0
  %v5523 = vadd.f32 0.0, %v5522
  %v5524 = vpop.f32.mrf.mxu0
  %v5525 = vpop.f32.mrf.mxu0
  %v5526 = vadd.f32 0.0, %v5525
  %v5527 = vpop.f32.mrf.mxu0
  %5528 = vmatprep.mubr.bf16.mxu0 0
  %5529 = vmatmul.mubr.bf16.gmra.mxu0 %v4106
  %v5530 = vpop.f32.mrf.mxu0
  %v5531 = vadd.f32 0.0, %v5530
  %v5532 = vpop.f32.mrf.mxu0
  %v5533 = vpop.f32.mrf.mxu0
  %v5534 = vadd.f32 0.0, %v5533
  %v5535 = vpop.f32.mrf.mxu0
  %5536 = vmatprep.mubr.bf16.mxu0 0
  %5537 = vmatmul.mubr.bf16.gmra.mxu0 %v4109
  %v5538 = vpop.f32.mrf.mxu0
  %v5539 = vadd.f32 0.0, %v5538
  %v5540 = vpop.f32.mrf.mxu0
  %v5541 = vpop.f32.mrf.mxu0
  %v5542 = vadd.f32 0.0, %v5541
  %v5543 = vpop.f32.mrf.mxu0
  %5544 = vmatprep.mubr.bf16.mxu0 0
  %5545 = vmatmul.mubr.bf16.gmra.mxu0 %v5424
  %v5546 = vpop.f32.mrf.mxu0
  %v5547 = vadd.f32 0.0, %v5546
  %v5548 = vpop.f32.mrf.mxu0
  %v5549 = vpop.f32.mrf.mxu0
  %v5550 = vadd.f32 0.0, %v5549
  %v5551 = vpop.f32.mrf.mxu0
  %5552 = vmatprep.mubr.bf16.mxu0 0
  %5553 = vmatmul.mubr.bf16.gmra.mxu0 %v5427
  %v5554 = vpop.f32.mrf.mxu0
  %v5555 = vadd.f32 0.0, %v5554
  %v5556 = vpop.f32.mrf.mxu0
  %v5557 = vpop.f32.mrf.mxu0
  %v5558 = vadd.f32 0.0, %v5557
  %v5559 = vpop.f32.mrf.mxu0
  %5560 = vmatprep.mubr.bf16.mxu0 0
  %5561 = vmatmul.mubr.bf16.gmra.mxu0 %v5430
  %v5562 = vpop.f32.mrf.mxu0
  %v5563 = vadd.f32 0.0, %v5562
  %v5564 = vpop.f32.mrf.mxu0
  %v5565 = vpop.f32.mrf.mxu0
  %v5566 = vadd.f32 0.0, %v5565
  %v5567 = vpop.f32.mrf.mxu0
  %5568 = vmatprep.mubr.bf16.mxu0 0
  %5569 = vmatmul.mubr.bf16.gmra.mxu0 %v5433
  %v5570 = vpop.f32.mrf.mxu0
  %v5571 = vadd.f32 0.0, %v5570
  %v5572 = vpop.f32.mrf.mxu0
  %v5573 = vpop.f32.mrf.mxu0
  %v5574 = vpop.f32.mrf.mxu0
  %5575 = vdwg.mxu0
  %v5576 = vadd.f32 %v5357, %v5478
  %v5577 = vadd.f32 %v5358, %v5483
  %v5578 = vadd.f32 %v5359, %v5486
  %v5579 = vadd.f32 %v5360, %v5491
  %v5580 = vadd.f32 %v5361, %v5494
  %v5581 = vadd.f32 %v5362, %v5499
  %v5582 = vadd.f32 %v5363, %v5502
  %v5583 = vadd.f32 %v5364, %v5507
  %v5584 = vadd.f32 %v5365, %v5510
  %v5585 = vadd.f32 %v5366, %v5515
  %v5586 = vadd.f32 %v5367, %v5518
  %v5587 = vadd.f32 %v5368, %v5523
  %v5588 = vadd.f32 %v5369, %v5526
  %v5589 = vadd.f32 %v5370, %v5531
  %v5590 = vadd.f32 %v5371, %v5534
  %v5591 = vadd.f32 %v5372, %v5539
  %v5592 = vadd.f32 %v5373, %v5542
  %v5593 = vadd.f32 %v5374, %v5547
  %v5594 = vadd.f32 %v5375, %v5550
  %v5595 = vadd.f32 %v5376, %v5555
  %v5596 = vadd.f32 %v5377, %v5558
  %v5597 = vadd.f32 %v5378, %v5563
  %v5598 = vadd.f32 %v5379, %v5566
  %v5599 = vadd.f32 %v5380, %v5571
  %v5600 = vpack.c.bf16 %v3450, %v3445
  %v5601 = vpack.c.bf16 %v3455, %v3455
  %v5610 = vunpack.c.l.b16 %v3670
  %v5611 = vunpack.c.l.b16 %v3671
  %v5612 = vunpack.c.l.b16 %v3672
  %v5613 = vunpack.c.l.b16 %v3673
  %v5614 = vunpack.c.l.b16 %v3674
  %v5615 = vunpack.c.l.b16 %v3675
  %v5616 = vunpack.c.l.b16 %v3676
  %v5617 = vunpack.c.l.b16 %v3677
  %v5618 = vpack.c.b16 %v5611, %v5610
  %v5619 = vpack.c.b16 %v5613, %v5612
  %v5620 = vpack.c.b16 %v5615, %v5614
  %v5621 = vpack.c.b16 %v5617, %v5616
  %v5626 = vsel %vm688, %v4255, 0
  %v5628 = vsel %vm688, %v4586, 0
  %v5631 = vsel %vm688, %v5600, 0
  %v5634 = vsel %vm688, %v5601, 0
  %5636 = vmatprep.subr.bf16.mxu0 0
  %5637 = vmatpush1.bf16.msra.mxu0 0
  %5638 = vmatprep.subr.bf16.mxu0 0
  %5639 = vmatpush1.bf16.msra.mxu0 0
  %5640 = vmatprep.subr.bf16.mxu0 0
  %5641 = vmatpush1.bf16.msra.mxu0 0
  %5642 = vmatprep.subr.bf16.mxu0 0
  %5643 = vmatpush1.bf16.msra.mxu0 0
  %5644 = vmatprep.subr.bf16.mxu0 0
  %5645 = vmatpush1.bf16.msra.mxu0 %v5621
  %5646 = vmatprep.subr.bf16.mxu0 0
  %5647 = vmatpush1.bf16.msra.mxu0 %v5620
  %5648 = vmatprep.subr.bf16.mxu0 0
  %5649 = vmatpush1.bf16.msra.mxu0 %v5619
  %5650 = vmatprep.subr.bf16.mxu0 0
  %5651 = vmatpush1.bf16.msra.mxu0 %v5618
  %5652 = vmatprep.subr.bf16.mxu0 0
  %5653 = vmatpush2.bf16.msra.mxu0 0
  %5654 = vmatprep.subr.bf16.mxu0 0
  %5655 = vmatpush2.bf16.msra.mxu0 0
  %5656 = vmatprep.subr.bf16.mxu0 0
  %5657 = vmatpush2.bf16.msra.mxu0 0
  %5658 = vmatprep.subr.bf16.mxu0 0
  %5659 = vmatpush2.bf16.msra.mxu0 0
  %5660 = vmatprep.subr.bf16.mxu0 0
  %5661 = vmatpush2.bf16.msra.mxu0 0
  %5662 = vmatprep.subr.bf16.mxu0 0
  %5663 = vmatpush2.bf16.msra.mxu0 0
  %5664 = vmatprep.subr.bf16.mxu0 0
  %5665 = vmatpush2.bf16.msra.mxu0 0
  %5666 = vmatprep.subr.bf16.mxu0 0
  %5667 = vmatpush2.bf16.msra.mxu0 0
  %5668 = vmatprep.mubr.bf16.mxu0 0
  %5669 = vmatmul.mubr.bf16.gmra.mxu0 %v3749
  %v5670 = vpop.f32.mrf.mxu0
  %v5671 = vpop.f32.mrf.mxu0
  %v5672 = vpop.f32.mrf.mxu0
  %v5673 = vpop.f32.mrf.mxu0
  %5674 = vmatprep.mubr.bf16.mxu0 0
  %5675 = vmatmul.mubr.bf16.gmra.mxu0 %v3752
  %v5676 = vpop.f32.mrf.mxu0
  %v5677 = vpop.f32.mrf.mxu0
  %v5678 = vpop.f32.mrf.mxu0
  %v5679 = vadd.f32 0.0, %v5678
  %v5680 = vpop.f32.mrf.mxu0
  %5681 = vmatprep.mubr.bf16.mxu0 0
  %5682 = vmatmul.mubr.bf16.gmra.mxu0 %v3755
  %v5683 = vpop.f32.mrf.mxu0
  %v5684 = vadd.f32 0.0, %v5683
  %v5685 = vpop.f32.mrf.mxu0
  %v5686 = vpop.f32.mrf.mxu0
  %v5687 = vadd.f32 0.0, %v5686
  %v5688 = vpop.f32.mrf.mxu0
  %5689 = vmatprep.mubr.bf16.mxu0 0
  %5690 = vmatmul.mubr.bf16.gmra.mxu0 %v3758
  %v5691 = vpop.f32.mrf.mxu0
  %v5692 = vadd.f32 0.0, %v5691
  %v5693 = vpop.f32.mrf.mxu0
  %v5694 = vpop.f32.mrf.mxu0
  %v5695 = vadd.f32 0.0, %v5694
  %v5696 = vpop.f32.mrf.mxu0
  %5697 = vmatprep.mubr.bf16.mxu0 0
  %5698 = vmatmul.mubr.bf16.gmra.mxu0 %v3761
  %v5699 = vpop.f32.mrf.mxu0
  %v5700 = vadd.f32 0.0, %v5699
  %v5701 = vpop.f32.mrf.mxu0
  %v5702 = vpop.f32.mrf.mxu0
  %v5703 = vadd.f32 0.0, %v5702
  %v5704 = vpop.f32.mrf.mxu0
  %5705 = vmatprep.mubr.bf16.mxu0 0
  %5706 = vmatmul.mubr.bf16.gmra.mxu0 %v3764
  %v5707 = vpop.f32.mrf.mxu0
  %v5708 = vadd.f32 0.0, %v5707
  %v5709 = vpop.f32.mrf.mxu0
  %v5710 = vpop.f32.mrf.mxu0
  %v5711 = vadd.f32 0.0, %v5710
  %v5712 = vpop.f32.mrf.mxu0
  %5713 = vmatprep.mubr.bf16.mxu0 0
  %5714 = vmatmul.mubr.bf16.gmra.mxu0 %v3767
  %v5715 = vpop.f32.mrf.mxu0
  %v5716 = vadd.f32 0.0, %v5715
  %v5717 = vpop.f32.mrf.mxu0
  %v5718 = vpop.f32.mrf.mxu0
  %v5719 = vadd.f32 0.0, %v5718
  %v5720 = vpop.f32.mrf.mxu0
  %5721 = vmatprep.mubr.bf16.mxu0 0
  %5722 = vmatmul.mubr.bf16.gmra.mxu0 %v3770
  %v5723 = vpop.f32.mrf.mxu0
  %v5724 = vadd.f32 0.0, %v5723
  %v5725 = vpop.f32.mrf.mxu0
  %v5726 = vpop.f32.mrf.mxu0
  %v5727 = vadd.f32 0.0, %v5726
  %v5728 = vpop.f32.mrf.mxu0
  %5729 = vmatprep.mubr.bf16.mxu0 0
  %5730 = vmatmul.mubr.bf16.gmra.mxu0 %v3773
  %v5731 = vpop.f32.mrf.mxu0
  %v5732 = vadd.f32 0.0, %v5731
  %v5733 = vpop.f32.mrf.mxu0
  %v5734 = vpop.f32.mrf.mxu0
  %v5735 = vadd.f32 0.0, %v5734
  %v5736 = vpop.f32.mrf.mxu0
  %5737 = vmatprep.mubr.bf16.mxu0 0
  %5738 = vmatmul.mubr.bf16.gmra.mxu0 %v3776
  %v5739 = vpop.f32.mrf.mxu0
  %v5740 = vadd.f32 0.0, %v5739
  %v5741 = vpop.f32.mrf.mxu0
  %v5742 = vpop.f32.mrf.mxu0
  %v5743 = vadd.f32 0.0, %v5742
  %v5744 = vpop.f32.mrf.mxu0
  %5745 = vmatprep.mubr.bf16.mxu0 0
  %5746 = vmatmul.mubr.bf16.gmra.mxu0 %v5626
  %v5747 = vpop.f32.mrf.mxu0
  %v5748 = vadd.f32 0.0, %v5747
  %v5749 = vpop.f32.mrf.mxu0
  %v5750 = vpop.f32.mrf.mxu0
  %v5751 = vadd.f32 0.0, %v5750
  %v5752 = vpop.f32.mrf.mxu0
  %5753 = vmatprep.mubr.bf16.mxu0 0
  %5754 = vmatmul.mubr.bf16.gmra.mxu0 %v5628
  %v5755 = vpop.f32.mrf.mxu0
  %v5756 = vadd.f32 0.0, %v5755
  %v5757 = vpop.f32.mrf.mxu0
  %v5758 = vpop.f32.mrf.mxu0
  %v5759 = vadd.f32 0.0, %v5758
  %v5760 = vpop.f32.mrf.mxu0
  %5761 = vmatprep.mubr.bf16.mxu0 0
  %5762 = vmatmul.mubr.bf16.gmra.mxu0 %v5631
  %v5763 = vpop.f32.mrf.mxu0
  %v5764 = vadd.f32 0.0, %v5763
  %v5765 = vpop.f32.mrf.mxu0
  %v5766 = vpop.f32.mrf.mxu0
  %v5767 = vadd.f32 0.0, %v5766
  %v5768 = vpop.f32.mrf.mxu0
  %5769 = vmatprep.mubr.bf16.mxu0 0
  %5770 = vmatmul.mubr.bf16.gmra.mxu0 %v5634
  %v5771 = vpop.f32.mrf.mxu0
  %v5772 = vadd.f32 0.0, %v5771
  %v5773 = vpop.f32.mrf.mxu0
  %v5774 = vpop.f32.mrf.mxu0
  %v5775 = vpop.f32.mrf.mxu0
  %5776 = vdwg.mxu0
  %v5777 = vadd.f32 %v5576, %v5679
  %v5778 = vadd.f32 %v5577, %v5684
  %v5779 = vadd.f32 %v5578, %v5687
  %v5780 = vadd.f32 %v5579, %v5692
  %v5781 = vadd.f32 %v5580, %v5695
  %v5782 = vadd.f32 %v5581, %v5700
  %v5783 = vadd.f32 %v5582, %v5703
  %v5784 = vadd.f32 %v5583, %v5708
  %v5785 = vadd.f32 %v5584, %v5711
  %v5786 = vadd.f32 %v5585, %v5716
  %v5787 = vadd.f32 %v5586, %v5719
  %v5788 = vadd.f32 %v5587, %v5724
  %v5789 = vadd.f32 %v5588, %v5727
  %v5790 = vadd.f32 %v5589, %v5732
  %v5791 = vadd.f32 %v5590, %v5735
  %v5792 = vadd.f32 %v5591, %v5740
  %v5793 = vadd.f32 %v5592, %v5743
  %v5794 = vadd.f32 %v5593, %v5748
  %v5795 = vadd.f32 %v5594, %v5751
  %v5796 = vadd.f32 %v5595, %v5756
  %v5797 = vadd.f32 %v5596, %v5759
  %v5798 = vadd.f32 %v5597, %v5764
  %v5799 = vadd.f32 %v5598, %v5767
  %v5800 = vadd.f32 %v5599, %v5772
  %v5801 = vpack.c.bf16 %v3460, %v3455
  %v5802 = vrot.slane %v4642, 1
  %v5803 = vsel %vm4256, %v4354, %v5802
  %v5804 = vor.u32 %v4639, %v5802
  %v5805 = vshll.u32 %v5600, 16
  %v5807 = vrot.slane %v5805, 1
  %v5808 = vsel %vm4256, %v5804, %v5807
  %v5809 = vshrl.u32 %v5600, 16
  %v5811 = vor.u32 %v5809, %v5807
  %v5813 = vshll.u32 %v5801, 16
  %v5815 = vrot.slane %v5813, 1
  %v5816 = vsel %vm4256, %v5811, %v5815
  %v5817 = vshrl.u32 %v5801, 16
  %v5819 = vor.u32 %v5817, %v5815
  %v5828 = vunpack.c.l.b16 %v3679
  %v5829 = vunpack.c.l.b16 %v3680
  %v5830 = vunpack.c.l.b16 %v3681
  %v5831 = vunpack.c.l.b16 %v3682
  %v5832 = vunpack.c.l.b16 %v3683
  %v5833 = vunpack.c.l.b16 %v3684
  %v5834 = vunpack.c.l.b16 %v3685
  %v5835 = vunpack.c.l.b16 %v3686
  %v5836 = vpack.c.b16 %v5829, %v5828
  %v5837 = vpack.c.b16 %v5831, %v5830
  %v5838 = vpack.c.b16 %v5833, %v5832
  %v5839 = vpack.c.b16 %v5835, %v5834
  %v5845 = vsel %vm688, %v5803, 0
  %v5848 = vsel %vm688, %v5808, 0
  %v5851 = vsel %vm688, %v5816, 0
  %v5854 = vsel %vm688, %v5819, 0
  %5856 = vmatprep.subr.bf16.mxu0 0
  %5857 = vmatpush1.bf16.msra.mxu0 0
  %5858 = vmatprep.subr.bf16.mxu0 0
  %5859 = vmatpush1.bf16.msra.mxu0 0
  %5860 = vmatprep.subr.bf16.mxu0 0
  %5861 = vmatpush1.bf16.msra.mxu0 0
  %5862 = vmatprep.subr.bf16.mxu0 0
  %5863 = vmatpush1.bf16.msra.mxu0 0
  %5864 = vmatprep.subr.bf16.mxu0 0
  %5865 = vmatpush1.bf16.msra.mxu0 %v5839
  %5866 = vmatprep.subr.bf16.mxu0 0
  %5867 = vmatpush1.bf16.msra.mxu0 %v5838
  %5868 = vmatprep.subr.bf16.mxu0 0
  %5869 = vmatpush1.bf16.msra.mxu0 %v5837
  %5870 = vmatprep.subr.bf16.mxu0 0
  %5871 = vmatpush1.bf16.msra.mxu0 %v5836
  %5872 = vmatprep.subr.bf16.mxu0 0
  %5873 = vmatpush2.bf16.msra.mxu0 0
  %5874 = vmatprep.subr.bf16.mxu0 0
  %5875 = vmatpush2.bf16.msra.mxu0 0
  %5876 = vmatprep.subr.bf16.mxu0 0
  %5877 = vmatpush2.bf16.msra.mxu0 0
  %5878 = vmatprep.subr.bf16.mxu0 0
  %5879 = vmatpush2.bf16.msra.mxu0 0
  %5880 = vmatprep.subr.bf16.mxu0 0
  %5881 = vmatpush2.bf16.msra.mxu0 0
  %5882 = vmatprep.subr.bf16.mxu0 0
  %5883 = vmatpush2.bf16.msra.mxu0 0
  %5884 = vmatprep.subr.bf16.mxu0 0
  %5885 = vmatpush2.bf16.msra.mxu0 0
  %5886 = vmatprep.subr.bf16.mxu0 0
  %5887 = vmatpush2.bf16.msra.mxu0 0
  %5888 = vmatprep.mubr.bf16.mxu0 0
  %5889 = vmatmul.mubr.bf16.gmra.mxu0 %v4389
  %v5890 = vpop.f32.mrf.mxu0
  %v5891 = vpop.f32.mrf.mxu0
  %v5892 = vpop.f32.mrf.mxu0
  %v5893 = vpop.f32.mrf.mxu0
  %5894 = vmatprep.mubr.bf16.mxu0 0
  %5895 = vmatmul.mubr.bf16.gmra.mxu0 %v4392
  %v5896 = vpop.f32.mrf.mxu0
  %v5897 = vpop.f32.mrf.mxu0
  %v5898 = vpop.f32.mrf.mxu0
  %v5899 = vadd.f32 0.0, %v5898
  %v5900 = vpop.f32.mrf.mxu0
  %5901 = vmatprep.mubr.bf16.mxu0 0
  %5902 = vmatmul.mubr.bf16.gmra.mxu0 %v4395
  %v5903 = vpop.f32.mrf.mxu0
  %v5904 = vadd.f32 0.0, %v5903
  %v5905 = vpop.f32.mrf.mxu0
  %v5906 = vpop.f32.mrf.mxu0
  %v5907 = vadd.f32 0.0, %v5906
  %v5908 = vpop.f32.mrf.mxu0
  %5909 = vmatprep.mubr.bf16.mxu0 0
  %5910 = vmatmul.mubr.bf16.gmra.mxu0 %v4398
  %v5911 = vpop.f32.mrf.mxu0
  %v5912 = vadd.f32 0.0, %v5911
  %v5913 = vpop.f32.mrf.mxu0
  %v5914 = vpop.f32.mrf.mxu0
  %v5915 = vadd.f32 0.0, %v5914
  %v5916 = vpop.f32.mrf.mxu0
  %5917 = vmatprep.mubr.bf16.mxu0 0
  %5918 = vmatmul.mubr.bf16.gmra.mxu0 %v4401
  %v5919 = vpop.f32.mrf.mxu0
  %v5920 = vadd.f32 0.0, %v5919
  %v5921 = vpop.f32.mrf.mxu0
  %v5922 = vpop.f32.mrf.mxu0
  %v5923 = vadd.f32 0.0, %v5922
  %v5924 = vpop.f32.mrf.mxu0
  %5925 = vmatprep.mubr.bf16.mxu0 0
  %5926 = vmatmul.mubr.bf16.gmra.mxu0 %v4404
  %v5927 = vpop.f32.mrf.mxu0
  %v5928 = vadd.f32 0.0, %v5927
  %v5929 = vpop.f32.mrf.mxu0
  %v5930 = vpop.f32.mrf.mxu0
  %v5931 = vadd.f32 0.0, %v5930
  %v5932 = vpop.f32.mrf.mxu0
  %5933 = vmatprep.mubr.bf16.mxu0 0
  %5934 = vmatmul.mubr.bf16.gmra.mxu0 %v4407
  %v5935 = vpop.f32.mrf.mxu0
  %v5936 = vadd.f32 0.0, %v5935
  %v5937 = vpop.f32.mrf.mxu0
  %v5938 = vpop.f32.mrf.mxu0
  %v5939 = vadd.f32 0.0, %v5938
  %v5940 = vpop.f32.mrf.mxu0
  %5941 = vmatprep.mubr.bf16.mxu0 0
  %5942 = vmatmul.mubr.bf16.gmra.mxu0 %v4410
  %v5943 = vpop.f32.mrf.mxu0
  %v5944 = vadd.f32 0.0, %v5943
  %v5945 = vpop.f32.mrf.mxu0
  %v5946 = vpop.f32.mrf.mxu0
  %v5947 = vadd.f32 0.0, %v5946
  %v5948 = vpop.f32.mrf.mxu0
  %5949 = vmatprep.mubr.bf16.mxu0 0
  %5950 = vmatmul.mubr.bf16.gmra.mxu0 %v4413
  %v5951 = vpop.f32.mrf.mxu0
  %v5952 = vadd.f32 0.0, %v5951
  %v5953 = vpop.f32.mrf.mxu0
  %v5954 = vpop.f32.mrf.mxu0
  %v5955 = vadd.f32 0.0, %v5954
  %v5956 = vpop.f32.mrf.mxu0
  %5957 = vmatprep.mubr.bf16.mxu0 0
  %5958 = vmatmul.mubr.bf16.gmra.mxu0 %v4416
  %v5959 = vpop.f32.mrf.mxu0
  %v5960 = vadd.f32 0.0, %v5959
  %v5961 = vpop.f32.mrf.mxu0
  %v5962 = vpop.f32.mrf.mxu0
  %v5963 = vadd.f32 0.0, %v5962
  %v5964 = vpop.f32.mrf.mxu0
  %5965 = vmatprep.mubr.bf16.mxu0 0
  %5966 = vmatmul.mubr.bf16.gmra.mxu0 %v5845
  %v5967 = vpop.f32.mrf.mxu0
  %v5968 = vadd.f32 0.0, %v5967
  %v5969 = vpop.f32.mrf.mxu0
  %v5970 = vpop.f32.mrf.mxu0
  %v5971 = vadd.f32 0.0, %v5970
  %v5972 = vpop.f32.mrf.mxu0
  %5973 = vmatprep.mubr.bf16.mxu0 0
  %5974 = vmatmul.mubr.bf16.gmra.mxu0 %v5848
  %v5975 = vpop.f32.mrf.mxu0
  %v5976 = vadd.f32 0.0, %v5975
  %v5977 = vpop.f32.mrf.mxu0
  %v5978 = vpop.f32.mrf.mxu0
  %v5979 = vadd.f32 0.0, %v5978
  %v5980 = vpop.f32.mrf.mxu0
  %5981 = vmatprep.mubr.bf16.mxu0 0
  %5982 = vmatmul.mubr.bf16.gmra.mxu0 %v5851
  %v5983 = vpop.f32.mrf.mxu0
  %v5984 = vadd.f32 0.0, %v5983
  %v5985 = vpop.f32.mrf.mxu0
  %v5986 = vpop.f32.mrf.mxu0
  %v5987 = vadd.f32 0.0, %v5986
  %v5988 = vpop.f32.mrf.mxu0
  %5989 = vmatprep.mubr.bf16.mxu0 0
  %5990 = vmatmul.mubr.bf16.gmra.mxu0 %v5854
  %v5991 = vpop.f32.mrf.mxu0
  %v5992 = vadd.f32 0.0, %v5991
  %v5993 = vpop.f32.mrf.mxu0
  %v5994 = vpop.f32.mrf.mxu0
  %v5995 = vpop.f32.mrf.mxu0
  %5996 = vdwg.mxu0
  %v5997 = vadd.f32 %v5777, %v5899
  %v5998 = vadd.f32 %v5778, %v5904
  %v5999 = vadd.f32 %v5779, %v5907
  %v6000 = vadd.f32 %v5780, %v5912
  %v6001 = vadd.f32 %v5781, %v5915
  %v6002 = vadd.f32 %v5782, %v5920
  %v6003 = vadd.f32 %v5783, %v5923
  %v6004 = vadd.f32 %v5784, %v5928
  %v6005 = vadd.f32 %v5785, %v5931
  %v6006 = vadd.f32 %v5786, %v5936
  %v6007 = vadd.f32 %v5787, %v5939
  %v6008 = vadd.f32 %v5788, %v5944
  %v6009 = vadd.f32 %v5789, %v5947
  %v6010 = vadd.f32 %v5790, %v5952
  %v6011 = vadd.f32 %v5791, %v5955
  %v6012 = vadd.f32 %v5792, %v5960
  %v6013 = vadd.f32 %v5793, %v5963
  %v6014 = vadd.f32 %v5794, %v5968
  %v6015 = vadd.f32 %v5795, %v5971
  %v6016 = vadd.f32 %v5796, %v5976
  %v6017 = vadd.f32 %v5797, %v5979
  %v6018 = vadd.f32 %v5798, %v5984
  %v6019 = vadd.f32 %v5799, %v5987
  %v6020 = vadd.f32 %v5800, %v5992
  %v6022 = vlaneseq
  %v6023 = vshrl.u32 %v6022, 7
  %v6024 = vsub.s32 0, %v6023
  %v6025 = vrot.slane %v3606, %v6024
  %v6027 = vadd.f32 %v5997, %v6025
  %v6028 = vadd.f32 %v5998, %v6025
  %v6029 = vadd.f32 %v5999, %v6025
  %v6030 = vadd.f32 %v6000, %v6025
  %v6031 = vadd.f32 %v6001, %v6025
  %v6032 = vadd.f32 %v6002, %v6025
  %v6033 = vadd.f32 %v6003, %v6025
  %v6034 = vadd.f32 %v6004, %v6025
  %v6035 = vadd.f32 %v6005, %v6025
  %v6036 = vadd.f32 %v6006, %v6025
  %v6037 = vadd.f32 %v6007, %v6025
  %v6038 = vadd.f32 %v6008, %v6025
  %v6039 = vadd.f32 %v6009, %v6025
  %v6040 = vadd.f32 %v6010, %v6025
  %v6041 = vadd.f32 %v6011, %v6025
  %v6042 = vadd.f32 %v6012, %v6025
  %v6043 = vadd.f32 %v6013, %v6025
  %v6044 = vadd.f32 %v6014, %v6025
  %v6045 = vadd.f32 %v6015, %v6025
  %v6046 = vadd.f32 %v6016, %v6025
  %v6047 = vadd.f32 %v6017, %v6025
  %v6048 = vadd.f32 %v6018, %v6025
  %v6049 = vadd.f32 %v6019, %v6025
  %v6050 = vadd.f32 %v6020, %v6025
  %v6051 = vmax.f32 %v6027, 0.0
  %v6052 = vmax.f32 %v6028, 0.0
  %v6053 = vmax.f32 %v6029, 0.0
  %v6054 = vmax.f32 %v6030, 0.0
  %v6055 = vmax.f32 %v6031, 0.0
  %v6056 = vmax.f32 %v6032, 0.0
  %v6057 = vmax.f32 %v6033, 0.0
  %v6058 = vmax.f32 %v6034, 0.0
  %v6059 = vmax.f32 %v6035, 0.0
  %v6060 = vmax.f32 %v6036, 0.0
  %v6061 = vmax.f32 %v6037, 0.0
  %v6062 = vmax.f32 %v6038, 0.0
  %v6063 = vmax.f32 %v6039, 0.0
  %v6064 = vmax.f32 %v6040, 0.0
  %v6065 = vmax.f32 %v6041, 0.0
  %v6066 = vmax.f32 %v6042, 0.0
  %v6067 = vmax.f32 %v6043, 0.0
  %v6068 = vmax.f32 %v6044, 0.0
  %v6069 = vmax.f32 %v6045, 0.0
  %v6070 = vmax.f32 %v6046, 0.0
  %v6071 = vmax.f32 %v6047, 0.0
  %v6072 = vmax.f32 %v6048, 0.0
  %v6073 = vmax.f32 %v6049, 0.0
  %v6074 = vmax.f32 %v6050, 0.0
  %v6075 = vpack.c.bf16 %v3470, %v3465
  %v6076 = vpack.c.bf16 %v3480, %v3475
  %v6077 = vpack.c.bf16 %v3490, %v3485
  %v6078 = vpack.c.bf16 %v3500, %v3495
  %v6079 = vpack.c.bf16 %v3510, %v3505
  %v6080 = vpack.c.bf16 %v3520, %v3515
  %v6081 = vpack.c.bf16 %v3530, %v3525
  %v6082 = vpack.c.bf16 %v3540, %v3535
  %v6083 = vpack.c.bf16 %v3550, %v3545
  %v6084 = vpack.c.bf16 %v3560, %v3555
  %v6085 = vpack.c.bf16 %v3465, %v3460
  %v6086 = vpack.c.bf16 %v3475, %v3470
  %v6087 = vpack.c.bf16 %v3485, %v3480
  %v6088 = vpack.c.bf16 %v3495, %v3490
  %v6089 = vpack.c.bf16 %v3505, %v3500
  %v6090 = vpack.c.bf16 %v3515, %v3510
  %v6091 = vpack.c.bf16 %v3525, %v3520
  %v6092 = vpack.c.bf16 %v3535, %v3530
  %v6093 = vpack.c.bf16 %v3545, %v3540
  %v6094 = vpack.c.bf16 %v3555, %v3550
  %v6095 = vpack.c.bf16 %v3560, %v3560
  %v6096 = vsel %vm688, %v5099, 0
  %v6098 = vsel %vm688, %v5381, 0
  %v6101 = vsel %vm688, %v6085, 0
  %v6104 = vsel %vm688, %v6086, 0
  %v6107 = vsel %vm688, %v6087, 0
  %v6110 = vsel %vm688, %v6088, 0
  %v6113 = vsel %vm688, %v6089, 0
  %v6116 = vsel %vm688, %v6090, 0
  %v6119 = vsel %vm688, %v6091, 0
  %v6122 = vsel %vm688, %v6092, 0
  %v6125 = vsel %vm688, %v6093, 0
  %v6128 = vsel %vm688, %v6094, 0
  %v6131 = vsel %vm688, %v6095, 0
  %6133 = vmatprep.subr.bf16.mxu0 0
  %6134 = vmatpush1.bf16.msra.mxu0 0
  %6135 = vmatprep.subr.bf16.mxu0 0
  %6136 = vmatpush1.bf16.msra.mxu0 0
  %6137 = vmatprep.subr.bf16.mxu0 0
  %6138 = vmatpush1.bf16.msra.mxu0 0
  %6139 = vmatprep.subr.bf16.mxu0 0
  %6140 = vmatpush1.bf16.msra.mxu0 0
  %6141 = vmatprep.subr.bf16.mxu0 0
  %6142 = vmatpush1.bf16.msra.mxu0 %v3734
  %6143 = vmatprep.subr.bf16.mxu0 0
  %6144 = vmatpush1.bf16.msra.mxu0 %v3733
  %6145 = vmatprep.subr.bf16.mxu0 0
  %6146 = vmatpush1.bf16.msra.mxu0 %v3732
  %6147 = vmatprep.subr.bf16.mxu0 0
  %6148 = vmatpush1.bf16.msra.mxu0 %v3731
  %6149 = vmatprep.subr.bf16.mxu0 0
  %6150 = vmatpush2.bf16.msra.mxu0 0
  %6151 = vmatprep.subr.bf16.mxu0 0
  %6152 = vmatpush2.bf16.msra.mxu0 0
  %6153 = vmatprep.subr.bf16.mxu0 0
  %6154 = vmatpush2.bf16.msra.mxu0 0
  %6155 = vmatprep.subr.bf16.mxu0 0
  %6156 = vmatpush2.bf16.msra.mxu0 0
  %6157 = vmatprep.subr.bf16.mxu0 0
  %6158 = vmatpush2.bf16.msra.mxu0 0
  %6159 = vmatprep.subr.bf16.mxu0 0
  %6160 = vmatpush2.bf16.msra.mxu0 0
  %6161 = vmatprep.subr.bf16.mxu0 0
  %6162 = vmatpush2.bf16.msra.mxu0 0
  %6163 = vmatprep.subr.bf16.mxu0 0
  %6164 = vmatpush2.bf16.msra.mxu0 0
  %6165 = vmatprep.mubr.bf16.mxu0 0
  %6166 = vmatmul.mubr.bf16.gmra.mxu0 %v4929
  %v6167 = vpop.f32.mrf.mxu0
  %v6168 = vadd.f32 0.0, %v6167
  %v6169 = vpop.f32.mrf.mxu0
  %v6170 = vpop.f32.mrf.mxu0
  %v6171 = vadd.f32 0.0, %v6170
  %v6172 = vpop.f32.mrf.mxu0
  %6173 = vmatprep.mubr.bf16.mxu0 0
  %6174 = vmatmul.mubr.bf16.gmra.mxu0 %v6096
  %v6175 = vpop.f32.mrf.mxu0
  %v6176 = vadd.f32 0.0, %v6175
  %v6177 = vpop.f32.mrf.mxu0
  %v6178 = vpop.f32.mrf.mxu0
  %v6179 = vadd.f32 0.0, %v6178
  %v6180 = vpop.f32.mrf.mxu0
  %6181 = vmatprep.mubr.bf16.mxu0 0
  %6182 = vmatmul.mubr.bf16.gmra.mxu0 %v6098
  %v6183 = vpop.f32.mrf.mxu0
  %v6184 = vadd.f32 0.0, %v6183
  %v6185 = vpop.f32.mrf.mxu0
  %v6186 = vpop.f32.mrf.mxu0
  %v6187 = vadd.f32 0.0, %v6186
  %v6188 = vpop.f32.mrf.mxu0
  %6189 = vmatprep.mubr.bf16.mxu0 0
  %6190 = vmatmul.mubr.bf16.gmra.mxu0 %v6101
  %v6191 = vpop.f32.mrf.mxu0
  %v6192 = vadd.f32 0.0, %v6191
  %v6193 = vpop.f32.mrf.mxu0
  %v6194 = vpop.f32.mrf.mxu0
  %v6195 = vadd.f32 0.0, %v6194
  %v6196 = vpop.f32.mrf.mxu0
  %6197 = vmatprep.mubr.bf16.mxu0 0
  %6198 = vmatmul.mubr.bf16.gmra.mxu0 %v6104
  %v6199 = vpop.f32.mrf.mxu0
  %v6200 = vadd.f32 0.0, %v6199
  %v6201 = vpop.f32.mrf.mxu0
  %v6202 = vpop.f32.mrf.mxu0
  %v6203 = vadd.f32 0.0, %v6202
  %v6204 = vpop.f32.mrf.mxu0
  %6205 = vmatprep.mubr.bf16.mxu0 0
  %6206 = vmatmul.mubr.bf16.gmra.mxu0 %v6107
  %v6207 = vpop.f32.mrf.mxu0
  %v6208 = vadd.f32 0.0, %v6207
  %v6209 = vpop.f32.mrf.mxu0
  %v6210 = vpop.f32.mrf.mxu0
  %v6211 = vadd.f32 0.0, %v6210
  %v6212 = vpop.f32.mrf.mxu0
  %6213 = vmatprep.mubr.bf16.mxu0 0
  %6214 = vmatmul.mubr.bf16.gmra.mxu0 %v6110
  %v6215 = vpop.f32.mrf.mxu0
  %v6216 = vadd.f32 0.0, %v6215
  %v6217 = vpop.f32.mrf.mxu0
  %v6218 = vpop.f32.mrf.mxu0
  %v6219 = vadd.f32 0.0, %v6218
  %v6220 = vpop.f32.mrf.mxu0
  %6221 = vmatprep.mubr.bf16.mxu0 0
  %6222 = vmatmul.mubr.bf16.gmra.mxu0 %v6113
  %v6223 = vpop.f32.mrf.mxu0
  %v6224 = vadd.f32 0.0, %v6223
  %v6225 = vpop.f32.mrf.mxu0
  %v6226 = vpop.f32.mrf.mxu0
  %v6227 = vadd.f32 0.0, %v6226
  %v6228 = vpop.f32.mrf.mxu0
  %6229 = vmatprep.mubr.bf16.mxu0 0
  %6230 = vmatmul.mubr.bf16.gmra.mxu0 %v6116
  %v6231 = vpop.f32.mrf.mxu0
  %v6232 = vadd.f32 0.0, %v6231
  %v6233 = vpop.f32.mrf.mxu0
  %v6234 = vpop.f32.mrf.mxu0
  %v6235 = vadd.f32 0.0, %v6234
  %v6236 = vpop.f32.mrf.mxu0
  %6237 = vmatprep.mubr.bf16.mxu0 0
  %6238 = vmatmul.mubr.bf16.gmra.mxu0 %v6119
  %v6239 = vpop.f32.mrf.mxu0
  %v6240 = vadd.f32 0.0, %v6239
  %v6241 = vpop.f32.mrf.mxu0
  %v6242 = vpop.f32.mrf.mxu0
  %v6243 = vadd.f32 0.0, %v6242
  %v6244 = vpop.f32.mrf.mxu0
  %6245 = vmatprep.mubr.bf16.mxu0 0
  %6246 = vmatmul.mubr.bf16.gmra.mxu0 %v6122
  %v6247 = vpop.f32.mrf.mxu0
  %v6248 = vadd.f32 0.0, %v6247
  %v6249 = vpop.f32.mrf.mxu0
  %v6250 = vpop.f32.mrf.mxu0
  %v6251 = vadd.f32 0.0, %v6250
  %v6252 = vpop.f32.mrf.mxu0
  %6253 = vmatprep.mubr.bf16.mxu0 0
  %6254 = vmatmul.mubr.bf16.gmra.mxu0 %v6125
  %v6255 = vpop.f32.mrf.mxu0
  %v6256 = vadd.f32 0.0, %v6255
  %v6257 = vpop.f32.mrf.mxu0
  %v6258 = vpop.f32.mrf.mxu0
  %v6259 = vadd.f32 0.0, %v6258
  %v6260 = vpop.f32.mrf.mxu0
  %6261 = vmatprep.mubr.bf16.mxu0 0
  %6262 = vmatmul.mubr.bf16.gmra.mxu0 %v6128
  %v6263 = vpop.f32.mrf.mxu0
  %v6264 = vpop.f32.mrf.mxu0
  %v6265 = vpop.f32.mrf.mxu0
  %v6266 = vpop.f32.mrf.mxu0
  %6267 = vmatprep.mubr.bf16.mxu0 0
  %6268 = vmatmul.mubr.bf16.gmra.mxu0 %v6131
  %v6269 = vpop.f32.mrf.mxu0
  %v6270 = vpop.f32.mrf.mxu0
  %v6271 = vpop.f32.mrf.mxu0
  %v6272 = vpop.f32.mrf.mxu0
  %6273 = vdwg.mxu0
  %v6274 = vrot.slane %v5809, 3
  %v6275 = vrot.slane %v5805, 4
  %v6276 = vor.u32 %v6274, %v6275
  %v6277 = vsel %vm3922, %v4645, %v6276
  %v6278 = vrot.slane %v5817, 3
  %v6279 = vrot.slane %v5813, 4
  %v6280 = vor.u32 %v6278, %v6279
  %v6281 = vsel %vm3922, %v6276, %v6280
  %v6283 = vshrl.u32 %v6075, 16
  %v6285 = vrot.slane %v6283, 3
  %v6286 = vshll.u32 %v6075, 16
  %v6288 = vrot.slane %v6286, 4
  %v6289 = vor.u32 %v6285, %v6288
  %v6290 = vsel %vm3922, %v6280, %v6289
  %v6292 = vshrl.u32 %v6076, 16
  %v6294 = vrot.slane %v6292, 3
  %v6295 = vshll.u32 %v6076, 16
  %v6297 = vrot.slane %v6295, 4
  %v6298 = vor.u32 %v6294, %v6297
  %v6299 = vsel %vm3922, %v6289, %v6298
  %v6301 = vshrl.u32 %v6077, 16
  %v6303 = vrot.slane %v6301, 3
  %v6304 = vshll.u32 %v6077, 16
  %v6306 = vrot.slane %v6304, 4
  %v6307 = vor.u32 %v6303, %v6306
  %v6308 = vsel %vm3922, %v6298, %v6307
  %v6310 = vshrl.u32 %v6078, 16
  %v6312 = vrot.slane %v6310, 3
  %v6313 = vshll.u32 %v6078, 16
  %v6315 = vrot.slane %v6313, 4
  %v6316 = vor.u32 %v6312, %v6315
  %v6317 = vsel %vm3922, %v6307, %v6316
  %v6319 = vshrl.u32 %v6079, 16
  %v6321 = vrot.slane %v6319, 3
  %v6322 = vshll.u32 %v6079, 16
  %v6324 = vrot.slane %v6322, 4
  %v6325 = vor.u32 %v6321, %v6324
  %v6326 = vsel %vm3922, %v6316, %v6325
  %v6328 = vshrl.u32 %v6080, 16
  %v6330 = vrot.slane %v6328, 3
  %v6331 = vshll.u32 %v6080, 16
  %v6333 = vrot.slane %v6331, 4
  %v6334 = vor.u32 %v6330, %v6333
  %v6335 = vsel %vm3922, %v6325, %v6334
  %v6337 = vshrl.u32 %v6081, 16
  %v6339 = vrot.slane %v6337, 3
  %v6340 = vshll.u32 %v6081, 16
  %v6342 = vrot.slane %v6340, 4
  %v6343 = vor.u32 %v6339, %v6342
  %v6344 = vsel %vm3922, %v6334, %v6343
  %v6346 = vshrl.u32 %v6082, 16
  %v6348 = vrot.slane %v6346, 3
  %v6349 = vshll.u32 %v6082, 16
  %v6351 = vrot.slane %v6349, 4
  %v6352 = vor.u32 %v6348, %v6351
  %v6353 = vsel %vm3922, %v6343, %v6352
  %v6355 = vshrl.u32 %v6083, 16
  %v6357 = vrot.slane %v6355, 3
  %v6358 = vshll.u32 %v6083, 16
  %v6360 = vrot.slane %v6358, 4
  %v6361 = vor.u32 %v6357, %v6360
  %v6362 = vsel %vm3922, %v6352, %v6361
  %v6364 = vshrl.u32 %v6084, 16
  %v6366 = vrot.slane %v6364, 3
  %v6367 = vshll.u32 %v6084, 16
  %v6369 = vrot.slane %v6367, 4
  %v6370 = vor.u32 %v6366, %v6369
  %v6371 = vsel %vm3922, %v6361, %v6370
  %v6373 = vsel %vm688, %v6277, 0
  %v6376 = vsel %vm688, %v6281, 0
  %v6379 = vsel %vm688, %v6290, 0
  %v6382 = vsel %vm688, %v6299, 0
  %v6385 = vsel %vm688, %v6308, 0
  %v6388 = vsel %vm688, %v6317, 0
  %v6391 = vsel %vm688, %v6326, 0
  %v6394 = vsel %vm688, %v6335, 0
  %v6397 = vsel %vm688, %v6344, 0
  %v6400 = vsel %vm688, %v6353, 0
  %v6403 = vsel %vm688, %v6362, 0
  %v6406 = vsel %vm688, %v6371, 0
  %v6409 = vsel %vm688, %v6370, 0
  %6411 = vmatprep.subr.bf16.mxu0 0
  %6412 = vmatpush1.bf16.msra.mxu0 0
  %6413 = vmatprep.subr.bf16.mxu0 0
  %6414 = vmatpush1.bf16.msra.mxu0 0
  %6415 = vmatprep.subr.bf16.mxu0 0
  %6416 = vmatpush1.bf16.msra.mxu0 0
  %6417 = vmatprep.subr.bf16.mxu0 0
  %6418 = vmatpush1.bf16.msra.mxu0 0
  %6419 = vmatprep.subr.bf16.mxu0 0
  %6420 = vmatpush1.bf16.msra.mxu0 %v4067
  %6421 = vmatprep.subr.bf16.mxu0 0
  %6422 = vmatpush1.bf16.msra.mxu0 %v4066
  %6423 = vmatprep.subr.bf16.mxu0 0
  %6424 = vmatpush1.bf16.msra.mxu0 %v4065
  %6425 = vmatprep.subr.bf16.mxu0 0
  %6426 = vmatpush1.bf16.msra.mxu0 %v4064
  %6427 = vmatprep.subr.bf16.mxu0 0
  %6428 = vmatpush2.bf16.msra.mxu0 0
  %6429 = vmatprep.subr.bf16.mxu0 0
  %6430 = vmatpush2.bf16.msra.mxu0 0
  %6431 = vmatprep.subr.bf16.mxu0 0
  %6432 = vmatpush2.bf16.msra.mxu0 0
  %6433 = vmatprep.subr.bf16.mxu0 0
  %6434 = vmatpush2.bf16.msra.mxu0 0
  %6435 = vmatprep.subr.bf16.mxu0 0
  %6436 = vmatpush2.bf16.msra.mxu0 0
  %6437 = vmatprep.subr.bf16.mxu0 0
  %6438 = vmatpush2.bf16.msra.mxu0 0
  %6439 = vmatprep.subr.bf16.mxu0 0
  %6440 = vmatpush2.bf16.msra.mxu0 0
  %6441 = vmatprep.subr.bf16.mxu0 0
  %6442 = vmatpush2.bf16.msra.mxu0 0
  %6443 = vmatprep.mubr.bf16.mxu0 0
  %6444 = vmatmul.mubr.bf16.gmra.mxu0 %v4708
  %v6445 = vpop.f32.mrf.mxu0
  %v6446 = vadd.f32 %v6168, %v6445
  %v6447 = vpop.f32.mrf.mxu0
  %v6448 = vpop.f32.mrf.mxu0
  %v6449 = vadd.f32 %v6171, %v6448
  %v6450 = vpop.f32.mrf.mxu0
  %6451 = vmatprep.mubr.bf16.mxu0 0
  %6452 = vmatmul.mubr.bf16.gmra.mxu0 %v6373
  %v6453 = vpop.f32.mrf.mxu0
  %v6454 = vadd.f32 %v6176, %v6453
  %v6455 = vpop.f32.mrf.mxu0
  %v6456 = vpop.f32.mrf.mxu0
  %v6457 = vadd.f32 %v6179, %v6456
  %v6458 = vpop.f32.mrf.mxu0
  %6459 = vmatprep.mubr.bf16.mxu0 0
  %6460 = vmatmul.mubr.bf16.gmra.mxu0 %v6376
  %v6461 = vpop.f32.mrf.mxu0
  %v6462 = vadd.f32 %v6184, %v6461
  %v6463 = vpop.f32.mrf.mxu0
  %v6464 = vpop.f32.mrf.mxu0
  %v6465 = vadd.f32 %v6187, %v6464
  %v6466 = vpop.f32.mrf.mxu0
  %6467 = vmatprep.mubr.bf16.mxu0 0
  %6468 = vmatmul.mubr.bf16.gmra.mxu0 %v6379
  %v6469 = vpop.f32.mrf.mxu0
  %v6470 = vadd.f32 %v6192, %v6469
  %v6471 = vpop.f32.mrf.mxu0
  %v6472 = vpop.f32.mrf.mxu0
  %v6473 = vadd.f32 %v6195, %v6472
  %v6474 = vpop.f32.mrf.mxu0
  %6475 = vmatprep.mubr.bf16.mxu0 0
  %6476 = vmatmul.mubr.bf16.gmra.mxu0 %v6382
  %v6477 = vpop.f32.mrf.mxu0
  %v6478 = vadd.f32 %v6200, %v6477
  %v6479 = vpop.f32.mrf.mxu0
  %v6480 = vpop.f32.mrf.mxu0
  %v6481 = vadd.f32 %v6203, %v6480
  %v6482 = vpop.f32.mrf.mxu0
  %6483 = vmatprep.mubr.bf16.mxu0 0
  %6484 = vmatmul.mubr.bf16.gmra.mxu0 %v6385
  %v6485 = vpop.f32.mrf.mxu0
  %v6486 = vadd.f32 %v6208, %v6485
  %v6487 = vpop.f32.mrf.mxu0
  %v6488 = vpop.f32.mrf.mxu0
  %v6489 = vadd.f32 %v6211, %v6488
  %v6490 = vpop.f32.mrf.mxu0
  %6491 = vmatprep.mubr.bf16.mxu0 0
  %6492 = vmatmul.mubr.bf16.gmra.mxu0 %v6388
  %v6493 = vpop.f32.mrf.mxu0
  %v6494 = vadd.f32 %v6216, %v6493
  %v6495 = vpop.f32.mrf.mxu0
  %v6496 = vpop.f32.mrf.mxu0
  %v6497 = vadd.f32 %v6219, %v6496
  %v6498 = vpop.f32.mrf.mxu0
  %6499 = vmatprep.mubr.bf16.mxu0 0
  %6500 = vmatmul.mubr.bf16.gmra.mxu0 %v6391
  %v6501 = vpop.f32.mrf.mxu0
  %v6502 = vadd.f32 %v6224, %v6501
  %v6503 = vpop.f32.mrf.mxu0
  %v6504 = vpop.f32.mrf.mxu0
  %v6505 = vadd.f32 %v6227, %v6504
  %v6506 = vpop.f32.mrf.mxu0
  %6507 = vmatprep.mubr.bf16.mxu0 0
  %6508 = vmatmul.mubr.bf16.gmra.mxu0 %v6394
  %v6509 = vpop.f32.mrf.mxu0
  %v6510 = vadd.f32 %v6232, %v6509
  %v6511 = vpop.f32.mrf.mxu0
  %v6512 = vpop.f32.mrf.mxu0
  %v6513 = vadd.f32 %v6235, %v6512
  %v6514 = vpop.f32.mrf.mxu0
  %6515 = vmatprep.mubr.bf16.mxu0 0
  %6516 = vmatmul.mubr.bf16.gmra.mxu0 %v6397
  %v6517 = vpop.f32.mrf.mxu0
  %v6518 = vadd.f32 %v6240, %v6517
  %v6519 = vpop.f32.mrf.mxu0
  %v6520 = vpop.f32.mrf.mxu0
  %v6521 = vadd.f32 %v6243, %v6520
  %v6522 = vpop.f32.mrf.mxu0
  %6523 = vmatprep.mubr.bf16.mxu0 0
  %6524 = vmatmul.mubr.bf16.gmra.mxu0 %v6400
  %v6525 = vpop.f32.mrf.mxu0
  %v6526 = vadd.f32 %v6248, %v6525
  %v6527 = vpop.f32.mrf.mxu0
  %v6528 = vpop.f32.mrf.mxu0
  %v6529 = vadd.f32 %v6251, %v6528
  %v6530 = vpop.f32.mrf.mxu0
  %6531 = vmatprep.mubr.bf16.mxu0 0
  %6532 = vmatmul.mubr.bf16.gmra.mxu0 %v6403
  %v6533 = vpop.f32.mrf.mxu0
  %v6534 = vadd.f32 %v6256, %v6533
  %v6535 = vpop.f32.mrf.mxu0
  %v6536 = vpop.f32.mrf.mxu0
  %v6537 = vadd.f32 %v6259, %v6536
  %v6538 = vpop.f32.mrf.mxu0
  %6539 = vmatprep.mubr.bf16.mxu0 0
  %6540 = vmatmul.mubr.bf16.gmra.mxu0 %v6406
  %v6541 = vpop.f32.mrf.mxu0
  %v6542 = vpop.f32.mrf.mxu0
  %v6543 = vpop.f32.mrf.mxu0
  %v6544 = vpop.f32.mrf.mxu0
  %6545 = vmatprep.mubr.bf16.mxu0 0
  %6546 = vmatmul.mubr.bf16.gmra.mxu0 %v6409
  %v6547 = vpop.f32.mrf.mxu0
  %v6548 = vpop.f32.mrf.mxu0
  %v6549 = vpop.f32.mrf.mxu0
  %v6550 = vpop.f32.mrf.mxu0
  %6551 = vdwg.mxu0
  %v6552 = vpack.c.bf16 %v3565, %v3560
  %v6553 = vrot.slane %v5394, 1
  %v6554 = vsel %vm4256, %v5149, %v6553
  %v6555 = vor.u32 %v5391, %v6553
  %v6556 = vshll.u32 %v6085, 16
  %v6558 = vrot.slane %v6556, 1
  %v6559 = vsel %vm4256, %v6555, %v6558
  %v6560 = vshrl.u32 %v6085, 16
  %v6562 = vor.u32 %v6560, %v6558
  %v6563 = vshll.u32 %v6086, 16
  %v6565 = vrot.slane %v6563, 1
  %v6566 = vsel %vm4256, %v6562, %v6565
  %v6567 = vshrl.u32 %v6086, 16
  %v6569 = vor.u32 %v6567, %v6565
  %v6570 = vshll.u32 %v6087, 16
  %v6572 = vrot.slane %v6570, 1
  %v6573 = vsel %vm4256, %v6569, %v6572
  %v6574 = vshrl.u32 %v6087, 16
  %v6576 = vor.u32 %v6574, %v6572
  %v6577 = vshll.u32 %v6088, 16
  %v6579 = vrot.slane %v6577, 1
  %v6580 = vsel %vm4256, %v6576, %v6579
  %v6581 = vshrl.u32 %v6088, 16
  %v6583 = vor.u32 %v6581, %v6579
  %v6584 = vshll.u32 %v6089, 16
  %v6586 = vrot.slane %v6584, 1
  %v6587 = vsel %vm4256, %v6583, %v6586
  %v6588 = vshrl.u32 %v6089, 16
  %v6590 = vor.u32 %v6588, %v6586
  %v6591 = vshll.u32 %v6090, 16
  %v6593 = vrot.slane %v6591, 1
  %v6594 = vsel %vm4256, %v6590, %v6593
  %v6595 = vshrl.u32 %v6090, 16
  %v6597 = vor.u32 %v6595, %v6593
  %v6598 = vshll.u32 %v6091, 16
  %v6600 = vrot.slane %v6598, 1
  %v6601 = vsel %vm4256, %v6597, %v6600
  %v6602 = vshrl.u32 %v6091, 16
  %v6604 = vor.u32 %v6602, %v6600
  %v6605 = vshll.u32 %v6092, 16
  %v6607 = vrot.slane %v6605, 1
  %v6608 = vsel %vm4256, %v6604, %v6607
  %v6609 = vshrl.u32 %v6092, 16
  %v6611 = vor.u32 %v6609, %v6607
  %v6612 = vshll.u32 %v6093, 16
  %v6614 = vrot.slane %v6612, 1
  %v6615 = vsel %vm4256, %v6611, %v6614
  %v6616 = vshrl.u32 %v6093, 16
  %v6618 = vor.u32 %v6616, %v6614
  %v6619 = vshll.u32 %v6094, 16
  %v6621 = vrot.slane %v6619, 1
  %v6622 = vsel %vm4256, %v6618, %v6621
  %v6623 = vshrl.u32 %v6094, 16
  %v6625 = vor.u32 %v6623, %v6621
  %v6627 = vshll.u32 %v6552, 16
  %v6629 = vrot.slane %v6627, 1
  %v6630 = vsel %vm4256, %v6625, %v6629
  %v6631 = vshrl.u32 %v6552, 16
  %v6633 = vor.u32 %v6631, %v6629
  %v6635 = vsel %vm688, %v6554, 0
  %v6638 = vsel %vm688, %v6559, 0
  %v6641 = vsel %vm688, %v6566, 0
  %v6644 = vsel %vm688, %v6573, 0
  %v6647 = vsel %vm688, %v6580, 0
  %v6650 = vsel %vm688, %v6587, 0
  %v6653 = vsel %vm688, %v6594, 0
  %v6656 = vsel %vm688, %v6601, 0
  %v6659 = vsel %vm688, %v6608, 0
  %v6662 = vsel %vm688, %v6615, 0
  %v6665 = vsel %vm688, %v6622, 0
  %v6668 = vsel %vm688, %v6630, 0
  %v6671 = vsel %vm688, %v6633, 0
  %6673 = vmatprep.subr.bf16.mxu0 0
  %6674 = vmatpush1.bf16.msra.mxu0 0
  %6675 = vmatprep.subr.bf16.mxu0 0
  %6676 = vmatpush1.bf16.msra.mxu0 0
  %6677 = vmatprep.subr.bf16.mxu0 0
  %6678 = vmatpush1.bf16.msra.mxu0 0
  %6679 = vmatprep.subr.bf16.mxu0 0
  %6680 = vmatpush1.bf16.msra.mxu0 0
  %6681 = vmatprep.subr.bf16.mxu0 0
  %6682 = vmatpush1.bf16.msra.mxu0 %v4374
  %6683 = vmatprep.subr.bf16.mxu0 0
  %6684 = vmatpush1.bf16.msra.mxu0 %v4373
  %6685 = vmatprep.subr.bf16.mxu0 0
  %6686 = vmatpush1.bf16.msra.mxu0 %v4372
  %6687 = vmatprep.subr.bf16.mxu0 0
  %6688 = vmatpush1.bf16.msra.mxu0 %v4371
  %6689 = vmatprep.subr.bf16.mxu0 0
  %6690 = vmatpush2.bf16.msra.mxu0 0
  %6691 = vmatprep.subr.bf16.mxu0 0
  %6692 = vmatpush2.bf16.msra.mxu0 0
  %6693 = vmatprep.subr.bf16.mxu0 0
  %6694 = vmatpush2.bf16.msra.mxu0 0
  %6695 = vmatprep.subr.bf16.mxu0 0
  %6696 = vmatpush2.bf16.msra.mxu0 0
  %6697 = vmatprep.subr.bf16.mxu0 0
  %6698 = vmatpush2.bf16.msra.mxu0 0
  %6699 = vmatprep.subr.bf16.mxu0 0
  %6700 = vmatpush2.bf16.msra.mxu0 0
  %6701 = vmatprep.subr.bf16.mxu0 0
  %6702 = vmatpush2.bf16.msra.mxu0 0
  %6703 = vmatprep.subr.bf16.mxu0 0
  %6704 = vmatpush2.bf16.msra.mxu0 0
  %6705 = vmatprep.mubr.bf16.mxu0 0
  %6706 = vmatmul.mubr.bf16.gmra.mxu0 %v5211
  %v6707 = vpop.f32.mrf.mxu0
  %v6708 = vadd.f32 0.0, %v6707
  %v6709 = vpop.f32.mrf.mxu0
  %v6710 = vpop.f32.mrf.mxu0
  %v6711 = vadd.f32 0.0, %v6710
  %v6712 = vpop.f32.mrf.mxu0
  %6713 = vmatprep.mubr.bf16.mxu0 0
  %6714 = vmatmul.mubr.bf16.gmra.mxu0 %v6635
  %v6715 = vpop.f32.mrf.mxu0
  %v6716 = vadd.f32 0.0, %v6715
  %v6717 = vpop.f32.mrf.mxu0
  %v6718 = vpop.f32.mrf.mxu0
  %v6719 = vadd.f32 0.0, %v6718
  %v6720 = vpop.f32.mrf.mxu0
  %6721 = vmatprep.mubr.bf16.mxu0 0
  %6722 = vmatmul.mubr.bf16.gmra.mxu0 %v6638
  %v6723 = vpop.f32.mrf.mxu0
  %v6724 = vadd.f32 0.0, %v6723
  %v6725 = vpop.f32.mrf.mxu0
  %v6726 = vpop.f32.mrf.mxu0
  %v6727 = vadd.f32 0.0, %v6726
  %v6728 = vpop.f32.mrf.mxu0
  %6729 = vmatprep.mubr.bf16.mxu0 0
  %6730 = vmatmul.mubr.bf16.gmra.mxu0 %v6641
  %v6731 = vpop.f32.mrf.mxu0
  %v6732 = vadd.f32 0.0, %v6731
  %v6733 = vpop.f32.mrf.mxu0
  %v6734 = vpop.f32.mrf.mxu0
  %v6735 = vadd.f32 0.0, %v6734
  %v6736 = vpop.f32.mrf.mxu0
  %6737 = vmatprep.mubr.bf16.mxu0 0
  %6738 = vmatmul.mubr.bf16.gmra.mxu0 %v6644
  %v6739 = vpop.f32.mrf.mxu0
  %v6740 = vadd.f32 0.0, %v6739
  %v6741 = vpop.f32.mrf.mxu0
  %v6742 = vpop.f32.mrf.mxu0
  %v6743 = vadd.f32 0.0, %v6742
  %v6744 = vpop.f32.mrf.mxu0
  %6745 = vmatprep.mubr.bf16.mxu0 0
  %6746 = vmatmul.mubr.bf16.gmra.mxu0 %v6647
  %v6747 = vpop.f32.mrf.mxu0
  %v6748 = vadd.f32 0.0, %v6747
  %v6749 = vpop.f32.mrf.mxu0
  %v6750 = vpop.f32.mrf.mxu0
  %v6751 = vadd.f32 0.0, %v6750
  %v6752 = vpop.f32.mrf.mxu0
  %6753 = vmatprep.mubr.bf16.mxu0 0
  %6754 = vmatmul.mubr.bf16.gmra.mxu0 %v6650
  %v6755 = vpop.f32.mrf.mxu0
  %v6756 = vadd.f32 0.0, %v6755
  %v6757 = vpop.f32.mrf.mxu0
  %v6758 = vpop.f32.mrf.mxu0
  %v6759 = vadd.f32 0.0, %v6758
  %v6760 = vpop.f32.mrf.mxu0
  %6761 = vmatprep.mubr.bf16.mxu0 0
  %6762 = vmatmul.mubr.bf16.gmra.mxu0 %v6653
  %v6763 = vpop.f32.mrf.mxu0
  %v6764 = vadd.f32 0.0, %v6763
  %v6765 = vpop.f32.mrf.mxu0
  %v6766 = vpop.f32.mrf.mxu0
  %v6767 = vadd.f32 0.0, %v6766
  %v6768 = vpop.f32.mrf.mxu0
  %6769 = vmatprep.mubr.bf16.mxu0 0
  %6770 = vmatmul.mubr.bf16.gmra.mxu0 %v6656
  %v6771 = vpop.f32.mrf.mxu0
  %v6772 = vadd.f32 0.0, %v6771
  %v6773 = vpop.f32.mrf.mxu0
  %v6774 = vpop.f32.mrf.mxu0
  %v6775 = vadd.f32 0.0, %v6774
  %v6776 = vpop.f32.mrf.mxu0
  %6777 = vmatprep.mubr.bf16.mxu0 0
  %6778 = vmatmul.mubr.bf16.gmra.mxu0 %v6659
  %v6779 = vpop.f32.mrf.mxu0
  %v6780 = vadd.f32 0.0, %v6779
  %v6781 = vpop.f32.mrf.mxu0
  %v6782 = vpop.f32.mrf.mxu0
  %v6783 = vadd.f32 0.0, %v6782
  %v6784 = vpop.f32.mrf.mxu0
  %6785 = vmatprep.mubr.bf16.mxu0 0
  %6786 = vmatmul.mubr.bf16.gmra.mxu0 %v6662
  %v6787 = vpop.f32.mrf.mxu0
  %v6788 = vadd.f32 0.0, %v6787
  %v6789 = vpop.f32.mrf.mxu0
  %v6790 = vpop.f32.mrf.mxu0
  %v6791 = vadd.f32 0.0, %v6790
  %v6792 = vpop.f32.mrf.mxu0
  %6793 = vmatprep.mubr.bf16.mxu0 0
  %6794 = vmatmul.mubr.bf16.gmra.mxu0 %v6665
  %v6795 = vpop.f32.mrf.mxu0
  %v6796 = vadd.f32 0.0, %v6795
  %v6797 = vpop.f32.mrf.mxu0
  %v6798 = vpop.f32.mrf.mxu0
  %v6799 = vadd.f32 0.0, %v6798
  %v6800 = vpop.f32.mrf.mxu0
  %6801 = vmatprep.mubr.bf16.mxu0 0
  %6802 = vmatmul.mubr.bf16.gmra.mxu0 %v6668
  %v6803 = vpop.f32.mrf.mxu0
  %v6804 = vpop.f32.mrf.mxu0
  %v6805 = vpop.f32.mrf.mxu0
  %v6806 = vpop.f32.mrf.mxu0
  %6807 = vmatprep.mubr.bf16.mxu0 0
  %6808 = vmatmul.mubr.bf16.gmra.mxu0 %v6671
  %v6809 = vpop.f32.mrf.mxu0
  %v6810 = vpop.f32.mrf.mxu0
  %v6811 = vpop.f32.mrf.mxu0
  %v6812 = vpop.f32.mrf.mxu0
  %6813 = vdwg.mxu0
  %v6814 = vadd.f32 %v6446, %v6708
  %v6815 = vadd.f32 %v6449, %v6711
  %v6816 = vadd.f32 %v6454, %v6716
  %v6817 = vadd.f32 %v6457, %v6719
  %v6818 = vadd.f32 %v6462, %v6724
  %v6819 = vadd.f32 %v6465, %v6727
  %v6820 = vadd.f32 %v6470, %v6732
  %v6821 = vadd.f32 %v6473, %v6735
  %v6822 = vadd.f32 %v6478, %v6740
  %v6823 = vadd.f32 %v6481, %v6743
  %v6824 = vadd.f32 %v6486, %v6748
  %v6825 = vadd.f32 %v6489, %v6751
  %v6826 = vadd.f32 %v6494, %v6756
  %v6827 = vadd.f32 %v6497, %v6759
  %v6828 = vadd.f32 %v6502, %v6764
  %v6829 = vadd.f32 %v6505, %v6767
  %v6830 = vadd.f32 %v6510, %v6772
  %v6831 = vadd.f32 %v6513, %v6775
  %v6832 = vadd.f32 %v6518, %v6780
  %v6833 = vadd.f32 %v6521, %v6783
  %v6834 = vadd.f32 %v6526, %v6788
  %v6835 = vadd.f32 %v6529, %v6791
  %v6836 = vadd.f32 %v6534, %v6796
  %v6837 = vadd.f32 %v6537, %v6799
  %v6838 = vpack.c.bf16 %v3575, %v3570
  %v6839 = vrot.slane %v6560, 3
  %v6840 = vrot.slane %v6556, 4
  %v6841 = vor.u32 %v6839, %v6840
  %v6842 = vsel %vm3922, %v5397, %v6841
  %v6843 = vrot.slane %v6567, 3
  %v6844 = vrot.slane %v6563, 4
  %v6845 = vor.u32 %v6843, %v6844
  %v6846 = vsel %vm3922, %v6841, %v6845
  %v6847 = vrot.slane %v6574, 3
  %v6848 = vrot.slane %v6570, 4
  %v6849 = vor.u32 %v6847, %v6848
  %v6850 = vsel %vm3922, %v6845, %v6849
  %v6851 = vrot.slane %v6581, 3
  %v6852 = vrot.slane %v6577, 4
  %v6853 = vor.u32 %v6851, %v6852
  %v6854 = vsel %vm3922, %v6849, %v6853
  %v6855 = vrot.slane %v6588, 3
  %v6856 = vrot.slane %v6584, 4
  %v6857 = vor.u32 %v6855, %v6856
  %v6858 = vsel %vm3922, %v6853, %v6857
  %v6859 = vrot.slane %v6595, 3
  %v6860 = vrot.slane %v6591, 4
  %v6861 = vor.u32 %v6859, %v6860
  %v6862 = vsel %vm3922, %v6857, %v6861
  %v6863 = vrot.slane %v6602, 3
  %v6864 = vrot.slane %v6598, 4
  %v6865 = vor.u32 %v6863, %v6864
  %v6866 = vsel %vm3922, %v6861, %v6865
  %v6867 = vrot.slane %v6609, 3
  %v6868 = vrot.slane %v6605, 4
  %v6869 = vor.u32 %v6867, %v6868
  %v6870 = vsel %vm3922, %v6865, %v6869
  %v6871 = vrot.slane %v6616, 3
  %v6872 = vrot.slane %v6612, 4
  %v6873 = vor.u32 %v6871, %v6872
  %v6874 = vsel %vm3922, %v6869, %v6873
  %v6875 = vrot.slane %v6623, 3
  %v6876 = vrot.slane %v6619, 4
  %v6877 = vor.u32 %v6875, %v6876
  %v6878 = vsel %vm3922, %v6873, %v6877
  %v6879 = vrot.slane %v6631, 3
  %v6880 = vrot.slane %v6627, 4
  %v6881 = vor.u32 %v6879, %v6880
  %v6882 = vsel %vm3922, %v6877, %v6881
  %v6884 = vshrl.u32 %v6838, 16
  %v6886 = vrot.slane %v6884, 3
  %v6887 = vshll.u32 %v6838, 16
  %v6889 = vrot.slane %v6887, 4
  %v6890 = vor.u32 %v6886, %v6889
  %v6891 = vsel %vm3922, %v6881, %v6890
  %v6893 = vsel %vm688, %v6842, 0
  %v6896 = vsel %vm688, %v6846, 0
  %v6899 = vsel %vm688, %v6850, 0
  %v6902 = vsel %vm688, %v6854, 0
  %v6905 = vsel %vm688, %v6858, 0
  %v6908 = vsel %vm688, %v6862, 0
  %v6911 = vsel %vm688, %v6866, 0
  %v6914 = vsel %vm688, %v6870, 0
  %v6917 = vsel %vm688, %v6874, 0
  %v6920 = vsel %vm688, %v6878, 0
  %v6923 = vsel %vm688, %v6882, 0
  %v6926 = vsel %vm688, %v6891, 0
  %v6929 = vsel %vm688, %v6890, 0
  %6931 = vmatprep.subr.bf16.mxu0 0
  %6932 = vmatpush1.bf16.msra.mxu0 0
  %6933 = vmatprep.subr.bf16.mxu0 0
  %6934 = vmatpush1.bf16.msra.mxu0 0
  %6935 = vmatprep.subr.bf16.mxu0 0
  %6936 = vmatpush1.bf16.msra.mxu0 0
  %6937 = vmatprep.subr.bf16.mxu0 0
  %6938 = vmatpush1.bf16.msra.mxu0 0
  %6939 = vmatprep.subr.bf16.mxu0 0
  %6940 = vmatpush1.bf16.msra.mxu0 %v4666
  %6941 = vmatprep.subr.bf16.mxu0 0
  %6942 = vmatpush1.bf16.msra.mxu0 %v4665
  %6943 = vmatprep.subr.bf16.mxu0 0
  %6944 = vmatpush1.bf16.msra.mxu0 %v4664
  %6945 = vmatprep.subr.bf16.mxu0 0
  %6946 = vmatpush1.bf16.msra.mxu0 %v4663
  %6947 = vmatprep.subr.bf16.mxu0 0
  %6948 = vmatpush2.bf16.msra.mxu0 0
  %6949 = vmatprep.subr.bf16.mxu0 0
  %6950 = vmatpush2.bf16.msra.mxu0 0
  %6951 = vmatprep.subr.bf16.mxu0 0
  %6952 = vmatpush2.bf16.msra.mxu0 0
  %6953 = vmatprep.subr.bf16.mxu0 0
  %6954 = vmatpush2.bf16.msra.mxu0 0
  %6955 = vmatprep.subr.bf16.mxu0 0
  %6956 = vmatpush2.bf16.msra.mxu0 0
  %6957 = vmatprep.subr.bf16.mxu0 0
  %6958 = vmatpush2.bf16.msra.mxu0 0
  %6959 = vmatprep.subr.bf16.mxu0 0
  %6960 = vmatpush2.bf16.msra.mxu0 0
  %6961 = vmatprep.subr.bf16.mxu0 0
  %6962 = vmatpush2.bf16.msra.mxu0 0
  %6963 = vmatprep.mubr.bf16.mxu0 0
  %6964 = vmatmul.mubr.bf16.gmra.mxu0 %v5430
  %v6965 = vpop.f32.mrf.mxu0
  %v6966 = vadd.f32 0.0, %v6965
  %v6967 = vpop.f32.mrf.mxu0
  %v6968 = vpop.f32.mrf.mxu0
  %v6969 = vadd.f32 0.0, %v6968
  %v6970 = vpop.f32.mrf.mxu0
  %6971 = vmatprep.mubr.bf16.mxu0 0
  %6972 = vmatmul.mubr.bf16.gmra.mxu0 %v6893
  %v6973 = vpop.f32.mrf.mxu0
  %v6974 = vadd.f32 0.0, %v6973
  %v6975 = vpop.f32.mrf.mxu0
  %v6976 = vpop.f32.mrf.mxu0
  %v6977 = vadd.f32 0.0, %v6976
  %v6978 = vpop.f32.mrf.mxu0
  %6979 = vmatprep.mubr.bf16.mxu0 0
  %6980 = vmatmul.mubr.bf16.gmra.mxu0 %v6896
  %v6981 = vpop.f32.mrf.mxu0
  %v6982 = vadd.f32 0.0, %v6981
  %v6983 = vpop.f32.mrf.mxu0
  %v6984 = vpop.f32.mrf.mxu0
  %v6985 = vadd.f32 0.0, %v6984
  %v6986 = vpop.f32.mrf.mxu0
  %6987 = vmatprep.mubr.bf16.mxu0 0
  %6988 = vmatmul.mubr.bf16.gmra.mxu0 %v6899
  %v6989 = vpop.f32.mrf.mxu0
  %v6990 = vadd.f32 0.0, %v6989
  %v6991 = vpop.f32.mrf.mxu0
  %v6992 = vpop.f32.mrf.mxu0
  %v6993 = vadd.f32 0.0, %v6992
  %v6994 = vpop.f32.mrf.mxu0
  %6995 = vmatprep.mubr.bf16.mxu0 0
  %6996 = vmatmul.mubr.bf16.gmra.mxu0 %v6902
  %v6997 = vpop.f32.mrf.mxu0
  %v6998 = vadd.f32 0.0, %v6997
  %v6999 = vpop.f32.mrf.mxu0
  %v7000 = vpop.f32.mrf.mxu0
  %v7001 = vadd.f32 0.0, %v7000
  %v7002 = vpop.f32.mrf.mxu0
  %7003 = vmatprep.mubr.bf16.mxu0 0
  %7004 = vmatmul.mubr.bf16.gmra.mxu0 %v6905
  %v7005 = vpop.f32.mrf.mxu0
  %v7006 = vadd.f32 0.0, %v7005
  %v7007 = vpop.f32.mrf.mxu0
  %v7008 = vpop.f32.mrf.mxu0
  %v7009 = vadd.f32 0.0, %v7008
  %v7010 = vpop.f32.mrf.mxu0
  %7011 = vmatprep.mubr.bf16.mxu0 0
  %7012 = vmatmul.mubr.bf16.gmra.mxu0 %v6908
  %v7013 = vpop.f32.mrf.mxu0
  %v7014 = vadd.f32 0.0, %v7013
  %v7015 = vpop.f32.mrf.mxu0
  %v7016 = vpop.f32.mrf.mxu0
  %v7017 = vadd.f32 0.0, %v7016
  %v7018 = vpop.f32.mrf.mxu0
  %7019 = vmatprep.mubr.bf16.mxu0 0
  %7020 = vmatmul.mubr.bf16.gmra.mxu0 %v6911
  %v7021 = vpop.f32.mrf.mxu0
  %v7022 = vadd.f32 0.0, %v7021
  %v7023 = vpop.f32.mrf.mxu0
  %v7024 = vpop.f32.mrf.mxu0
  %v7025 = vadd.f32 0.0, %v7024
  %v7026 = vpop.f32.mrf.mxu0
  %7027 = vmatprep.mubr.bf16.mxu0 0
  %7028 = vmatmul.mubr.bf16.gmra.mxu0 %v6914
  %v7029 = vpop.f32.mrf.mxu0
  %v7030 = vadd.f32 0.0, %v7029
  %v7031 = vpop.f32.mrf.mxu0
  %v7032 = vpop.f32.mrf.mxu0
  %v7033 = vadd.f32 0.0, %v7032
  %v7034 = vpop.f32.mrf.mxu0
  %7035 = vmatprep.mubr.bf16.mxu0 0
  %7036 = vmatmul.mubr.bf16.gmra.mxu0 %v6917
  %v7037 = vpop.f32.mrf.mxu0
  %v7038 = vadd.f32 0.0, %v7037
  %v7039 = vpop.f32.mrf.mxu0
  %v7040 = vpop.f32.mrf.mxu0
  %v7041 = vadd.f32 0.0, %v7040
  %v7042 = vpop.f32.mrf.mxu0
  %7043 = vmatprep.mubr.bf16.mxu0 0
  %7044 = vmatmul.mubr.bf16.gmra.mxu0 %v6920
  %v7045 = vpop.f32.mrf.mxu0
  %v7046 = vadd.f32 0.0, %v7045
  %v7047 = vpop.f32.mrf.mxu0
  %v7048 = vpop.f32.mrf.mxu0
  %v7049 = vadd.f32 0.0, %v7048
  %v7050 = vpop.f32.mrf.mxu0
  %7051 = vmatprep.mubr.bf16.mxu0 0
  %7052 = vmatmul.mubr.bf16.gmra.mxu0 %v6923
  %v7053 = vpop.f32.mrf.mxu0
  %v7054 = vadd.f32 0.0, %v7053
  %v7055 = vpop.f32.mrf.mxu0
  %v7056 = vpop.f32.mrf.mxu0
  %v7057 = vadd.f32 0.0, %v7056
  %v7058 = vpop.f32.mrf.mxu0
  %7059 = vmatprep.mubr.bf16.mxu0 0
  %7060 = vmatmul.mubr.bf16.gmra.mxu0 %v6926
  %v7061 = vpop.f32.mrf.mxu0
  %v7062 = vpop.f32.mrf.mxu0
  %v7063 = vpop.f32.mrf.mxu0
  %v7064 = vpop.f32.mrf.mxu0
  %7065 = vmatprep.mubr.bf16.mxu0 0
  %7066 = vmatmul.mubr.bf16.gmra.mxu0 %v6929
  %v7067 = vpop.f32.mrf.mxu0
  %v7068 = vpop.f32.mrf.mxu0
  %v7069 = vpop.f32.mrf.mxu0
  %v7070 = vpop.f32.mrf.mxu0
  %7071 = vdwg.mxu0
  %v7072 = vadd.f32 %v6814, %v6966
  %v7073 = vadd.f32 %v6815, %v6969
  %v7074 = vadd.f32 %v6816, %v6974
  %v7075 = vadd.f32 %v6817, %v6977
  %v7076 = vadd.f32 %v6818, %v6982
  %v7077 = vadd.f32 %v6819, %v6985
  %v7078 = vadd.f32 %v6820, %v6990
  %v7079 = vadd.f32 %v6821, %v6993
  %v7080 = vadd.f32 %v6822, %v6998
  %v7081 = vadd.f32 %v6823, %v7001
  %v7082 = vadd.f32 %v6824, %v7006
  %v7083 = vadd.f32 %v6825, %v7009
  %v7084 = vadd.f32 %v6826, %v7014
  %v7085 = vadd.f32 %v6827, %v7017
  %v7086 = vadd.f32 %v6828, %v7022
  %v7087 = vadd.f32 %v6829, %v7025
  %v7088 = vadd.f32 %v6830, %v7030
  %v7089 = vadd.f32 %v6831, %v7033
  %v7090 = vadd.f32 %v6832, %v7038
  %v7091 = vadd.f32 %v6833, %v7041
  %v7092 = vadd.f32 %v6834, %v7046
  %v7093 = vadd.f32 %v6835, %v7049
  %v7094 = vadd.f32 %v6836, %v7054
  %v7095 = vadd.f32 %v6837, %v7057
  %v7096 = vpack.c.bf16 %v3570, %v3565
  %v7097 = vpack.c.bf16 %v3575, %v3575
  %v7098 = vsel %vm688, %v5801, 0
  %v7100 = vsel %vm688, %v6075, 0
  %v7102 = vsel %vm688, %v6076, 0
  %v7104 = vsel %vm688, %v6077, 0
  %v7106 = vsel %vm688, %v6078, 0
  %v7108 = vsel %vm688, %v6079, 0
  %v7110 = vsel %vm688, %v6080, 0
  %v7112 = vsel %vm688, %v6081, 0
  %v7114 = vsel %vm688, %v6082, 0
  %v7116 = vsel %vm688, %v6083, 0
  %v7118 = vsel %vm688, %v6084, 0
  %v7121 = vsel %vm688, %v7096, 0
  %v7124 = vsel %vm688, %v7097, 0
  %7126 = vmatprep.subr.bf16.mxu0 0
  %7127 = vmatpush1.bf16.msra.mxu0 0
  %7128 = vmatprep.subr.bf16.mxu0 0
  %7129 = vmatpush1.bf16.msra.mxu0 0
  %7130 = vmatprep.subr.bf16.mxu0 0
  %7131 = vmatpush1.bf16.msra.mxu0 0
  %7132 = vmatprep.subr.bf16.mxu0 0
  %7133 = vmatpush1.bf16.msra.mxu0 0
  %7134 = vmatprep.subr.bf16.mxu0 0
  %7135 = vmatpush1.bf16.msra.mxu0 %v4899
  %7136 = vmatprep.subr.bf16.mxu0 0
  %7137 = vmatpush1.bf16.msra.mxu0 %v4898
  %7138 = vmatprep.subr.bf16.mxu0 0
  %7139 = vmatpush1.bf16.msra.mxu0 %v4897
  %7140 = vmatprep.subr.bf16.mxu0 0
  %7141 = vmatpush1.bf16.msra.mxu0 %v4896
  %7142 = vmatprep.subr.bf16.mxu0 0
  %7143 = vmatpush2.bf16.msra.mxu0 0
  %7144 = vmatprep.subr.bf16.mxu0 0
  %7145 = vmatpush2.bf16.msra.mxu0 0
  %7146 = vmatprep.subr.bf16.mxu0 0
  %7147 = vmatpush2.bf16.msra.mxu0 0
  %7148 = vmatprep.subr.bf16.mxu0 0
  %7149 = vmatpush2.bf16.msra.mxu0 0
  %7150 = vmatprep.subr.bf16.mxu0 0
  %7151 = vmatpush2.bf16.msra.mxu0 0
  %7152 = vmatprep.subr.bf16.mxu0 0
  %7153 = vmatpush2.bf16.msra.mxu0 0
  %7154 = vmatprep.subr.bf16.mxu0 0
  %7155 = vmatpush2.bf16.msra.mxu0 0
  %7156 = vmatprep.subr.bf16.mxu0 0
  %7157 = vmatpush2.bf16.msra.mxu0 0
  %7158 = vmatprep.mubr.bf16.mxu0 0
  %7159 = vmatmul.mubr.bf16.gmra.mxu0 %v5631
  %v7160 = vpop.f32.mrf.mxu0
  %v7161 = vadd.f32 0.0, %v7160
  %v7162 = vpop.f32.mrf.mxu0
  %v7163 = vpop.f32.mrf.mxu0
  %v7164 = vadd.f32 0.0, %v7163
  %v7165 = vpop.f32.mrf.mxu0
  %7166 = vmatprep.mubr.bf16.mxu0 0
  %7167 = vmatmul.mubr.bf16.gmra.mxu0 %v7098
  %v7168 = vpop.f32.mrf.mxu0
  %v7169 = vadd.f32 0.0, %v7168
  %v7170 = vpop.f32.mrf.mxu0
  %v7171 = vpop.f32.mrf.mxu0
  %v7172 = vadd.f32 0.0, %v7171
  %v7173 = vpop.f32.mrf.mxu0
  %7174 = vmatprep.mubr.bf16.mxu0 0
  %7175 = vmatmul.mubr.bf16.gmra.mxu0 %v7100
  %v7176 = vpop.f32.mrf.mxu0
  %v7177 = vadd.f32 0.0, %v7176
  %v7178 = vpop.f32.mrf.mxu0
  %v7179 = vpop.f32.mrf.mxu0
  %v7180 = vadd.f32 0.0, %v7179
  %v7181 = vpop.f32.mrf.mxu0
  %7182 = vmatprep.mubr.bf16.mxu0 0
  %7183 = vmatmul.mubr.bf16.gmra.mxu0 %v7102
  %v7184 = vpop.f32.mrf.mxu0
  %v7185 = vadd.f32 0.0, %v7184
  %v7186 = vpop.f32.mrf.mxu0
  %v7187 = vpop.f32.mrf.mxu0
  %v7188 = vadd.f32 0.0, %v7187
  %v7189 = vpop.f32.mrf.mxu0
  %7190 = vmatprep.mubr.bf16.mxu0 0
  %7191 = vmatmul.mubr.bf16.gmra.mxu0 %v7104
  %v7192 = vpop.f32.mrf.mxu0
  %v7193 = vadd.f32 0.0, %v7192
  %v7194 = vpop.f32.mrf.mxu0
  %v7195 = vpop.f32.mrf.mxu0
  %v7196 = vadd.f32 0.0, %v7195
  %v7197 = vpop.f32.mrf.mxu0
  %7198 = vmatprep.mubr.bf16.mxu0 0
  %7199 = vmatmul.mubr.bf16.gmra.mxu0 %v7106
  %v7200 = vpop.f32.mrf.mxu0
  %v7201 = vadd.f32 0.0, %v7200
  %v7202 = vpop.f32.mrf.mxu0
  %v7203 = vpop.f32.mrf.mxu0
  %v7204 = vadd.f32 0.0, %v7203
  %v7205 = vpop.f32.mrf.mxu0
  %7206 = vmatprep.mubr.bf16.mxu0 0
  %7207 = vmatmul.mubr.bf16.gmra.mxu0 %v7108
  %v7208 = vpop.f32.mrf.mxu0
  %v7209 = vadd.f32 0.0, %v7208
  %v7210 = vpop.f32.mrf.mxu0
  %v7211 = vpop.f32.mrf.mxu0
  %v7212 = vadd.f32 0.0, %v7211
  %v7213 = vpop.f32.mrf.mxu0
  %7214 = vmatprep.mubr.bf16.mxu0 0
  %7215 = vmatmul.mubr.bf16.gmra.mxu0 %v7110
  %v7216 = vpop.f32.mrf.mxu0
  %v7217 = vadd.f32 0.0, %v7216
  %v7218 = vpop.f32.mrf.mxu0
  %v7219 = vpop.f32.mrf.mxu0
  %v7220 = vadd.f32 0.0, %v7219
  %v7221 = vpop.f32.mrf.mxu0
  %7222 = vmatprep.mubr.bf16.mxu0 0
  %7223 = vmatmul.mubr.bf16.gmra.mxu0 %v7112
  %v7224 = vpop.f32.mrf.mxu0
  %v7225 = vadd.f32 0.0, %v7224
  %v7226 = vpop.f32.mrf.mxu0
  %v7227 = vpop.f32.mrf.mxu0
  %v7228 = vadd.f32 0.0, %v7227
  %v7229 = vpop.f32.mrf.mxu0
  %7230 = vmatprep.mubr.bf16.mxu0 0
  %7231 = vmatmul.mubr.bf16.gmra.mxu0 %v7114
  %v7232 = vpop.f32.mrf.mxu0
  %v7233 = vadd.f32 0.0, %v7232
  %v7234 = vpop.f32.mrf.mxu0
  %v7235 = vpop.f32.mrf.mxu0
  %v7236 = vadd.f32 0.0, %v7235
  %v7237 = vpop.f32.mrf.mxu0
  %7238 = vmatprep.mubr.bf16.mxu0 0
  %7239 = vmatmul.mubr.bf16.gmra.mxu0 %v7116
  %v7240 = vpop.f32.mrf.mxu0
  %v7241 = vadd.f32 0.0, %v7240
  %v7242 = vpop.f32.mrf.mxu0
  %v7243 = vpop.f32.mrf.mxu0
  %v7244 = vadd.f32 0.0, %v7243
  %v7245 = vpop.f32.mrf.mxu0
  %7246 = vmatprep.mubr.bf16.mxu0 0
  %7247 = vmatmul.mubr.bf16.gmra.mxu0 %v7118
  %v7248 = vpop.f32.mrf.mxu0
  %v7249 = vadd.f32 0.0, %v7248
  %v7250 = vpop.f32.mrf.mxu0
  %v7251 = vpop.f32.mrf.mxu0
  %v7252 = vadd.f32 0.0, %v7251
  %v7253 = vpop.f32.mrf.mxu0
  %7254 = vmatprep.mubr.bf16.mxu0 0
  %7255 = vmatmul.mubr.bf16.gmra.mxu0 %v7121
  %v7256 = vpop.f32.mrf.mxu0
  %v7257 = vpop.f32.mrf.mxu0
  %v7258 = vpop.f32.mrf.mxu0
  %v7259 = vpop.f32.mrf.mxu0
  %7260 = vmatprep.mubr.bf16.mxu0 0
  %7261 = vmatmul.mubr.bf16.gmra.mxu0 %v7124
  %v7262 = vpop.f32.mrf.mxu0
  %v7263 = vpop.f32.mrf.mxu0
  %v7264 = vpop.f32.mrf.mxu0
  %v7265 = vpop.f32.mrf.mxu0
  %7266 = vdwg.mxu0
  %v7267 = vadd.f32 %v7072, %v7161
  %v7268 = vadd.f32 %v7073, %v7164
  %v7269 = vadd.f32 %v7074, %v7169
  %v7270 = vadd.f32 %v7075, %v7172
  %v7271 = vadd.f32 %v7076, %v7177
  %v7272 = vadd.f32 %v7077, %v7180
  %v7273 = vadd.f32 %v7078, %v7185
  %v7274 = vadd.f32 %v7079, %v7188
  %v7275 = vadd.f32 %v7080, %v7193
  %v7276 = vadd.f32 %v7081, %v7196
  %v7277 = vadd.f32 %v7082, %v7201
  %v7278 = vadd.f32 %v7083, %v7204
  %v7279 = vadd.f32 %v7084, %v7209
  %v7280 = vadd.f32 %v7085, %v7212
  %v7281 = vadd.f32 %v7086, %v7217
  %v7282 = vadd.f32 %v7087, %v7220
  %v7283 = vadd.f32 %v7088, %v7225
  %v7284 = vadd.f32 %v7089, %v7228
  %v7285 = vadd.f32 %v7090, %v7233
  %v7286 = vadd.f32 %v7091, %v7236
  %v7287 = vadd.f32 %v7092, %v7241
  %v7288 = vadd.f32 %v7093, %v7244
  %v7289 = vadd.f32 %v7094, %v7249
  %v7290 = vadd.f32 %v7095, %v7252
  %v7291 = vpack.c.bf16 %v3580, %v3575
  %v7292 = vrot.slane %v6286, 1
  %v7293 = vsel %vm4256, %v5819, %v7292
  %v7294 = vor.u32 %v6283, %v7292
  %v7295 = vrot.slane %v6295, 1
  %v7296 = vsel %vm4256, %v7294, %v7295
  %v7297 = vor.u32 %v6292, %v7295
  %v7298 = vrot.slane %v6304, 1
  %v7299 = vsel %vm4256, %v7297, %v7298
  %v7300 = vor.u32 %v6301, %v7298
  %v7301 = vrot.slane %v6313, 1
  %v7302 = vsel %vm4256, %v7300, %v7301
  %v7303 = vor.u32 %v6310, %v7301
  %v7304 = vrot.slane %v6322, 1
  %v7305 = vsel %vm4256, %v7303, %v7304
  %v7306 = vor.u32 %v6319, %v7304
  %v7307 = vrot.slane %v6331, 1
  %v7308 = vsel %vm4256, %v7306, %v7307
  %v7309 = vor.u32 %v6328, %v7307
  %v7310 = vrot.slane %v6340, 1
  %v7311 = vsel %vm4256, %v7309, %v7310
  %v7312 = vor.u32 %v6337, %v7310
  %v7313 = vrot.slane %v6349, 1
  %v7314 = vsel %vm4256, %v7312, %v7313
  %v7315 = vor.u32 %v6346, %v7313
  %v7316 = vrot.slane %v6358, 1
  %v7317 = vsel %vm4256, %v7315, %v7316
  %v7318 = vor.u32 %v6355, %v7316
  %v7319 = vrot.slane %v6367, 1
  %v7320 = vsel %vm4256, %v7318, %v7319
  %v7321 = vor.u32 %v6364, %v7319
  %v7322 = vshll.u32 %v7096, 16
  %v7324 = vrot.slane %v7322, 1
  %v7325 = vsel %vm4256, %v7321, %v7324
  %v7326 = vshrl.u32 %v7096, 16
  %v7328 = vor.u32 %v7326, %v7324
  %v7330 = vshll.u32 %v7291, 16
  %v7332 = vrot.slane %v7330, 1
  %v7333 = vsel %vm4256, %v7328, %v7332
  %v7334 = vshrl.u32 %v7291, 16
  %v7336 = vor.u32 %v7334, %v7332
  %v7338 = vsel %vm688, %v7293, 0
  %v7341 = vsel %vm688, %v7296, 0
  %v7344 = vsel %vm688, %v7299, 0
  %v7347 = vsel %vm688, %v7302, 0
  %v7350 = vsel %vm688, %v7305, 0
  %v7353 = vsel %vm688, %v7308, 0
  %v7356 = vsel %vm688, %v7311, 0
  %v7359 = vsel %vm688, %v7314, 0
  %v7362 = vsel %vm688, %v7317, 0
  %v7365 = vsel %vm688, %v7320, 0
  %v7368 = vsel %vm688, %v7325, 0
  %v7371 = vsel %vm688, %v7333, 0
  %v7374 = vsel %vm688, %v7336, 0
  %7376 = vmatprep.subr.bf16.mxu0 0
  %7377 = vmatpush1.bf16.msra.mxu0 0
  %7378 = vmatprep.subr.bf16.mxu0 0
  %7379 = vmatpush1.bf16.msra.mxu0 0
  %7380 = vmatprep.subr.bf16.mxu0 0
  %7381 = vmatpush1.bf16.msra.mxu0 0
  %7382 = vmatprep.subr.bf16.mxu0 0
  %7383 = vmatpush1.bf16.msra.mxu0 0
  %7384 = vmatprep.subr.bf16.mxu0 0
  %7385 = vmatpush1.bf16.msra.mxu0 %v5169
  %7386 = vmatprep.subr.bf16.mxu0 0
  %7387 = vmatpush1.bf16.msra.mxu0 %v5168
  %7388 = vmatprep.subr.bf16.mxu0 0
  %7389 = vmatpush1.bf16.msra.mxu0 %v5167
  %7390 = vmatprep.subr.bf16.mxu0 0
  %7391 = vmatpush1.bf16.msra.mxu0 %v5166
  %7392 = vmatprep.subr.bf16.mxu0 0
  %7393 = vmatpush2.bf16.msra.mxu0 0
  %7394 = vmatprep.subr.bf16.mxu0 0
  %7395 = vmatpush2.bf16.msra.mxu0 0
  %7396 = vmatprep.subr.bf16.mxu0 0
  %7397 = vmatpush2.bf16.msra.mxu0 0
  %7398 = vmatprep.subr.bf16.mxu0 0
  %7399 = vmatpush2.bf16.msra.mxu0 0
  %7400 = vmatprep.subr.bf16.mxu0 0
  %7401 = vmatpush2.bf16.msra.mxu0 0
  %7402 = vmatprep.subr.bf16.mxu0 0
  %7403 = vmatpush2.bf16.msra.mxu0 0
  %7404 = vmatprep.subr.bf16.mxu0 0
  %7405 = vmatpush2.bf16.msra.mxu0 0
  %7406 = vmatprep.subr.bf16.mxu0 0
  %7407 = vmatpush2.bf16.msra.mxu0 0
  %7408 = vmatprep.mubr.bf16.mxu0 0
  %7409 = vmatmul.mubr.bf16.gmra.mxu0 %v5851
  %v7410 = vpop.f32.mrf.mxu0
  %v7411 = vadd.f32 0.0, %v7410
  %v7412 = vpop.f32.mrf.mxu0
  %v7413 = vpop.f32.mrf.mxu0
  %v7414 = vadd.f32 0.0, %v7413
  %v7415 = vpop.f32.mrf.mxu0
  %7416 = vmatprep.mubr.bf16.mxu0 0
  %7417 = vmatmul.mubr.bf16.gmra.mxu0 %v7338
  %v7418 = vpop.f32.mrf.mxu0
  %v7419 = vadd.f32 0.0, %v7418
  %v7420 = vpop.f32.mrf.mxu0
  %v7421 = vpop.f32.mrf.mxu0
  %v7422 = vadd.f32 0.0, %v7421
  %v7423 = vpop.f32.mrf.mxu0
  %7424 = vmatprep.mubr.bf16.mxu0 0
  %7425 = vmatmul.mubr.bf16.gmra.mxu0 %v7341
  %v7426 = vpop.f32.mrf.mxu0
  %v7427 = vadd.f32 0.0, %v7426
  %v7428 = vpop.f32.mrf.mxu0
  %v7429 = vpop.f32.mrf.mxu0
  %v7430 = vadd.f32 0.0, %v7429
  %v7431 = vpop.f32.mrf.mxu0
  %7432 = vmatprep.mubr.bf16.mxu0 0
  %7433 = vmatmul.mubr.bf16.gmra.mxu0 %v7344
  %v7434 = vpop.f32.mrf.mxu0
  %v7435 = vadd.f32 0.0, %v7434
  %v7436 = vpop.f32.mrf.mxu0
  %v7437 = vpop.f32.mrf.mxu0
  %v7438 = vadd.f32 0.0, %v7437
  %v7439 = vpop.f32.mrf.mxu0
  %7440 = vmatprep.mubr.bf16.mxu0 0
  %7441 = vmatmul.mubr.bf16.gmra.mxu0 %v7347
  %v7442 = vpop.f32.mrf.mxu0
  %v7443 = vadd.f32 0.0, %v7442
  %v7444 = vpop.f32.mrf.mxu0
  %v7445 = vpop.f32.mrf.mxu0
  %v7446 = vadd.f32 0.0, %v7445
  %v7447 = vpop.f32.mrf.mxu0
  %7448 = vmatprep.mubr.bf16.mxu0 0
  %7449 = vmatmul.mubr.bf16.gmra.mxu0 %v7350
  %v7450 = vpop.f32.mrf.mxu0
  %v7451 = vadd.f32 0.0, %v7450
  %v7452 = vpop.f32.mrf.mxu0
  %v7453 = vpop.f32.mrf.mxu0
  %v7454 = vadd.f32 0.0, %v7453
  %v7455 = vpop.f32.mrf.mxu0
  %7456 = vmatprep.mubr.bf16.mxu0 0
  %7457 = vmatmul.mubr.bf16.gmra.mxu0 %v7353
  %v7458 = vpop.f32.mrf.mxu0
  %v7459 = vadd.f32 0.0, %v7458
  %v7460 = vpop.f32.mrf.mxu0
  %v7461 = vpop.f32.mrf.mxu0
  %v7462 = vadd.f32 0.0, %v7461
  %v7463 = vpop.f32.mrf.mxu0
  %7464 = vmatprep.mubr.bf16.mxu0 0
  %7465 = vmatmul.mubr.bf16.gmra.mxu0 %v7356
  %v7466 = vpop.f32.mrf.mxu0
  %v7467 = vadd.f32 0.0, %v7466
  %v7468 = vpop.f32.mrf.mxu0
  %v7469 = vpop.f32.mrf.mxu0
  %v7470 = vadd.f32 0.0, %v7469
  %v7471 = vpop.f32.mrf.mxu0
  %7472 = vmatprep.mubr.bf16.mxu0 0
  %7473 = vmatmul.mubr.bf16.gmra.mxu0 %v7359
  %v7474 = vpop.f32.mrf.mxu0
  %v7475 = vadd.f32 0.0, %v7474
  %v7476 = vpop.f32.mrf.mxu0
  %v7477 = vpop.f32.mrf.mxu0
  %v7478 = vadd.f32 0.0, %v7477
  %v7479 = vpop.f32.mrf.mxu0
  %7480 = vmatprep.mubr.bf16.mxu0 0
  %7481 = vmatmul.mubr.bf16.gmra.mxu0 %v7362
  %v7482 = vpop.f32.mrf.mxu0
  %v7483 = vadd.f32 0.0, %v7482
  %v7484 = vpop.f32.mrf.mxu0
  %v7485 = vpop.f32.mrf.mxu0
  %v7486 = vadd.f32 0.0, %v7485
  %v7487 = vpop.f32.mrf.mxu0
  %7488 = vmatprep.mubr.bf16.mxu0 0
  %7489 = vmatmul.mubr.bf16.gmra.mxu0 %v7365
  %v7490 = vpop.f32.mrf.mxu0
  %v7491 = vadd.f32 0.0, %v7490
  %v7492 = vpop.f32.mrf.mxu0
  %v7493 = vpop.f32.mrf.mxu0
  %v7494 = vadd.f32 0.0, %v7493
  %v7495 = vpop.f32.mrf.mxu0
  %7496 = vmatprep.mubr.bf16.mxu0 0
  %7497 = vmatmul.mubr.bf16.gmra.mxu0 %v7368
  %v7498 = vpop.f32.mrf.mxu0
  %v7499 = vadd.f32 0.0, %v7498
  %v7500 = vpop.f32.mrf.mxu0
  %v7501 = vpop.f32.mrf.mxu0
  %v7502 = vadd.f32 0.0, %v7501
  %v7503 = vpop.f32.mrf.mxu0
  %7504 = vmatprep.mubr.bf16.mxu0 0
  %7505 = vmatmul.mubr.bf16.gmra.mxu0 %v7371
  %v7506 = vpop.f32.mrf.mxu0
  %v7507 = vpop.f32.mrf.mxu0
  %v7508 = vpop.f32.mrf.mxu0
  %v7509 = vpop.f32.mrf.mxu0
  %7510 = vmatprep.mubr.bf16.mxu0 0
  %7511 = vmatmul.mubr.bf16.gmra.mxu0 %v7374
  %v7512 = vpop.f32.mrf.mxu0
  %v7513 = vpop.f32.mrf.mxu0
  %v7514 = vpop.f32.mrf.mxu0
  %v7515 = vpop.f32.mrf.mxu0
  %7516 = vdwg.mxu0
  %v7517 = vadd.f32 %v7267, %v7411
  %v7518 = vadd.f32 %v7268, %v7414
  %v7519 = vadd.f32 %v7269, %v7419
  %v7520 = vadd.f32 %v7270, %v7422
  %v7521 = vadd.f32 %v7271, %v7427
  %v7522 = vadd.f32 %v7272, %v7430
  %v7523 = vadd.f32 %v7273, %v7435
  %v7524 = vadd.f32 %v7274, %v7438
  %v7525 = vadd.f32 %v7275, %v7443
  %v7526 = vadd.f32 %v7276, %v7446
  %v7527 = vadd.f32 %v7277, %v7451
  %v7528 = vadd.f32 %v7278, %v7454
  %v7529 = vadd.f32 %v7279, %v7459
  %v7530 = vadd.f32 %v7280, %v7462
  %v7531 = vadd.f32 %v7281, %v7467
  %v7532 = vadd.f32 %v7282, %v7470
  %v7533 = vadd.f32 %v7283, %v7475
  %v7534 = vadd.f32 %v7284, %v7478
  %v7535 = vadd.f32 %v7285, %v7483
  %v7536 = vadd.f32 %v7286, %v7486
  %v7537 = vadd.f32 %v7287, %v7491
  %v7538 = vadd.f32 %v7288, %v7494
  %v7539 = vadd.f32 %v7289, %v7499
  %v7540 = vadd.f32 %v7290, %v7502
  %v7541 = vpack.c.bf16 %v3590, %v3585
  %v7542 = vrot.slane %v7326, 3
  %v7543 = vrot.slane %v7322, 4
  %v7544 = vor.u32 %v7542, %v7543
  %v7545 = vsel %vm3922, %v6370, %v7544
  %v7546 = vrot.slane %v7334, 3
  %v7547 = vrot.slane %v7330, 4
  %v7548 = vor.u32 %v7546, %v7547
  %v7549 = vsel %vm3922, %v7544, %v7548
  %v7551 = vshrl.u32 %v7541, 16
  %v7553 = vrot.slane %v7551, 3
  %v7554 = vshll.u32 %v7541, 16
  %v7556 = vrot.slane %v7554, 4
  %v7557 = vor.u32 %v7553, %v7556
  %v7558 = vsel %vm3922, %v7548, %v7557
  %v7560 = vsel %vm688, %v7545, 0
  %v7563 = vsel %vm688, %v7549, 0
  %v7566 = vsel %vm688, %v7558, 0
  %v7569 = vsel %vm688, %v7557, 0
  %7571 = vmatprep.subr.bf16.mxu0 0
  %7572 = vmatpush1.bf16.msra.mxu0 0
  %7573 = vmatprep.subr.bf16.mxu0 0
  %7574 = vmatpush1.bf16.msra.mxu0 0
  %7575 = vmatprep.subr.bf16.mxu0 0
  %7576 = vmatpush1.bf16.msra.mxu0 0
  %7577 = vmatprep.subr.bf16.mxu0 0
  %7578 = vmatpush1.bf16.msra.mxu0 0
  %7579 = vmatprep.subr.bf16.mxu0 0
  %7580 = vmatpush1.bf16.msra.mxu0 %v5418
  %7581 = vmatprep.subr.bf16.mxu0 0
  %7582 = vmatpush1.bf16.msra.mxu0 %v5417
  %7583 = vmatprep.subr.bf16.mxu0 0
  %7584 = vmatpush1.bf16.msra.mxu0 %v5416
  %7585 = vmatprep.subr.bf16.mxu0 0
  %7586 = vmatpush1.bf16.msra.mxu0 %v5415
  %7587 = vmatprep.subr.bf16.mxu0 0
  %7588 = vmatpush2.bf16.msra.mxu0 0
  %7589 = vmatprep.subr.bf16.mxu0 0
  %7590 = vmatpush2.bf16.msra.mxu0 0
  %7591 = vmatprep.subr.bf16.mxu0 0
  %7592 = vmatpush2.bf16.msra.mxu0 0
  %7593 = vmatprep.subr.bf16.mxu0 0
  %7594 = vmatpush2.bf16.msra.mxu0 0
  %7595 = vmatprep.subr.bf16.mxu0 0
  %7596 = vmatpush2.bf16.msra.mxu0 0
  %7597 = vmatprep.subr.bf16.mxu0 0
  %7598 = vmatpush2.bf16.msra.mxu0 0
  %7599 = vmatprep.subr.bf16.mxu0 0
  %7600 = vmatpush2.bf16.msra.mxu0 0
  %7601 = vmatprep.subr.bf16.mxu0 0
  %7602 = vmatpush2.bf16.msra.mxu0 0
  %7603 = vmatprep.mubr.bf16.mxu0 0
  %7604 = vmatmul.mubr.bf16.gmra.mxu0 %v6379
  %v7605 = vpop.f32.mrf.mxu0
  %v7606 = vadd.f32 0.0, %v7605
  %v7607 = vpop.f32.mrf.mxu0
  %v7608 = vpop.f32.mrf.mxu0
  %v7609 = vadd.f32 0.0, %v7608
  %v7610 = vpop.f32.mrf.mxu0
  %7611 = vmatprep.mubr.bf16.mxu0 0
  %7612 = vmatmul.mubr.bf16.gmra.mxu0 %v6382
  %v7613 = vpop.f32.mrf.mxu0
  %v7614 = vadd.f32 0.0, %v7613
  %v7615 = vpop.f32.mrf.mxu0
  %v7616 = vpop.f32.mrf.mxu0
  %v7617 = vadd.f32 0.0, %v7616
  %v7618 = vpop.f32.mrf.mxu0
  %7619 = vmatprep.mubr.bf16.mxu0 0
  %7620 = vmatmul.mubr.bf16.gmra.mxu0 %v6385
  %v7621 = vpop.f32.mrf.mxu0
  %v7622 = vadd.f32 0.0, %v7621
  %v7623 = vpop.f32.mrf.mxu0
  %v7624 = vpop.f32.mrf.mxu0
  %v7625 = vadd.f32 0.0, %v7624
  %v7626 = vpop.f32.mrf.mxu0
  %7627 = vmatprep.mubr.bf16.mxu0 0
  %7628 = vmatmul.mubr.bf16.gmra.mxu0 %v6388
  %v7629 = vpop.f32.mrf.mxu0
  %v7630 = vadd.f32 0.0, %v7629
  %v7631 = vpop.f32.mrf.mxu0
  %v7632 = vpop.f32.mrf.mxu0
  %v7633 = vadd.f32 0.0, %v7632
  %v7634 = vpop.f32.mrf.mxu0
  %7635 = vmatprep.mubr.bf16.mxu0 0
  %7636 = vmatmul.mubr.bf16.gmra.mxu0 %v6391
  %v7637 = vpop.f32.mrf.mxu0
  %v7638 = vadd.f32 0.0, %v7637
  %v7639 = vpop.f32.mrf.mxu0
  %v7640 = vpop.f32.mrf.mxu0
  %v7641 = vadd.f32 0.0, %v7640
  %v7642 = vpop.f32.mrf.mxu0
  %7643 = vmatprep.mubr.bf16.mxu0 0
  %7644 = vmatmul.mubr.bf16.gmra.mxu0 %v6394
  %v7645 = vpop.f32.mrf.mxu0
  %v7646 = vadd.f32 0.0, %v7645
  %v7647 = vpop.f32.mrf.mxu0
  %v7648 = vpop.f32.mrf.mxu0
  %v7649 = vadd.f32 0.0, %v7648
  %v7650 = vpop.f32.mrf.mxu0
  %7651 = vmatprep.mubr.bf16.mxu0 0
  %7652 = vmatmul.mubr.bf16.gmra.mxu0 %v6397
  %v7653 = vpop.f32.mrf.mxu0
  %v7654 = vadd.f32 0.0, %v7653
  %v7655 = vpop.f32.mrf.mxu0
  %v7656 = vpop.f32.mrf.mxu0
  %v7657 = vadd.f32 0.0, %v7656
  %v7658 = vpop.f32.mrf.mxu0
  %7659 = vmatprep.mubr.bf16.mxu0 0
  %7660 = vmatmul.mubr.bf16.gmra.mxu0 %v6400
  %v7661 = vpop.f32.mrf.mxu0
  %v7662 = vadd.f32 0.0, %v7661
  %v7663 = vpop.f32.mrf.mxu0
  %v7664 = vpop.f32.mrf.mxu0
  %v7665 = vadd.f32 0.0, %v7664
  %v7666 = vpop.f32.mrf.mxu0
  %7667 = vmatprep.mubr.bf16.mxu0 0
  %7668 = vmatmul.mubr.bf16.gmra.mxu0 %v6403
  %v7669 = vpop.f32.mrf.mxu0
  %v7670 = vadd.f32 0.0, %v7669
  %v7671 = vpop.f32.mrf.mxu0
  %v7672 = vpop.f32.mrf.mxu0
  %v7673 = vadd.f32 0.0, %v7672
  %v7674 = vpop.f32.mrf.mxu0
  %7675 = vmatprep.mubr.bf16.mxu0 0
  %7676 = vmatmul.mubr.bf16.gmra.mxu0 %v6406
  %v7677 = vpop.f32.mrf.mxu0
  %v7678 = vadd.f32 0.0, %v7677
  %v7679 = vpop.f32.mrf.mxu0
  %v7680 = vpop.f32.mrf.mxu0
  %v7681 = vadd.f32 0.0, %v7680
  %v7682 = vpop.f32.mrf.mxu0
  %7683 = vmatprep.mubr.bf16.mxu0 0
  %7684 = vmatmul.mubr.bf16.gmra.mxu0 %v7560
  %v7685 = vpop.f32.mrf.mxu0
  %v7686 = vadd.f32 0.0, %v7685
  %v7687 = vpop.f32.mrf.mxu0
  %v7688 = vpop.f32.mrf.mxu0
  %v7689 = vadd.f32 0.0, %v7688
  %v7690 = vpop.f32.mrf.mxu0
  %7691 = vmatprep.mubr.bf16.mxu0 0
  %7692 = vmatmul.mubr.bf16.gmra.mxu0 %v7563
  %v7693 = vpop.f32.mrf.mxu0
  %v7694 = vadd.f32 0.0, %v7693
  %v7695 = vpop.f32.mrf.mxu0
  %v7696 = vpop.f32.mrf.mxu0
  %v7697 = vadd.f32 0.0, %v7696
  %v7698 = vpop.f32.mrf.mxu0
  %7699 = vmatprep.mubr.bf16.mxu0 0
  %7700 = vmatmul.mubr.bf16.gmra.mxu0 %v7566
  %v7701 = vpop.f32.mrf.mxu0
  %v7702 = vpop.f32.mrf.mxu0
  %v7703 = vpop.f32.mrf.mxu0
  %v7704 = vpop.f32.mrf.mxu0
  %7705 = vmatprep.mubr.bf16.mxu0 0
  %7706 = vmatmul.mubr.bf16.gmra.mxu0 %v7569
  %v7707 = vpop.f32.mrf.mxu0
  %v7708 = vpop.f32.mrf.mxu0
  %v7709 = vpop.f32.mrf.mxu0
  %v7710 = vpop.f32.mrf.mxu0
  %7711 = vdwg.mxu0
  %v7712 = vadd.f32 %v7517, %v7606
  %v7713 = vadd.f32 %v7518, %v7609
  %v7714 = vadd.f32 %v7519, %v7614
  %v7715 = vadd.f32 %v7520, %v7617
  %v7716 = vadd.f32 %v7521, %v7622
  %v7717 = vadd.f32 %v7522, %v7625
  %v7718 = vadd.f32 %v7523, %v7630
  %v7719 = vadd.f32 %v7524, %v7633
  %v7720 = vadd.f32 %v7525, %v7638
  %v7721 = vadd.f32 %v7526, %v7641
  %v7722 = vadd.f32 %v7527, %v7646
  %v7723 = vadd.f32 %v7528, %v7649
  %v7724 = vadd.f32 %v7529, %v7654
  %v7725 = vadd.f32 %v7530, %v7657
  %v7726 = vadd.f32 %v7531, %v7662
  %v7727 = vadd.f32 %v7532, %v7665
  %v7728 = vadd.f32 %v7533, %v7670
  %v7729 = vadd.f32 %v7534, %v7673
  %v7730 = vadd.f32 %v7535, %v7678
  %v7731 = vadd.f32 %v7536, %v7681
  %v7732 = vadd.f32 %v7537, %v7686
  %v7733 = vadd.f32 %v7538, %v7689
  %v7734 = vadd.f32 %v7539, %v7694
  %v7735 = vadd.f32 %v7540, %v7697
  %v7736 = vpack.c.bf16 %v3585, %v3580
  %v7737 = vpack.c.bf16 %v3590, %v3590
  %v7738 = vsel %vm688, %v6552, 0
  %v7740 = vsel %vm688, %v6838, 0
  %v7743 = vsel %vm688, %v7736, 0
  %v7746 = vsel %vm688, %v7737, 0
  %7748 = vmatprep.subr.bf16.mxu0 0
  %7749 = vmatpush1.bf16.msra.mxu0 0
  %7750 = vmatprep.subr.bf16.mxu0 0
  %7751 = vmatpush1.bf16.msra.mxu0 0
  %7752 = vmatprep.subr.bf16.mxu0 0
  %7753 = vmatpush1.bf16.msra.mxu0 0
  %7754 = vmatprep.subr.bf16.mxu0 0
  %7755 = vmatpush1.bf16.msra.mxu0 0
  %7756 = vmatprep.subr.bf16.mxu0 0
  %7757 = vmatpush1.bf16.msra.mxu0 %v5621
  %7758 = vmatprep.subr.bf16.mxu0 0
  %7759 = vmatpush1.bf16.msra.mxu0 %v5620
  %7760 = vmatprep.subr.bf16.mxu0 0
  %7761 = vmatpush1.bf16.msra.mxu0 %v5619
  %7762 = vmatprep.subr.bf16.mxu0 0
  %7763 = vmatpush1.bf16.msra.mxu0 %v5618
  %7764 = vmatprep.subr.bf16.mxu0 0
  %7765 = vmatpush2.bf16.msra.mxu0 0
  %7766 = vmatprep.subr.bf16.mxu0 0
  %7767 = vmatpush2.bf16.msra.mxu0 0
  %7768 = vmatprep.subr.bf16.mxu0 0
  %7769 = vmatpush2.bf16.msra.mxu0 0
  %7770 = vmatprep.subr.bf16.mxu0 0
  %7771 = vmatpush2.bf16.msra.mxu0 0
  %7772 = vmatprep.subr.bf16.mxu0 0
  %7773 = vmatpush2.bf16.msra.mxu0 0
  %7774 = vmatprep.subr.bf16.mxu0 0
  %7775 = vmatpush2.bf16.msra.mxu0 0
  %7776 = vmatprep.subr.bf16.mxu0 0
  %7777 = vmatpush2.bf16.msra.mxu0 0
  %7778 = vmatprep.subr.bf16.mxu0 0
  %7779 = vmatpush2.bf16.msra.mxu0 0
  %7780 = vmatprep.mubr.bf16.mxu0 0
  %7781 = vmatmul.mubr.bf16.gmra.mxu0 %v6101
  %v7782 = vpop.f32.mrf.mxu0
  %v7783 = vadd.f32 0.0, %v7782
  %v7784 = vpop.f32.mrf.mxu0
  %v7785 = vpop.f32.mrf.mxu0
  %v7786 = vadd.f32 0.0, %v7785
  %v7787 = vpop.f32.mrf.mxu0
  %7788 = vmatprep.mubr.bf16.mxu0 0
  %7789 = vmatmul.mubr.bf16.gmra.mxu0 %v6104
  %v7790 = vpop.f32.mrf.mxu0
  %v7791 = vadd.f32 0.0, %v7790
  %v7792 = vpop.f32.mrf.mxu0
  %v7793 = vpop.f32.mrf.mxu0
  %v7794 = vadd.f32 0.0, %v7793
  %v7795 = vpop.f32.mrf.mxu0
  %7796 = vmatprep.mubr.bf16.mxu0 0
  %7797 = vmatmul.mubr.bf16.gmra.mxu0 %v6107
  %v7798 = vpop.f32.mrf.mxu0
  %v7799 = vadd.f32 0.0, %v7798
  %v7800 = vpop.f32.mrf.mxu0
  %v7801 = vpop.f32.mrf.mxu0
  %v7802 = vadd.f32 0.0, %v7801
  %v7803 = vpop.f32.mrf.mxu0
  %7804 = vmatprep.mubr.bf16.mxu0 0
  %7805 = vmatmul.mubr.bf16.gmra.mxu0 %v6110
  %v7806 = vpop.f32.mrf.mxu0
  %v7807 = vadd.f32 0.0, %v7806
  %v7808 = vpop.f32.mrf.mxu0
  %v7809 = vpop.f32.mrf.mxu0
  %v7810 = vadd.f32 0.0, %v7809
  %v7811 = vpop.f32.mrf.mxu0
  %7812 = vmatprep.mubr.bf16.mxu0 0
  %7813 = vmatmul.mubr.bf16.gmra.mxu0 %v6113
  %v7814 = vpop.f32.mrf.mxu0
  %v7815 = vadd.f32 0.0, %v7814
  %v7816 = vpop.f32.mrf.mxu0
  %v7817 = vpop.f32.mrf.mxu0
  %v7818 = vadd.f32 0.0, %v7817
  %v7819 = vpop.f32.mrf.mxu0
  %7820 = vmatprep.mubr.bf16.mxu0 0
  %7821 = vmatmul.mubr.bf16.gmra.mxu0 %v6116
  %v7822 = vpop.f32.mrf.mxu0
  %v7823 = vadd.f32 0.0, %v7822
  %v7824 = vpop.f32.mrf.mxu0
  %v7825 = vpop.f32.mrf.mxu0
  %v7826 = vadd.f32 0.0, %v7825
  %v7827 = vpop.f32.mrf.mxu0
  %7828 = vmatprep.mubr.bf16.mxu0 0
  %7829 = vmatmul.mubr.bf16.gmra.mxu0 %v6119
  %v7830 = vpop.f32.mrf.mxu0
  %v7831 = vadd.f32 0.0, %v7830
  %v7832 = vpop.f32.mrf.mxu0
  %v7833 = vpop.f32.mrf.mxu0
  %v7834 = vadd.f32 0.0, %v7833
  %v7835 = vpop.f32.mrf.mxu0
  %7836 = vmatprep.mubr.bf16.mxu0 0
  %7837 = vmatmul.mubr.bf16.gmra.mxu0 %v6122
  %v7838 = vpop.f32.mrf.mxu0
  %v7839 = vadd.f32 0.0, %v7838
  %v7840 = vpop.f32.mrf.mxu0
  %v7841 = vpop.f32.mrf.mxu0
  %v7842 = vadd.f32 0.0, %v7841
  %v7843 = vpop.f32.mrf.mxu0
  %7844 = vmatprep.mubr.bf16.mxu0 0
  %7845 = vmatmul.mubr.bf16.gmra.mxu0 %v6125
  %v7846 = vpop.f32.mrf.mxu0
  %v7847 = vadd.f32 0.0, %v7846
  %v7848 = vpop.f32.mrf.mxu0
  %v7849 = vpop.f32.mrf.mxu0
  %v7850 = vadd.f32 0.0, %v7849
  %v7851 = vpop.f32.mrf.mxu0
  %7852 = vmatprep.mubr.bf16.mxu0 0
  %7853 = vmatmul.mubr.bf16.gmra.mxu0 %v6128
  %v7854 = vpop.f32.mrf.mxu0
  %v7855 = vadd.f32 0.0, %v7854
  %v7856 = vpop.f32.mrf.mxu0
  %v7857 = vpop.f32.mrf.mxu0
  %v7858 = vadd.f32 0.0, %v7857
  %v7859 = vpop.f32.mrf.mxu0
  %7860 = vmatprep.mubr.bf16.mxu0 0
  %7861 = vmatmul.mubr.bf16.gmra.mxu0 %v7738
  %v7862 = vpop.f32.mrf.mxu0
  %v7863 = vadd.f32 0.0, %v7862
  %v7864 = vpop.f32.mrf.mxu0
  %v7865 = vpop.f32.mrf.mxu0
  %v7866 = vadd.f32 0.0, %v7865
  %v7867 = vpop.f32.mrf.mxu0
  %7868 = vmatprep.mubr.bf16.mxu0 0
  %7869 = vmatmul.mubr.bf16.gmra.mxu0 %v7740
  %v7870 = vpop.f32.mrf.mxu0
  %v7871 = vadd.f32 0.0, %v7870
  %v7872 = vpop.f32.mrf.mxu0
  %v7873 = vpop.f32.mrf.mxu0
  %v7874 = vadd.f32 0.0, %v7873
  %v7875 = vpop.f32.mrf.mxu0
  %7876 = vmatprep.mubr.bf16.mxu0 0
  %7877 = vmatmul.mubr.bf16.gmra.mxu0 %v7743
  %v7878 = vpop.f32.mrf.mxu0
  %v7879 = vpop.f32.mrf.mxu0
  %v7880 = vpop.f32.mrf.mxu0
  %v7881 = vpop.f32.mrf.mxu0
  %7882 = vmatprep.mubr.bf16.mxu0 0
  %7883 = vmatmul.mubr.bf16.gmra.mxu0 %v7746
  %v7884 = vpop.f32.mrf.mxu0
  %v7885 = vpop.f32.mrf.mxu0
  %v7886 = vpop.f32.mrf.mxu0
  %v7887 = vpop.f32.mrf.mxu0
  %7888 = vdwg.mxu0
  %v7889 = vadd.f32 %v7712, %v7783
  %v7890 = vadd.f32 %v7713, %v7786
  %v7891 = vadd.f32 %v7714, %v7791
  %v7892 = vadd.f32 %v7715, %v7794
  %v7893 = vadd.f32 %v7716, %v7799
  %v7894 = vadd.f32 %v7717, %v7802
  %v7895 = vadd.f32 %v7718, %v7807
  %v7896 = vadd.f32 %v7719, %v7810
  %v7897 = vadd.f32 %v7720, %v7815
  %v7898 = vadd.f32 %v7721, %v7818
  %v7899 = vadd.f32 %v7722, %v7823
  %v7900 = vadd.f32 %v7723, %v7826
  %v7901 = vadd.f32 %v7724, %v7831
  %v7902 = vadd.f32 %v7725, %v7834
  %v7903 = vadd.f32 %v7726, %v7839
  %v7904 = vadd.f32 %v7727, %v7842
  %v7905 = vadd.f32 %v7728, %v7847
  %v7906 = vadd.f32 %v7729, %v7850
  %v7907 = vadd.f32 %v7730, %v7855
  %v7908 = vadd.f32 %v7731, %v7858
  %v7909 = vadd.f32 %v7732, %v7863
  %v7910 = vadd.f32 %v7733, %v7866
  %v7911 = vadd.f32 %v7734, %v7871
  %v7912 = vadd.f32 %v7735, %v7874
  %v7913 = vpack.c.bf16 %v3595, %v3590
  %v7914 = vrot.slane %v6887, 1
  %v7915 = vsel %vm4256, %v6633, %v7914
  %v7916 = vor.u32 %v6884, %v7914
  %v7917 = vshll.u32 %v7736, 16
  %v7919 = vrot.slane %v7917, 1
  %v7920 = vsel %vm4256, %v7916, %v7919
  %v7921 = vshrl.u32 %v7736, 16
  %v7923 = vor.u32 %v7921, %v7919
  %v7925 = vshll.u32 %v7913, 16
  %v7927 = vrot.slane %v7925, 1
  %v7928 = vsel %vm4256, %v7923, %v7927
  %v7929 = vshrl.u32 %v7913, 16
  %v7931 = vor.u32 %v7929, %v7927
  %v7933 = vsel %vm688, %v7915, 0
  %v7936 = vsel %vm688, %v7920, 0
  %v7939 = vsel %vm688, %v7928, 0
  %v7942 = vsel %vm688, %v7931, 0
  %7944 = vmatprep.subr.bf16.mxu0 0
  %7945 = vmatpush1.bf16.msra.mxu0 0
  %7946 = vmatprep.subr.bf16.mxu0 0
  %7947 = vmatpush1.bf16.msra.mxu0 0
  %7948 = vmatprep.subr.bf16.mxu0 0
  %7949 = vmatpush1.bf16.msra.mxu0 0
  %7950 = vmatprep.subr.bf16.mxu0 0
  %7951 = vmatpush1.bf16.msra.mxu0 0
  %7952 = vmatprep.subr.bf16.mxu0 0
  %7953 = vmatpush1.bf16.msra.mxu0 %v5839
  %7954 = vmatprep.subr.bf16.mxu0 0
  %7955 = vmatpush1.bf16.msra.mxu0 %v5838
  %7956 = vmatprep.subr.bf16.mxu0 0
  %7957 = vmatpush1.bf16.msra.mxu0 %v5837
  %7958 = vmatprep.subr.bf16.mxu0 0
  %7959 = vmatpush1.bf16.msra.mxu0 %v5836
  %7960 = vmatprep.subr.bf16.mxu0 0
  %7961 = vmatpush2.bf16.msra.mxu0 0
  %7962 = vmatprep.subr.bf16.mxu0 0
  %7963 = vmatpush2.bf16.msra.mxu0 0
  %7964 = vmatprep.subr.bf16.mxu0 0
  %7965 = vmatpush2.bf16.msra.mxu0 0
  %7966 = vmatprep.subr.bf16.mxu0 0
  %7967 = vmatpush2.bf16.msra.mxu0 0
  %7968 = vmatprep.subr.bf16.mxu0 0
  %7969 = vmatpush2.bf16.msra.mxu0 0
  %7970 = vmatprep.subr.bf16.mxu0 0
  %7971 = vmatpush2.bf16.msra.mxu0 0
  %7972 = vmatprep.subr.bf16.mxu0 0
  %7973 = vmatpush2.bf16.msra.mxu0 0
  %7974 = vmatprep.subr.bf16.mxu0 0
  %7975 = vmatpush2.bf16.msra.mxu0 0
  %7976 = vmatprep.mubr.bf16.mxu0 0
  %7977 = vmatmul.mubr.bf16.gmra.mxu0 %v6641
  %v7978 = vpop.f32.mrf.mxu0
  %v7979 = vadd.f32 0.0, %v7978
  %v7980 = vpop.f32.mrf.mxu0
  %v7981 = vpop.f32.mrf.mxu0
  %v7982 = vadd.f32 0.0, %v7981
  %v7983 = vpop.f32.mrf.mxu0
  %7984 = vmatprep.mubr.bf16.mxu0 0
  %7985 = vmatmul.mubr.bf16.gmra.mxu0 %v6644
  %v7986 = vpop.f32.mrf.mxu0
  %v7987 = vadd.f32 0.0, %v7986
  %v7988 = vpop.f32.mrf.mxu0
  %v7989 = vpop.f32.mrf.mxu0
  %v7990 = vadd.f32 0.0, %v7989
  %v7991 = vpop.f32.mrf.mxu0
  %7992 = vmatprep.mubr.bf16.mxu0 0
  %7993 = vmatmul.mubr.bf16.gmra.mxu0 %v6647
  %v7994 = vpop.f32.mrf.mxu0
  %v7995 = vadd.f32 0.0, %v7994
  %v7996 = vpop.f32.mrf.mxu0
  %v7997 = vpop.f32.mrf.mxu0
  %v7998 = vadd.f32 0.0, %v7997
  %v7999 = vpop.f32.mrf.mxu0
  %8000 = vmatprep.mubr.bf16.mxu0 0
  %8001 = vmatmul.mubr.bf16.gmra.mxu0 %v6650
  %v8002 = vpop.f32.mrf.mxu0
  %v8003 = vadd.f32 0.0, %v8002
  %v8004 = vpop.f32.mrf.mxu0
  %v8005 = vpop.f32.mrf.mxu0
  %v8006 = vadd.f32 0.0, %v8005
  %v8007 = vpop.f32.mrf.mxu0
  %8008 = vmatprep.mubr.bf16.mxu0 0
  %8009 = vmatmul.mubr.bf16.gmra.mxu0 %v6653
  %v8010 = vpop.f32.mrf.mxu0
  %v8011 = vadd.f32 0.0, %v8010
  %v8012 = vpop.f32.mrf.mxu0
  %v8013 = vpop.f32.mrf.mxu0
  %v8014 = vadd.f32 0.0, %v8013
  %v8015 = vpop.f32.mrf.mxu0
  %8016 = vmatprep.mubr.bf16.mxu0 0
  %8017 = vmatmul.mubr.bf16.gmra.mxu0 %v6656
  %v8018 = vpop.f32.mrf.mxu0
  %v8019 = vadd.f32 0.0, %v8018
  %v8020 = vpop.f32.mrf.mxu0
  %v8021 = vpop.f32.mrf.mxu0
  %v8022 = vadd.f32 0.0, %v8021
  %v8023 = vpop.f32.mrf.mxu0
  %8024 = vmatprep.mubr.bf16.mxu0 0
  %8025 = vmatmul.mubr.bf16.gmra.mxu0 %v6659
  %v8026 = vpop.f32.mrf.mxu0
  %v8027 = vadd.f32 0.0, %v8026
  %v8028 = vpop.f32.mrf.mxu0
  %v8029 = vpop.f32.mrf.mxu0
  %v8030 = vadd.f32 0.0, %v8029
  %v8031 = vpop.f32.mrf.mxu0
  %8032 = vmatprep.mubr.bf16.mxu0 0
  %8033 = vmatmul.mubr.bf16.gmra.mxu0 %v6662
  %v8034 = vpop.f32.mrf.mxu0
  %v8035 = vadd.f32 0.0, %v8034
  %v8036 = vpop.f32.mrf.mxu0
  %v8037 = vpop.f32.mrf.mxu0
  %v8038 = vadd.f32 0.0, %v8037
  %v8039 = vpop.f32.mrf.mxu0
  %8040 = vmatprep.mubr.bf16.mxu0 0
  %8041 = vmatmul.mubr.bf16.gmra.mxu0 %v6665
  %v8042 = vpop.f32.mrf.mxu0
  %v8043 = vadd.f32 0.0, %v8042
  %v8044 = vpop.f32.mrf.mxu0
  %v8045 = vpop.f32.mrf.mxu0
  %v8046 = vadd.f32 0.0, %v8045
  %v8047 = vpop.f32.mrf.mxu0
  %8048 = vmatprep.mubr.bf16.mxu0 0
  %8049 = vmatmul.mubr.bf16.gmra.mxu0 %v6668
  %v8050 = vpop.f32.mrf.mxu0
  %v8051 = vadd.f32 0.0, %v8050
  %v8052 = vpop.f32.mrf.mxu0
  %v8053 = vpop.f32.mrf.mxu0
  %v8054 = vadd.f32 0.0, %v8053
  %v8055 = vpop.f32.mrf.mxu0
  %8056 = vmatprep.mubr.bf16.mxu0 0
  %8057 = vmatmul.mubr.bf16.gmra.mxu0 %v7933
  %v8058 = vpop.f32.mrf.mxu0
  %v8059 = vadd.f32 0.0, %v8058
  %v8060 = vpop.f32.mrf.mxu0
  %v8061 = vpop.f32.mrf.mxu0
  %v8062 = vadd.f32 0.0, %v8061
  %v8063 = vpop.f32.mrf.mxu0
  %8064 = vmatprep.mubr.bf16.mxu0 0
  %8065 = vmatmul.mubr.bf16.gmra.mxu0 %v7936
  %v8066 = vpop.f32.mrf.mxu0
  %v8067 = vadd.f32 0.0, %v8066
  %v8068 = vpop.f32.mrf.mxu0
  %v8069 = vpop.f32.mrf.mxu0
  %v8070 = vadd.f32 0.0, %v8069
  %v8071 = vpop.f32.mrf.mxu0
  %8072 = vmatprep.mubr.bf16.mxu0 0
  %8073 = vmatmul.mubr.bf16.gmra.mxu0 %v7939
  %v8074 = vpop.f32.mrf.mxu0
  %v8075 = vpop.f32.mrf.mxu0
  %v8076 = vpop.f32.mrf.mxu0
  %v8077 = vpop.f32.mrf.mxu0
  %8078 = vmatprep.mubr.bf16.mxu0 0
  %8079 = vmatmul.mubr.bf16.gmra.mxu0 %v7942
  %v8080 = vpop.f32.mrf.mxu0
  %v8081 = vpop.f32.mrf.mxu0
  %v8082 = vpop.f32.mrf.mxu0
  %v8083 = vpop.f32.mrf.mxu0
  %8084 = vdwg.mxu0
  %v8085 = vadd.f32 %v7889, %v7979
  %v8086 = vadd.f32 %v7890, %v7982
  %v8087 = vadd.f32 %v7891, %v7987
  %v8088 = vadd.f32 %v7892, %v7990
  %v8089 = vadd.f32 %v7893, %v7995
  %v8090 = vadd.f32 %v7894, %v7998
  %v8091 = vadd.f32 %v7895, %v8003
  %v8092 = vadd.f32 %v7896, %v8006
  %v8093 = vadd.f32 %v7897, %v8011
  %v8094 = vadd.f32 %v7898, %v8014
  %v8095 = vadd.f32 %v7899, %v8019
  %v8096 = vadd.f32 %v7900, %v8022
  %v8097 = vadd.f32 %v7901, %v8027
  %v8098 = vadd.f32 %v7902, %v8030
  %v8099 = vadd.f32 %v7903, %v8035
  %v8100 = vadd.f32 %v7904, %v8038
  %v8101 = vadd.f32 %v7905, %v8043
  %v8102 = vadd.f32 %v7906, %v8046
  %v8103 = vadd.f32 %v7907, %v8051
  %v8104 = vadd.f32 %v7908, %v8054
  %v8105 = vadd.f32 %v7909, %v8059
  %v8106 = vadd.f32 %v7910, %v8062
  %v8107 = vadd.f32 %v7911, %v8067
  %v8108 = vadd.f32 %v7912, %v8070
  %v8109 = vadd.f32 %v8085, %v6025
  %v8110 = vadd.f32 %v8086, %v6025
  %v8111 = vadd.f32 %v8087, %v6025
  %v8112 = vadd.f32 %v8088, %v6025
  %v8113 = vadd.f32 %v8089, %v6025
  %v8114 = vadd.f32 %v8090, %v6025
  %v8115 = vadd.f32 %v8091, %v6025
  %v8116 = vadd.f32 %v8092, %v6025
  %v8117 = vadd.f32 %v8093, %v6025
  %v8118 = vadd.f32 %v8094, %v6025
  %v8119 = vadd.f32 %v8095, %v6025
  %v8120 = vadd.f32 %v8096, %v6025
  %v8121 = vadd.f32 %v8097, %v6025
  %v8122 = vadd.f32 %v8098, %v6025
  %v8123 = vadd.f32 %v8099, %v6025
  %v8124 = vadd.f32 %v8100, %v6025
  %v8125 = vadd.f32 %v8101, %v6025
  %v8126 = vadd.f32 %v8102, %v6025
  %v8127 = vadd.f32 %v8103, %v6025
  %v8128 = vadd.f32 %v8104, %v6025
  %v8129 = vadd.f32 %v8105, %v6025
  %v8130 = vadd.f32 %v8106, %v6025
  %v8131 = vadd.f32 %v8107, %v6025
  %v8132 = vadd.f32 %v8108, %v6025
  %v8133 = vmax.f32 %v8109, 0.0
  %v8134 = vmax.f32 %v8110, 0.0
  %v8135 = vmax.f32 %v8111, 0.0
  %v8136 = vmax.f32 %v8112, 0.0
  %v8137 = vmax.f32 %v8113, 0.0
  %v8138 = vmax.f32 %v8114, 0.0
  %v8139 = vmax.f32 %v8115, 0.0
  %v8140 = vmax.f32 %v8116, 0.0
  %v8141 = vmax.f32 %v8117, 0.0
  %v8142 = vmax.f32 %v8118, 0.0
  %v8143 = vmax.f32 %v8119, 0.0
  %v8144 = vmax.f32 %v8120, 0.0
  %v8145 = vmax.f32 %v8121, 0.0
  %v8146 = vmax.f32 %v8122, 0.0
  %v8147 = vmax.f32 %v8123, 0.0
  %v8148 = vmax.f32 %v8124, 0.0
  %v8149 = vmax.f32 %v8125, 0.0
  %v8150 = vmax.f32 %v8126, 0.0
  %v8151 = vmax.f32 %v8127, 0.0
  %v8152 = vmax.f32 %v8128, 0.0
  %v8153 = vmax.f32 %v8129, 0.0
  %v8154 = vmax.f32 %v8130, 0.0
  %v8155 = vmax.f32 %v8131, 0.0
  %v8156 = vmax.f32 %v8132, 0.0
  %v8157 = vmax.f32 %v6051, %v6054
  %v8158 = vmax.f32 %v6052, %v6055
  %v8159 = vmax.f32 %v6053, %v6056
  %v8160 = vmax.f32 %v6057, %v6060
  %v8161 = vmax.f32 %v6058, %v6061
  %v8162 = vmax.f32 %v6059, %v6062
  %v8163 = vmax.f32 %v6063, %v6066
  %v8164 = vmax.f32 %v6064, %v6067
  %v8165 = vmax.f32 %v6065, %v6068
  %v8166 = vmax.f32 %v6069, %v6072
  %v8167 = vmax.f32 %v6070, %v6073
  %v8168 = vmax.f32 %v6071, %v6074
  %v8169 = vmax.f32 %v8133, %v8136
  %v8170 = vmax.f32 %v8134, %v8137
  %v8171 = vmax.f32 %v8135, %v8138
  %v8172 = vmax.f32 %v8139, %v8142
  %v8173 = vmax.f32 %v8140, %v8143
  %v8174 = vmax.f32 %v8141, %v8144
  %v8175 = vmax.f32 %v8145, %v8148
  %v8176 = vmax.f32 %v8146, %v8149
  %v8177 = vmax.f32 %v8147, %v8150
  %v8178 = vmax.f32 %v8151, %v8154
  %v8179 = vmax.f32 %v8152, %v8155
  %v8180 = vmax.f32 %v8153, %v8156
  %v8205 = vrot.slane %v8157, 1
  %v8206 = vrot.slane %v8158, 1
  %v8207 = vsel %vm1967, %v8205, %v8206
  %v8208 = vrot.slane %v8159, 1
  %v8209 = vsel %vm1967, %v8206, %v8208
  %v8210 = vrot.slane %v8160, 1
  %v8211 = vrot.slane %v8161, 1
  %v8212 = vsel %vm1967, %v8210, %v8211
  %v8213 = vrot.slane %v8162, 1
  %v8214 = vsel %vm1967, %v8211, %v8213
  %v8215 = vrot.slane %v8163, 1
  %v8216 = vrot.slane %v8164, 1
  %v8217 = vsel %vm1967, %v8215, %v8216
  %v8218 = vrot.slane %v8165, 1
  %v8219 = vsel %vm1967, %v8216, %v8218
  %v8220 = vrot.slane %v8166, 1
  %v8221 = vrot.slane %v8167, 1
  %v8222 = vsel %vm1967, %v8220, %v8221
  %v8223 = vrot.slane %v8168, 1
  %v8224 = vsel %vm1967, %v8221, %v8223
  %v8225 = vrot.slane %v8169, 1
  %v8226 = vrot.slane %v8170, 1
  %v8227 = vsel %vm1967, %v8225, %v8226
  %v8228 = vrot.slane %v8171, 1
  %v8229 = vsel %vm1967, %v8226, %v8228
  %v8230 = vrot.slane %v8172, 1
  %v8231 = vrot.slane %v8173, 1
  %v8232 = vsel %vm1967, %v8230, %v8231
  %v8233 = vrot.slane %v8174, 1
  %v8234 = vsel %vm1967, %v8231, %v8233
  %v8235 = vrot.slane %v8175, 1
  %v8236 = vrot.slane %v8176, 1
  %v8237 = vsel %vm1967, %v8235, %v8236
  %v8238 = vrot.slane %v8177, 1
  %v8239 = vsel %vm1967, %v8236, %v8238
  %v8240 = vrot.slane %v8178, 1
  %v8241 = vrot.slane %v8179, 1
  %v8242 = vsel %vm1967, %v8240, %v8241
  %v8243 = vrot.slane %v8180, 1
  %v8244 = vsel %vm1967, %v8241, %v8243
  %v8269 = vmax.f32 %v8157, %v8207
  %v8270 = vmax.f32 %v8158, %v8209
  %v8271 = vmax.f32 %v8159, %v8208
  %v8272 = vmax.f32 %v8160, %v8212
  %v8273 = vmax.f32 %v8161, %v8214
  %v8274 = vmax.f32 %v8162, %v8213
  %v8275 = vmax.f32 %v8163, %v8217
  %v8276 = vmax.f32 %v8164, %v8219
  %v8277 = vmax.f32 %v8165, %v8218
  %v8278 = vmax.f32 %v8166, %v8222
  %v8279 = vmax.f32 %v8167, %v8224
  %v8280 = vmax.f32 %v8168, %v8223
  %v8281 = vmax.f32 %v8169, %v8227
  %v8282 = vmax.f32 %v8170, %v8229
  %v8283 = vmax.f32 %v8171, %v8228
  %v8284 = vmax.f32 %v8172, %v8232
  %v8285 = vmax.f32 %v8173, %v8234
  %v8286 = vmax.f32 %v8174, %v8233
  %v8287 = vmax.f32 %v8175, %v8237
  %v8288 = vmax.f32 %v8176, %v8239
  %v8289 = vmax.f32 %v8177, %v8238
  %v8290 = vmax.f32 %v8178, %v8242
  %v8291 = vmax.f32 %v8179, %v8244
  %v8292 = vmax.f32 %v8180, %v8243
  %v8317 = vrot.slane %v8269, 1
  %v8318 = vrot.slane %v8270, 1
  %v8319 = vsel %vm1967, %v8317, %v8318
  %v8320 = vrot.slane %v8271, 1
  %v8321 = vsel %vm1967, %v8318, %v8320
  %v8322 = vrot.slane %v8272, 1
  %v8323 = vrot.slane %v8273, 1
  %v8324 = vsel %vm1967, %v8322, %v8323
  %v8325 = vrot.slane %v8274, 1
  %v8326 = vsel %vm1967, %v8323, %v8325
  %v8327 = vrot.slane %v8275, 1
  %v8328 = vrot.slane %v8276, 1
  %v8329 = vsel %vm1967, %v8327, %v8328
  %v8330 = vrot.slane %v8277, 1
  %v8331 = vsel %vm1967, %v8328, %v8330
  %v8332 = vrot.slane %v8278, 1
  %v8333 = vrot.slane %v8279, 1
  %v8334 = vsel %vm1967, %v8332, %v8333
  %v8335 = vrot.slane %v8280, 1
  %v8336 = vsel %vm1967, %v8333, %v8335
  %v8337 = vrot.slane %v8281, 1
  %v8338 = vrot.slane %v8282, 1
  %v8339 = vsel %vm1967, %v8337, %v8338
  %v8340 = vrot.slane %v8283, 1
  %v8341 = vsel %vm1967, %v8338, %v8340
  %v8342 = vrot.slane %v8284, 1
  %v8343 = vrot.slane %v8285, 1
  %v8344 = vsel %vm1967, %v8342, %v8343
  %v8345 = vrot.slane %v8286, 1
  %v8346 = vsel %vm1967, %v8343, %v8345
  %v8347 = vrot.slane %v8287, 1
  %v8348 = vrot.slane %v8288, 1
  %v8349 = vsel %vm1967, %v8347, %v8348
  %v8350 = vrot.slane %v8289, 1
  %v8351 = vsel %vm1967, %v8348, %v8350
  %v8352 = vrot.slane %v8290, 1
  %v8353 = vrot.slane %v8291, 1
  %v8354 = vsel %vm1967, %v8352, %v8353
  %v8355 = vrot.slane %v8292, 1
  %v8356 = vsel %vm1967, %v8353, %v8355
  %v8373 = vld [vmem:[%s6] sm:$0xff]
  %v8374 = vld [vmem:[%s6 + $0x8] sm:$0xff]
  %v8375 = vld [vmem:[%s6 + $0x10] sm:$0xff]
  %v8376 = vld [vmem:[%s6 + $0x18] sm:$0xff]
  %v8377 = vld [vmem:[%s6 + $0x20] sm:$0xff]
  %v8378 = vld [vmem:[%s6 + $0x28] sm:$0xff]
  %v8379 = vld [vmem:[%s6 + $0x30] sm:$0xff]
  %v8380 = vld [vmem:[%s6 + $0x38] sm:$0xff]
  %v8381 = vld [vmem:[%s6 + $0x40] sm:$0xff]
  %v8382 = vld [vmem:[%s6 + $0x48] sm:$0xff]
  %v8383 = vld [vmem:[%s6 + $0x50] sm:$0xff]
  %v8384 = vld [vmem:[%s6 + $0x58] sm:$0xff]
  %v8385 = vld [vmem:[%s6 + $0x60] sm:$0xff]
  %v8386 = vld [vmem:[%s6 + $0x68] sm:$0xff]
  %v8387 = vld [vmem:[%s6 + $0x70] sm:$0xff]
  %v8388 = vld [vmem:[%s6 + $0x78] sm:$0xff]
  %v8389 = vld [vmem:[%s6 + $0x80] sm:$0xff]
  %v8390 = vld [vmem:[%s6 + $0x88] sm:$0xff]
  %v8391 = vld [vmem:[%s6 + $0x90] sm:$0xff]
  %v8392 = vld [vmem:[%s6 + $0x98] sm:$0xff]
  %v8393 = vld [vmem:[%s6 + $0xa0] sm:$0xff]
  %v8394 = vld [vmem:[%s6 + $0xa8] sm:$0xff]
  %v8395 = vld [vmem:[%s6 + $0xb0] sm:$0xff]
  %v8396 = vld [vmem:[%s6 + $0xb8] sm:$0xff]
  %v8397 = vld [vmem:[%s6 + $0xc0] sm:$0xff]
  %v8398 = vld [vmem:[%s6 + $0xc8] sm:$0xff]
  %v8399 = vld [vmem:[%s6 + $0xd0] sm:$0xff]
  %v8400 = vld [vmem:[%s6 + $0xd8] sm:$0xff]
  %8401 = vmatprep.subr.mxu0 0.0
  %8402 = vmatpush1.msra.mxu0 %v8356
  %8403 = vmatprep.subr.mxu0 0.0
  %8404 = vmatpush1.msra.mxu0 %v8354
  %8405 = vmatprep.subr.mxu0 0.0
  %8406 = vmatpush1.msra.mxu0 %v8351
  %8407 = vmatprep.subr.mxu0 0.0
  %8408 = vmatpush1.msra.mxu0 %v8349
  %8409 = vmatprep.subr.mxu0 0.0
  %8410 = vmatpush1.msra.mxu0 %v8346
  %8411 = vmatprep.subr.mxu0 0.0
  %8412 = vmatpush1.msra.mxu0 %v8344
  %8413 = vmatprep.subr.mxu0 0.0
  %8414 = vmatpush1.msra.mxu0 %v8341
  %8415 = vmatprep.subr.mxu0 0.0
  %8416 = vmatpush1.msra.mxu0 %v8339
  %8417 = vmatprep.subr.mxu0 0.0
  %8418 = vmatpush1.msra.mxu0 %v8336
  %8419 = vmatprep.subr.mxu0 0.0
  %8420 = vmatpush1.msra.mxu0 %v8334
  %8421 = vmatprep.subr.mxu0 0.0
  %8422 = vmatpush1.msra.mxu0 %v8331
  %8423 = vmatprep.subr.mxu0 0.0
  %8424 = vmatpush1.msra.mxu0 %v8329
  %8425 = vmatprep.subr.mxu0 0.0
  %8426 = vmatpush1.msra.mxu0 %v8326
  %8427 = vmatprep.subr.mxu0 0.0
  %8428 = vmatpush1.msra.mxu0 %v8324
  %8429 = vmatprep.subr.mxu0 0.0
  %8430 = vmatpush1.msra.mxu0 %v8321
  %8431 = vmatprep.subr.mxu0 0.0
  %8432 = vmatpush1.msra.mxu0 %v8319
  %8433 = vmatprep.subr.mxu0 0.0
  %8434 = vmatpush2.msra.mxu0 0.0
  %8435 = vmatprep.subr.mxu0 0.0
  %8436 = vmatpush2.msra.mxu0 0.0
  %8437 = vmatprep.subr.mxu0 0.0
  %8438 = vmatpush2.msra.mxu0 0.0
  %8439 = vmatprep.subr.mxu0 0.0
  %8440 = vmatpush2.msra.mxu0 0.0
  %8441 = vmatprep.subr.mxu0 0.0
  %8442 = vmatpush2.msra.mxu0 0.0
  %8443 = vmatprep.subr.mxu0 0.0
  %8444 = vmatpush2.msra.mxu0 0.0
  %8445 = vmatprep.subr.mxu0 0.0
  %8446 = vmatpush2.msra.mxu0 0.0
  %8447 = vmatprep.subr.mxu0 0.0
  %8448 = vmatpush2.msra.mxu0 0.0
  %8449 = vmatprep.subr.mxu0 0.0
  %8450 = vmatpush2.msra.mxu0 0.0
  %8451 = vmatprep.subr.mxu0 0.0
  %8452 = vmatpush2.msra.mxu0 0.0
  %8453 = vmatprep.subr.mxu0 0.0
  %8454 = vmatpush2.msra.mxu0 0.0
  %8455 = vmatprep.subr.mxu0 0.0
  %8456 = vmatpush2.msra.mxu0 0.0
  %8457 = vmatprep.subr.mxu0 0.0
  %8458 = vmatpush2.msra.mxu0 0.0
  %8459 = vmatprep.subr.mxu0 0.0
  %8460 = vmatpush2.msra.mxu0 0.0
  %8461 = vmatprep.subr.mxu0 0.0
  %8462 = vmatpush2.msra.mxu0 0.0
  %8463 = vmatprep.subr.mxu0 0.0
  %8464 = vmatpush2.msra.mxu0 0.0
  %8465 = vmatprep.mubr.f32.mxu0 0.0
  %8466 = vmatmul.mubr.f32.gmra.mxu0 %v8373
  %v8467 = vpop.f32.mrf.mxu0
  %v8468 = vpop.f32.mrf.mxu0
  %8469 = vmatprep.mubr.f32.mxu0 0.0
  %8470 = vmatmul.mubr.f32.gmra.mxu0 %v8374
  %v8471 = vpop.f32.mrf.mxu0
  %v8472 = vadd.f32 0.0, %v8471
  %v8473 = vpop.f32.mrf.mxu0
  %8474 = vmatprep.mubr.f32.mxu0 0.0
  %8475 = vmatmul.mubr.f32.gmra.mxu0 %v8375
  %v8476 = vpop.f32.mrf.mxu0
  %v8477 = vadd.f32 0.0, %v8476
  %v8478 = vpop.f32.mrf.mxu0
  %8479 = vmatprep.mubr.f32.mxu0 0.0
  %8480 = vmatmul.mubr.f32.gmra.mxu0 %v8376
  %v8481 = vpop.f32.mrf.mxu0
  %v8482 = vadd.f32 0.0, %v8481
  %v8483 = vpop.f32.mrf.mxu0
  %8484 = vmatprep.mubr.f32.mxu0 0.0
  %8485 = vmatmul.mubr.f32.gmra.mxu0 %v8377
  %v8486 = vpop.f32.mrf.mxu0
  %v8487 = vadd.f32 0.0, %v8486
  %v8488 = vpop.f32.mrf.mxu0
  %8489 = vmatprep.mubr.f32.mxu0 0.0
  %8490 = vmatmul.mubr.f32.gmra.mxu0 %v8378
  %v8491 = vpop.f32.mrf.mxu0
  %v8492 = vadd.f32 0.0, %v8491
  %v8493 = vpop.f32.mrf.mxu0
  %8494 = vmatprep.mubr.f32.mxu0 0.0
  %8495 = vmatmul.mubr.f32.gmra.mxu0 %v8379
  %v8496 = vpop.f32.mrf.mxu0
  %v8497 = vadd.f32 0.0, %v8496
  %v8498 = vpop.f32.mrf.mxu0
  %8499 = vmatprep.mubr.f32.mxu0 0.0
  %8500 = vmatmul.mubr.f32.gmra.mxu0 %v8380
  %v8501 = vpop.f32.mrf.mxu0
  %v8502 = vadd.f32 0.0, %v8501
  %v8503 = vpop.f32.mrf.mxu0
  %8504 = vmatprep.mubr.f32.mxu0 0.0
  %8505 = vmatmul.mubr.f32.gmra.mxu0 %v8381
  %v8506 = vpop.f32.mrf.mxu0
  %v8507 = vadd.f32 0.0, %v8506
  %v8508 = vpop.f32.mrf.mxu0
  %8509 = vmatprep.mubr.f32.mxu0 0.0
  %8510 = vmatmul.mubr.f32.gmra.mxu0 %v8382
  %v8511 = vpop.f32.mrf.mxu0
  %v8512 = vadd.f32 0.0, %v8511
  %v8513 = vpop.f32.mrf.mxu0
  %8514 = vmatprep.mubr.f32.mxu0 0.0
  %8515 = vmatmul.mubr.f32.gmra.mxu0 %v8383
  %v8516 = vpop.f32.mrf.mxu0
  %v8517 = vadd.f32 0.0, %v8516
  %v8518 = vpop.f32.mrf.mxu0
  %8519 = vmatprep.mubr.f32.mxu0 0.0
  %8520 = vmatmul.mubr.f32.gmra.mxu0 %v8384
  %v8521 = vpop.f32.mrf.mxu0
  %v8522 = vadd.f32 0.0, %v8521
  %v8523 = vpop.f32.mrf.mxu0
  %8524 = vmatprep.mubr.f32.mxu0 0.0
  %8525 = vmatmul.mubr.f32.gmra.mxu0 %v8385
  %v8526 = vpop.f32.mrf.mxu0
  %v8527 = vadd.f32 0.0, %v8526
  %v8528 = vpop.f32.mrf.mxu0
  %8529 = vmatprep.mubr.f32.mxu0 0.0
  %8530 = vmatmul.mubr.f32.gmra.mxu0 %v8386
  %v8531 = vpop.f32.mrf.mxu0
  %v8532 = vadd.f32 0.0, %v8531
  %v8533 = vpop.f32.mrf.mxu0
  %8534 = vmatprep.mubr.f32.mxu0 0.0
  %8535 = vmatmul.mubr.f32.gmra.mxu0 %v8387
  %v8536 = vpop.f32.mrf.mxu0
  %v8537 = vadd.f32 0.0, %v8536
  %v8538 = vpop.f32.mrf.mxu0
  %8539 = vmatprep.mubr.f32.mxu0 0.0
  %8540 = vmatmul.mubr.f32.gmra.mxu0 %v8388
  %v8541 = vpop.f32.mrf.mxu0
  %v8542 = vadd.f32 0.0, %v8541
  %v8543 = vpop.f32.mrf.mxu0
  %8544 = vmatprep.mubr.f32.mxu0 0.0
  %8545 = vmatmul.mubr.f32.gmra.mxu0 %v8389
  %v8546 = vpop.f32.mrf.mxu0
  %v8547 = vadd.f32 0.0, %v8546
  %v8548 = vpop.f32.mrf.mxu0
  %8549 = vmatprep.mubr.f32.mxu0 0.0
  %8550 = vmatmul.mubr.f32.gmra.mxu0 %v8390
  %v8551 = vpop.f32.mrf.mxu0
  %v8552 = vadd.f32 0.0, %v8551
  %v8553 = vpop.f32.mrf.mxu0
  %8554 = vmatprep.mubr.f32.mxu0 0.0
  %8555 = vmatmul.mubr.f32.gmra.mxu0 %v8391
  %v8556 = vpop.f32.mrf.mxu0
  %v8557 = vadd.f32 0.0, %v8556
  %v8558 = vpop.f32.mrf.mxu0
  %8559 = vmatprep.mubr.f32.mxu0 0.0
  %8560 = vmatmul.mubr.f32.gmra.mxu0 %v8392
  %v8561 = vpop.f32.mrf.mxu0
  %v8562 = vadd.f32 0.0, %v8561
  %v8563 = vpop.f32.mrf.mxu0
  %8564 = vmatprep.mubr.f32.mxu0 0.0
  %8565 = vmatmul.mubr.f32.gmra.mxu0 %v8393
  %v8566 = vpop.f32.mrf.mxu0
  %v8567 = vadd.f32 0.0, %v8566
  %v8568 = vpop.f32.mrf.mxu0
  %8569 = vmatprep.mubr.f32.mxu0 0.0
  %8570 = vmatmul.mubr.f32.gmra.mxu0 %v8394
  %v8571 = vpop.f32.mrf.mxu0
  %v8572 = vadd.f32 0.0, %v8571
  %v8573 = vpop.f32.mrf.mxu0
  %8574 = vmatprep.mubr.f32.mxu0 0.0
  %8575 = vmatmul.mubr.f32.gmra.mxu0 %v8395
  %v8576 = vpop.f32.mrf.mxu0
  %v8577 = vadd.f32 0.0, %v8576
  %v8578 = vpop.f32.mrf.mxu0
  %8579 = vmatprep.mubr.f32.mxu0 0.0
  %8580 = vmatmul.mubr.f32.gmra.mxu0 %v8396
  %v8581 = vpop.f32.mrf.mxu0
  %v8582 = vadd.f32 0.0, %v8581
  %v8583 = vpop.f32.mrf.mxu0
  %8584 = vmatprep.mubr.f32.mxu0 0.0
  %8585 = vmatmul.mubr.f32.gmra.mxu0 %v8397
  %v8586 = vpop.f32.mrf.mxu0
  %v8587 = vadd.f32 0.0, %v8586
  %v8588 = vpop.f32.mrf.mxu0
  %8589 = vmatprep.mubr.f32.mxu0 0.0
  %8590 = vmatmul.mubr.f32.gmra.mxu0 %v8398
  %v8591 = vpop.f32.mrf.mxu0
  %v8592 = vadd.f32 0.0, %v8591
  %v8593 = vpop.f32.mrf.mxu0
  %8594 = vmatprep.mubr.f32.mxu0 0.0
  %8595 = vmatmul.mubr.f32.gmra.mxu0 %v8399
  %v8596 = vpop.f32.mrf.mxu0
  %v8597 = vadd.f32 0.0, %v8596
  %v8598 = vpop.f32.mrf.mxu0
  %8599 = vmatprep.mubr.f32.mxu0 0.0
  %8600 = vmatmul.mubr.f32.gmra.mxu0 %v8400
  %v8601 = vpop.f32.mrf.mxu0
  %v8602 = vpop.f32.mrf.mxu0
  %8603 = vdwg.mxu0
  %v8604 = vld [vmem:[%s8] sm:$0x1]
  %v8605 = vld [vmem:[%s7] sm:$0xf]
  %v8606 = vld [vmem:[%s7 + $0x4] sm:$0xf]
  %v8607 = vld [vmem:[%s7 + $0x8] sm:$0xf]
  %v8608 = vld [vmem:[%s7 + $0xc] sm:$0xf]
  %s8609 = scalar_lea.vmem %s7, 16
  %v8610 = vld [vmem:[%s8609] sm:$0xf]
  %v8611 = vld [vmem:[%s8609 + $0x4] sm:$0xf]
  %v8612 = vld [vmem:[%s8609 + $0x8] sm:$0xf]
  %v8613 = vld [vmem:[%s8609 + $0xc] sm:$0xf]
  %s8614 = scalar_lea.vmem %s7, 32
  %v8615 = vld [vmem:[%s8614] sm:$0xf]
  %v8616 = vld [vmem:[%s8614 + $0x4] sm:$0xf]
  %v8617 = vld [vmem:[%s8614 + $0x8] sm:$0xf]
  %v8618 = vld [vmem:[%s8614 + $0xc] sm:$0xf]
  %s8619 = scalar_lea.vmem %s7, 48
  %v8620 = vld [vmem:[%s8619] sm:$0xf]
  %v8621 = vld [vmem:[%s8619 + $0x4] sm:$0xf]
  %v8622 = vld [vmem:[%s8619 + $0x8] sm:$0xf]
  %v8623 = vld [vmem:[%s8619 + $0xc] sm:$0xf]
  %s8624 = scalar_lea.vmem %s7, 64
  %v8625 = vld [vmem:[%s8624] sm:$0xf]
  %v8626 = vld [vmem:[%s8624 + $0x4] sm:$0xf]
  %v8627 = vld [vmem:[%s8624 + $0x8] sm:$0xf]
  %v8628 = vld [vmem:[%s8624 + $0xc] sm:$0xf]
  %s8629 = scalar_lea.vmem %s7, 80
  %v8630 = vld [vmem:[%s8629] sm:$0xf]
  %v8631 = vld [vmem:[%s8629 + $0x4] sm:$0xf]
  %v8632 = vld [vmem:[%s8629 + $0x8] sm:$0xf]
  %v8633 = vld [vmem:[%s8629 + $0xc] sm:$0xf]
  %s8634 = scalar_lea.vmem %s7, 96
  %v8635 = vld [vmem:[%s8634] sm:$0xf]
  %v8636 = vld [vmem:[%s8634 + $0x4] sm:$0xf]
  %v8637 = vld [vmem:[%s8634 + $0x8] sm:$0xf]
  %v8638 = vld [vmem:[%s8634 + $0xc] sm:$0xf]
  %s8639 = scalar_lea.vmem %s7, 112
  %v8640 = vld [vmem:[%s8639] sm:$0xf]
  %v8641 = vld [vmem:[%s8639 + $0x4] sm:$0xf]
  %v8642 = vld [vmem:[%s8639 + $0x8] sm:$0xf]
  %v8643 = vld [vmem:[%s8639 + $0xc] sm:$0xf]
  %s8644 = scalar_lea.vmem %s7, 128
  %v8645 = vld [vmem:[%s8644] sm:$0xf]
  %v8646 = vld [vmem:[%s8644 + $0x4] sm:$0xf]
  %v8647 = vld [vmem:[%s8644 + $0x8] sm:$0xf]
  %v8648 = vld [vmem:[%s8644 + $0xc] sm:$0xf]
  %v8649 = vpack.c.bf16 %v8477, %v8472
  %v8650 = vpack.c.bf16 %v8487, %v8482
  %v8651 = vpack.c.bf16 %v8497, %v8492
  %v8652 = vpack.c.bf16 %v8507, %v8502
  %v8653 = vpack.c.bf16 %v8517, %v8512
  %v8654 = vpack.c.bf16 %v8527, %v8522
  %v8655 = vpack.c.bf16 %v8537, %v8532
  %v8656 = vpack.c.bf16 %v8547, %v8542
  %v8657 = vpack.c.bf16 %v8557, %v8552
  %v8658 = vpack.c.bf16 %v8567, %v8562
  %v8659 = vpack.c.bf16 %v8572, %v8572
  %v8660 = vpack.c.bf16 %v8482, %v8477
  %v8661 = vpack.c.bf16 %v8492, %v8487
  %v8662 = vpack.c.bf16 %v8502, %v8497
  %v8663 = vpack.c.bf16 %v8512, %v8507
  %v8664 = vpack.c.bf16 %v8522, %v8517
  %v8665 = vpack.c.bf16 %v8532, %v8527
  %v8666 = vpack.c.bf16 %v8542, %v8537
  %v8667 = vpack.c.bf16 %v8552, %v8547
  %v8668 = vpack.c.bf16 %v8562, %v8557
  %v8669 = vpack.c.bf16 %v8572, %v8567
  %v8674 = vunpack.c.l.b16 %v8610
  %v8675 = vunpack.c.l.b16 %v8611
  %v8676 = vunpack.c.l.b16 %v8612
  %v8677 = vunpack.c.l.b16 %v8613
  %v8678 = vpack.c.b16 %v8675, %v8674
  %v8679 = vpack.c.b16 %v8677, %v8676
  %vm8682 = vcmask 261120
  %v8684 = vsel %vm8682, %v8660, 0
  %v8687 = vsel %vm8682, %v8661, 0
  %v8690 = vsel %vm8682, %v8662, 0
  %v8693 = vsel %vm8682, %v8663, 0
  %v8696 = vsel %vm8682, %v8664, 0
  %v8699 = vsel %vm8682, %v8665, 0
  %v8702 = vsel %vm8682, %v8666, 0
  %v8705 = vsel %vm8682, %v8667, 0
  %v8708 = vsel %vm8682, %v8668, 0
  %v8711 = vsel %vm8682, %v8669, 0
  %8713 = vmatprep.subr.bf16.mxu0 0
  %8714 = vmatpush1.bf16.msra.mxu0 0
  %8715 = vmatprep.subr.bf16.mxu0 0
  %8716 = vmatpush1.bf16.msra.mxu0 0
  %8717 = vmatprep.subr.bf16.mxu0 0
  %8718 = vmatpush1.bf16.msra.mxu0 0
  %8719 = vmatprep.subr.bf16.mxu0 0
  %8720 = vmatpush1.bf16.msra.mxu0 0
  %8721 = vmatprep.subr.bf16.mxu0 0
  %8722 = vmatpush1.bf16.msra.mxu0 0
  %8723 = vmatprep.subr.bf16.mxu0 0
  %8724 = vmatpush1.bf16.msra.mxu0 0
  %8725 = vmatprep.subr.bf16.mxu0 0
  %8726 = vmatpush1.bf16.msra.mxu0 %v8679
  %8727 = vmatprep.subr.bf16.mxu0 0
  %8728 = vmatpush1.bf16.msra.mxu0 %v8678
  %8729 = vmatprep.subr.bf16.mxu0 0
  %8730 = vmatpush2.bf16.msra.mxu0 0
  %8731 = vmatprep.subr.bf16.mxu0 0
  %8732 = vmatpush2.bf16.msra.mxu0 0
  %8733 = vmatprep.subr.bf16.mxu0 0
  %8734 = vmatpush2.bf16.msra.mxu0 0
  %8735 = vmatprep.subr.bf16.mxu0 0
  %8736 = vmatpush2.bf16.msra.mxu0 0
  %8737 = vmatprep.subr.bf16.mxu0 0
  %8738 = vmatpush2.bf16.msra.mxu0 0
  %8739 = vmatprep.subr.bf16.mxu0 0
  %8740 = vmatpush2.bf16.msra.mxu0 0
  %8741 = vmatprep.subr.bf16.mxu0 0
  %8742 = vmatpush2.bf16.msra.mxu0 0
  %8743 = vmatprep.subr.bf16.mxu0 0
  %8744 = vmatpush2.bf16.msra.mxu0 0
  %8745 = vmatprep.mubr.bf16.mxu0 0
  %8746 = vmatmul.mubr.bf16.gmra.mxu0 %v8684
  %v8747 = vpop.f32.mrf.mxu0
  %v8748 = vpop.f32.mrf.mxu0
  %v8749 = vpop.f32.mrf.mxu0
  %v8750 = vpop.f32.mrf.mxu0
  %8751 = vmatprep.mubr.bf16.mxu0 0
  %8752 = vmatmul.mubr.bf16.gmra.mxu0 %v8687
  %v8753 = vpop.f32.mrf.mxu0
  %v8754 = vadd.f32 0.0, %v8753
  %v8755 = vpop.f32.mrf.mxu0
  %v8756 = vpop.f32.mrf.mxu0
  %v8757 = vadd.f32 0.0, %v8756
  %v8758 = vpop.f32.mrf.mxu0
  %8759 = vmatprep.mubr.bf16.mxu0 0
  %8760 = vmatmul.mubr.bf16.gmra.mxu0 %v8690
  %v8761 = vpop.f32.mrf.mxu0
  %v8762 = vadd.f32 0.0, %v8761
  %v8763 = vpop.f32.mrf.mxu0
  %v8764 = vpop.f32.mrf.mxu0
  %v8765 = vadd.f32 0.0, %v8764
  %v8766 = vpop.f32.mrf.mxu0
  %8767 = vmatprep.mubr.bf16.mxu0 0
  %8768 = vmatmul.mubr.bf16.gmra.mxu0 %v8693
  %v8769 = vpop.f32.mrf.mxu0
  %v8770 = vadd.f32 0.0, %v8769
  %v8771 = vpop.f32.mrf.mxu0
  %v8772 = vpop.f32.mrf.mxu0
  %v8773 = vadd.f32 0.0, %v8772
  %v8774 = vpop.f32.mrf.mxu0
  %8775 = vmatprep.mubr.bf16.mxu0 0
  %8776 = vmatmul.mubr.bf16.gmra.mxu0 %v8696
  %v8777 = vpop.f32.mrf.mxu0
  %v8778 = vadd.f32 0.0, %v8777
  %v8779 = vpop.f32.mrf.mxu0
  %v8780 = vpop.f32.mrf.mxu0
  %v8781 = vadd.f32 0.0, %v8780
  %v8782 = vpop.f32.mrf.mxu0
  %8783 = vmatprep.mubr.bf16.mxu0 0
  %8784 = vmatmul.mubr.bf16.gmra.mxu0 %v8699
  %v8785 = vpop.f32.mrf.mxu0
  %v8786 = vadd.f32 0.0, %v8785
  %v8787 = vpop.f32.mrf.mxu0
  %v8788 = vpop.f32.mrf.mxu0
  %v8789 = vadd.f32 0.0, %v8788
  %v8790 = vpop.f32.mrf.mxu0
  %8791 = vmatprep.mubr.bf16.mxu0 0
  %8792 = vmatmul.mubr.bf16.gmra.mxu0 %v8702
  %v8793 = vpop.f32.mrf.mxu0
  %v8794 = vadd.f32 0.0, %v8793
  %v8795 = vpop.f32.mrf.mxu0
  %v8796 = vpop.f32.mrf.mxu0
  %v8797 = vadd.f32 0.0, %v8796
  %v8798 = vpop.f32.mrf.mxu0
  %8799 = vmatprep.mubr.bf16.mxu0 0
  %8800 = vmatmul.mubr.bf16.gmra.mxu0 %v8705
  %v8801 = vpop.f32.mrf.mxu0
  %v8802 = vadd.f32 0.0, %v8801
  %v8803 = vpop.f32.mrf.mxu0
  %v8804 = vpop.f32.mrf.mxu0
  %v8805 = vadd.f32 0.0, %v8804
  %v8806 = vpop.f32.mrf.mxu0
  %8807 = vmatprep.mubr.bf16.mxu0 0
  %8808 = vmatmul.mubr.bf16.gmra.mxu0 %v8708
  %v8809 = vpop.f32.mrf.mxu0
  %v8810 = vadd.f32 0.0, %v8809
  %v8811 = vpop.f32.mrf.mxu0
  %v8812 = vpop.f32.mrf.mxu0
  %v8813 = vadd.f32 0.0, %v8812
  %v8814 = vpop.f32.mrf.mxu0
  %8815 = vmatprep.mubr.bf16.mxu0 0
  %8816 = vmatmul.mubr.bf16.gmra.mxu0 %v8711
  %v8817 = vpop.f32.mrf.mxu0
  %v8818 = vpop.f32.mrf.mxu0
  %v8819 = vpop.f32.mrf.mxu0
  %v8820 = vpop.f32.mrf.mxu0
  %8821 = vdwg.mxu0
  %v8823 = vshrl.u32 %v8649, 16
  %v8825 = vrot.slane %v8823, 3
  %v8826 = vshll.u32 %v8649, 16
  %v8828 = vrot.slane %v8826, 4
  %v8829 = vor.u32 %v8825, %v8828
  %v8831 = vshrl.u32 %v8650, 16
  %v8833 = vrot.slane %v8831, 3
  %v8834 = vshll.u32 %v8650, 16
  %v8836 = vrot.slane %v8834, 4
  %v8837 = vor.u32 %v8833, %v8836
  %v8838 = vsel %vm3922, %v8829, %v8837
  %v8840 = vshrl.u32 %v8651, 16
  %v8842 = vrot.slane %v8840, 3
  %v8843 = vshll.u32 %v8651, 16
  %v8845 = vrot.slane %v8843, 4
  %v8846 = vor.u32 %v8842, %v8845
  %v8847 = vsel %vm3922, %v8837, %v8846
  %v8849 = vshrl.u32 %v8652, 16
  %v8851 = vrot.slane %v8849, 3
  %v8852 = vshll.u32 %v8652, 16
  %v8854 = vrot.slane %v8852, 4
  %v8855 = vor.u32 %v8851, %v8854
  %v8856 = vsel %vm3922, %v8846, %v8855
  %v8858 = vshrl.u32 %v8653, 16
  %v8860 = vrot.slane %v8858, 3
  %v8861 = vshll.u32 %v8653, 16
  %v8863 = vrot.slane %v8861, 4
  %v8864 = vor.u32 %v8860, %v8863
  %v8865 = vsel %vm3922, %v8855, %v8864
  %v8867 = vshrl.u32 %v8654, 16
  %v8869 = vrot.slane %v8867, 3
  %v8870 = vshll.u32 %v8654, 16
  %v8872 = vrot.slane %v8870, 4
  %v8873 = vor.u32 %v8869, %v8872
  %v8874 = vsel %vm3922, %v8864, %v8873
  %v8876 = vshrl.u32 %v8655, 16
  %v8878 = vrot.slane %v8876, 3
  %v8879 = vshll.u32 %v8655, 16
  %v8881 = vrot.slane %v8879, 4
  %v8882 = vor.u32 %v8878, %v8881
  %v8883 = vsel %vm3922, %v8873, %v8882
  %v8885 = vshrl.u32 %v8656, 16
  %v8887 = vrot.slane %v8885, 3
  %v8888 = vshll.u32 %v8656, 16
  %v8890 = vrot.slane %v8888, 4
  %v8891 = vor.u32 %v8887, %v8890
  %v8892 = vsel %vm3922, %v8882, %v8891
  %v8894 = vshrl.u32 %v8657, 16
  %v8896 = vrot.slane %v8894, 3
  %v8897 = vshll.u32 %v8657, 16
  %v8899 = vrot.slane %v8897, 4
  %v8900 = vor.u32 %v8896, %v8899
  %v8901 = vsel %vm3922, %v8891, %v8900
  %v8903 = vshrl.u32 %v8658, 16
  %v8905 = vrot.slane %v8903, 3
  %v8906 = vshll.u32 %v8658, 16
  %v8908 = vrot.slane %v8906, 4
  %v8909 = vor.u32 %v8905, %v8908
  %v8910 = vsel %vm3922, %v8900, %v8909
  %v8912 = vshrl.u32 %v8659, 16
  %v8914 = vrot.slane %v8912, 3
  %v8915 = vshll.u32 %v8659, 16
  %v8917 = vrot.slane %v8915, 4
  %v8918 = vor.u32 %v8914, %v8917
  %v8919 = vsel %vm3922, %v8909, %v8918
  %v8924 = vunpack.c.l.b16 %v8605
  %v8925 = vunpack.c.l.b16 %v8606
  %v8926 = vunpack.c.l.b16 %v8607
  %v8927 = vunpack.c.l.b16 %v8608
  %v8928 = vpack.c.b16 %v8925, %v8924
  %v8929 = vpack.c.b16 %v8927, %v8926
  %v8933 = vsel %vm8682, %v8838, 0
  %v8936 = vsel %vm8682, %v8847, 0
  %v8939 = vsel %vm8682, %v8856, 0
  %v8942 = vsel %vm8682, %v8865, 0
  %v8945 = vsel %vm8682, %v8874, 0
  %v8948 = vsel %vm8682, %v8883, 0
  %v8951 = vsel %vm8682, %v8892, 0
  %v8954 = vsel %vm8682, %v8901, 0
  %v8957 = vsel %vm8682, %v8910, 0
  %v8960 = vsel %vm8682, %v8919, 0
  %8962 = vmatprep.subr.bf16.mxu0 0
  %8963 = vmatpush1.bf16.msra.mxu0 0
  %8964 = vmatprep.subr.bf16.mxu0 0
  %8965 = vmatpush1.bf16.msra.mxu0 0
  %8966 = vmatprep.subr.bf16.mxu0 0
  %8967 = vmatpush1.bf16.msra.mxu0 0
  %8968 = vmatprep.subr.bf16.mxu0 0
  %8969 = vmatpush1.bf16.msra.mxu0 0
  %8970 = vmatprep.subr.bf16.mxu0 0
  %8971 = vmatpush1.bf16.msra.mxu0 0
  %8972 = vmatprep.subr.bf16.mxu0 0
  %8973 = vmatpush1.bf16.msra.mxu0 0
  %8974 = vmatprep.subr.bf16.mxu0 0
  %8975 = vmatpush1.bf16.msra.mxu0 %v8929
  %8976 = vmatprep.subr.bf16.mxu0 0
  %8977 = vmatpush1.bf16.msra.mxu0 %v8928
  %8978 = vmatprep.subr.bf16.mxu0 0
  %8979 = vmatpush2.bf16.msra.mxu0 0
  %8980 = vmatprep.subr.bf16.mxu0 0
  %8981 = vmatpush2.bf16.msra.mxu0 0
  %8982 = vmatprep.subr.bf16.mxu0 0
  %8983 = vmatpush2.bf16.msra.mxu0 0
  %8984 = vmatprep.subr.bf16.mxu0 0
  %8985 = vmatpush2.bf16.msra.mxu0 0
  %8986 = vmatprep.subr.bf16.mxu0 0
  %8987 = vmatpush2.bf16.msra.mxu0 0
  %8988 = vmatprep.subr.bf16.mxu0 0
  %8989 = vmatpush2.bf16.msra.mxu0 0
  %8990 = vmatprep.subr.bf16.mxu0 0
  %8991 = vmatpush2.bf16.msra.mxu0 0
  %8992 = vmatprep.subr.bf16.mxu0 0
  %8993 = vmatpush2.bf16.msra.mxu0 0
  %8994 = vmatprep.mubr.bf16.mxu0 0
  %8995 = vmatmul.mubr.bf16.gmra.mxu0 %v8933
  %v8996 = vpop.f32.mrf.mxu0
  %v8997 = vpop.f32.mrf.mxu0
  %v8998 = vpop.f32.mrf.mxu0
  %v8999 = vpop.f32.mrf.mxu0
  %9000 = vmatprep.mubr.bf16.mxu0 0
  %9001 = vmatmul.mubr.bf16.gmra.mxu0 %v8936
  %v9002 = vpop.f32.mrf.mxu0
  %v9003 = vadd.f32 %v8754, %v9002
  %v9004 = vpop.f32.mrf.mxu0
  %v9005 = vpop.f32.mrf.mxu0
  %v9006 = vadd.f32 %v8757, %v9005
  %v9007 = vpop.f32.mrf.mxu0
  %9008 = vmatprep.mubr.bf16.mxu0 0
  %9009 = vmatmul.mubr.bf16.gmra.mxu0 %v8939
  %v9010 = vpop.f32.mrf.mxu0
  %v9011 = vadd.f32 %v8762, %v9010
  %v9012 = vpop.f32.mrf.mxu0
  %v9013 = vpop.f32.mrf.mxu0
  %v9014 = vadd.f32 %v8765, %v9013
  %v9015 = vpop.f32.mrf.mxu0
  %9016 = vmatprep.mubr.bf16.mxu0 0
  %9017 = vmatmul.mubr.bf16.gmra.mxu0 %v8942
  %v9018 = vpop.f32.mrf.mxu0
  %v9019 = vadd.f32 %v8770, %v9018
  %v9020 = vpop.f32.mrf.mxu0
  %v9021 = vpop.f32.mrf.mxu0
  %v9022 = vadd.f32 %v8773, %v9021
  %v9023 = vpop.f32.mrf.mxu0
  %9024 = vmatprep.mubr.bf16.mxu0 0
  %9025 = vmatmul.mubr.bf16.gmra.mxu0 %v8945
  %v9026 = vpop.f32.mrf.mxu0
  %v9027 = vadd.f32 %v8778, %v9026
  %v9028 = vpop.f32.mrf.mxu0
  %v9029 = vpop.f32.mrf.mxu0
  %v9030 = vadd.f32 %v8781, %v9029
  %v9031 = vpop.f32.mrf.mxu0
  %9032 = vmatprep.mubr.bf16.mxu0 0
  %9033 = vmatmul.mubr.bf16.gmra.mxu0 %v8948
  %v9034 = vpop.f32.mrf.mxu0
  %v9035 = vadd.f32 %v8786, %v9034
  %v9036 = vpop.f32.mrf.mxu0
  %v9037 = vpop.f32.mrf.mxu0
  %v9038 = vadd.f32 %v8789, %v9037
  %v9039 = vpop.f32.mrf.mxu0
  %9040 = vmatprep.mubr.bf16.mxu0 0
  %9041 = vmatmul.mubr.bf16.gmra.mxu0 %v8951
  %v9042 = vpop.f32.mrf.mxu0
  %v9043 = vadd.f32 %v8794, %v9042
  %v9044 = vpop.f32.mrf.mxu0
  %v9045 = vpop.f32.mrf.mxu0
  %v9046 = vadd.f32 %v8797, %v9045
  %v9047 = vpop.f32.mrf.mxu0
  %9048 = vmatprep.mubr.bf16.mxu0 0
  %9049 = vmatmul.mubr.bf16.gmra.mxu0 %v8954
  %v9050 = vpop.f32.mrf.mxu0
  %v9051 = vadd.f32 %v8802, %v9050
  %v9052 = vpop.f32.mrf.mxu0
  %v9053 = vpop.f32.mrf.mxu0
  %v9054 = vadd.f32 %v8805, %v9053
  %v9055 = vpop.f32.mrf.mxu0
  %9056 = vmatprep.mubr.bf16.mxu0 0
  %9057 = vmatmul.mubr.bf16.gmra.mxu0 %v8957
  %v9058 = vpop.f32.mrf.mxu0
  %v9059 = vadd.f32 %v8810, %v9058
  %v9060 = vpop.f32.mrf.mxu0
  %v9061 = vpop.f32.mrf.mxu0
  %v9062 = vadd.f32 %v8813, %v9061
  %v9063 = vpop.f32.mrf.mxu0
  %9064 = vmatprep.mubr.bf16.mxu0 0
  %9065 = vmatmul.mubr.bf16.gmra.mxu0 %v8960
  %v9066 = vpop.f32.mrf.mxu0
  %v9067 = vpop.f32.mrf.mxu0
  %v9068 = vpop.f32.mrf.mxu0
  %v9069 = vpop.f32.mrf.mxu0
  %9070 = vdwg.mxu0
  %v9071 = vpack.c.bf16 %v8577, %v8577
  %v9072 = vshrl.u32 %v8660, 16
  %v9074 = vshll.u32 %v8660, 16
  %v9076 = vrot.slane %v9074, 1
  %v9077 = vor.u32 %v9072, %v9076
  %v9078 = vshll.u32 %v8661, 16
  %v9080 = vrot.slane %v9078, 1
  %v9081 = vsel %vm4256, %v9077, %v9080
  %v9082 = vshrl.u32 %v8661, 16
  %v9084 = vor.u32 %v9082, %v9080
  %v9085 = vshll.u32 %v8662, 16
  %v9087 = vrot.slane %v9085, 1
  %v9088 = vsel %vm4256, %v9084, %v9087
  %v9089 = vshrl.u32 %v8662, 16
  %v9091 = vor.u32 %v9089, %v9087
  %v9092 = vshll.u32 %v8663, 16
  %v9094 = vrot.slane %v9092, 1
  %v9095 = vsel %vm4256, %v9091, %v9094
  %v9096 = vshrl.u32 %v8663, 16
  %v9098 = vor.u32 %v9096, %v9094
  %v9099 = vshll.u32 %v8664, 16
  %v9101 = vrot.slane %v9099, 1
  %v9102 = vsel %vm4256, %v9098, %v9101
  %v9103 = vshrl.u32 %v8664, 16
  %v9105 = vor.u32 %v9103, %v9101
  %v9106 = vshll.u32 %v8665, 16
  %v9108 = vrot.slane %v9106, 1
  %v9109 = vsel %vm4256, %v9105, %v9108
  %v9110 = vshrl.u32 %v8665, 16
  %v9112 = vor.u32 %v9110, %v9108
  %v9113 = vshll.u32 %v8666, 16
  %v9115 = vrot.slane %v9113, 1
  %v9116 = vsel %vm4256, %v9112, %v9115
  %v9117 = vshrl.u32 %v8666, 16
  %v9119 = vor.u32 %v9117, %v9115
  %v9120 = vshll.u32 %v8667, 16
  %v9122 = vrot.slane %v9120, 1
  %v9123 = vsel %vm4256, %v9119, %v9122
  %v9124 = vshrl.u32 %v8667, 16
  %v9126 = vor.u32 %v9124, %v9122
  %v9127 = vshll.u32 %v8668, 16
  %v9129 = vrot.slane %v9127, 1
  %v9130 = vsel %vm4256, %v9126, %v9129
  %v9131 = vshrl.u32 %v8668, 16
  %v9133 = vor.u32 %v9131, %v9129
  %v9134 = vshll.u32 %v8669, 16
  %v9136 = vrot.slane %v9134, 1
  %v9137 = vsel %vm4256, %v9133, %v9136
  %v9138 = vshrl.u32 %v8669, 16
  %v9140 = vor.u32 %v9138, %v9136
  %v9142 = vshll.u32 %v9071, 16
  %v9144 = vrot.slane %v9142, 1
  %v9145 = vsel %vm4256, %v9140, %v9144
  %v9150 = vunpack.c.l.b16 %v8615
  %v9151 = vunpack.c.l.b16 %v8616
  %v9152 = vunpack.c.l.b16 %v8617
  %v9153 = vunpack.c.l.b16 %v8618
  %v9154 = vpack.c.b16 %v9151, %v9150
  %v9155 = vpack.c.b16 %v9153, %v9152
  %v9159 = vsel %vm8682, %v9081, 0
  %v9162 = vsel %vm8682, %v9088, 0
  %v9165 = vsel %vm8682, %v9095, 0
  %v9168 = vsel %vm8682, %v9102, 0
  %v9171 = vsel %vm8682, %v9109, 0
  %v9174 = vsel %vm8682, %v9116, 0
  %v9177 = vsel %vm8682, %v9123, 0
  %v9180 = vsel %vm8682, %v9130, 0
  %v9183 = vsel %vm8682, %v9137, 0
  %v9186 = vsel %vm8682, %v9145, 0
  %9188 = vmatprep.subr.bf16.mxu0 0
  %9189 = vmatpush1.bf16.msra.mxu0 0
  %9190 = vmatprep.subr.bf16.mxu0 0
  %9191 = vmatpush1.bf16.msra.mxu0 0
  %9192 = vmatprep.subr.bf16.mxu0 0
  %9193 = vmatpush1.bf16.msra.mxu0 0
  %9194 = vmatprep.subr.bf16.mxu0 0
  %9195 = vmatpush1.bf16.msra.mxu0 0
  %9196 = vmatprep.subr.bf16.mxu0 0
  %9197 = vmatpush1.bf16.msra.mxu0 0
  %9198 = vmatprep.subr.bf16.mxu0 0
  %9199 = vmatpush1.bf16.msra.mxu0 0
  %9200 = vmatprep.subr.bf16.mxu0 0
  %9201 = vmatpush1.bf16.msra.mxu0 %v9155
  %9202 = vmatprep.subr.bf16.mxu0 0
  %9203 = vmatpush1.bf16.msra.mxu0 %v9154
  %9204 = vmatprep.subr.bf16.mxu0 0
  %9205 = vmatpush2.bf16.msra.mxu0 0
  %9206 = vmatprep.subr.bf16.mxu0 0
  %9207 = vmatpush2.bf16.msra.mxu0 0
  %9208 = vmatprep.subr.bf16.mxu0 0
  %9209 = vmatpush2.bf16.msra.mxu0 0
  %9210 = vmatprep.subr.bf16.mxu0 0
  %9211 = vmatpush2.bf16.msra.mxu0 0
  %9212 = vmatprep.subr.bf16.mxu0 0
  %9213 = vmatpush2.bf16.msra.mxu0 0
  %9214 = vmatprep.subr.bf16.mxu0 0
  %9215 = vmatpush2.bf16.msra.mxu0 0
  %9216 = vmatprep.subr.bf16.mxu0 0
  %9217 = vmatpush2.bf16.msra.mxu0 0
  %9218 = vmatprep.subr.bf16.mxu0 0
  %9219 = vmatpush2.bf16.msra.mxu0 0
  %9220 = vmatprep.mubr.bf16.mxu0 0
  %9221 = vmatmul.mubr.bf16.gmra.mxu0 %v9159
  %v9222 = vpop.f32.mrf.mxu0
  %v9223 = vpop.f32.mrf.mxu0
  %v9224 = vpop.f32.mrf.mxu0
  %v9225 = vpop.f32.mrf.mxu0
  %9226 = vmatprep.mubr.bf16.mxu0 0
  %9227 = vmatmul.mubr.bf16.gmra.mxu0 %v9162
  %v9228 = vpop.f32.mrf.mxu0
  %v9229 = vadd.f32 0.0, %v9228
  %v9230 = vpop.f32.mrf.mxu0
  %v9231 = vpop.f32.mrf.mxu0
  %v9232 = vadd.f32 0.0, %v9231
  %v9233 = vpop.f32.mrf.mxu0
  %9234 = vmatprep.mubr.bf16.mxu0 0
  %9235 = vmatmul.mubr.bf16.gmra.mxu0 %v9165
  %v9236 = vpop.f32.mrf.mxu0
  %v9237 = vadd.f32 0.0, %v9236
  %v9238 = vpop.f32.mrf.mxu0
  %v9239 = vpop.f32.mrf.mxu0
  %v9240 = vadd.f32 0.0, %v9239
  %v9241 = vpop.f32.mrf.mxu0
  %9242 = vmatprep.mubr.bf16.mxu0 0
  %9243 = vmatmul.mubr.bf16.gmra.mxu0 %v9168
  %v9244 = vpop.f32.mrf.mxu0
  %v9245 = vadd.f32 0.0, %v9244
  %v9246 = vpop.f32.mrf.mxu0
  %v9247 = vpop.f32.mrf.mxu0
  %v9248 = vadd.f32 0.0, %v9247
  %v9249 = vpop.f32.mrf.mxu0
  %9250 = vmatprep.mubr.bf16.mxu0 0
  %9251 = vmatmul.mubr.bf16.gmra.mxu0 %v9171
  %v9252 = vpop.f32.mrf.mxu0
  %v9253 = vadd.f32 0.0, %v9252
  %v9254 = vpop.f32.mrf.mxu0
  %v9255 = vpop.f32.mrf.mxu0
  %v9256 = vadd.f32 0.0, %v9255
  %v9257 = vpop.f32.mrf.mxu0
  %9258 = vmatprep.mubr.bf16.mxu0 0
  %9259 = vmatmul.mubr.bf16.gmra.mxu0 %v9174
  %v9260 = vpop.f32.mrf.mxu0
  %v9261 = vadd.f32 0.0, %v9260
  %v9262 = vpop.f32.mrf.mxu0
  %v9263 = vpop.f32.mrf.mxu0
  %v9264 = vadd.f32 0.0, %v9263
  %v9265 = vpop.f32.mrf.mxu0
  %9266 = vmatprep.mubr.bf16.mxu0 0
  %9267 = vmatmul.mubr.bf16.gmra.mxu0 %v9177
  %v9268 = vpop.f32.mrf.mxu0
  %v9269 = vadd.f32 0.0, %v9268
  %v9270 = vpop.f32.mrf.mxu0
  %v9271 = vpop.f32.mrf.mxu0
  %v9272 = vadd.f32 0.0, %v9271
  %v9273 = vpop.f32.mrf.mxu0
  %9274 = vmatprep.mubr.bf16.mxu0 0
  %9275 = vmatmul.mubr.bf16.gmra.mxu0 %v9180
  %v9276 = vpop.f32.mrf.mxu0
  %v9277 = vadd.f32 0.0, %v9276
  %v9278 = vpop.f32.mrf.mxu0
  %v9279 = vpop.f32.mrf.mxu0
  %v9280 = vadd.f32 0.0, %v9279
  %v9281 = vpop.f32.mrf.mxu0
  %9282 = vmatprep.mubr.bf16.mxu0 0
  %9283 = vmatmul.mubr.bf16.gmra.mxu0 %v9183
  %v9284 = vpop.f32.mrf.mxu0
  %v9285 = vadd.f32 0.0, %v9284
  %v9286 = vpop.f32.mrf.mxu0
  %v9287 = vpop.f32.mrf.mxu0
  %v9288 = vadd.f32 0.0, %v9287
  %v9289 = vpop.f32.mrf.mxu0
  %9290 = vmatprep.mubr.bf16.mxu0 0
  %9291 = vmatmul.mubr.bf16.gmra.mxu0 %v9186
  %v9292 = vpop.f32.mrf.mxu0
  %v9293 = vpop.f32.mrf.mxu0
  %v9294 = vpop.f32.mrf.mxu0
  %v9295 = vpop.f32.mrf.mxu0
  %9296 = vdwg.mxu0
  %v9297 = vadd.f32 %v9003, %v9229
  %v9298 = vadd.f32 %v9006, %v9232
  %v9299 = vadd.f32 %v9011, %v9237
  %v9300 = vadd.f32 %v9014, %v9240
  %v9301 = vadd.f32 %v9019, %v9245
  %v9302 = vadd.f32 %v9022, %v9248
  %v9303 = vadd.f32 %v9027, %v9253
  %v9304 = vadd.f32 %v9030, %v9256
  %v9305 = vadd.f32 %v9035, %v9261
  %v9306 = vadd.f32 %v9038, %v9264
  %v9307 = vadd.f32 %v9043, %v9269
  %v9308 = vadd.f32 %v9046, %v9272
  %v9309 = vadd.f32 %v9051, %v9277
  %v9310 = vadd.f32 %v9054, %v9280
  %v9311 = vadd.f32 %v9059, %v9285
  %v9312 = vadd.f32 %v9062, %v9288
  %v9313 = vpack.c.bf16 %v8577, %v8572
  %v9314 = vpack.c.bf16 %v8582, %v8582
  %v9316 = vshrl.u32 %v9313, 16
  %v9318 = vrot.slane %v9316, 3
  %v9319 = vshll.u32 %v9313, 16
  %v9321 = vrot.slane %v9319, 4
  %v9322 = vor.u32 %v9318, %v9321
  %v9323 = vsel %vm3922, %v8909, %v9322
  %v9325 = vshrl.u32 %v9314, 16
  %v9327 = vrot.slane %v9325, 3
  %v9328 = vshll.u32 %v9314, 16
  %v9330 = vrot.slane %v9328, 4
  %v9331 = vor.u32 %v9327, %v9330
  %v9332 = vsel %vm3922, %v9322, %v9331
  %v9337 = vunpack.c.l.b16 %v8620
  %v9338 = vunpack.c.l.b16 %v8621
  %v9339 = vunpack.c.l.b16 %v8622
  %v9340 = vunpack.c.l.b16 %v8623
  %v9341 = vpack.c.b16 %v9338, %v9337
  %v9342 = vpack.c.b16 %v9340, %v9339
  %v9346 = vsel %vm8682, %v9323, 0
  %v9349 = vsel %vm8682, %v9332, 0
  %9351 = vmatprep.subr.bf16.mxu0 0
  %9352 = vmatpush1.bf16.msra.mxu0 0
  %9353 = vmatprep.subr.bf16.mxu0 0
  %9354 = vmatpush1.bf16.msra.mxu0 0
  %9355 = vmatprep.subr.bf16.mxu0 0
  %9356 = vmatpush1.bf16.msra.mxu0 0
  %9357 = vmatprep.subr.bf16.mxu0 0
  %9358 = vmatpush1.bf16.msra.mxu0 0
  %9359 = vmatprep.subr.bf16.mxu0 0
  %9360 = vmatpush1.bf16.msra.mxu0 0
  %9361 = vmatprep.subr.bf16.mxu0 0
  %9362 = vmatpush1.bf16.msra.mxu0 0
  %9363 = vmatprep.subr.bf16.mxu0 0
  %9364 = vmatpush1.bf16.msra.mxu0 %v9342
  %9365 = vmatprep.subr.bf16.mxu0 0
  %9366 = vmatpush1.bf16.msra.mxu0 %v9341
  %9367 = vmatprep.subr.bf16.mxu0 0
  %9368 = vmatpush2.bf16.msra.mxu0 0
  %9369 = vmatprep.subr.bf16.mxu0 0
  %9370 = vmatpush2.bf16.msra.mxu0 0
  %9371 = vmatprep.subr.bf16.mxu0 0
  %9372 = vmatpush2.bf16.msra.mxu0 0
  %9373 = vmatprep.subr.bf16.mxu0 0
  %9374 = vmatpush2.bf16.msra.mxu0 0
  %9375 = vmatprep.subr.bf16.mxu0 0
  %9376 = vmatpush2.bf16.msra.mxu0 0
  %9377 = vmatprep.subr.bf16.mxu0 0
  %9378 = vmatpush2.bf16.msra.mxu0 0
  %9379 = vmatprep.subr.bf16.mxu0 0
  %9380 = vmatpush2.bf16.msra.mxu0 0
  %9381 = vmatprep.subr.bf16.mxu0 0
  %9382 = vmatpush2.bf16.msra.mxu0 0
  %9383 = vmatprep.mubr.bf16.mxu0 0
  %9384 = vmatmul.mubr.bf16.gmra.mxu0 %v8936
  %v9385 = vpop.f32.mrf.mxu0
  %v9386 = vpop.f32.mrf.mxu0
  %v9387 = vpop.f32.mrf.mxu0
  %v9388 = vpop.f32.mrf.mxu0
  %9389 = vmatprep.mubr.bf16.mxu0 0
  %9390 = vmatmul.mubr.bf16.gmra.mxu0 %v8939
  %v9391 = vpop.f32.mrf.mxu0
  %v9392 = vadd.f32 0.0, %v9391
  %v9393 = vpop.f32.mrf.mxu0
  %v9394 = vpop.f32.mrf.mxu0
  %v9395 = vadd.f32 0.0, %v9394
  %v9396 = vpop.f32.mrf.mxu0
  %9397 = vmatprep.mubr.bf16.mxu0 0
  %9398 = vmatmul.mubr.bf16.gmra.mxu0 %v8942
  %v9399 = vpop.f32.mrf.mxu0
  %v9400 = vadd.f32 0.0, %v9399
  %v9401 = vpop.f32.mrf.mxu0
  %v9402 = vpop.f32.mrf.mxu0
  %v9403 = vadd.f32 0.0, %v9402
  %v9404 = vpop.f32.mrf.mxu0
  %9405 = vmatprep.mubr.bf16.mxu0 0
  %9406 = vmatmul.mubr.bf16.gmra.mxu0 %v8945
  %v9407 = vpop.f32.mrf.mxu0
  %v9408 = vadd.f32 0.0, %v9407
  %v9409 = vpop.f32.mrf.mxu0
  %v9410 = vpop.f32.mrf.mxu0
  %v9411 = vadd.f32 0.0, %v9410
  %v9412 = vpop.f32.mrf.mxu0
  %9413 = vmatprep.mubr.bf16.mxu0 0
  %9414 = vmatmul.mubr.bf16.gmra.mxu0 %v8948
  %v9415 = vpop.f32.mrf.mxu0
  %v9416 = vadd.f32 0.0, %v9415
  %v9417 = vpop.f32.mrf.mxu0
  %v9418 = vpop.f32.mrf.mxu0
  %v9419 = vadd.f32 0.0, %v9418
  %v9420 = vpop.f32.mrf.mxu0
  %9421 = vmatprep.mubr.bf16.mxu0 0
  %9422 = vmatmul.mubr.bf16.gmra.mxu0 %v8951
  %v9423 = vpop.f32.mrf.mxu0
  %v9424 = vadd.f32 0.0, %v9423
  %v9425 = vpop.f32.mrf.mxu0
  %v9426 = vpop.f32.mrf.mxu0
  %v9427 = vadd.f32 0.0, %v9426
  %v9428 = vpop.f32.mrf.mxu0
  %9429 = vmatprep.mubr.bf16.mxu0 0
  %9430 = vmatmul.mubr.bf16.gmra.mxu0 %v8954
  %v9431 = vpop.f32.mrf.mxu0
  %v9432 = vadd.f32 0.0, %v9431
  %v9433 = vpop.f32.mrf.mxu0
  %v9434 = vpop.f32.mrf.mxu0
  %v9435 = vadd.f32 0.0, %v9434
  %v9436 = vpop.f32.mrf.mxu0
  %9437 = vmatprep.mubr.bf16.mxu0 0
  %9438 = vmatmul.mubr.bf16.gmra.mxu0 %v8957
  %v9439 = vpop.f32.mrf.mxu0
  %v9440 = vadd.f32 0.0, %v9439
  %v9441 = vpop.f32.mrf.mxu0
  %v9442 = vpop.f32.mrf.mxu0
  %v9443 = vadd.f32 0.0, %v9442
  %v9444 = vpop.f32.mrf.mxu0
  %9445 = vmatprep.mubr.bf16.mxu0 0
  %9446 = vmatmul.mubr.bf16.gmra.mxu0 %v9346
  %v9447 = vpop.f32.mrf.mxu0
  %v9448 = vadd.f32 0.0, %v9447
  %v9449 = vpop.f32.mrf.mxu0
  %v9450 = vpop.f32.mrf.mxu0
  %v9451 = vadd.f32 0.0, %v9450
  %v9452 = vpop.f32.mrf.mxu0
  %9453 = vmatprep.mubr.bf16.mxu0 0
  %9454 = vmatmul.mubr.bf16.gmra.mxu0 %v9349
  %v9455 = vpop.f32.mrf.mxu0
  %v9456 = vpop.f32.mrf.mxu0
  %v9457 = vpop.f32.mrf.mxu0
  %v9458 = vpop.f32.mrf.mxu0
  %9459 = vdwg.mxu0
  %v9460 = vadd.f32 %v9297, %v9392
  %v9461 = vadd.f32 %v9298, %v9395
  %v9462 = vadd.f32 %v9299, %v9400
  %v9463 = vadd.f32 %v9300, %v9403
  %v9464 = vadd.f32 %v9301, %v9408
  %v9465 = vadd.f32 %v9302, %v9411
  %v9466 = vadd.f32 %v9303, %v9416
  %v9467 = vadd.f32 %v9304, %v9419
  %v9468 = vadd.f32 %v9305, %v9424
  %v9469 = vadd.f32 %v9306, %v9427
  %v9470 = vadd.f32 %v9307, %v9432
  %v9471 = vadd.f32 %v9308, %v9435
  %v9472 = vadd.f32 %v9309, %v9440
  %v9473 = vadd.f32 %v9310, %v9443
  %v9474 = vadd.f32 %v9311, %v9448
  %v9475 = vadd.f32 %v9312, %v9451
  %v9476 = vpack.c.bf16 %v8582, %v8577
  %v9481 = vunpack.c.l.b16 %v8625
  %v9482 = vunpack.c.l.b16 %v8626
  %v9483 = vunpack.c.l.b16 %v8627
  %v9484 = vunpack.c.l.b16 %v8628
  %v9485 = vpack.c.b16 %v9482, %v9481
  %v9486 = vpack.c.b16 %v9484, %v9483
  %v9490 = vsel %vm8682, %v9476, 0
  %9492 = vmatprep.subr.bf16.mxu0 0
  %9493 = vmatpush1.bf16.msra.mxu0 0
  %9494 = vmatprep.subr.bf16.mxu0 0
  %9495 = vmatpush1.bf16.msra.mxu0 0
  %9496 = vmatprep.subr.bf16.mxu0 0
  %9497 = vmatpush1.bf16.msra.mxu0 0
  %9498 = vmatprep.subr.bf16.mxu0 0
  %9499 = vmatpush1.bf16.msra.mxu0 0
  %9500 = vmatprep.subr.bf16.mxu0 0
  %9501 = vmatpush1.bf16.msra.mxu0 0
  %9502 = vmatprep.subr.bf16.mxu0 0
  %9503 = vmatpush1.bf16.msra.mxu0 0
  %9504 = vmatprep.subr.bf16.mxu0 0
  %9505 = vmatpush1.bf16.msra.mxu0 %v9486
  %9506 = vmatprep.subr.bf16.mxu0 0
  %9507 = vmatpush1.bf16.msra.mxu0 %v9485
  %9508 = vmatprep.subr.bf16.mxu0 0
  %9509 = vmatpush2.bf16.msra.mxu0 0
  %9510 = vmatprep.subr.bf16.mxu0 0
  %9511 = vmatpush2.bf16.msra.mxu0 0
  %9512 = vmatprep.subr.bf16.mxu0 0
  %9513 = vmatpush2.bf16.msra.mxu0 0
  %9514 = vmatprep.subr.bf16.mxu0 0
  %9515 = vmatpush2.bf16.msra.mxu0 0
  %9516 = vmatprep.subr.bf16.mxu0 0
  %9517 = vmatpush2.bf16.msra.mxu0 0
  %9518 = vmatprep.subr.bf16.mxu0 0
  %9519 = vmatpush2.bf16.msra.mxu0 0
  %9520 = vmatprep.subr.bf16.mxu0 0
  %9521 = vmatpush2.bf16.msra.mxu0 0
  %9522 = vmatprep.subr.bf16.mxu0 0
  %9523 = vmatpush2.bf16.msra.mxu0 0
  %9524 = vmatprep.mubr.bf16.mxu0 0
  %9525 = vmatmul.mubr.bf16.gmra.mxu0 %v8687
  %v9526 = vpop.f32.mrf.mxu0
  %v9527 = vpop.f32.mrf.mxu0
  %v9528 = vpop.f32.mrf.mxu0
  %v9529 = vpop.f32.mrf.mxu0
  %9530 = vmatprep.mubr.bf16.mxu0 0
  %9531 = vmatmul.mubr.bf16.gmra.mxu0 %v8690
  %v9532 = vpop.f32.mrf.mxu0
  %v9533 = vadd.f32 0.0, %v9532
  %v9534 = vpop.f32.mrf.mxu0
  %v9535 = vpop.f32.mrf.mxu0
  %v9536 = vadd.f32 0.0, %v9535
  %v9537 = vpop.f32.mrf.mxu0
  %9538 = vmatprep.mubr.bf16.mxu0 0
  %9539 = vmatmul.mubr.bf16.gmra.mxu0 %v8693
  %v9540 = vpop.f32.mrf.mxu0
  %v9541 = vadd.f32 0.0, %v9540
  %v9542 = vpop.f32.mrf.mxu0
  %v9543 = vpop.f32.mrf.mxu0
  %v9544 = vadd.f32 0.0, %v9543
  %v9545 = vpop.f32.mrf.mxu0
  %9546 = vmatprep.mubr.bf16.mxu0 0
  %9547 = vmatmul.mubr.bf16.gmra.mxu0 %v8696
  %v9548 = vpop.f32.mrf.mxu0
  %v9549 = vadd.f32 0.0, %v9548
  %v9550 = vpop.f32.mrf.mxu0
  %v9551 = vpop.f32.mrf.mxu0
  %v9552 = vadd.f32 0.0, %v9551
  %v9553 = vpop.f32.mrf.mxu0
  %9554 = vmatprep.mubr.bf16.mxu0 0
  %9555 = vmatmul.mubr.bf16.gmra.mxu0 %v8699
  %v9556 = vpop.f32.mrf.mxu0
  %v9557 = vadd.f32 0.0, %v9556
  %v9558 = vpop.f32.mrf.mxu0
  %v9559 = vpop.f32.mrf.mxu0
  %v9560 = vadd.f32 0.0, %v9559
  %v9561 = vpop.f32.mrf.mxu0
  %9562 = vmatprep.mubr.bf16.mxu0 0
  %9563 = vmatmul.mubr.bf16.gmra.mxu0 %v8702
  %v9564 = vpop.f32.mrf.mxu0
  %v9565 = vadd.f32 0.0, %v9564
  %v9566 = vpop.f32.mrf.mxu0
  %v9567 = vpop.f32.mrf.mxu0
  %v9568 = vadd.f32 0.0, %v9567
  %v9569 = vpop.f32.mrf.mxu0
  %9570 = vmatprep.mubr.bf16.mxu0 0
  %9571 = vmatmul.mubr.bf16.gmra.mxu0 %v8705
  %v9572 = vpop.f32.mrf.mxu0
  %v9573 = vadd.f32 0.0, %v9572
  %v9574 = vpop.f32.mrf.mxu0
  %v9575 = vpop.f32.mrf.mxu0
  %v9576 = vadd.f32 0.0, %v9575
  %v9577 = vpop.f32.mrf.mxu0
  %9578 = vmatprep.mubr.bf16.mxu0 0
  %9579 = vmatmul.mubr.bf16.gmra.mxu0 %v8708
  %v9580 = vpop.f32.mrf.mxu0
  %v9581 = vadd.f32 0.0, %v9580
  %v9582 = vpop.f32.mrf.mxu0
  %v9583 = vpop.f32.mrf.mxu0
  %v9584 = vadd.f32 0.0, %v9583
  %v9585 = vpop.f32.mrf.mxu0
  %9586 = vmatprep.mubr.bf16.mxu0 0
  %9587 = vmatmul.mubr.bf16.gmra.mxu0 %v8711
  %v9588 = vpop.f32.mrf.mxu0
  %v9589 = vadd.f32 0.0, %v9588
  %v9590 = vpop.f32.mrf.mxu0
  %v9591 = vpop.f32.mrf.mxu0
  %v9592 = vadd.f32 0.0, %v9591
  %v9593 = vpop.f32.mrf.mxu0
  %9594 = vmatprep.mubr.bf16.mxu0 0
  %9595 = vmatmul.mubr.bf16.gmra.mxu0 %v9490
  %v9596 = vpop.f32.mrf.mxu0
  %v9597 = vpop.f32.mrf.mxu0
  %v9598 = vpop.f32.mrf.mxu0
  %v9599 = vpop.f32.mrf.mxu0
  %9600 = vdwg.mxu0
  %v9601 = vadd.f32 %v9460, %v9533
  %v9602 = vadd.f32 %v9461, %v9536
  %v9603 = vadd.f32 %v9462, %v9541
  %v9604 = vadd.f32 %v9463, %v9544
  %v9605 = vadd.f32 %v9464, %v9549
  %v9606 = vadd.f32 %v9465, %v9552
  %v9607 = vadd.f32 %v9466, %v9557
  %v9608 = vadd.f32 %v9467, %v9560
  %v9609 = vadd.f32 %v9468, %v9565
  %v9610 = vadd.f32 %v9469, %v9568
  %v9611 = vadd.f32 %v9470, %v9573
  %v9612 = vadd.f32 %v9471, %v9576
  %v9613 = vadd.f32 %v9472, %v9581
  %v9614 = vadd.f32 %v9473, %v9584
  %v9615 = vadd.f32 %v9474, %v9589
  %v9616 = vadd.f32 %v9475, %v9592
  %v9617 = vpack.c.bf16 %v8587, %v8587
  %v9618 = vshll.u32 %v9476, 16
  %v9620 = vrot.slane %v9618, 1
  %v9621 = vsel %vm4256, %v9140, %v9620
  %v9622 = vshrl.u32 %v9476, 16
  %v9624 = vor.u32 %v9622, %v9620
  %v9626 = vshll.u32 %v9617, 16
  %v9628 = vrot.slane %v9626, 1
  %v9629 = vsel %vm4256, %v9624, %v9628
  %v9634 = vunpack.c.l.b16 %v8630
  %v9635 = vunpack.c.l.b16 %v8631
  %v9636 = vunpack.c.l.b16 %v8632
  %v9637 = vunpack.c.l.b16 %v8633
  %v9638 = vpack.c.b16 %v9635, %v9634
  %v9639 = vpack.c.b16 %v9637, %v9636
  %v9643 = vsel %vm8682, %v9621, 0
  %v9646 = vsel %vm8682, %v9629, 0
  %9648 = vmatprep.subr.bf16.mxu0 0
  %9649 = vmatpush1.bf16.msra.mxu0 0
  %9650 = vmatprep.subr.bf16.mxu0 0
  %9651 = vmatpush1.bf16.msra.mxu0 0
  %9652 = vmatprep.subr.bf16.mxu0 0
  %9653 = vmatpush1.bf16.msra.mxu0 0
  %9654 = vmatprep.subr.bf16.mxu0 0
  %9655 = vmatpush1.bf16.msra.mxu0 0
  %9656 = vmatprep.subr.bf16.mxu0 0
  %9657 = vmatpush1.bf16.msra.mxu0 0
  %9658 = vmatprep.subr.bf16.mxu0 0
  %9659 = vmatpush1.bf16.msra.mxu0 0
  %9660 = vmatprep.subr.bf16.mxu0 0
  %9661 = vmatpush1.bf16.msra.mxu0 %v9639
  %9662 = vmatprep.subr.bf16.mxu0 0
  %9663 = vmatpush1.bf16.msra.mxu0 %v9638
  %9664 = vmatprep.subr.bf16.mxu0 0
  %9665 = vmatpush2.bf16.msra.mxu0 0
  %9666 = vmatprep.subr.bf16.mxu0 0
  %9667 = vmatpush2.bf16.msra.mxu0 0
  %9668 = vmatprep.subr.bf16.mxu0 0
  %9669 = vmatpush2.bf16.msra.mxu0 0
  %9670 = vmatprep.subr.bf16.mxu0 0
  %9671 = vmatpush2.bf16.msra.mxu0 0
  %9672 = vmatprep.subr.bf16.mxu0 0
  %9673 = vmatpush2.bf16.msra.mxu0 0
  %9674 = vmatprep.subr.bf16.mxu0 0
  %9675 = vmatpush2.bf16.msra.mxu0 0
  %9676 = vmatprep.subr.bf16.mxu0 0
  %9677 = vmatpush2.bf16.msra.mxu0 0
  %9678 = vmatprep.subr.bf16.mxu0 0
  %9679 = vmatpush2.bf16.msra.mxu0 0
  %9680 = vmatprep.mubr.bf16.mxu0 0
  %9681 = vmatmul.mubr.bf16.gmra.mxu0 %v9162
  %v9682 = vpop.f32.mrf.mxu0
  %v9683 = vpop.f32.mrf.mxu0
  %v9684 = vpop.f32.mrf.mxu0
  %v9685 = vpop.f32.mrf.mxu0
  %9686 = vmatprep.mubr.bf16.mxu0 0
  %9687 = vmatmul.mubr.bf16.gmra.mxu0 %v9165
  %v9688 = vpop.f32.mrf.mxu0
  %v9689 = vadd.f32 0.0, %v9688
  %v9690 = vpop.f32.mrf.mxu0
  %v9691 = vpop.f32.mrf.mxu0
  %v9692 = vadd.f32 0.0, %v9691
  %v9693 = vpop.f32.mrf.mxu0
  %9694 = vmatprep.mubr.bf16.mxu0 0
  %9695 = vmatmul.mubr.bf16.gmra.mxu0 %v9168
  %v9696 = vpop.f32.mrf.mxu0
  %v9697 = vadd.f32 0.0, %v9696
  %v9698 = vpop.f32.mrf.mxu0
  %v9699 = vpop.f32.mrf.mxu0
  %v9700 = vadd.f32 0.0, %v9699
  %v9701 = vpop.f32.mrf.mxu0
  %9702 = vmatprep.mubr.bf16.mxu0 0
  %9703 = vmatmul.mubr.bf16.gmra.mxu0 %v9171
  %v9704 = vpop.f32.mrf.mxu0
  %v9705 = vadd.f32 0.0, %v9704
  %v9706 = vpop.f32.mrf.mxu0
  %v9707 = vpop.f32.mrf.mxu0
  %v9708 = vadd.f32 0.0, %v9707
  %v9709 = vpop.f32.mrf.mxu0
  %9710 = vmatprep.mubr.bf16.mxu0 0
  %9711 = vmatmul.mubr.bf16.gmra.mxu0 %v9174
  %v9712 = vpop.f32.mrf.mxu0
  %v9713 = vadd.f32 0.0, %v9712
  %v9714 = vpop.f32.mrf.mxu0
  %v9715 = vpop.f32.mrf.mxu0
  %v9716 = vadd.f32 0.0, %v9715
  %v9717 = vpop.f32.mrf.mxu0
  %9718 = vmatprep.mubr.bf16.mxu0 0
  %9719 = vmatmul.mubr.bf16.gmra.mxu0 %v9177
  %v9720 = vpop.f32.mrf.mxu0
  %v9721 = vadd.f32 0.0, %v9720
  %v9722 = vpop.f32.mrf.mxu0
  %v9723 = vpop.f32.mrf.mxu0
  %v9724 = vadd.f32 0.0, %v9723
  %v9725 = vpop.f32.mrf.mxu0
  %9726 = vmatprep.mubr.bf16.mxu0 0
  %9727 = vmatmul.mubr.bf16.gmra.mxu0 %v9180
  %v9728 = vpop.f32.mrf.mxu0
  %v9729 = vadd.f32 0.0, %v9728
  %v9730 = vpop.f32.mrf.mxu0
  %v9731 = vpop.f32.mrf.mxu0
  %v9732 = vadd.f32 0.0, %v9731
  %v9733 = vpop.f32.mrf.mxu0
  %9734 = vmatprep.mubr.bf16.mxu0 0
  %9735 = vmatmul.mubr.bf16.gmra.mxu0 %v9183
  %v9736 = vpop.f32.mrf.mxu0
  %v9737 = vadd.f32 0.0, %v9736
  %v9738 = vpop.f32.mrf.mxu0
  %v9739 = vpop.f32.mrf.mxu0
  %v9740 = vadd.f32 0.0, %v9739
  %v9741 = vpop.f32.mrf.mxu0
  %9742 = vmatprep.mubr.bf16.mxu0 0
  %9743 = vmatmul.mubr.bf16.gmra.mxu0 %v9643
  %v9744 = vpop.f32.mrf.mxu0
  %v9745 = vadd.f32 0.0, %v9744
  %v9746 = vpop.f32.mrf.mxu0
  %v9747 = vpop.f32.mrf.mxu0
  %v9748 = vadd.f32 0.0, %v9747
  %v9749 = vpop.f32.mrf.mxu0
  %9750 = vmatprep.mubr.bf16.mxu0 0
  %9751 = vmatmul.mubr.bf16.gmra.mxu0 %v9646
  %v9752 = vpop.f32.mrf.mxu0
  %v9753 = vpop.f32.mrf.mxu0
  %v9754 = vpop.f32.mrf.mxu0
  %v9755 = vpop.f32.mrf.mxu0
  %9756 = vdwg.mxu0
  %v9757 = vadd.f32 %v9601, %v9689
  %v9758 = vadd.f32 %v9602, %v9692
  %v9759 = vadd.f32 %v9603, %v9697
  %v9760 = vadd.f32 %v9604, %v9700
  %v9761 = vadd.f32 %v9605, %v9705
  %v9762 = vadd.f32 %v9606, %v9708
  %v9763 = vadd.f32 %v9607, %v9713
  %v9764 = vadd.f32 %v9608, %v9716
  %v9765 = vadd.f32 %v9609, %v9721
  %v9766 = vadd.f32 %v9610, %v9724
  %v9767 = vadd.f32 %v9611, %v9729
  %v9768 = vadd.f32 %v9612, %v9732
  %v9769 = vadd.f32 %v9613, %v9737
  %v9770 = vadd.f32 %v9614, %v9740
  %v9771 = vadd.f32 %v9615, %v9745
  %v9772 = vadd.f32 %v9616, %v9748
  %v9773 = vpack.c.bf16 %v8587, %v8582
  %v9774 = vpack.c.bf16 %v8592, %v8592
  %v9776 = vshrl.u32 %v9773, 16
  %v9778 = vrot.slane %v9776, 3
  %v9779 = vshll.u32 %v9773, 16
  %v9781 = vrot.slane %v9779, 4
  %v9782 = vor.u32 %v9778, %v9781
  %v9783 = vsel %vm3922, %v9322, %v9782
  %v9785 = vshrl.u32 %v9774, 16
  %v9787 = vrot.slane %v9785, 3
  %v9788 = vshll.u32 %v9774, 16
  %v9790 = vrot.slane %v9788, 4
  %v9791 = vor.u32 %v9787, %v9790
  %v9792 = vsel %vm3922, %v9782, %v9791
  %v9797 = vunpack.c.l.b16 %v8635
  %v9798 = vunpack.c.l.b16 %v8636
  %v9799 = vunpack.c.l.b16 %v8637
  %v9800 = vunpack.c.l.b16 %v8638
  %v9801 = vpack.c.b16 %v9798, %v9797
  %v9802 = vpack.c.b16 %v9800, %v9799
  %v9806 = vsel %vm8682, %v9783, 0
  %v9809 = vsel %vm8682, %v9792, 0
  %9811 = vmatprep.subr.bf16.mxu0 0
  %9812 = vmatpush1.bf16.msra.mxu0 0
  %9813 = vmatprep.subr.bf16.mxu0 0
  %9814 = vmatpush1.bf16.msra.mxu0 0
  %9815 = vmatprep.subr.bf16.mxu0 0
  %9816 = vmatpush1.bf16.msra.mxu0 0
  %9817 = vmatprep.subr.bf16.mxu0 0
  %9818 = vmatpush1.bf16.msra.mxu0 0
  %9819 = vmatprep.subr.bf16.mxu0 0
  %9820 = vmatpush1.bf16.msra.mxu0 0
  %9821 = vmatprep.subr.bf16.mxu0 0
  %9822 = vmatpush1.bf16.msra.mxu0 0
  %9823 = vmatprep.subr.bf16.mxu0 0
  %9824 = vmatpush1.bf16.msra.mxu0 %v9802
  %9825 = vmatprep.subr.bf16.mxu0 0
  %9826 = vmatpush1.bf16.msra.mxu0 %v9801
  %9827 = vmatprep.subr.bf16.mxu0 0
  %9828 = vmatpush2.bf16.msra.mxu0 0
  %9829 = vmatprep.subr.bf16.mxu0 0
  %9830 = vmatpush2.bf16.msra.mxu0 0
  %9831 = vmatprep.subr.bf16.mxu0 0
  %9832 = vmatpush2.bf16.msra.mxu0 0
  %9833 = vmatprep.subr.bf16.mxu0 0
  %9834 = vmatpush2.bf16.msra.mxu0 0
  %9835 = vmatprep.subr.bf16.mxu0 0
  %9836 = vmatpush2.bf16.msra.mxu0 0
  %9837 = vmatprep.subr.bf16.mxu0 0
  %9838 = vmatpush2.bf16.msra.mxu0 0
  %9839 = vmatprep.subr.bf16.mxu0 0
  %9840 = vmatpush2.bf16.msra.mxu0 0
  %9841 = vmatprep.subr.bf16.mxu0 0
  %9842 = vmatpush2.bf16.msra.mxu0 0
  %9843 = vmatprep.mubr.bf16.mxu0 0
  %9844 = vmatmul.mubr.bf16.gmra.mxu0 %v8939
  %v9845 = vpop.f32.mrf.mxu0
  %v9846 = vpop.f32.mrf.mxu0
  %v9847 = vpop.f32.mrf.mxu0
  %v9848 = vpop.f32.mrf.mxu0
  %9849 = vmatprep.mubr.bf16.mxu0 0
  %9850 = vmatmul.mubr.bf16.gmra.mxu0 %v8942
  %v9851 = vpop.f32.mrf.mxu0
  %v9852 = vadd.f32 0.0, %v9851
  %v9853 = vpop.f32.mrf.mxu0
  %v9854 = vpop.f32.mrf.mxu0
  %v9855 = vadd.f32 0.0, %v9854
  %v9856 = vpop.f32.mrf.mxu0
  %9857 = vmatprep.mubr.bf16.mxu0 0
  %9858 = vmatmul.mubr.bf16.gmra.mxu0 %v8945
  %v9859 = vpop.f32.mrf.mxu0
  %v9860 = vadd.f32 0.0, %v9859
  %v9861 = vpop.f32.mrf.mxu0
  %v9862 = vpop.f32.mrf.mxu0
  %v9863 = vadd.f32 0.0, %v9862
  %v9864 = vpop.f32.mrf.mxu0
  %9865 = vmatprep.mubr.bf16.mxu0 0
  %9866 = vmatmul.mubr.bf16.gmra.mxu0 %v8948
  %v9867 = vpop.f32.mrf.mxu0
  %v9868 = vadd.f32 0.0, %v9867
  %v9869 = vpop.f32.mrf.mxu0
  %v9870 = vpop.f32.mrf.mxu0
  %v9871 = vadd.f32 0.0, %v9870
  %v9872 = vpop.f32.mrf.mxu0
  %9873 = vmatprep.mubr.bf16.mxu0 0
  %9874 = vmatmul.mubr.bf16.gmra.mxu0 %v8951
  %v9875 = vpop.f32.mrf.mxu0
  %v9876 = vadd.f32 0.0, %v9875
  %v9877 = vpop.f32.mrf.mxu0
  %v9878 = vpop.f32.mrf.mxu0
  %v9879 = vadd.f32 0.0, %v9878
  %v9880 = vpop.f32.mrf.mxu0
  %9881 = vmatprep.mubr.bf16.mxu0 0
  %9882 = vmatmul.mubr.bf16.gmra.mxu0 %v8954
  %v9883 = vpop.f32.mrf.mxu0
  %v9884 = vadd.f32 0.0, %v9883
  %v9885 = vpop.f32.mrf.mxu0
  %v9886 = vpop.f32.mrf.mxu0
  %v9887 = vadd.f32 0.0, %v9886
  %v9888 = vpop.f32.mrf.mxu0
  %9889 = vmatprep.mubr.bf16.mxu0 0
  %9890 = vmatmul.mubr.bf16.gmra.mxu0 %v8957
  %v9891 = vpop.f32.mrf.mxu0
  %v9892 = vadd.f32 0.0, %v9891
  %v9893 = vpop.f32.mrf.mxu0
  %v9894 = vpop.f32.mrf.mxu0
  %v9895 = vadd.f32 0.0, %v9894
  %v9896 = vpop.f32.mrf.mxu0
  %9897 = vmatprep.mubr.bf16.mxu0 0
  %9898 = vmatmul.mubr.bf16.gmra.mxu0 %v9346
  %v9899 = vpop.f32.mrf.mxu0
  %v9900 = vadd.f32 0.0, %v9899
  %v9901 = vpop.f32.mrf.mxu0
  %v9902 = vpop.f32.mrf.mxu0
  %v9903 = vadd.f32 0.0, %v9902
  %v9904 = vpop.f32.mrf.mxu0
  %9905 = vmatprep.mubr.bf16.mxu0 0
  %9906 = vmatmul.mubr.bf16.gmra.mxu0 %v9806
  %v9907 = vpop.f32.mrf.mxu0
  %v9908 = vadd.f32 0.0, %v9907
  %v9909 = vpop.f32.mrf.mxu0
  %v9910 = vpop.f32.mrf.mxu0
  %v9911 = vadd.f32 0.0, %v9910
  %v9912 = vpop.f32.mrf.mxu0
  %9913 = vmatprep.mubr.bf16.mxu0 0
  %9914 = vmatmul.mubr.bf16.gmra.mxu0 %v9809
  %v9915 = vpop.f32.mrf.mxu0
  %v9916 = vpop.f32.mrf.mxu0
  %v9917 = vpop.f32.mrf.mxu0
  %v9918 = vpop.f32.mrf.mxu0
  %9919 = vdwg.mxu0
  %v9920 = vadd.f32 %v9757, %v9852
  %v9921 = vadd.f32 %v9758, %v9855
  %v9922 = vadd.f32 %v9759, %v9860
  %v9923 = vadd.f32 %v9760, %v9863
  %v9924 = vadd.f32 %v9761, %v9868
  %v9925 = vadd.f32 %v9762, %v9871
  %v9926 = vadd.f32 %v9763, %v9876
  %v9927 = vadd.f32 %v9764, %v9879
  %v9928 = vadd.f32 %v9765, %v9884
  %v9929 = vadd.f32 %v9766, %v9887
  %v9930 = vadd.f32 %v9767, %v9892
  %v9931 = vadd.f32 %v9768, %v9895
  %v9932 = vadd.f32 %v9769, %v9900
  %v9933 = vadd.f32 %v9770, %v9903
  %v9934 = vadd.f32 %v9771, %v9908
  %v9935 = vadd.f32 %v9772, %v9911
  %v9936 = vpack.c.bf16 %v8592, %v8587
  %v9941 = vunpack.c.l.b16 %v8640
  %v9942 = vunpack.c.l.b16 %v8641
  %v9943 = vunpack.c.l.b16 %v8642
  %v9944 = vunpack.c.l.b16 %v8643
  %v9945 = vpack.c.b16 %v9942, %v9941
  %v9946 = vpack.c.b16 %v9944, %v9943
  %v9950 = vsel %vm8682, %v9936, 0
  %9952 = vmatprep.subr.bf16.mxu0 0
  %9953 = vmatpush1.bf16.msra.mxu0 0
  %9954 = vmatprep.subr.bf16.mxu0 0
  %9955 = vmatpush1.bf16.msra.mxu0 0
  %9956 = vmatprep.subr.bf16.mxu0 0
  %9957 = vmatpush1.bf16.msra.mxu0 0
  %9958 = vmatprep.subr.bf16.mxu0 0
  %9959 = vmatpush1.bf16.msra.mxu0 0
  %9960 = vmatprep.subr.bf16.mxu0 0
  %9961 = vmatpush1.bf16.msra.mxu0 0
  %9962 = vmatprep.subr.bf16.mxu0 0
  %9963 = vmatpush1.bf16.msra.mxu0 0
  %9964 = vmatprep.subr.bf16.mxu0 0
  %9965 = vmatpush1.bf16.msra.mxu0 %v9946
  %9966 = vmatprep.subr.bf16.mxu0 0
  %9967 = vmatpush1.bf16.msra.mxu0 %v9945
  %9968 = vmatprep.subr.bf16.mxu0 0
  %9969 = vmatpush2.bf16.msra.mxu0 0
  %9970 = vmatprep.subr.bf16.mxu0 0
  %9971 = vmatpush2.bf16.msra.mxu0 0
  %9972 = vmatprep.subr.bf16.mxu0 0
  %9973 = vmatpush2.bf16.msra.mxu0 0
  %9974 = vmatprep.subr.bf16.mxu0 0
  %9975 = vmatpush2.bf16.msra.mxu0 0
  %9976 = vmatprep.subr.bf16.mxu0 0
  %9977 = vmatpush2.bf16.msra.mxu0 0
  %9978 = vmatprep.subr.bf16.mxu0 0
  %9979 = vmatpush2.bf16.msra.mxu0 0
  %9980 = vmatprep.subr.bf16.mxu0 0
  %9981 = vmatpush2.bf16.msra.mxu0 0
  %9982 = vmatprep.subr.bf16.mxu0 0
  %9983 = vmatpush2.bf16.msra.mxu0 0
  %9984 = vmatprep.mubr.bf16.mxu0 0
  %9985 = vmatmul.mubr.bf16.gmra.mxu0 %v8690
  %v9986 = vpop.f32.mrf.mxu0
  %v9987 = vpop.f32.mrf.mxu0
  %v9988 = vpop.f32.mrf.mxu0
  %v9989 = vpop.f32.mrf.mxu0
  %9990 = vmatprep.mubr.bf16.mxu0 0
  %9991 = vmatmul.mubr.bf16.gmra.mxu0 %v8693
  %v9992 = vpop.f32.mrf.mxu0
  %v9993 = vadd.f32 0.0, %v9992
  %v9994 = vpop.f32.mrf.mxu0
  %v9995 = vpop.f32.mrf.mxu0
  %v9996 = vadd.f32 0.0, %v9995
  %v9997 = vpop.f32.mrf.mxu0
  %9998 = vmatprep.mubr.bf16.mxu0 0
  %9999 = vmatmul.mubr.bf16.gmra.mxu0 %v8696
  %v10000 = vpop.f32.mrf.mxu0
  %v10001 = vadd.f32 0.0, %v10000
  %v10002 = vpop.f32.mrf.mxu0
  %v10003 = vpop.f32.mrf.mxu0
  %v10004 = vadd.f32 0.0, %v10003
  %v10005 = vpop.f32.mrf.mxu0
  %10006 = vmatprep.mubr.bf16.mxu0 0
  %10007 = vmatmul.mubr.bf16.gmra.mxu0 %v8699
  %v10008 = vpop.f32.mrf.mxu0
  %v10009 = vadd.f32 0.0, %v10008
  %v10010 = vpop.f32.mrf.mxu0
  %v10011 = vpop.f32.mrf.mxu0
  %v10012 = vadd.f32 0.0, %v10011
  %v10013 = vpop.f32.mrf.mxu0
  %10014 = vmatprep.mubr.bf16.mxu0 0
  %10015 = vmatmul.mubr.bf16.gmra.mxu0 %v8702
  %v10016 = vpop.f32.mrf.mxu0
  %v10017 = vadd.f32 0.0, %v10016
  %v10018 = vpop.f32.mrf.mxu0
  %v10019 = vpop.f32.mrf.mxu0
  %v10020 = vadd.f32 0.0, %v10019
  %v10021 = vpop.f32.mrf.mxu0
  %10022 = vmatprep.mubr.bf16.mxu0 0
  %10023 = vmatmul.mubr.bf16.gmra.mxu0 %v8705
  %v10024 = vpop.f32.mrf.mxu0
  %v10025 = vadd.f32 0.0, %v10024
  %v10026 = vpop.f32.mrf.mxu0
  %v10027 = vpop.f32.mrf.mxu0
  %v10028 = vadd.f32 0.0, %v10027
  %v10029 = vpop.f32.mrf.mxu0
  %10030 = vmatprep.mubr.bf16.mxu0 0
  %10031 = vmatmul.mubr.bf16.gmra.mxu0 %v8708
  %v10032 = vpop.f32.mrf.mxu0
  %v10033 = vadd.f32 0.0, %v10032
  %v10034 = vpop.f32.mrf.mxu0
  %v10035 = vpop.f32.mrf.mxu0
  %v10036 = vadd.f32 0.0, %v10035
  %v10037 = vpop.f32.mrf.mxu0
  %10038 = vmatprep.mubr.bf16.mxu0 0
  %10039 = vmatmul.mubr.bf16.gmra.mxu0 %v8711
  %v10040 = vpop.f32.mrf.mxu0
  %v10041 = vadd.f32 0.0, %v10040
  %v10042 = vpop.f32.mrf.mxu0
  %v10043 = vpop.f32.mrf.mxu0
  %v10044 = vadd.f32 0.0, %v10043
  %v10045 = vpop.f32.mrf.mxu0
  %10046 = vmatprep.mubr.bf16.mxu0 0
  %10047 = vmatmul.mubr.bf16.gmra.mxu0 %v9490
  %v10048 = vpop.f32.mrf.mxu0
  %v10049 = vadd.f32 0.0, %v10048
  %v10050 = vpop.f32.mrf.mxu0
  %v10051 = vpop.f32.mrf.mxu0
  %v10052 = vadd.f32 0.0, %v10051
  %v10053 = vpop.f32.mrf.mxu0
  %10054 = vmatprep.mubr.bf16.mxu0 0
  %10055 = vmatmul.mubr.bf16.gmra.mxu0 %v9950
  %v10056 = vpop.f32.mrf.mxu0
  %v10057 = vpop.f32.mrf.mxu0
  %v10058 = vpop.f32.mrf.mxu0
  %v10059 = vpop.f32.mrf.mxu0
  %10060 = vdwg.mxu0
  %v10061 = vadd.f32 %v9920, %v9993
  %v10062 = vadd.f32 %v9921, %v9996
  %v10063 = vadd.f32 %v9922, %v10001
  %v10064 = vadd.f32 %v9923, %v10004
  %v10065 = vadd.f32 %v9924, %v10009
  %v10066 = vadd.f32 %v9925, %v10012
  %v10067 = vadd.f32 %v9926, %v10017
  %v10068 = vadd.f32 %v9927, %v10020
  %v10069 = vadd.f32 %v9928, %v10025
  %v10070 = vadd.f32 %v9929, %v10028
  %v10071 = vadd.f32 %v9930, %v10033
  %v10072 = vadd.f32 %v9931, %v10036
  %v10073 = vadd.f32 %v9932, %v10041
  %v10074 = vadd.f32 %v9933, %v10044
  %v10075 = vadd.f32 %v9934, %v10049
  %v10076 = vadd.f32 %v9935, %v10052
  %v10077 = vpack.c.bf16 %v8597, %v8597
  %v10078 = vshll.u32 %v9936, 16
  %v10080 = vrot.slane %v10078, 1
  %v10081 = vsel %vm4256, %v9624, %v10080
  %v10082 = vshrl.u32 %v9936, 16
  %v10084 = vor.u32 %v10082, %v10080
  %v10086 = vshll.u32 %v10077, 16
  %v10088 = vrot.slane %v10086, 1
  %v10089 = vsel %vm4256, %v10084, %v10088
  %v10094 = vunpack.c.l.b16 %v8645
  %v10095 = vunpack.c.l.b16 %v8646
  %v10096 = vunpack.c.l.b16 %v8647
  %v10097 = vunpack.c.l.b16 %v8648
  %v10098 = vpack.c.b16 %v10095, %v10094
  %v10099 = vpack.c.b16 %v10097, %v10096
  %v10103 = vsel %vm8682, %v10081, 0
  %v10106 = vsel %vm8682, %v10089, 0
  %10108 = vmatprep.subr.bf16.mxu0 0
  %10109 = vmatpush1.bf16.msra.mxu0 0
  %10110 = vmatprep.subr.bf16.mxu0 0
  %10111 = vmatpush1.bf16.msra.mxu0 0
  %10112 = vmatprep.subr.bf16.mxu0 0
  %10113 = vmatpush1.bf16.msra.mxu0 0
  %10114 = vmatprep.subr.bf16.mxu0 0
  %10115 = vmatpush1.bf16.msra.mxu0 0
  %10116 = vmatprep.subr.bf16.mxu0 0
  %10117 = vmatpush1.bf16.msra.mxu0 0
  %10118 = vmatprep.subr.bf16.mxu0 0
  %10119 = vmatpush1.bf16.msra.mxu0 0
  %10120 = vmatprep.subr.bf16.mxu0 0
  %10121 = vmatpush1.bf16.msra.mxu0 %v10099
  %10122 = vmatprep.subr.bf16.mxu0 0
  %10123 = vmatpush1.bf16.msra.mxu0 %v10098
  %10124 = vmatprep.subr.bf16.mxu0 0
  %10125 = vmatpush2.bf16.msra.mxu0 0
  %10126 = vmatprep.subr.bf16.mxu0 0
  %10127 = vmatpush2.bf16.msra.mxu0 0
  %10128 = vmatprep.subr.bf16.mxu0 0
  %10129 = vmatpush2.bf16.msra.mxu0 0
  %10130 = vmatprep.subr.bf16.mxu0 0
  %10131 = vmatpush2.bf16.msra.mxu0 0
  %10132 = vmatprep.subr.bf16.mxu0 0
  %10133 = vmatpush2.bf16.msra.mxu0 0
  %10134 = vmatprep.subr.bf16.mxu0 0
  %10135 = vmatpush2.bf16.msra.mxu0 0
  %10136 = vmatprep.subr.bf16.mxu0 0
  %10137 = vmatpush2.bf16.msra.mxu0 0
  %10138 = vmatprep.subr.bf16.mxu0 0
  %10139 = vmatpush2.bf16.msra.mxu0 0
  %10140 = vmatprep.mubr.bf16.mxu0 0
  %10141 = vmatmul.mubr.bf16.gmra.mxu0 %v9165
  %v10142 = vpop.f32.mrf.mxu0
  %v10143 = vpop.f32.mrf.mxu0
  %v10144 = vpop.f32.mrf.mxu0
  %v10145 = vpop.f32.mrf.mxu0
  %10146 = vmatprep.mubr.bf16.mxu0 0
  %10147 = vmatmul.mubr.bf16.gmra.mxu0 %v9168
  %v10148 = vpop.f32.mrf.mxu0
  %v10149 = vadd.f32 0.0, %v10148
  %v10150 = vpop.f32.mrf.mxu0
  %v10151 = vpop.f32.mrf.mxu0
  %v10152 = vadd.f32 0.0, %v10151
  %v10153 = vpop.f32.mrf.mxu0
  %10154 = vmatprep.mubr.bf16.mxu0 0
  %10155 = vmatmul.mubr.bf16.gmra.mxu0 %v9171
  %v10156 = vpop.f32.mrf.mxu0
  %v10157 = vadd.f32 0.0, %v10156
  %v10158 = vpop.f32.mrf.mxu0
  %v10159 = vpop.f32.mrf.mxu0
  %v10160 = vadd.f32 0.0, %v10159
  %v10161 = vpop.f32.mrf.mxu0
  %10162 = vmatprep.mubr.bf16.mxu0 0
  %10163 = vmatmul.mubr.bf16.gmra.mxu0 %v9174
  %v10164 = vpop.f32.mrf.mxu0
  %v10165 = vadd.f32 0.0, %v10164
  %v10166 = vpop.f32.mrf.mxu0
  %v10167 = vpop.f32.mrf.mxu0
  %v10168 = vadd.f32 0.0, %v10167
  %v10169 = vpop.f32.mrf.mxu0
  %10170 = vmatprep.mubr.bf16.mxu0 0
  %10171 = vmatmul.mubr.bf16.gmra.mxu0 %v9177
  %v10172 = vpop.f32.mrf.mxu0
  %v10173 = vadd.f32 0.0, %v10172
  %v10174 = vpop.f32.mrf.mxu0
  %v10175 = vpop.f32.mrf.mxu0
  %v10176 = vadd.f32 0.0, %v10175
  %v10177 = vpop.f32.mrf.mxu0
  %10178 = vmatprep.mubr.bf16.mxu0 0
  %10179 = vmatmul.mubr.bf16.gmra.mxu0 %v9180
  %v10180 = vpop.f32.mrf.mxu0
  %v10181 = vadd.f32 0.0, %v10180
  %v10182 = vpop.f32.mrf.mxu0
  %v10183 = vpop.f32.mrf.mxu0
  %v10184 = vadd.f32 0.0, %v10183
  %v10185 = vpop.f32.mrf.mxu0
  %10186 = vmatprep.mubr.bf16.mxu0 0
  %10187 = vmatmul.mubr.bf16.gmra.mxu0 %v9183
  %v10188 = vpop.f32.mrf.mxu0
  %v10189 = vadd.f32 0.0, %v10188
  %v10190 = vpop.f32.mrf.mxu0
  %v10191 = vpop.f32.mrf.mxu0
  %v10192 = vadd.f32 0.0, %v10191
  %v10193 = vpop.f32.mrf.mxu0
  %10194 = vmatprep.mubr.bf16.mxu0 0
  %10195 = vmatmul.mubr.bf16.gmra.mxu0 %v9643
  %v10196 = vpop.f32.mrf.mxu0
  %v10197 = vadd.f32 0.0, %v10196
  %v10198 = vpop.f32.mrf.mxu0
  %v10199 = vpop.f32.mrf.mxu0
  %v10200 = vadd.f32 0.0, %v10199
  %v10201 = vpop.f32.mrf.mxu0
  %10202 = vmatprep.mubr.bf16.mxu0 0
  %10203 = vmatmul.mubr.bf16.gmra.mxu0 %v10103
  %v10204 = vpop.f32.mrf.mxu0
  %v10205 = vadd.f32 0.0, %v10204
  %v10206 = vpop.f32.mrf.mxu0
  %v10207 = vpop.f32.mrf.mxu0
  %v10208 = vadd.f32 0.0, %v10207
  %v10209 = vpop.f32.mrf.mxu0
  %10210 = vmatprep.mubr.bf16.mxu0 0
  %10211 = vmatmul.mubr.bf16.gmra.mxu0 %v10106
  %v10212 = vpop.f32.mrf.mxu0
  %v10213 = vpop.f32.mrf.mxu0
  %v10214 = vpop.f32.mrf.mxu0
  %v10215 = vpop.f32.mrf.mxu0
  %10216 = vdwg.mxu0
  %v10217 = vadd.f32 %v10061, %v10149
  %v10218 = vadd.f32 %v10062, %v10152
  %v10219 = vadd.f32 %v10063, %v10157
  %v10220 = vadd.f32 %v10064, %v10160
  %v10221 = vadd.f32 %v10065, %v10165
  %v10222 = vadd.f32 %v10066, %v10168
  %v10223 = vadd.f32 %v10067, %v10173
  %v10224 = vadd.f32 %v10068, %v10176
  %v10225 = vadd.f32 %v10069, %v10181
  %v10226 = vadd.f32 %v10070, %v10184
  %v10227 = vadd.f32 %v10071, %v10189
  %v10228 = vadd.f32 %v10072, %v10192
  %v10229 = vadd.f32 %v10073, %v10197
  %v10230 = vadd.f32 %v10074, %v10200
  %v10231 = vadd.f32 %v10075, %v10205
  %v10232 = vadd.f32 %v10076, %v10208
  %v10234 = vlaneseq
  %v10235 = vshrl.u32 %v10234, 7
  %v10236 = vsub.s32 0, %v10235
  %v10237 = vrot.slane %v8604, %v10236
  %v10239 = vadd.f32 %v10217, %v10237
  %v10240 = vadd.f32 %v10218, %v10237
  %v10241 = vadd.f32 %v10219, %v10237
  %v10242 = vadd.f32 %v10220, %v10237
  %v10243 = vadd.f32 %v10221, %v10237
  %v10244 = vadd.f32 %v10222, %v10237
  %v10245 = vadd.f32 %v10223, %v10237
  %v10246 = vadd.f32 %v10224, %v10237
  %v10247 = vadd.f32 %v10225, %v10237
  %v10248 = vadd.f32 %v10226, %v10237
  %v10249 = vadd.f32 %v10227, %v10237
  %v10250 = vadd.f32 %v10228, %v10237
  %v10251 = vadd.f32 %v10229, %v10237
  %v10252 = vadd.f32 %v10230, %v10237
  %v10253 = vadd.f32 %v10231, %v10237
  %v10254 = vadd.f32 %v10232, %v10237
  %v10255 = vmax.f32 %v10239, 0.0
  %v10256 = vmax.f32 %v10240, 0.0
  %v10257 = vmax.f32 %v10241, 0.0
  %v10258 = vmax.f32 %v10242, 0.0
  %v10259 = vmax.f32 %v10243, 0.0
  %v10260 = vmax.f32 %v10244, 0.0
  %v10261 = vmax.f32 %v10245, 0.0
  %v10262 = vmax.f32 %v10246, 0.0
  %v10263 = vmax.f32 %v10247, 0.0
  %v10264 = vmax.f32 %v10248, 0.0
  %v10265 = vmax.f32 %v10249, 0.0
  %v10266 = vmax.f32 %v10250, 0.0
  %v10267 = vmax.f32 %v10251, 0.0
  %v10268 = vmax.f32 %v10252, 0.0
  %v10269 = vmax.f32 %v10253, 0.0
  %v10270 = vmax.f32 %v10254, 0.0
  %v10271 = vmax.f32 %v10255, %v10257
  %v10272 = vmax.f32 %v10256, %v10258
  %v10273 = vmax.f32 %v10259, %v10261
  %v10274 = vmax.f32 %v10260, %v10262
  %v10275 = vmax.f32 %v10263, %v10265
  %v10276 = vmax.f32 %v10264, %v10266
  %v10277 = vmax.f32 %v10267, %v10269
  %v10278 = vmax.f32 %v10268, %v10270
  %v10287 = vrot.slane %v10271, 1
  %v10288 = vrot.slane %v10272, 1
  %v10289 = vsel %vm1967, %v10287, %v10288
  %v10290 = vrot.slane %v10273, 1
  %v10291 = vrot.slane %v10274, 1
  %v10292 = vsel %vm1967, %v10290, %v10291
  %v10293 = vrot.slane %v10275, 1
  %v10294 = vrot.slane %v10276, 1
  %v10295 = vsel %vm1967, %v10293, %v10294
  %v10296 = vrot.slane %v10277, 1
  %v10297 = vrot.slane %v10278, 1
  %v10298 = vsel %vm1967, %v10296, %v10297
  %v10307 = vmax.f32 %v10271, %v10289
  %v10308 = vmax.f32 %v10272, %v10288
  %v10309 = vmax.f32 %v10273, %v10292
  %v10310 = vmax.f32 %v10274, %v10291
  %v10311 = vmax.f32 %v10275, %v10295
  %v10312 = vmax.f32 %v10276, %v10294
  %v10313 = vmax.f32 %v10277, %v10298
  %v10314 = vmax.f32 %v10278, %v10297
  %v10323 = vrot.slane %v10307, 1
  %v10324 = vrot.slane %v10308, 1
  %v10325 = vsel %vm1967, %v10323, %v10324
  %v10326 = vrot.slane %v10309, 1
  %v10327 = vrot.slane %v10310, 1
  %v10328 = vsel %vm1967, %v10326, %v10327
  %v10329 = vrot.slane %v10311, 1
  %v10330 = vrot.slane %v10312, 1
  %v10331 = vsel %vm1967, %v10329, %v10330
  %v10332 = vrot.slane %v10313, 1
  %v10333 = vrot.slane %v10314, 1
  %v10334 = vsel %vm1967, %v10332, %v10333
  %v10339 = vld [vmem:[%s9] sm:$0xff]
  %v10340 = vld [vmem:[%s9 + $0x8] sm:$0xff]
  %v10341 = vld [vmem:[%s9 + $0x10] sm:$0xff]
  %v10342 = vld [vmem:[%s9 + $0x18] sm:$0xff]
  %v10343 = vld [vmem:[%s9 + $0x20] sm:$0xff]
  %v10344 = vld [vmem:[%s9 + $0x28] sm:$0xff]
  %v10345 = vld [vmem:[%s9 + $0x30] sm:$0xff]
  %v10346 = vld [vmem:[%s9 + $0x38] sm:$0xff]
  %v10347 = vld [vmem:[%s9 + $0x40] sm:$0xff]
  %v10348 = vld [vmem:[%s9 + $0x48] sm:$0xff]
  %v10350 = vsel %vm8682, %v10339, 0
  %v10353 = vsel %vm8682, %v10340, 0
  %v10356 = vsel %vm8682, %v10341, 0
  %v10359 = vsel %vm8682, %v10342, 0
  %v10362 = vsel %vm8682, %v10343, 0
  %v10365 = vsel %vm8682, %v10344, 0
  %v10368 = vsel %vm8682, %v10345, 0
  %v10371 = vsel %vm8682, %v10346, 0
  %v10374 = vsel %vm8682, %v10347, 0
  %v10377 = vsel %vm8682, %v10348, 0
  %10379 = vmatprep.subr.mxu0 0.0
  %10380 = vmatpush1.msra.mxu0 0.0
  %10381 = vmatprep.subr.mxu0 0.0
  %10382 = vmatpush1.msra.mxu0 0.0
  %10383 = vmatprep.subr.mxu0 0.0
  %10384 = vmatpush1.msra.mxu0 0.0
  %10385 = vmatprep.subr.mxu0 0.0
  %10386 = vmatpush1.msra.mxu0 0.0
  %10387 = vmatprep.subr.mxu0 0.0
  %10388 = vmatpush1.msra.mxu0 0.0
  %10389 = vmatprep.subr.mxu0 0.0
  %10390 = vmatpush1.msra.mxu0 0.0
  %10391 = vmatprep.subr.mxu0 0.0
  %10392 = vmatpush1.msra.mxu0 0.0
  %10393 = vmatprep.subr.mxu0 0.0
  %10394 = vmatpush1.msra.mxu0 0.0
  %10395 = vmatprep.subr.mxu0 0.0
  %10396 = vmatpush1.msra.mxu0 0.0
  %10397 = vmatprep.subr.mxu0 0.0
  %10398 = vmatpush1.msra.mxu0 0.0
  %10399 = vmatprep.subr.mxu0 0.0
  %10400 = vmatpush1.msra.mxu0 0.0
  %10401 = vmatprep.subr.mxu0 0.0
  %10402 = vmatpush1.msra.mxu0 0.0
  %10403 = vmatprep.subr.mxu0 0.0
  %10404 = vmatpush1.msra.mxu0 %v10334
  %10405 = vmatprep.subr.mxu0 0.0
  %10406 = vmatpush1.msra.mxu0 %v10331
  %10407 = vmatprep.subr.mxu0 0.0
  %10408 = vmatpush1.msra.mxu0 %v10328
  %10409 = vmatprep.subr.mxu0 0.0
  %10410 = vmatpush1.msra.mxu0 %v10325
  %10411 = vmatprep.subr.mxu0 0.0
  %10412 = vmatpush2.msra.mxu0 0.0
  %10413 = vmatprep.subr.mxu0 0.0
  %10414 = vmatpush2.msra.mxu0 0.0
  %10415 = vmatprep.subr.mxu0 0.0
  %10416 = vmatpush2.msra.mxu0 0.0
  %10417 = vmatprep.subr.mxu0 0.0
  %10418 = vmatpush2.msra.mxu0 0.0
  %10419 = vmatprep.subr.mxu0 0.0
  %10420 = vmatpush2.msra.mxu0 0.0
  %10421 = vmatprep.subr.mxu0 0.0
  %10422 = vmatpush2.msra.mxu0 0.0
  %10423 = vmatprep.subr.mxu0 0.0
  %10424 = vmatpush2.msra.mxu0 0.0
  %10425 = vmatprep.subr.mxu0 0.0
  %10426 = vmatpush2.msra.mxu0 0.0
  %10427 = vmatprep.subr.mxu0 0.0
  %10428 = vmatpush2.msra.mxu0 0.0
  %10429 = vmatprep.subr.mxu0 0.0
  %10430 = vmatpush2.msra.mxu0 0.0
  %10431 = vmatprep.subr.mxu0 0.0
  %10432 = vmatpush2.msra.mxu0 0.0
  %10433 = vmatprep.subr.mxu0 0.0
  %10434 = vmatpush2.msra.mxu0 0.0
  %10435 = vmatprep.subr.mxu0 0.0
  %10436 = vmatpush2.msra.mxu0 0.0
  %10437 = vmatprep.subr.mxu0 0.0
  %10438 = vmatpush2.msra.mxu0 0.0
  %10439 = vmatprep.subr.mxu0 0.0
  %10440 = vmatpush2.msra.mxu0 0.0
  %10441 = vmatprep.subr.mxu0 0.0
  %10442 = vmatpush2.msra.mxu0 0.0
  %10443 = vmatprep.mubr.f32.mxu0 0.0
  %10444 = vmatmul.mubr.f32.gmra.mxu0 %v10350
  %v10445 = vpop.f32.mrf.mxu0
  %v10446 = vadd.f32 0.0, %v10445
  %v10447 = vpop.f32.mrf.mxu0
  %10448 = vmatprep.mubr.f32.mxu0 0.0
  %10449 = vmatmul.mubr.f32.gmra.mxu0 %v10353
  %v10450 = vpop.f32.mrf.mxu0
  %v10451 = vadd.f32 0.0, %v10450
  %v10452 = vpop.f32.mrf.mxu0
  %10453 = vmatprep.mubr.f32.mxu0 0.0
  %10454 = vmatmul.mubr.f32.gmra.mxu0 %v10356
  %v10455 = vpop.f32.mrf.mxu0
  %v10456 = vadd.f32 0.0, %v10455
  %v10457 = vpop.f32.mrf.mxu0
  %10458 = vmatprep.mubr.f32.mxu0 0.0
  %10459 = vmatmul.mubr.f32.gmra.mxu0 %v10359
  %v10460 = vpop.f32.mrf.mxu0
  %v10461 = vadd.f32 0.0, %v10460
  %v10462 = vpop.f32.mrf.mxu0
  %10463 = vmatprep.mubr.f32.mxu0 0.0
  %10464 = vmatmul.mubr.f32.gmra.mxu0 %v10362
  %v10465 = vpop.f32.mrf.mxu0
  %v10466 = vadd.f32 0.0, %v10465
  %v10467 = vpop.f32.mrf.mxu0
  %10468 = vmatprep.mubr.f32.mxu0 0.0
  %10469 = vmatmul.mubr.f32.gmra.mxu0 %v10365
  %v10470 = vpop.f32.mrf.mxu0
  %v10471 = vadd.f32 0.0, %v10470
  %v10472 = vpop.f32.mrf.mxu0
  %10473 = vmatprep.mubr.f32.mxu0 0.0
  %10474 = vmatmul.mubr.f32.gmra.mxu0 %v10368
  %v10475 = vpop.f32.mrf.mxu0
  %v10476 = vadd.f32 0.0, %v10475
  %v10477 = vpop.f32.mrf.mxu0
  %10478 = vmatprep.mubr.f32.mxu0 0.0
  %10479 = vmatmul.mubr.f32.gmra.mxu0 %v10371
  %v10480 = vpop.f32.mrf.mxu0
  %v10481 = vadd.f32 0.0, %v10480
  %v10482 = vpop.f32.mrf.mxu0
  %10483 = vmatprep.mubr.f32.mxu0 0.0
  %10484 = vmatmul.mubr.f32.gmra.mxu0 %v10374
  %v10485 = vpop.f32.mrf.mxu0
  %v10486 = vadd.f32 0.0, %v10485
  %v10487 = vpop.f32.mrf.mxu0
  %10488 = vmatprep.mubr.f32.mxu0 0.0
  %10489 = vmatmul.mubr.f32.gmra.mxu0 %v10377
  %v10490 = vpop.f32.mrf.mxu0
  %v10491 = vadd.f32 0.0, %v10490
  %v10492 = vpop.f32.mrf.mxu0
  %10493 = vdwg.mxu0
  %v10494 = vld [vmem:[%s11] sm:$0x1]
  %v10495 = vld [vmem:[%s10] sm:$0xf]
  %v10496 = vld [vmem:[%s10 + $0x4] sm:$0xf]
  %s10497 = scalar_lea.vmem %s10, 8
  %v10498 = vld [vmem:[%s10497] sm:$0xf]
  %v10499 = vld [vmem:[%s10497 + $0x4] sm:$0xf]
  %s10500 = scalar_lea.vmem %s10, 16
  %v10501 = vld [vmem:[%s10500] sm:$0xf]
  %v10502 = vld [vmem:[%s10500 + $0x4] sm:$0xf]
  %s10503 = scalar_lea.vmem %s10, 24
  %v10504 = vld [vmem:[%s10503] sm:$0xf]
  %v10505 = vld [vmem:[%s10503 + $0x4] sm:$0xf]
  %s10506 = scalar_lea.vmem %s10, 32
  %v10507 = vld [vmem:[%s10506] sm:$0xf]
  %v10508 = vld [vmem:[%s10506 + $0x4] sm:$0xf]
  %s10509 = scalar_lea.vmem %s10, 40
  %v10510 = vld [vmem:[%s10509] sm:$0xf]
  %v10511 = vld [vmem:[%s10509 + $0x4] sm:$0xf]
  %s10512 = scalar_lea.vmem %s10, 48
  %v10513 = vld [vmem:[%s10512] sm:$0xf]
  %v10514 = vld [vmem:[%s10512 + $0x4] sm:$0xf]
  %s10515 = scalar_lea.vmem %s10, 56
  %v10516 = vld [vmem:[%s10515] sm:$0xf]
  %v10517 = vld [vmem:[%s10515 + $0x4] sm:$0xf]
  %s10518 = scalar_lea.vmem %s10, 64
  %v10519 = vld [vmem:[%s10518] sm:$0xf]
  %v10520 = vld [vmem:[%s10518 + $0x4] sm:$0xf]
  %v10521 = vpack.c.bf16 %v10451, %v10446
  %v10522 = vpack.c.bf16 %v10461, %v10456
  %v10523 = vpack.c.bf16 %v10471, %v10466
  %v10524 = vpack.c.bf16 %v10476, %v10476
  %v10525 = vpack.c.bf16 %v10456, %v10451
  %v10526 = vpack.c.bf16 %v10466, %v10461
  %v10527 = vpack.c.bf16 %v10476, %v10471
  %v10530 = vunpack.c.l.b16 %v10498
  %v10531 = vunpack.c.l.b16 %v10499
  %v10532 = vpack.c.b16 %v10531, %v10530
  %vm10534 = vcmask 130048
  %v10536 = vsel %vm10534, %v10525, 0
  %v10539 = vsel %vm10534, %v10526, 0
  %v10542 = vsel %vm10534, %v10527, 0
  %10544 = vmatprep.subr.bf16.mxu0 0
  %10545 = vmatpush1.bf16.msra.mxu0 0
  %10546 = vmatprep.subr.bf16.mxu0 0
  %10547 = vmatpush1.bf16.msra.mxu0 0
  %10548 = vmatprep.subr.bf16.mxu0 0
  %10549 = vmatpush1.bf16.msra.mxu0 0
  %10550 = vmatprep.subr.bf16.mxu0 0
  %10551 = vmatpush1.bf16.msra.mxu0 0
  %10552 = vmatprep.subr.bf16.mxu0 0
  %10553 = vmatpush1.bf16.msra.mxu0 0
  %10554 = vmatprep.subr.bf16.mxu0 0
  %10555 = vmatpush1.bf16.msra.mxu0 0
  %10556 = vmatprep.subr.bf16.mxu0 0
  %10557 = vmatpush1.bf16.msra.mxu0 0
  %10558 = vmatprep.subr.bf16.mxu0 0
  %10559 = vmatpush1.bf16.msra.mxu0 %v10532
  %10560 = vmatprep.subr.bf16.mxu0 0
  %10561 = vmatpush2.bf16.msra.mxu0 0
  %10562 = vmatprep.subr.bf16.mxu0 0
  %10563 = vmatpush2.bf16.msra.mxu0 0
  %10564 = vmatprep.subr.bf16.mxu0 0
  %10565 = vmatpush2.bf16.msra.mxu0 0
  %10566 = vmatprep.subr.bf16.mxu0 0
  %10567 = vmatpush2.bf16.msra.mxu0 0
  %10568 = vmatprep.subr.bf16.mxu0 0
  %10569 = vmatpush2.bf16.msra.mxu0 0
  %10570 = vmatprep.subr.bf16.mxu0 0
  %10571 = vmatpush2.bf16.msra.mxu0 0
  %10572 = vmatprep.subr.bf16.mxu0 0
  %10573 = vmatpush2.bf16.msra.mxu0 0
  %10574 = vmatprep.subr.bf16.mxu0 0
  %10575 = vmatpush2.bf16.msra.mxu0 0
  %10576 = vmatprep.mubr.bf16.mxu0 0
  %10577 = vmatmul.mubr.bf16.gmra.mxu0 %v10536
  %v10578 = vpop.f32.mrf.mxu0
  %v10579 = vpop.f32.mrf.mxu0
  %v10580 = vpop.f32.mrf.mxu0
  %v10581 = vadd.f32 0.0, %v10580
  %v10582 = vpop.f32.mrf.mxu0
  %10583 = vmatprep.mubr.bf16.mxu0 0
  %10584 = vmatmul.mubr.bf16.gmra.mxu0 %v10539
  %v10585 = vpop.f32.mrf.mxu0
  %v10586 = vadd.f32 0.0, %v10585
  %v10587 = vpop.f32.mrf.mxu0
  %v10588 = vpop.f32.mrf.mxu0
  %v10589 = vadd.f32 0.0, %v10588
  %v10590 = vpop.f32.mrf.mxu0
  %10591 = vmatprep.mubr.bf16.mxu0 0
  %10592 = vmatmul.mubr.bf16.gmra.mxu0 %v10542
  %v10593 = vpop.f32.mrf.mxu0
  %v10594 = vadd.f32 0.0, %v10593
  %v10595 = vpop.f32.mrf.mxu0
  %v10596 = vpop.f32.mrf.mxu0
  %v10597 = vpop.f32.mrf.mxu0
  %10598 = vdwg.mxu0
  %v10600 = vshrl.u32 %v10521, 16
  %v10602 = vrot.slane %v10600, 3
  %v10603 = vshll.u32 %v10521, 16
  %v10605 = vrot.slane %v10603, 4
  %v10606 = vor.u32 %v10602, %v10605
  %v10608 = vshrl.u32 %v10522, 16
  %v10610 = vrot.slane %v10608, 3
  %v10611 = vshll.u32 %v10522, 16
  %v10613 = vrot.slane %v10611, 4
  %v10614 = vor.u32 %v10610, %v10613
  %v10615 = vsel %vm3922, %v10606, %v10614
  %v10617 = vshrl.u32 %v10523, 16
  %v10619 = vrot.slane %v10617, 3
  %v10620 = vshll.u32 %v10523, 16
  %v10622 = vrot.slane %v10620, 4
  %v10623 = vor.u32 %v10619, %v10622
  %v10624 = vsel %vm3922, %v10614, %v10623
  %v10626 = vshrl.u32 %v10524, 16
  %v10628 = vrot.slane %v10626, 3
  %v10629 = vshll.u32 %v10524, 16
  %v10631 = vrot.slane %v10629, 4
  %v10632 = vor.u32 %v10628, %v10631
  %v10633 = vsel %vm3922, %v10623, %v10632
  %v10636 = vunpack.c.l.b16 %v10495
  %v10637 = vunpack.c.l.b16 %v10496
  %v10638 = vpack.c.b16 %v10637, %v10636
  %v10641 = vsel %vm10534, %v10615, 0
  %v10644 = vsel %vm10534, %v10624, 0
  %v10647 = vsel %vm10534, %v10633, 0
  %10649 = vmatprep.subr.bf16.mxu0 0
  %10650 = vmatpush1.bf16.msra.mxu0 0
  %10651 = vmatprep.subr.bf16.mxu0 0
  %10652 = vmatpush1.bf16.msra.mxu0 0
  %10653 = vmatprep.subr.bf16.mxu0 0
  %10654 = vmatpush1.bf16.msra.mxu0 0
  %10655 = vmatprep.subr.bf16.mxu0 0
  %10656 = vmatpush1.bf16.msra.mxu0 0
  %10657 = vmatprep.subr.bf16.mxu0 0
  %10658 = vmatpush1.bf16.msra.mxu0 0
  %10659 = vmatprep.subr.bf16.mxu0 0
  %10660 = vmatpush1.bf16.msra.mxu0 0
  %10661 = vmatprep.subr.bf16.mxu0 0
  %10662 = vmatpush1.bf16.msra.mxu0 0
  %10663 = vmatprep.subr.bf16.mxu0 0
  %10664 = vmatpush1.bf16.msra.mxu0 %v10638
  %10665 = vmatprep.subr.bf16.mxu0 0
  %10666 = vmatpush2.bf16.msra.mxu0 0
  %10667 = vmatprep.subr.bf16.mxu0 0
  %10668 = vmatpush2.bf16.msra.mxu0 0
  %10669 = vmatprep.subr.bf16.mxu0 0
  %10670 = vmatpush2.bf16.msra.mxu0 0
  %10671 = vmatprep.subr.bf16.mxu0 0
  %10672 = vmatpush2.bf16.msra.mxu0 0
  %10673 = vmatprep.subr.bf16.mxu0 0
  %10674 = vmatpush2.bf16.msra.mxu0 0
  %10675 = vmatprep.subr.bf16.mxu0 0
  %10676 = vmatpush2.bf16.msra.mxu0 0
  %10677 = vmatprep.subr.bf16.mxu0 0
  %10678 = vmatpush2.bf16.msra.mxu0 0
  %10679 = vmatprep.subr.bf16.mxu0 0
  %10680 = vmatpush2.bf16.msra.mxu0 0
  %10681 = vmatprep.mubr.bf16.mxu0 0
  %10682 = vmatmul.mubr.bf16.gmra.mxu0 %v10641
  %v10683 = vpop.f32.mrf.mxu0
  %v10684 = vpop.f32.mrf.mxu0
  %v10685 = vpop.f32.mrf.mxu0
  %v10686 = vadd.f32 %v10581, %v10685
  %v10687 = vpop.f32.mrf.mxu0
  %10688 = vmatprep.mubr.bf16.mxu0 0
  %10689 = vmatmul.mubr.bf16.gmra.mxu0 %v10644
  %v10690 = vpop.f32.mrf.mxu0
  %v10691 = vadd.f32 %v10586, %v10690
  %v10692 = vpop.f32.mrf.mxu0
  %v10693 = vpop.f32.mrf.mxu0
  %v10694 = vadd.f32 %v10589, %v10693
  %v10695 = vpop.f32.mrf.mxu0
  %10696 = vmatprep.mubr.bf16.mxu0 0
  %10697 = vmatmul.mubr.bf16.gmra.mxu0 %v10647
  %v10698 = vpop.f32.mrf.mxu0
  %v10699 = vadd.f32 %v10594, %v10698
  %v10700 = vpop.f32.mrf.mxu0
  %v10701 = vpop.f32.mrf.mxu0
  %v10702 = vpop.f32.mrf.mxu0
  %10703 = vdwg.mxu0
  %v10704 = vpack.c.bf16 %v10481, %v10481
  %v10705 = vshrl.u32 %v10525, 16
  %v10707 = vshll.u32 %v10525, 16
  %v10709 = vrot.slane %v10707, 1
  %v10710 = vor.u32 %v10705, %v10709
  %v10711 = vshll.u32 %v10526, 16
  %v10713 = vrot.slane %v10711, 1
  %v10714 = vsel %vm4256, %v10710, %v10713
  %v10715 = vshrl.u32 %v10526, 16
  %v10717 = vor.u32 %v10715, %v10713
  %v10718 = vshll.u32 %v10527, 16
  %v10720 = vrot.slane %v10718, 1
  %v10721 = vsel %vm4256, %v10717, %v10720
  %v10722 = vshrl.u32 %v10527, 16
  %v10724 = vor.u32 %v10722, %v10720
  %v10726 = vshll.u32 %v10704, 16
  %v10728 = vrot.slane %v10726, 1
  %v10729 = vsel %vm4256, %v10724, %v10728
  %v10732 = vunpack.c.l.b16 %v10501
  %v10733 = vunpack.c.l.b16 %v10502
  %v10734 = vpack.c.b16 %v10733, %v10732
  %v10737 = vsel %vm10534, %v10714, 0
  %v10740 = vsel %vm10534, %v10721, 0
  %v10743 = vsel %vm10534, %v10729, 0
  %10745 = vmatprep.subr.bf16.mxu0 0
  %10746 = vmatpush1.bf16.msra.mxu0 0
  %10747 = vmatprep.subr.bf16.mxu0 0
  %10748 = vmatpush1.bf16.msra.mxu0 0
  %10749 = vmatprep.subr.bf16.mxu0 0
  %10750 = vmatpush1.bf16.msra.mxu0 0
  %10751 = vmatprep.subr.bf16.mxu0 0
  %10752 = vmatpush1.bf16.msra.mxu0 0
  %10753 = vmatprep.subr.bf16.mxu0 0
  %10754 = vmatpush1.bf16.msra.mxu0 0
  %10755 = vmatprep.subr.bf16.mxu0 0
  %10756 = vmatpush1.bf16.msra.mxu0 0
  %10757 = vmatprep.subr.bf16.mxu0 0
  %10758 = vmatpush1.bf16.msra.mxu0 0
  %10759 = vmatprep.subr.bf16.mxu0 0
  %10760 = vmatpush1.bf16.msra.mxu0 %v10734
  %10761 = vmatprep.subr.bf16.mxu0 0
  %10762 = vmatpush2.bf16.msra.mxu0 0
  %10763 = vmatprep.subr.bf16.mxu0 0
  %10764 = vmatpush2.bf16.msra.mxu0 0
  %10765 = vmatprep.subr.bf16.mxu0 0
  %10766 = vmatpush2.bf16.msra.mxu0 0
  %10767 = vmatprep.subr.bf16.mxu0 0
  %10768 = vmatpush2.bf16.msra.mxu0 0
  %10769 = vmatprep.subr.bf16.mxu0 0
  %10770 = vmatpush2.bf16.msra.mxu0 0
  %10771 = vmatprep.subr.bf16.mxu0 0
  %10772 = vmatpush2.bf16.msra.mxu0 0
  %10773 = vmatprep.subr.bf16.mxu0 0
  %10774 = vmatpush2.bf16.msra.mxu0 0
  %10775 = vmatprep.subr.bf16.mxu0 0
  %10776 = vmatpush2.bf16.msra.mxu0 0
  %10777 = vmatprep.mubr.bf16.mxu0 0
  %10778 = vmatmul.mubr.bf16.gmra.mxu0 %v10737
  %v10779 = vpop.f32.mrf.mxu0
  %v10780 = vpop.f32.mrf.mxu0
  %v10781 = vpop.f32.mrf.mxu0
  %v10782 = vadd.f32 0.0, %v10781
  %v10783 = vpop.f32.mrf.mxu0
  %10784 = vmatprep.mubr.bf16.mxu0 0
  %10785 = vmatmul.mubr.bf16.gmra.mxu0 %v10740
  %v10786 = vpop.f32.mrf.mxu0
  %v10787 = vadd.f32 0.0, %v10786
  %v10788 = vpop.f32.mrf.mxu0
  %v10789 = vpop.f32.mrf.mxu0
  %v10790 = vadd.f32 0.0, %v10789
  %v10791 = vpop.f32.mrf.mxu0
  %10792 = vmatprep.mubr.bf16.mxu0 0
  %10793 = vmatmul.mubr.bf16.gmra.mxu0 %v10743
  %v10794 = vpop.f32.mrf.mxu0
  %v10795 = vadd.f32 0.0, %v10794
  %v10796 = vpop.f32.mrf.mxu0
  %v10797 = vpop.f32.mrf.mxu0
  %v10798 = vpop.f32.mrf.mxu0
  %10799 = vdwg.mxu0
  %v10800 = vadd.f32 %v10686, %v10782
  %v10801 = vadd.f32 %v10691, %v10787
  %v10802 = vadd.f32 %v10694, %v10790
  %v10803 = vadd.f32 %v10699, %v10795
  %v10804 = vrot.slane %v10705, 3
  %v10805 = vrot.slane %v10707, 4
  %v10806 = vor.u32 %v10804, %v10805
  %v10807 = vrot.slane %v10715, 3
  %v10808 = vrot.slane %v10711, 4
  %v10809 = vor.u32 %v10807, %v10808
  %v10810 = vsel %vm3922, %v10806, %v10809
  %v10811 = vrot.slane %v10722, 3
  %v10812 = vrot.slane %v10718, 4
  %v10813 = vor.u32 %v10811, %v10812
  %v10814 = vsel %vm3922, %v10809, %v10813
  %v10815 = vshrl.u32 %v10704, 16
  %v10817 = vrot.slane %v10815, 3
  %v10818 = vrot.slane %v10726, 4
  %v10819 = vor.u32 %v10817, %v10818
  %v10820 = vsel %vm3922, %v10813, %v10819
  %v10823 = vunpack.c.l.b16 %v10504
  %v10824 = vunpack.c.l.b16 %v10505
  %v10825 = vpack.c.b16 %v10824, %v10823
  %v10828 = vsel %vm10534, %v10810, 0
  %v10831 = vsel %vm10534, %v10814, 0
  %v10834 = vsel %vm10534, %v10820, 0
  %10836 = vmatprep.subr.bf16.mxu0 0
  %10837 = vmatpush1.bf16.msra.mxu0 0
  %10838 = vmatprep.subr.bf16.mxu0 0
  %10839 = vmatpush1.bf16.msra.mxu0 0
  %10840 = vmatprep.subr.bf16.mxu0 0
  %10841 = vmatpush1.bf16.msra.mxu0 0
  %10842 = vmatprep.subr.bf16.mxu0 0
  %10843 = vmatpush1.bf16.msra.mxu0 0
  %10844 = vmatprep.subr.bf16.mxu0 0
  %10845 = vmatpush1.bf16.msra.mxu0 0
  %10846 = vmatprep.subr.bf16.mxu0 0
  %10847 = vmatpush1.bf16.msra.mxu0 0
  %10848 = vmatprep.subr.bf16.mxu0 0
  %10849 = vmatpush1.bf16.msra.mxu0 0
  %10850 = vmatprep.subr.bf16.mxu0 0
  %10851 = vmatpush1.bf16.msra.mxu0 %v10825
  %10852 = vmatprep.subr.bf16.mxu0 0
  %10853 = vmatpush2.bf16.msra.mxu0 0
  %10854 = vmatprep.subr.bf16.mxu0 0
  %10855 = vmatpush2.bf16.msra.mxu0 0
  %10856 = vmatprep.subr.bf16.mxu0 0
  %10857 = vmatpush2.bf16.msra.mxu0 0
  %10858 = vmatprep.subr.bf16.mxu0 0
  %10859 = vmatpush2.bf16.msra.mxu0 0
  %10860 = vmatprep.subr.bf16.mxu0 0
  %10861 = vmatpush2.bf16.msra.mxu0 0
  %10862 = vmatprep.subr.bf16.mxu0 0
  %10863 = vmatpush2.bf16.msra.mxu0 0
  %10864 = vmatprep.subr.bf16.mxu0 0
  %10865 = vmatpush2.bf16.msra.mxu0 0
  %10866 = vmatprep.subr.bf16.mxu0 0
  %10867 = vmatpush2.bf16.msra.mxu0 0
  %10868 = vmatprep.mubr.bf16.mxu0 0
  %10869 = vmatmul.mubr.bf16.gmra.mxu0 %v10828
  %v10870 = vpop.f32.mrf.mxu0
  %v10871 = vpop.f32.mrf.mxu0
  %v10872 = vpop.f32.mrf.mxu0
  %v10873 = vadd.f32 0.0, %v10872
  %v10874 = vpop.f32.mrf.mxu0
  %10875 = vmatprep.mubr.bf16.mxu0 0
  %10876 = vmatmul.mubr.bf16.gmra.mxu0 %v10831
  %v10877 = vpop.f32.mrf.mxu0
  %v10878 = vadd.f32 0.0, %v10877
  %v10879 = vpop.f32.mrf.mxu0
  %v10880 = vpop.f32.mrf.mxu0
  %v10881 = vadd.f32 0.0, %v10880
  %v10882 = vpop.f32.mrf.mxu0
  %10883 = vmatprep.mubr.bf16.mxu0 0
  %10884 = vmatmul.mubr.bf16.gmra.mxu0 %v10834
  %v10885 = vpop.f32.mrf.mxu0
  %v10886 = vadd.f32 0.0, %v10885
  %v10887 = vpop.f32.mrf.mxu0
  %v10888 = vpop.f32.mrf.mxu0
  %v10889 = vpop.f32.mrf.mxu0
  %10890 = vdwg.mxu0
  %v10891 = vadd.f32 %v10800, %v10873
  %v10892 = vadd.f32 %v10801, %v10878
  %v10893 = vadd.f32 %v10802, %v10881
  %v10894 = vadd.f32 %v10803, %v10886
  %v10895 = vpack.c.bf16 %v10481, %v10476
  %v10898 = vunpack.c.l.b16 %v10507
  %v10899 = vunpack.c.l.b16 %v10508
  %v10900 = vpack.c.b16 %v10899, %v10898
  %v10902 = vsel %vm10534, %v10522, 0
  %v10904 = vsel %vm10534, %v10523, 0
  %v10907 = vsel %vm10534, %v10895, 0
  %10909 = vmatprep.subr.bf16.mxu0 0
  %10910 = vmatpush1.bf16.msra.mxu0 0
  %10911 = vmatprep.subr.bf16.mxu0 0
  %10912 = vmatpush1.bf16.msra.mxu0 0
  %10913 = vmatprep.subr.bf16.mxu0 0
  %10914 = vmatpush1.bf16.msra.mxu0 0
  %10915 = vmatprep.subr.bf16.mxu0 0
  %10916 = vmatpush1.bf16.msra.mxu0 0
  %10917 = vmatprep.subr.bf16.mxu0 0
  %10918 = vmatpush1.bf16.msra.mxu0 0
  %10919 = vmatprep.subr.bf16.mxu0 0
  %10920 = vmatpush1.bf16.msra.mxu0 0
  %10921 = vmatprep.subr.bf16.mxu0 0
  %10922 = vmatpush1.bf16.msra.mxu0 0
  %10923 = vmatprep.subr.bf16.mxu0 0
  %10924 = vmatpush1.bf16.msra.mxu0 %v10900
  %10925 = vmatprep.subr.bf16.mxu0 0
  %10926 = vmatpush2.bf16.msra.mxu0 0
  %10927 = vmatprep.subr.bf16.mxu0 0
  %10928 = vmatpush2.bf16.msra.mxu0 0
  %10929 = vmatprep.subr.bf16.mxu0 0
  %10930 = vmatpush2.bf16.msra.mxu0 0
  %10931 = vmatprep.subr.bf16.mxu0 0
  %10932 = vmatpush2.bf16.msra.mxu0 0
  %10933 = vmatprep.subr.bf16.mxu0 0
  %10934 = vmatpush2.bf16.msra.mxu0 0
  %10935 = vmatprep.subr.bf16.mxu0 0
  %10936 = vmatpush2.bf16.msra.mxu0 0
  %10937 = vmatprep.subr.bf16.mxu0 0
  %10938 = vmatpush2.bf16.msra.mxu0 0
  %10939 = vmatprep.subr.bf16.mxu0 0
  %10940 = vmatpush2.bf16.msra.mxu0 0
  %10941 = vmatprep.mubr.bf16.mxu0 0
  %10942 = vmatmul.mubr.bf16.gmra.mxu0 %v10902
  %v10943 = vpop.f32.mrf.mxu0
  %v10944 = vpop.f32.mrf.mxu0
  %v10945 = vpop.f32.mrf.mxu0
  %v10946 = vadd.f32 0.0, %v10945
  %v10947 = vpop.f32.mrf.mxu0
  %10948 = vmatprep.mubr.bf16.mxu0 0
  %10949 = vmatmul.mubr.bf16.gmra.mxu0 %v10904
  %v10950 = vpop.f32.mrf.mxu0
  %v10951 = vadd.f32 0.0, %v10950
  %v10952 = vpop.f32.mrf.mxu0
  %v10953 = vpop.f32.mrf.mxu0
  %v10954 = vadd.f32 0.0, %v10953
  %v10955 = vpop.f32.mrf.mxu0
  %10956 = vmatprep.mubr.bf16.mxu0 0
  %10957 = vmatmul.mubr.bf16.gmra.mxu0 %v10907
  %v10958 = vpop.f32.mrf.mxu0
  %v10959 = vadd.f32 0.0, %v10958
  %v10960 = vpop.f32.mrf.mxu0
  %v10961 = vpop.f32.mrf.mxu0
  %v10962 = vpop.f32.mrf.mxu0
  %10963 = vdwg.mxu0
  %v10964 = vadd.f32 %v10891, %v10946
  %v10965 = vadd.f32 %v10892, %v10951
  %v10966 = vadd.f32 %v10893, %v10954
  %v10967 = vadd.f32 %v10894, %v10959
  %v10968 = vpack.c.bf16 %v10486, %v10486
  %v10969 = vrot.slane %v10611, 1
  %v10970 = vor.u32 %v10608, %v10969
  %v10971 = vrot.slane %v10620, 1
  %v10972 = vsel %vm4256, %v10970, %v10971
  %v10973 = vor.u32 %v10617, %v10971
  %v10974 = vshll.u32 %v10895, 16
  %v10976 = vrot.slane %v10974, 1
  %v10977 = vsel %vm4256, %v10973, %v10976
  %v10978 = vshrl.u32 %v10895, 16
  %v10980 = vor.u32 %v10978, %v10976
  %v10982 = vshll.u32 %v10968, 16
  %v10984 = vrot.slane %v10982, 1
  %v10985 = vsel %vm4256, %v10980, %v10984
  %v10988 = vunpack.c.l.b16 %v10510
  %v10989 = vunpack.c.l.b16 %v10511
  %v10990 = vpack.c.b16 %v10989, %v10988
  %v10993 = vsel %vm10534, %v10972, 0
  %v10996 = vsel %vm10534, %v10977, 0
  %v10999 = vsel %vm10534, %v10985, 0
  %11001 = vmatprep.subr.bf16.mxu0 0
  %11002 = vmatpush1.bf16.msra.mxu0 0
  %11003 = vmatprep.subr.bf16.mxu0 0
  %11004 = vmatpush1.bf16.msra.mxu0 0
  %11005 = vmatprep.subr.bf16.mxu0 0
  %11006 = vmatpush1.bf16.msra.mxu0 0
  %11007 = vmatprep.subr.bf16.mxu0 0
  %11008 = vmatpush1.bf16.msra.mxu0 0
  %11009 = vmatprep.subr.bf16.mxu0 0
  %11010 = vmatpush1.bf16.msra.mxu0 0
  %11011 = vmatprep.subr.bf16.mxu0 0
  %11012 = vmatpush1.bf16.msra.mxu0 0
  %11013 = vmatprep.subr.bf16.mxu0 0
  %11014 = vmatpush1.bf16.msra.mxu0 0
  %11015 = vmatprep.subr.bf16.mxu0 0
  %11016 = vmatpush1.bf16.msra.mxu0 %v10990
  %11017 = vmatprep.subr.bf16.mxu0 0
  %11018 = vmatpush2.bf16.msra.mxu0 0
  %11019 = vmatprep.subr.bf16.mxu0 0
  %11020 = vmatpush2.bf16.msra.mxu0 0
  %11021 = vmatprep.subr.bf16.mxu0 0
  %11022 = vmatpush2.bf16.msra.mxu0 0
  %11023 = vmatprep.subr.bf16.mxu0 0
  %11024 = vmatpush2.bf16.msra.mxu0 0
  %11025 = vmatprep.subr.bf16.mxu0 0
  %11026 = vmatpush2.bf16.msra.mxu0 0
  %11027 = vmatprep.subr.bf16.mxu0 0
  %11028 = vmatpush2.bf16.msra.mxu0 0
  %11029 = vmatprep.subr.bf16.mxu0 0
  %11030 = vmatpush2.bf16.msra.mxu0 0
  %11031 = vmatprep.subr.bf16.mxu0 0
  %11032 = vmatpush2.bf16.msra.mxu0 0
  %11033 = vmatprep.mubr.bf16.mxu0 0
  %11034 = vmatmul.mubr.bf16.gmra.mxu0 %v10993
  %v11035 = vpop.f32.mrf.mxu0
  %v11036 = vpop.f32.mrf.mxu0
  %v11037 = vpop.f32.mrf.mxu0
  %v11038 = vadd.f32 0.0, %v11037
  %v11039 = vpop.f32.mrf.mxu0
  %11040 = vmatprep.mubr.bf16.mxu0 0
  %11041 = vmatmul.mubr.bf16.gmra.mxu0 %v10996
  %v11042 = vpop.f32.mrf.mxu0
  %v11043 = vadd.f32 0.0, %v11042
  %v11044 = vpop.f32.mrf.mxu0
  %v11045 = vpop.f32.mrf.mxu0
  %v11046 = vadd.f32 0.0, %v11045
  %v11047 = vpop.f32.mrf.mxu0
  %11048 = vmatprep.mubr.bf16.mxu0 0
  %11049 = vmatmul.mubr.bf16.gmra.mxu0 %v10999
  %v11050 = vpop.f32.mrf.mxu0
  %v11051 = vadd.f32 0.0, %v11050
  %v11052 = vpop.f32.mrf.mxu0
  %v11053 = vpop.f32.mrf.mxu0
  %v11054 = vpop.f32.mrf.mxu0
  %11055 = vdwg.mxu0
  %v11056 = vadd.f32 %v10964, %v11038
  %v11057 = vadd.f32 %v10965, %v11043
  %v11058 = vadd.f32 %v10966, %v11046
  %v11059 = vadd.f32 %v10967, %v11051
  %v11060 = vrot.slane %v10978, 3
  %v11061 = vrot.slane %v10974, 4
  %v11062 = vor.u32 %v11060, %v11061
  %v11063 = vsel %vm3922, %v10623, %v11062
  %v11064 = vshrl.u32 %v10968, 16
  %v11066 = vrot.slane %v11064, 3
  %v11067 = vrot.slane %v10982, 4
  %v11068 = vor.u32 %v11066, %v11067
  %v11069 = vsel %vm3922, %v11062, %v11068
  %v11072 = vunpack.c.l.b16 %v10513
  %v11073 = vunpack.c.l.b16 %v10514
  %v11074 = vpack.c.b16 %v11073, %v11072
  %v11077 = vsel %vm10534, %v11063, 0
  %v11080 = vsel %vm10534, %v11069, 0
  %11082 = vmatprep.subr.bf16.mxu0 0
  %11083 = vmatpush1.bf16.msra.mxu0 0
  %11084 = vmatprep.subr.bf16.mxu0 0
  %11085 = vmatpush1.bf16.msra.mxu0 0
  %11086 = vmatprep.subr.bf16.mxu0 0
  %11087 = vmatpush1.bf16.msra.mxu0 0
  %11088 = vmatprep.subr.bf16.mxu0 0
  %11089 = vmatpush1.bf16.msra.mxu0 0
  %11090 = vmatprep.subr.bf16.mxu0 0
  %11091 = vmatpush1.bf16.msra.mxu0 0
  %11092 = vmatprep.subr.bf16.mxu0 0
  %11093 = vmatpush1.bf16.msra.mxu0 0
  %11094 = vmatprep.subr.bf16.mxu0 0
  %11095 = vmatpush1.bf16.msra.mxu0 0
  %11096 = vmatprep.subr.bf16.mxu0 0
  %11097 = vmatpush1.bf16.msra.mxu0 %v11074
  %11098 = vmatprep.subr.bf16.mxu0 0
  %11099 = vmatpush2.bf16.msra.mxu0 0
  %11100 = vmatprep.subr.bf16.mxu0 0
  %11101 = vmatpush2.bf16.msra.mxu0 0
  %11102 = vmatprep.subr.bf16.mxu0 0
  %11103 = vmatpush2.bf16.msra.mxu0 0
  %11104 = vmatprep.subr.bf16.mxu0 0
  %11105 = vmatpush2.bf16.msra.mxu0 0
  %11106 = vmatprep.subr.bf16.mxu0 0
  %11107 = vmatpush2.bf16.msra.mxu0 0
  %11108 = vmatprep.subr.bf16.mxu0 0
  %11109 = vmatpush2.bf16.msra.mxu0 0
  %11110 = vmatprep.subr.bf16.mxu0 0
  %11111 = vmatpush2.bf16.msra.mxu0 0
  %11112 = vmatprep.subr.bf16.mxu0 0
  %11113 = vmatpush2.bf16.msra.mxu0 0
  %11114 = vmatprep.mubr.bf16.mxu0 0
  %11115 = vmatmul.mubr.bf16.gmra.mxu0 %v10644
  %v11116 = vpop.f32.mrf.mxu0
  %v11117 = vpop.f32.mrf.mxu0
  %v11118 = vpop.f32.mrf.mxu0
  %v11119 = vadd.f32 0.0, %v11118
  %v11120 = vpop.f32.mrf.mxu0
  %11121 = vmatprep.mubr.bf16.mxu0 0
  %11122 = vmatmul.mubr.bf16.gmra.mxu0 %v11077
  %v11123 = vpop.f32.mrf.mxu0
  %v11124 = vadd.f32 0.0, %v11123
  %v11125 = vpop.f32.mrf.mxu0
  %v11126 = vpop.f32.mrf.mxu0
  %v11127 = vadd.f32 0.0, %v11126
  %v11128 = vpop.f32.mrf.mxu0
  %11129 = vmatprep.mubr.bf16.mxu0 0
  %11130 = vmatmul.mubr.bf16.gmra.mxu0 %v11080
  %v11131 = vpop.f32.mrf.mxu0
  %v11132 = vadd.f32 0.0, %v11131
  %v11133 = vpop.f32.mrf.mxu0
  %v11134 = vpop.f32.mrf.mxu0
  %v11135 = vpop.f32.mrf.mxu0
  %11136 = vdwg.mxu0
  %v11137 = vadd.f32 %v11056, %v11119
  %v11138 = vadd.f32 %v11057, %v11124
  %v11139 = vadd.f32 %v11058, %v11127
  %v11140 = vadd.f32 %v11059, %v11132
  %v11141 = vpack.c.bf16 %v10486, %v10481
  %v11144 = vunpack.c.l.b16 %v10516
  %v11145 = vunpack.c.l.b16 %v10517
  %v11146 = vpack.c.b16 %v11145, %v11144
  %v11149 = vsel %vm10534, %v11141, 0
  %11151 = vmatprep.subr.bf16.mxu0 0
  %11152 = vmatpush1.bf16.msra.mxu0 0
  %11153 = vmatprep.subr.bf16.mxu0 0
  %11154 = vmatpush1.bf16.msra.mxu0 0
  %11155 = vmatprep.subr.bf16.mxu0 0
  %11156 = vmatpush1.bf16.msra.mxu0 0
  %11157 = vmatprep.subr.bf16.mxu0 0
  %11158 = vmatpush1.bf16.msra.mxu0 0
  %11159 = vmatprep.subr.bf16.mxu0 0
  %11160 = vmatpush1.bf16.msra.mxu0 0
  %11161 = vmatprep.subr.bf16.mxu0 0
  %11162 = vmatpush1.bf16.msra.mxu0 0
  %11163 = vmatprep.subr.bf16.mxu0 0
  %11164 = vmatpush1.bf16.msra.mxu0 0
  %11165 = vmatprep.subr.bf16.mxu0 0
  %11166 = vmatpush1.bf16.msra.mxu0 %v11146
  %11167 = vmatprep.subr.bf16.mxu0 0
  %11168 = vmatpush2.bf16.msra.mxu0 0
  %11169 = vmatprep.subr.bf16.mxu0 0
  %11170 = vmatpush2.bf16.msra.mxu0 0
  %11171 = vmatprep.subr.bf16.mxu0 0
  %11172 = vmatpush2.bf16.msra.mxu0 0
  %11173 = vmatprep.subr.bf16.mxu0 0
  %11174 = vmatpush2.bf16.msra.mxu0 0
  %11175 = vmatprep.subr.bf16.mxu0 0
  %11176 = vmatpush2.bf16.msra.mxu0 0
  %11177 = vmatprep.subr.bf16.mxu0 0
  %11178 = vmatpush2.bf16.msra.mxu0 0
  %11179 = vmatprep.subr.bf16.mxu0 0
  %11180 = vmatpush2.bf16.msra.mxu0 0
  %11181 = vmatprep.subr.bf16.mxu0 0
  %11182 = vmatpush2.bf16.msra.mxu0 0
  %11183 = vmatprep.mubr.bf16.mxu0 0
  %11184 = vmatmul.mubr.bf16.gmra.mxu0 %v10539
  %v11185 = vpop.f32.mrf.mxu0
  %v11186 = vpop.f32.mrf.mxu0
  %v11187 = vpop.f32.mrf.mxu0
  %v11188 = vadd.f32 0.0, %v11187
  %v11189 = vpop.f32.mrf.mxu0
  %11190 = vmatprep.mubr.bf16.mxu0 0
  %11191 = vmatmul.mubr.bf16.gmra.mxu0 %v10542
  %v11192 = vpop.f32.mrf.mxu0
  %v11193 = vadd.f32 0.0, %v11192
  %v11194 = vpop.f32.mrf.mxu0
  %v11195 = vpop.f32.mrf.mxu0
  %v11196 = vadd.f32 0.0, %v11195
  %v11197 = vpop.f32.mrf.mxu0
  %11198 = vmatprep.mubr.bf16.mxu0 0
  %11199 = vmatmul.mubr.bf16.gmra.mxu0 %v11149
  %v11200 = vpop.f32.mrf.mxu0
  %v11201 = vadd.f32 0.0, %v11200
  %v11202 = vpop.f32.mrf.mxu0
  %v11203 = vpop.f32.mrf.mxu0
  %v11204 = vpop.f32.mrf.mxu0
  %11205 = vdwg.mxu0
  %v11206 = vadd.f32 %v11137, %v11188
  %v11207 = vadd.f32 %v11138, %v11193
  %v11208 = vadd.f32 %v11139, %v11196
  %v11209 = vadd.f32 %v11140, %v11201
  %v11210 = vpack.c.bf16 %v10491, %v10491
  %v11211 = vshll.u32 %v11141, 16
  %v11213 = vrot.slane %v11211, 1
  %v11214 = vsel %vm4256, %v10724, %v11213
  %v11215 = vshrl.u32 %v11141, 16
  %v11217 = vor.u32 %v11215, %v11213
  %v11219 = vshll.u32 %v11210, 16
  %v11221 = vrot.slane %v11219, 1
  %v11222 = vsel %vm4256, %v11217, %v11221
  %v11225 = vunpack.c.l.b16 %v10519
  %v11226 = vunpack.c.l.b16 %v10520
  %v11227 = vpack.c.b16 %v11226, %v11225
  %v11230 = vsel %vm10534, %v11214, 0
  %v11233 = vsel %vm10534, %v11222, 0
  %11235 = vmatprep.subr.bf16.mxu0 0
  %11236 = vmatpush1.bf16.msra.mxu0 0
  %11237 = vmatprep.subr.bf16.mxu0 0
  %11238 = vmatpush1.bf16.msra.mxu0 0
  %11239 = vmatprep.subr.bf16.mxu0 0
  %11240 = vmatpush1.bf16.msra.mxu0 0
  %11241 = vmatprep.subr.bf16.mxu0 0
  %11242 = vmatpush1.bf16.msra.mxu0 0
  %11243 = vmatprep.subr.bf16.mxu0 0
  %11244 = vmatpush1.bf16.msra.mxu0 0
  %11245 = vmatprep.subr.bf16.mxu0 0
  %11246 = vmatpush1.bf16.msra.mxu0 0
  %11247 = vmatprep.subr.bf16.mxu0 0
  %11248 = vmatpush1.bf16.msra.mxu0 0
  %11249 = vmatprep.subr.bf16.mxu0 0
  %11250 = vmatpush1.bf16.msra.mxu0 %v11227
  %11251 = vmatprep.subr.bf16.mxu0 0
  %11252 = vmatpush2.bf16.msra.mxu0 0
  %11253 = vmatprep.subr.bf16.mxu0 0
  %11254 = vmatpush2.bf16.msra.mxu0 0
  %11255 = vmatprep.subr.bf16.mxu0 0
  %11256 = vmatpush2.bf16.msra.mxu0 0
  %11257 = vmatprep.subr.bf16.mxu0 0
  %11258 = vmatpush2.bf16.msra.mxu0 0
  %11259 = vmatprep.subr.bf16.mxu0 0
  %11260 = vmatpush2.bf16.msra.mxu0 0
  %11261 = vmatprep.subr.bf16.mxu0 0
  %11262 = vmatpush2.bf16.msra.mxu0 0
  %11263 = vmatprep.subr.bf16.mxu0 0
  %11264 = vmatpush2.bf16.msra.mxu0 0
  %11265 = vmatprep.subr.bf16.mxu0 0
  %11266 = vmatpush2.bf16.msra.mxu0 0
  %11267 = vmatprep.mubr.bf16.mxu0 0
  %11268 = vmatmul.mubr.bf16.gmra.mxu0 %v10740
  %v11269 = vpop.f32.mrf.mxu0
  %v11270 = vpop.f32.mrf.mxu0
  %v11271 = vpop.f32.mrf.mxu0
  %v11272 = vadd.f32 0.0, %v11271
  %v11273 = vpop.f32.mrf.mxu0
  %11274 = vmatprep.mubr.bf16.mxu0 0
  %11275 = vmatmul.mubr.bf16.gmra.mxu0 %v11230
  %v11276 = vpop.f32.mrf.mxu0
  %v11277 = vadd.f32 0.0, %v11276
  %v11278 = vpop.f32.mrf.mxu0
  %v11279 = vpop.f32.mrf.mxu0
  %v11280 = vadd.f32 0.0, %v11279
  %v11281 = vpop.f32.mrf.mxu0
  %11282 = vmatprep.mubr.bf16.mxu0 0
  %11283 = vmatmul.mubr.bf16.gmra.mxu0 %v11233
  %v11284 = vpop.f32.mrf.mxu0
  %v11285 = vadd.f32 0.0, %v11284
  %v11286 = vpop.f32.mrf.mxu0
  %v11287 = vpop.f32.mrf.mxu0
  %v11288 = vpop.f32.mrf.mxu0
  %11289 = vdwg.mxu0
  %v11290 = vadd.f32 %v11206, %v11272
  %v11291 = vadd.f32 %v11207, %v11277
  %v11292 = vadd.f32 %v11208, %v11280
  %v11293 = vadd.f32 %v11209, %v11285
  %v11295 = vlaneseq
  %v11296 = vshrl.u32 %v11295, 7
  %v11297 = vsub.s32 0, %v11296
  %v11298 = vrot.slane %v10494, %v11297
  %v11300 = vadd.f32 %v11290, %v11298
  %v11301 = vadd.f32 %v11291, %v11298
  %v11302 = vadd.f32 %v11292, %v11298
  %v11303 = vadd.f32 %v11293, %v11298
  %v11304 = vmax.f32 %v11300, 0.0
  %v11305 = vmax.f32 %v11301, 0.0
  %v11306 = vmax.f32 %v11302, 0.0
  %v11307 = vmax.f32 %v11303, 0.0
  %v11308 = vadd.f32 %v11304, %v10461
  %v11309 = vadd.f32 %v11305, %v10466
  %v11310 = vadd.f32 %v11306, %v10471
  %v11311 = vadd.f32 %v11307, %v10476
  %v11312 = vmax.f32 %v11308, %v11309
  %v11313 = vmax.f32 %v11310, %v11311
  %v11314 = vld [vmem:[%s12] sm:$0xff]
  %v11315 = vld [vmem:[%s12 + $0x8] sm:$0xff]
  %v11316 = vld [vmem:[%s12 + $0x10] sm:$0xff]
  %v11317 = vld [vmem:[%s12 + $0x18] sm:$0xff]
  %v11318 = vld [vmem:[%s12 + $0x20] sm:$0xff]
  %v11319 = vld [vmem:[%s12 + $0x28] sm:$0xff]
  %v11320 = vld [vmem:[%s12 + $0x30] sm:$0xff]
  %v11321 = vld [vmem:[%s12 + $0x38] sm:$0xff]
  %v11323 = vrot.slane %v11312, 1
  %v11325 = vmax.f32 %v11312, %v11323
  %v11327 = vrot.slane %v11325, 3
  %v11328 = vsel %vm10534, %v11327, 0
  %11330 = vmatprep.subr.mxu0 0.0
  %11331 = vmatpush1.msra.mxu0 0.0
  %11332 = vmatprep.subr.mxu0 0.0
  %11333 = vmatpush1.msra.mxu0 0.0
  %11334 = vmatprep.subr.mxu0 0.0
  %11335 = vmatpush1.msra.mxu0 0.0
  %11336 = vmatprep.subr.mxu0 0.0
  %11337 = vmatpush1.msra.mxu0 0.0
  %11338 = vmatprep.subr.mxu0 0.0
  %11339 = vmatpush1.msra.mxu0 0.0
  %11340 = vmatprep.subr.mxu0 0.0
  %11341 = vmatpush1.msra.mxu0 0.0
  %11342 = vmatprep.subr.mxu0 0.0
  %11343 = vmatpush1.msra.mxu0 0.0
  %11344 = vmatprep.subr.mxu0 0.0
  %11345 = vmatpush1.msra.mxu0 0.0
  %11346 = vmatprep.subr.mxu0 0.0
  %11347 = vmatpush1.msra.mxu0 0.0
  %11348 = vmatprep.subr.mxu0 0.0
  %11349 = vmatpush1.msra.mxu0 0.0
  %11350 = vmatprep.subr.mxu0 0.0
  %11351 = vmatpush1.msra.mxu0 0.0
  %11352 = vmatprep.subr.mxu0 0.0
  %11353 = vmatpush1.msra.mxu0 0.0
  %11354 = vmatprep.subr.mxu0 0.0
  %11355 = vmatpush1.msra.mxu0 0.0
  %11356 = vmatprep.subr.mxu0 0.0
  %11357 = vmatpush1.msra.mxu0 0.0
  %11358 = vmatprep.subr.mxu0 0.0
  %11359 = vmatpush1.msra.mxu0 %v11317
  %11360 = vmatprep.subr.mxu0 0.0
  %11361 = vmatpush1.msra.mxu0 %v11316
  %11362 = vmatprep.subr.mxu0 0.0
  %11363 = vmatpush2.msra.mxu0 0.0
  %11364 = vmatprep.subr.mxu0 0.0
  %11365 = vmatpush2.msra.mxu0 0.0
  %11366 = vmatprep.subr.mxu0 0.0
  %11367 = vmatpush2.msra.mxu0 0.0
  %11368 = vmatprep.subr.mxu0 0.0
  %11369 = vmatpush2.msra.mxu0 0.0
  %11370 = vmatprep.subr.mxu0 0.0
  %11371 = vmatpush2.msra.mxu0 0.0
  %11372 = vmatprep.subr.mxu0 0.0
  %11373 = vmatpush2.msra.mxu0 0.0
  %11374 = vmatprep.subr.mxu0 0.0
  %11375 = vmatpush2.msra.mxu0 0.0
  %11376 = vmatprep.subr.mxu0 0.0
  %11377 = vmatpush2.msra.mxu0 0.0
  %11378 = vmatprep.subr.mxu0 0.0
  %11379 = vmatpush2.msra.mxu0 0.0
  %11380 = vmatprep.subr.mxu0 0.0
  %11381 = vmatpush2.msra.mxu0 0.0
  %11382 = vmatprep.subr.mxu0 0.0
  %11383 = vmatpush2.msra.mxu0 0.0
  %11384 = vmatprep.subr.mxu0 0.0
  %11385 = vmatpush2.msra.mxu0 0.0
  %11386 = vmatprep.subr.mxu0 0.0
  %11387 = vmatpush2.msra.mxu0 0.0
  %11388 = vmatprep.subr.mxu0 0.0
  %11389 = vmatpush2.msra.mxu0 0.0
  %11390 = vmatprep.subr.mxu0 0.0
  %11391 = vmatpush2.msra.mxu0 0.0
  %11392 = vmatprep.subr.mxu0 0.0
  %11393 = vmatpush2.msra.mxu0 0.0
  %11394 = vmatprep.mubr.f32.mxu0 0.0
  %11395 = vmatmul.mubr.f32.gmra.mxu0 %v11328
  %v11396 = vpop.f32.mrf.mxu0
  %v11397 = vadd.f32 0.0, %v11396
  %v11398 = vpop.f32.mrf.mxu0
  %11399 = vdwg.mxu0
  %v11400 = vrot.slane %v11325, 1
  %v11401 = vsel %vm10534, %v11400, 0
  %11403 = vmatprep.subr.mxu0 0.0
  %11404 = vmatpush1.msra.mxu0 0.0
  %11405 = vmatprep.subr.mxu0 0.0
  %11406 = vmatpush1.msra.mxu0 0.0
  %11407 = vmatprep.subr.mxu0 0.0
  %11408 = vmatpush1.msra.mxu0 0.0
  %11409 = vmatprep.subr.mxu0 0.0
  %11410 = vmatpush1.msra.mxu0 0.0
  %11411 = vmatprep.subr.mxu0 0.0
  %11412 = vmatpush1.msra.mxu0 0.0
  %11413 = vmatprep.subr.mxu0 0.0
  %11414 = vmatpush1.msra.mxu0 0.0
  %11415 = vmatprep.subr.mxu0 0.0
  %11416 = vmatpush1.msra.mxu0 0.0
  %11417 = vmatprep.subr.mxu0 0.0
  %11418 = vmatpush1.msra.mxu0 0.0
  %11419 = vmatprep.subr.mxu0 0.0
  %11420 = vmatpush1.msra.mxu0 0.0
  %11421 = vmatprep.subr.mxu0 0.0
  %11422 = vmatpush1.msra.mxu0 0.0
  %11423 = vmatprep.subr.mxu0 0.0
  %11424 = vmatpush1.msra.mxu0 0.0
  %11425 = vmatprep.subr.mxu0 0.0
  %11426 = vmatpush1.msra.mxu0 0.0
  %11427 = vmatprep.subr.mxu0 0.0
  %11428 = vmatpush1.msra.mxu0 0.0
  %11429 = vmatprep.subr.mxu0 0.0
  %11430 = vmatpush1.msra.mxu0 0.0
  %11431 = vmatprep.subr.mxu0 0.0
  %11432 = vmatpush1.msra.mxu0 %v11315
  %11433 = vmatprep.subr.mxu0 0.0
  %11434 = vmatpush1.msra.mxu0 %v11314
  %11435 = vmatprep.subr.mxu0 0.0
  %11436 = vmatpush2.msra.mxu0 0.0
  %11437 = vmatprep.subr.mxu0 0.0
  %11438 = vmatpush2.msra.mxu0 0.0
  %11439 = vmatprep.subr.mxu0 0.0
  %11440 = vmatpush2.msra.mxu0 0.0
  %11441 = vmatprep.subr.mxu0 0.0
  %11442 = vmatpush2.msra.mxu0 0.0
  %11443 = vmatprep.subr.mxu0 0.0
  %11444 = vmatpush2.msra.mxu0 0.0
  %11445 = vmatprep.subr.mxu0 0.0
  %11446 = vmatpush2.msra.mxu0 0.0
  %11447 = vmatprep.subr.mxu0 0.0
  %11448 = vmatpush2.msra.mxu0 0.0
  %11449 = vmatprep.subr.mxu0 0.0
  %11450 = vmatpush2.msra.mxu0 0.0
  %11451 = vmatprep.subr.mxu0 0.0
  %11452 = vmatpush2.msra.mxu0 0.0
  %11453 = vmatprep.subr.mxu0 0.0
  %11454 = vmatpush2.msra.mxu0 0.0
  %11455 = vmatprep.subr.mxu0 0.0
  %11456 = vmatpush2.msra.mxu0 0.0
  %11457 = vmatprep.subr.mxu0 0.0
  %11458 = vmatpush2.msra.mxu0 0.0
  %11459 = vmatprep.subr.mxu0 0.0
  %11460 = vmatpush2.msra.mxu0 0.0
  %11461 = vmatprep.subr.mxu0 0.0
  %11462 = vmatpush2.msra.mxu0 0.0
  %11463 = vmatprep.subr.mxu0 0.0
  %11464 = vmatpush2.msra.mxu0 0.0
  %11465 = vmatprep.subr.mxu0 0.0
  %11466 = vmatpush2.msra.mxu0 0.0
  %11467 = vmatprep.mubr.f32.mxu0 0.0
  %11468 = vmatmul.mubr.f32.gmra.mxu0 %v11401
  %v11469 = vpop.f32.mrf.mxu0
  %v11470 = vadd.f32 %v11397, %v11469
  %v11471 = vpop.f32.mrf.mxu0
  %11472 = vdwg.mxu0
  %v11474 = vrot.slane %v11313, 1
  %v11476 = vmax.f32 %v11313, %v11474
  %v11478 = vrot.slane %v11476, 1
  %v11479 = vsel %vm10534, %v11478, 0
  %11481 = vmatprep.subr.mxu0 0.0
  %11482 = vmatpush1.msra.mxu0 0.0
  %11483 = vmatprep.subr.mxu0 0.0
  %11484 = vmatpush1.msra.mxu0 0.0
  %11485 = vmatprep.subr.mxu0 0.0
  %11486 = vmatpush1.msra.mxu0 0.0
  %11487 = vmatprep.subr.mxu0 0.0
  %11488 = vmatpush1.msra.mxu0 0.0
  %11489 = vmatprep.subr.mxu0 0.0
  %11490 = vmatpush1.msra.mxu0 0.0
  %11491 = vmatprep.subr.mxu0 0.0
  %11492 = vmatpush1.msra.mxu0 0.0
  %11493 = vmatprep.subr.mxu0 0.0
  %11494 = vmatpush1.msra.mxu0 0.0
  %11495 = vmatprep.subr.mxu0 0.0
  %11496 = vmatpush1.msra.mxu0 0.0
  %11497 = vmatprep.subr.mxu0 0.0
  %11498 = vmatpush1.msra.mxu0 0.0
  %11499 = vmatprep.subr.mxu0 0.0
  %11500 = vmatpush1.msra.mxu0 0.0
  %11501 = vmatprep.subr.mxu0 0.0
  %11502 = vmatpush1.msra.mxu0 0.0
  %11503 = vmatprep.subr.mxu0 0.0
  %11504 = vmatpush1.msra.mxu0 0.0
  %11505 = vmatprep.subr.mxu0 0.0
  %11506 = vmatpush1.msra.mxu0 0.0
  %11507 = vmatprep.subr.mxu0 0.0
  %11508 = vmatpush1.msra.mxu0 0.0
  %11509 = vmatprep.subr.mxu0 0.0
  %11510 = vmatpush1.msra.mxu0 %v11319
  %11511 = vmatprep.subr.mxu0 0.0
  %11512 = vmatpush1.msra.mxu0 %v11318
  %11513 = vmatprep.subr.mxu0 0.0
  %11514 = vmatpush2.msra.mxu0 0.0
  %11515 = vmatprep.subr.mxu0 0.0
  %11516 = vmatpush2.msra.mxu0 0.0
  %11517 = vmatprep.subr.mxu0 0.0
  %11518 = vmatpush2.msra.mxu0 0.0
  %11519 = vmatprep.subr.mxu0 0.0
  %11520 = vmatpush2.msra.mxu0 0.0
  %11521 = vmatprep.subr.mxu0 0.0
  %11522 = vmatpush2.msra.mxu0 0.0
  %11523 = vmatprep.subr.mxu0 0.0
  %11524 = vmatpush2.msra.mxu0 0.0
  %11525 = vmatprep.subr.mxu0 0.0
  %11526 = vmatpush2.msra.mxu0 0.0
  %11527 = vmatprep.subr.mxu0 0.0
  %11528 = vmatpush2.msra.mxu0 0.0
  %11529 = vmatprep.subr.mxu0 0.0
  %11530 = vmatpush2.msra.mxu0 0.0
  %11531 = vmatprep.subr.mxu0 0.0
  %11532 = vmatpush2.msra.mxu0 0.0
  %11533 = vmatprep.subr.mxu0 0.0
  %11534 = vmatpush2.msra.mxu0 0.0
  %11535 = vmatprep.subr.mxu0 0.0
  %11536 = vmatpush2.msra.mxu0 0.0
  %11537 = vmatprep.subr.mxu0 0.0
  %11538 = vmatpush2.msra.mxu0 0.0
  %11539 = vmatprep.subr.mxu0 0.0
  %11540 = vmatpush2.msra.mxu0 0.0
  %11541 = vmatprep.subr.mxu0 0.0
  %11542 = vmatpush2.msra.mxu0 0.0
  %11543 = vmatprep.subr.mxu0 0.0
  %11544 = vmatpush2.msra.mxu0 0.0
  %11545 = vmatprep.mubr.f32.mxu0 0.0
  %11546 = vmatmul.mubr.f32.gmra.mxu0 %v11479
  %v11547 = vpop.f32.mrf.mxu0
  %v11548 = vadd.f32 0.0, %v11547
  %v11549 = vpop.f32.mrf.mxu0
  %11550 = vdwg.mxu0
  %v11551 = vadd.f32 %v11470, %v11548
  %v11552 = vrot.slane %v11476, 3
  %v11553 = vsel %vm10534, %v11552, 0
  %11555 = vmatprep.subr.mxu0 0.0
  %11556 = vmatpush1.msra.mxu0 0.0
  %11557 = vmatprep.subr.mxu0 0.0
  %11558 = vmatpush1.msra.mxu0 0.0
  %11559 = vmatprep.subr.mxu0 0.0
  %11560 = vmatpush1.msra.mxu0 0.0
  %11561 = vmatprep.subr.mxu0 0.0
  %11562 = vmatpush1.msra.mxu0 0.0
  %11563 = vmatprep.subr.mxu0 0.0
  %11564 = vmatpush1.msra.mxu0 0.0
  %11565 = vmatprep.subr.mxu0 0.0
  %11566 = vmatpush1.msra.mxu0 0.0
  %11567 = vmatprep.subr.mxu0 0.0
  %11568 = vmatpush1.msra.mxu0 0.0
  %11569 = vmatprep.subr.mxu0 0.0
  %11570 = vmatpush1.msra.mxu0 0.0
  %11571 = vmatprep.subr.mxu0 0.0
  %11572 = vmatpush1.msra.mxu0 0.0
  %11573 = vmatprep.subr.mxu0 0.0
  %11574 = vmatpush1.msra.mxu0 0.0
  %11575 = vmatprep.subr.mxu0 0.0
  %11576 = vmatpush1.msra.mxu0 0.0
  %11577 = vmatprep.subr.mxu0 0.0
  %11578 = vmatpush1.msra.mxu0 0.0
  %11579 = vmatprep.subr.mxu0 0.0
  %11580 = vmatpush1.msra.mxu0 0.0
  %11581 = vmatprep.subr.mxu0 0.0
  %11582 = vmatpush1.msra.mxu0 0.0
  %11583 = vmatprep.subr.mxu0 0.0
  %11584 = vmatpush1.msra.mxu0 %v11321
  %11585 = vmatprep.subr.mxu0 0.0
  %11586 = vmatpush1.msra.mxu0 %v11320
  %11587 = vmatprep.subr.mxu0 0.0
  %11588 = vmatpush2.msra.mxu0 0.0
  %11589 = vmatprep.subr.mxu0 0.0
  %11590 = vmatpush2.msra.mxu0 0.0
  %11591 = vmatprep.subr.mxu0 0.0
  %11592 = vmatpush2.msra.mxu0 0.0
  %11593 = vmatprep.subr.mxu0 0.0
  %11594 = vmatpush2.msra.mxu0 0.0
  %11595 = vmatprep.subr.mxu0 0.0
  %11596 = vmatpush2.msra.mxu0 0.0
  %11597 = vmatprep.subr.mxu0 0.0
  %11598 = vmatpush2.msra.mxu0 0.0
  %11599 = vmatprep.subr.mxu0 0.0
  %11600 = vmatpush2.msra.mxu0 0.0
  %11601 = vmatprep.subr.mxu0 0.0
  %11602 = vmatpush2.msra.mxu0 0.0
  %11603 = vmatprep.subr.mxu0 0.0
  %11604 = vmatpush2.msra.mxu0 0.0
  %11605 = vmatprep.subr.mxu0 0.0
  %11606 = vmatpush2.msra.mxu0 0.0
  %11607 = vmatprep.subr.mxu0 0.0
  %11608 = vmatpush2.msra.mxu0 0.0
  %11609 = vmatprep.subr.mxu0 0.0
  %11610 = vmatpush2.msra.mxu0 0.0
  %11611 = vmatprep.subr.mxu0 0.0
  %11612 = vmatpush2.msra.mxu0 0.0
  %11613 = vmatprep.subr.mxu0 0.0
  %11614 = vmatpush2.msra.mxu0 0.0
  %11615 = vmatprep.subr.mxu0 0.0
  %11616 = vmatpush2.msra.mxu0 0.0
  %11617 = vmatprep.subr.mxu0 0.0
  %11618 = vmatpush2.msra.mxu0 0.0
  %11619 = vmatprep.mubr.f32.mxu0 0.0
  %11620 = vmatmul.mubr.f32.gmra.mxu0 %v11553
  %v11621 = vpop.f32.mrf.mxu0
  %v11622 = vadd.f32 0.0, %v11621
  %v11623 = vpop.f32.mrf.mxu0
  %11624 = vdwg.mxu0
  %v11625 = vadd.f32 %v11551, %v11622
  %v11626 = vld [vmem:[%s13] sm:$0x1]
  %v11627 = vadd.f32 %v11625, %v11626
  %v11628 = vmax.f32 %v11627, 0.0
  %v11629 = vld [vmem:[%s14] sm:$0xff]
  %v11630 = vld [vmem:[%s14 + $0x8] sm:$0xff]
  %v11631 = vld [vmem:[%s14 + $0x10] sm:$0xff]
  %v11632 = vld [vmem:[%s14 + $0x18] sm:$0xff]
  %v11633 = vld [vmem:[%s14 + $0x20] sm:$0xff]
  %v11634 = vld [vmem:[%s14 + $0x28] sm:$0xff]
  %v11635 = vld [vmem:[%s14 + $0x30] sm:$0xff]
  %v11636 = vld [vmem:[%s14 + $0x38] sm:$0xff]
  %v11637 = vld [vmem:[%s15] sm:$0x1]
  %v11639 = vsel %vm688, %v11628, 0
  %11641 = vmatprep.subr.mxu0 0.0
  %11642 = vmatpush1.msra.mxu0 0.0
  %11643 = vmatprep.subr.mxu0 0.0
  %11644 = vmatpush1.msra.mxu0 0.0
  %11645 = vmatprep.subr.mxu0 0.0
  %11646 = vmatpush1.msra.mxu0 0.0
  %11647 = vmatprep.subr.mxu0 0.0
  %11648 = vmatpush1.msra.mxu0 0.0
  %11649 = vmatprep.subr.mxu0 0.0
  %11650 = vmatpush1.msra.mxu0 0.0
  %11651 = vmatprep.subr.mxu0 0.0
  %11652 = vmatpush1.msra.mxu0 0.0
  %11653 = vmatprep.subr.mxu0 0.0
  %11654 = vmatpush1.msra.mxu0 0.0
  %11655 = vmatprep.subr.mxu0 0.0
  %11656 = vmatpush1.msra.mxu0 0.0
  %11657 = vmatprep.subr.mxu0 0.0
  %11658 = vmatpush1.msra.mxu0 %v11636
  %11659 = vmatprep.subr.mxu0 0.0
  %11660 = vmatpush1.msra.mxu0 %v11635
  %11661 = vmatprep.subr.mxu0 0.0
  %11662 = vmatpush1.msra.mxu0 %v11634
  %11663 = vmatprep.subr.mxu0 0.0
  %11664 = vmatpush1.msra.mxu0 %v11633
  %11665 = vmatprep.subr.mxu0 0.0
  %11666 = vmatpush1.msra.mxu0 %v11632
  %11667 = vmatprep.subr.mxu0 0.0
  %11668 = vmatpush1.msra.mxu0 %v11631
  %11669 = vmatprep.subr.mxu0 0.0
  %11670 = vmatpush1.msra.mxu0 %v11630
  %11671 = vmatprep.subr.mxu0 0.0
  %11672 = vmatpush1.msra.mxu0 %v11629
  %11673 = vmatprep.subr.mxu0 0.0
  %11674 = vmatpush2.msra.mxu0 0.0
  %11675 = vmatprep.subr.mxu0 0.0
  %11676 = vmatpush2.msra.mxu0 0.0
  %11677 = vmatprep.subr.mxu0 0.0
  %11678 = vmatpush2.msra.mxu0 0.0
  %11679 = vmatprep.subr.mxu0 0.0
  %11680 = vmatpush2.msra.mxu0 0.0
  %11681 = vmatprep.subr.mxu0 0.0
  %11682 = vmatpush2.msra.mxu0 0.0
  %11683 = vmatprep.subr.mxu0 0.0
  %11684 = vmatpush2.msra.mxu0 0.0
  %11685 = vmatprep.subr.mxu0 0.0
  %11686 = vmatpush2.msra.mxu0 0.0
  %11687 = vmatprep.subr.mxu0 0.0
  %11688 = vmatpush2.msra.mxu0 0.0
  %11689 = vmatprep.subr.mxu0 0.0
  %11690 = vmatpush2.msra.mxu0 0.0
  %11691 = vmatprep.subr.mxu0 0.0
  %11692 = vmatpush2.msra.mxu0 0.0
  %11693 = vmatprep.subr.mxu0 0.0
  %11694 = vmatpush2.msra.mxu0 0.0
  %11695 = vmatprep.subr.mxu0 0.0
  %11696 = vmatpush2.msra.mxu0 0.0
  %11697 = vmatprep.subr.mxu0 0.0
  %11698 = vmatpush2.msra.mxu0 0.0
  %11699 = vmatprep.subr.mxu0 0.0
  %11700 = vmatpush2.msra.mxu0 0.0
  %11701 = vmatprep.subr.mxu0 0.0
  %11702 = vmatpush2.msra.mxu0 0.0
  %11703 = vmatprep.subr.mxu0 0.0
  %11704 = vmatpush2.msra.mxu0 0.0
  %11705 = vmatprep.mubr.f32.mxu0 0.0
  %11706 = vmatmul.mubr.f32.gmra.mxu0 %v11639
  %v11707 = vpop.f32.mrf.mxu0
  %v11708 = vadd.f32 %v11637, %v11707
  %v11709 = vpop.f32.mrf.mxu0
  %11710 = vdwg.mxu0
  %vm11711 = vcmask 24576
  %11712 = vst.msk [vmem:[%s16] sm:$0x1] %vm11711, %v11708
  // Predicated region
  $region66: #{net_depth_forward.1} parent=0 // pred_check
    _
  $region67: #{net_depth_forward.1} parent=0 // pred_check_branch
    %11714 = sbr.rel (0) target = $region69
  $region68: #{net_depth_forward.1} parent=0 // pred_region
    _
  $region69: #{net_depth_forward.1} parent=0 // pred_fallthru
    _
  // Predicated region
  $region70: #{net_depth_forward.1} parent=0 // pred_check
    _
  $region71: #{net_depth_forward.1} parent=0 // pred_check_branch
    %11716 = sbr.rel (0) target = $region73
  $region72: #{net_depth_forward.1} parent=0 // pred_region
    _
  $region73: #{net_depth_forward.1} parent=0 // pred_fallthru
    _

</llo_original>
